<compile_context>
chip_gen: v7x
topology: tpu7x:2x2x1
jax: 0.10.0
libtpu: 0.0.40
codegen_flags: <defaults>
</compile_context>

<pallas_src>
import functools

import jax
import jax.numpy as jnp
from jax import lax
from jax.experimental import pallas as pl
from jax.experimental.pallas import tpu as pltpu


# ---------------------------------------------------------------------------
# Pallas kernel: one (batch, row-tile) step.
# ---------------------------------------------------------------------------
def _decoder_kernel(skip_ref, bott_ref, rh_ref, rw_ref,
                    wskip_ref, bskip_ref,
                    wlast_ref, blast_ref,
                    wpred_ref, bpred_ref,
                    pred_ref, feat_ref,
                    pad_ref):
    # skip_ref : (1, (H+2)*W, Cs)   bf16  skip features, zero row top/bottom
    # bott_ref : (1, Hb, Wb*Cbp)    f32   bottleneck (channels padded to Cbp)
    # rh_ref   : (H+2, Hb)          f32   row-upsample operator (zero edge rows)
    # rw_ref   : (W, Wb)            f32   col-upsample operator
    # wskip_ref: (Cs, C1)           bf16  1x1 skip conv (BN folded, 48->C1 pad)
    # bskip_ref: (1, C1)            f32
    # wlast_ref: (9*Ccat, 256)      bf16  3x3 conv, per-tap lane-aligned blocks
    # blast_ref: (1, 256)           f32
    # wpred_ref: (256, CP)          bf16  1x1 prediction conv (N padded to CP)
    # bpred_ref: (1, CP)            f32
    # pred_ref : (1, TH*W, num_out) out   predictions (only real lanes to HBM)
    # feat_ref : (1, TH*W, 256)     out   decoder features
    # pad_ref  : (TH+2, W+2, Ccat)  bf16  zero-bordered conv-input scratch
    THp, Wp, Ccat = pad_ref.shape
    TH, W = THp - 2, Wp - 2
    C1 = wskip_ref.shape[1]          # skip channel block (128)
    Cbp = Ccat - C1                  # bottleneck channel block
    Wb = rw_ref.shape[1]
    num_out = pred_ref.shape[2]
    MT = TH * W

    rt = pl.program_id(1)
    r0 = pl.multiple_of(rt * TH, TH)        # first output row of this tile
    r0w = pl.multiple_of(rt * MT, MT)       # offset into row-padded flat skip

    # --- skip branch: 1x1 conv (+ folded BN) + ReLU on the TH+2 halo rows ---
    sk = skip_ref[0, pl.ds(r0w, THp * W), :]                       # ((TH+2)*W, Cs)
    s = jnp.dot(sk, wskip_ref[...], preferred_element_type=jnp.float32)
    s = jnp.maximum(s + bskip_ref[...], 0.0)
    pad_ref[:, 1:W + 1, :C1] = s.astype(pad_ref.dtype).reshape(THp, W, C1)

    # --- separable bilinear upsample of the bottleneck (f32 weights) --------
    rh_t = rh_ref[pl.ds(r0, THp), :]                               # (TH+2, Hb)
    tmp = jnp.dot(rh_t, bott_ref[0], preferred_element_type=jnp.float32)
    tmp = tmp.reshape(THp, Wb, Cbp)
    rww = rw_ref[...]                                              # (W, Wb)
    for i in range(THp):                                           # small, unrolled
        up_i = jnp.dot(rww, tmp[i], preferred_element_type=jnp.float32)  # (W, Cbp)
        pad_ref[i, 1:W + 1, C1:] = up_i.astype(pad_ref.dtype)

    # --- conv zero padding: left/right columns + image top/bottom rows ------
    pad_ref[:, 0, :] = jnp.zeros((THp, Ccat), pad_ref.dtype)
    pad_ref[:, W + 1, :] = jnp.zeros((THp, Ccat), pad_ref.dtype)

    @pl.when(rt == 0)
    def _():
        pad_ref[0, :, :] = jnp.zeros((Wp, Ccat), pad_ref.dtype)

    @pl.when(rt == pl.num_programs(1) - 1)
    def _():
        pad_ref[THp - 1, :, :] = jnp.zeros((Wp, Ccat), pad_ref.dtype)

    # --- 3x3 conv: 9 shifted taps accumulated into one f32 accumulator ------
    acc = None
    for t in range(9):
        ky, kx = t // 3, t % 3
        tap = pad_ref[ky:ky + TH, kx:kx + W, :].reshape(MT, Ccat)  # bf16
        wblk = wlast_ref[t * Ccat:(t + 1) * Ccat, :]               # static view
        d = jnp.dot(tap, wblk, preferred_element_type=jnp.float32)
        acc = d if acc is None else acc + d
    feat = jnp.maximum(acc + blast_ref[...], 0.0)                  # (TH*W, 256)
    feat_ref[0] = feat.astype(feat_ref.dtype)

    # --- predictions: 1x1 conv + bias; only num_out lanes hit HBM -----------
    pred = jnp.dot(feat.astype(jnp.bfloat16), wpred_ref[...],
                   preferred_element_type=jnp.float32)
    pred = pred + bpred_ref[...]
    pred_ref[0] = pred[:, :num_out].astype(pred_ref.dtype)


# ---------------------------------------------------------------------------
# Helpers (wrapper-side glue).
# ---------------------------------------------------------------------------
def _bilinear_matrix(n_out, n_in):
    """Row-interpolation matrix matching F.interpolate(bilinear, align_corners=False)."""
    scale = n_in / n_out
    dst = jnp.arange(n_out, dtype=jnp.float32)
    src = jnp.maximum((dst + 0.5) * scale - 0.5, 0.0)   # PyTorch clamps negatives to 0
    i0 = jnp.clip(jnp.floor(src).astype(jnp.int32), 0, n_in - 1)
    i1 = jnp.minimum(i0 + 1, n_in - 1)
    w1 = src - i0.astype(jnp.float32)
    w0 = 1.0 - w1
    rows = jnp.arange(n_out)
    mat = jnp.zeros((n_out, n_in), jnp.float32)
    mat = mat.at[rows, i0].add(w0)
    mat = mat.at[rows, i1].add(w1)
    return mat


def _fold_bn(w_mat, gamma, beta, mean, var, eps=1e-5):
    """Fold inference-mode BatchNorm2d into matmul weights. Returns (w, bias)."""
    scale = gamma / jnp.sqrt(var + eps)
    return w_mat * scale[None, :], beta - mean * scale


def _pick_tile_rows(H, W, requested=None):
    """Largest row tile <= target that divides H and keeps TH*W sublane-aligned."""
    target = requested if requested is not None else max(1, 2048 // max(W, 1))
    target = int(min(H, max(1, target)))
    for th in range(target, 0, -1):
        if H % th == 0 and ((th * W) % 8 == 0 or th == H):
            return th
    return H


# ---------------------------------------------------------------------------
# Public forward (skip_add=True, upsample=True configuration).
# ---------------------------------------------------------------------------
def decoder_deeplabv3p_forward(features_bottleneck, features_skip_4x, params,
                               tile_rows=None):
    """features_bottleneck: (B, Cb, Hb, Wb); features_skip_4x: (B, Cs, H, W).

    params (PyTorch layouts):
      skip_w (48, Cs, 1, 1), skip_bn=(gamma,beta,mean,var) each (48,)
      last_w (256, 48+Cb, 3, 3), last_bn=(gamma,beta,mean,var) each (256,)
      pred_w (num_out, 256, 1, 1), pred_b (num_out,)
    Returns (predictions_4x (B,num_out,H,W), features (B,256,H,W)).
    """
    B, Cb, Hb, Wb = features_bottleneck.shape
    _, Cs, H, W = features_skip_4x.shape
    dtype = features_bottleneck.dtype

    C_mid = params["skip_w"].shape[0]                # 48
    Cdec = params["last_w"].shape[0]                 # 256
    num_out = params["pred_w"].shape[0]

    C1 = max(128, ((C_mid + 127) // 128) * 128)      # lane-aligned skip block
    Cbp = ((Cb + 127) // 128) * 128                  # lane-aligned bottleneck block
    Ccat = C1 + Cbp
    CP = max(128, ((num_out + 127) // 128) * 128)    # MXU-friendly pred matmul N

    TH = _pick_tile_rows(H, W, tile_rows)
    RT = H // TH
    HW = H * W

    # ---- inputs: NHWC, channel/row padding, bf16 (f32 for the upsample) ----
    bott = jnp.transpose(features_bottleneck, (0, 2, 3, 1))          # (B,Hb,Wb,Cb)
    bott = jnp.pad(bott, ((0, 0), (0, 0), (0, 0), (0, Cbp - Cb)))
    bott = bott.reshape(B, Hb, Wb * Cbp).astype(jnp.float32)

    skip = jnp.transpose(features_skip_4x, (0, 2, 3, 1))             # (B,H,W,Cs)
    skip = jnp.pad(skip, ((0, 0), (1, 1), (0, 0), (0, 0)))           # zero halo rows
    skip = skip.reshape(B, (H + 2) * W, Cs).astype(jnp.bfloat16)

    rh = jnp.pad(_bilinear_matrix(H, Hb), ((1, 1), (0, 0)))          # (H+2,Hb) f32
    rw = _bilinear_matrix(W, Wb)                                     # (W,Wb)   f32

    # ---- weights: fold BN, reorder/pad channels to lane-aligned blocks -----
    w_skip = params["skip_w"].reshape(C_mid, Cs).T                   # (Cs, 48)
    w_skip, b_skip = _fold_bn(w_skip, *params["skip_bn"])
    w_skip = jnp.pad(w_skip, ((0, 0), (0, C1 - C_mid))).astype(jnp.bfloat16)
    b_skip = jnp.pad(b_skip, (0, C1 - C_mid)).reshape(1, C1).astype(jnp.float32)

    w_last = jnp.transpose(params["last_w"], (2, 3, 1, 0))           # (3,3,Ccat0,256)
    w_last = w_last.reshape(9 * (C_mid + Cb), Cdec)
    w_last, b_last = _fold_bn(w_last, *params["last_bn"])
    w_last = w_last.reshape(3, 3, C_mid + Cb, Cdec)
    w_pad = jnp.zeros((3, 3, Ccat, Cdec), w_last.dtype)
    w_pad = w_pad.at[:, :, :C_mid, :].set(w_last[:, :, :C_mid, :])
    w_pad = w_pad.at[:, :, C1:C1 + Cb, :].set(w_last[:, :, C_mid:, :])
    w_last = w_pad.reshape(9 * Ccat, Cdec).astype(jnp.bfloat16)
    b_last = b_last.reshape(1, Cdec).astype(jnp.float32)

    w_pred = params["pred_w"].reshape(num_out, Cdec).T               # (256, num_out)
    w_pred = jnp.pad(w_pred, ((0, 0), (0, CP - num_out))).astype(jnp.bfloat16)
    b_pred = jnp.pad(params["pred_b"], (0, CP - num_out)).reshape(1, CP)
    b_pred = b_pred.astype(jnp.float32)

    grid_spec = pltpu.PrefetchScalarGridSpec(
        num_scalar_prefetch=0,
        grid=(B, RT),
        in_specs=[
            pl.BlockSpec((1, (H + 2) * W, Cs), lambda b, r: (b, 0, 0)),   # skip
            pl.BlockSpec((1, Hb, Wb * Cbp), lambda b, r: (b, 0, 0)),      # bottleneck
            pl.BlockSpec((H + 2, Hb), lambda b, r: (0, 0)),               # Rh (padded)
            pl.BlockSpec((W, Wb), lambda b, r: (0, 0)),                   # Rw
            pl.BlockSpec((Cs, C1), lambda b, r: (0, 0)),                  # skip 1x1 w
            pl.BlockSpec((1, C1), lambda b, r: (0, 0)),                   # skip bias
            pl.BlockSpec((9 * Ccat, Cdec), lambda b, r: (0, 0)),          # 3x3 w
            pl.BlockSpec((1, Cdec), lambda b, r: (0, 0)),                 # 3x3 bias
            pl.BlockSpec((Cdec, CP), lambda b, r: (0, 0)),                # pred w
            pl.BlockSpec((1, CP), lambda b, r: (0, 0)),                   # pred bias
        ],
        out_specs=[
            pl.BlockSpec((1, TH * W, num_out), lambda b, r: (b, r, 0)),   # predictions
            pl.BlockSpec((1, TH * W, Cdec), lambda b, r: (b, r, 0)),      # features
        ],
        scratch_shapes=[pltpu.VMEM((TH + 2, W + 2, Ccat), jnp.bfloat16)],
    )

    pred_flat, feat_flat = pl.pallas_call(
        _decoder_kernel,
        out_shape=(jax.ShapeDtypeStruct((B, HW, num_out), dtype),
                   jax.ShapeDtypeStruct((B, HW, Cdec), dtype)),
        grid_spec=grid_spec,
        compiler_params=pltpu.CompilerParams(
            dimension_semantics=("parallel", "parallel"),
            vmem_limit_bytes=48 * 1024 * 1024),
    )(skip, bott, rh, rw, w_skip, b_skip, w_last, b_last, w_pred, b_pred)

    feat = jnp.transpose(feat_flat.reshape(B, H, W, Cdec), (0, 3, 1, 2))
    pred = jnp.transpose(pred_flat.reshape(B, H, W, num_out), (0, 3, 1, 2))
    return pred, feat


# ---------------------------------------------------------------------------
# Pure-JAX reference (f32, mirrors the PyTorch module, BN in eval mode).
# ---------------------------------------------------------------------------
def _reference(features_bottleneck, features_skip_4x, params):
    eps = 1e-5
    _, _, Hb, Wb = features_bottleneck.shape
    _, _, H, W = features_skip_4x.shape

    rh = _bilinear_matrix(H, Hb)
    rw = _bilinear_matrix(W, Wb)
    up = jnp.einsum('Hh,bchw->bcHw', rh, features_bottleneck)
    up = jnp.einsum('Ww,bchw->bchW', rw, up)

    def bn(x, gamma, beta, mean, var):
        inv = gamma / jnp.sqrt(var + eps)
        return (x - mean[None, :, None, None]) * inv[None, :, None, None] \
            + beta[None, :, None, None]

    dn = lax.conv_dimension_numbers(features_skip_4x.shape, params["skip_w"].shape,
                                    ("NCHW", "OIHW", "NCHW"))
    y = lax.conv_general_dilated(features_skip_4x, params["skip_w"], (1, 1), "VALID",
                                 dimension_numbers=dn)
    y = jnp.maximum(bn(y, *params["skip_bn"]), 0.0)

    x = jnp.concatenate([y, up], axis=1)
    dn2 = lax.conv_dimension_numbers(x.shape, params["last_w"].shape,
                                     ("NCHW", "OIHW", "NCHW"))
    x = lax.conv_general_dilated(x, params["last_w"], (1, 1), ((1, 1), (1, 1)),
                                 dimension_numbers=dn2)
    x = jnp.maximum(bn(x, *params["last_bn"]), 0.0)

    dn3 = lax.conv_dimension_numbers(x.shape, params["pred_w"].shape,
                                     ("NCHW", "OIHW", "NCHW"))
    pred = lax.conv_general_dilated(x, params["pred_w"], (1, 1), "VALID",
                                    dimension_numbers=dn3)
    pred = pred + params["pred_b"][None, :, None, None]
    return pred, x


if __name__ == "__main__":
    B = 2
    bottleneck_ch, skip_4x_ch, num_out_ch = 16, 8, 8
    Hb, Wb = 8, 8        # bottleneck spatial (scale > 4)
    H, W = 16, 16        # skip / output spatial (scale == 4)
    Ccat = 48 + bottleneck_ch

    key = jax.random.PRNGKey(0)
    ks = jax.random.split(key, 14)

    features_bottleneck = jax.random.normal(ks[0], (B, bottleneck_ch, Hb, Wb), jnp.float32)
    features_skip_4x = jax.random.normal(ks[1], (B, skip_4x_ch, H, W), jnp.float32)

    params = {
        "skip_w": jax.random.normal(ks[2], (48, skip_4x_ch, 1, 1), jnp.float32)
                  * (2.0 / skip_4x_ch) ** 0.5,
        "skip_bn": (
            1.0 + 0.1 * jax.random.normal(ks[3], (48,), jnp.float32),
            0.1 * jax.random.normal(ks[4], (48,), jnp.float32),
            0.1 * jax.random.normal(ks[5], (48,), jnp.float32),
            0.8 + 0.4 * jax.random.uniform(ks[6], (48,), jnp.float32),
        ),
        "last_w": jax.random.normal(ks[7], (256, Ccat, 3, 3), jnp.float32)
                  * (2.0 / (9 * Ccat)) ** 0.5,
        "last_bn": (
            1.0 + 0.1 * jax.random.normal(ks[8], (256,), jnp.float32),
            0.1 * jax.random.normal(ks[9], (256,), jnp.float32),
            0.1 * jax.random.normal(ks[10], (256,), jnp.float32),
            0.8 + 0.4 * jax.random.uniform(ks[11], (256,), jnp.float32),
        ),
        "pred_w": jax.random.normal(ks[12], (num_out_ch, 256, 1, 1), jnp.float32)
                  * (2.0 / 256.0) ** 0.5,
        "pred_b": 0.1 * jax.random.normal(ks[13], (num_out_ch,), jnp.float32),
    }

    # tile_rows=8 -> 2 row tiles: exercises the halo / boundary-zeroing paths.
    fwd = jax.jit(functools.partial(decoder_deeplabv3p_forward, tile_rows=8))
    pred, feat = fwd(features_bottleneck, features_skip_4x, params)
    pred = jax.block_until_ready(pred)
    feat = jax.block_until_ready(feat)

    pred_gold, feat_gold = _reference(features_bottleneck, features_skip_4x, params)
    pred_gold = jax.block_until_ready(pred_gold)
    feat_gold = jax.block_until_ready(feat_gold)

    assert pred.shape == (B, num_out_ch, H, W)
    assert feat.shape == (B, 256, H, W)
    # Kernel uses bf16 MXU operands (f32 accumulation) vs. an f32 reference.
    assert jnp.allclose(feat, feat_gold, atol=8e-2, rtol=8e-2), \
        float(jnp.max(jnp.abs(feat - feat_gold)))
    assert jnp.allclose(pred, pred_gold, atol=8e-2, rtol=8e-2), \
        float(jnp.max(jnp.abs(pred - pred_gold)))

    print("KERNEL_OK")
</pallas_src>

<mosaic_0001>
module attributes {stable_mosaic.version = 11 : i64} {
  func.func private @main(%arg0: i32) attributes {dimension_semantics = [#tpu.dimension_semantics<core_parallel>], iteration_bounds = array<i64: 2>, tpu.core_type = #tpu.core_type<sc_scalar_subcore>, window_params = []} {
    return
  }
}

module attributes {stable_mosaic.version = 11 : i64} {
  func.func private @main(%arg0: i32) attributes {dimension_semantics = [#tpu.dimension_semantics<core_parallel>], iteration_bounds = array<i64: 2>, tpu.core_type = #tpu.core_type<sc_scalar_subcore>, window_params = []} {
    return
  }
}

module attributes {stable_mosaic.version = 11 : i64} {
  func.func @_decoder_kernel(%arg0: i32, %arg1: i32, %arg2: memref<1x288x8xbf16, #tpu.memory_space<vmem>>, %arg3: memref<1x8x1024xf32, #tpu.memory_space<vmem>>, %arg4: memref<18x8xf32, #tpu.memory_space<vmem>>, %arg5: memref<16x8xf32, #tpu.memory_space<vmem>>, %arg6: memref<8x128xbf16, #tpu.memory_space<vmem>>, %arg7: memref<1x128xf32, #tpu.memory_space<vmem>>, %arg8: memref<2304x256xbf16, #tpu.memory_space<vmem>>, %arg9: memref<1x256xf32, #tpu.memory_space<vmem>>, %arg10: memref<256x128xbf16, #tpu.memory_space<vmem>>, %arg11: memref<1x128xf32, #tpu.memory_space<vmem>>, %arg12: memref<1x128x8xf32, #tpu.memory_space<vmem>>, %arg13: memref<1x128x256xf32, #tpu.memory_space<vmem>>, %arg14: memref<10x18x256xbf16, #tpu.memory_space<vmem>>) attributes {dimension_semantics = [#tpu.dimension_semantics<parallel>, #tpu.dimension_semantics<parallel>], iteration_bounds = array<i64: 2, 2>, scalar_prefetch = 0 : i64, scratch_operands = 1 : i64, tpu.core_type = #tpu.core_type<tc>, window_params = [{transform_indices = @transform_0, window_bounds = array<i64: 1, 288, 8>}, {transform_indices = @transform_1, window_bounds = array<i64: 1, 8, 1024>}, {pipeline_mode = #tpu.pipeline_mode<synchronous>, transform_indices = @transform_2, window_bounds = array<i64: 18, 8>}, {pipeline_mode = #tpu.pipeline_mode<synchronous>, transform_indices = @transform_3, window_bounds = array<i64: 16, 8>}, {pipeline_mode = #tpu.pipeline_mode<synchronous>, transform_indices = @transform_4, window_bounds = array<i64: 8, 128>}, {pipeline_mode = #tpu.pipeline_mode<synchronous>, transform_indices = @transform_5, window_bounds = array<i64: 1, 128>}, {pipeline_mode = #tpu.pipeline_mode<synchronous>, transform_indices = @transform_6, window_bounds = array<i64: 2304, 256>}, {pipeline_mode = #tpu.pipeline_mode<synchronous>, transform_indices = @transform_7, window_bounds = array<i64: 1, 256>}, {pipeline_mode = #tpu.pipeline_mode<synchronous>, transform_indices = @transform_8, window_bounds = array<i64: 256, 128>}, {pipeline_mode = #tpu.pipeline_mode<synchronous>, transform_indices = @transform_9, window_bounds = array<i64: 1, 128>}, {transform_indices = @transform_10, window_bounds = array<i64: 1, 128, 8>}, {transform_indices = @transform_11, window_bounds = array<i64: 1, 128, 256>}]} {
    %c8_i32 = arith.constant 8 : i32
    %0 = arith.muli %arg1, %c8_i32 : i32
    %1 = tpu.assume_multiple %0, 8 : i32
    %c128_i32 = arith.constant 128 : i32
    %2 = arith.muli %arg1, %c128_i32 : i32
    %3 = tpu.assume_multiple %2, 128 : i32
    %c0 = arith.constant 0 : index
    %4 = arith.index_cast %3 : i32 to index
    %c0_0 = arith.constant 0 : index
    %5 = vector.load %arg2[%c0, %4, %c0_0] : memref<1x288x8xbf16, #tpu.memory_space<vmem>>, vector<1x160x8xbf16>
    %6 = vector.shape_cast %5 : vector<1x160x8xbf16> to vector<160x8xbf16>
    %c0_1 = arith.constant 0 : index
    %c0_2 = arith.constant 0 : index
    %7 = vector.load %arg6[%c0_1, %c0_2] : memref<8x128xbf16, #tpu.memory_space<vmem>>, vector<8x128xbf16>
    %cst = arith.constant dense<0.000000e+00> : vector<160x128xf32>
    %8 = tpu.matmul %6, %7, %cst {dimension_numbers = #tpu.dot_dimension_numbers<[1], [0], [0], [1], [0, 0, 1, 1], [], []>} : vector<160x8xbf16>, vector<8x128xbf16>, vector<160x128xf32> -> vector<160x128xf32>
    %c0_3 = arith.constant 0 : index
    %c0_4 = arith.constant 0 : index
    %9 = vector.load %arg7[%c0_3, %c0_4] : memref<1x128xf32, #tpu.memory_space<vmem>>, vector<1x128xf32>
    %10 = vector.broadcast %9 : vector<1x128xf32> to vector<160x128xf32>
    %11 = arith.addf %8, %10 : vector<160x128xf32>
    %cst_5 = arith.constant 0.000000e+00 : f32
    %12 = vector.broadcast %cst_5 : f32 to vector<160x128xf32>
    %13 = arith.maximumf %11, %12 : vector<160x128xf32>
    %14 = arith.truncf %13 : vector<160x128xf32> to vector<160x128xbf16>
    %15 = vector.shape_cast %14 : vector<160x128xbf16> to vector<10x16x128xbf16>
    %c0_6 = arith.constant 0 : index
    %c1 = arith.constant 1 : index
    %c0_7 = arith.constant 0 : index
    %16 = vector.load %arg14[%c0_6, %c1, %c0_7] : memref<10x18x256xbf16, #tpu.memory_space<vmem>>, vector<10x16x128xbf16>
    tpu.vector_store %arg14[%c0_6, %c1, %c0_7], %15 {strides = array<i32>} : memref<10x18x256xbf16, #tpu.memory_space<vmem>>, vector<10x16x128xbf16>,
    %17 = arith.index_cast %1 : i32 to index
    %c0_8 = arith.constant 0 : index
    %18 = vector.load %arg4[%17, %c0_8] : memref<18x8xf32, #tpu.memory_space<vmem>>, vector<10x8xf32>
    %c0_9 = arith.constant 0 : index
    %c0_10 = arith.constant 0 : index
    %c0_11 = arith.constant 0 : index
    %19 = vector.load %arg3[%c0_9, %c0_10, %c0_11] : memref<1x8x1024xf32, #tpu.memory_space<vmem>>, vector<1x8x1024xf32>
    %20 = vector.shape_cast %19 : vector<1x8x1024xf32> to vector<8x1024xf32>
    %cst_12 = arith.constant dense<0.000000e+00> : vector<10x1024xf32>
    %21 = tpu.matmul %18, %20, %cst_12 {dimension_numbers = #tpu.dot_dimension_numbers<[1], [0], [0], [1], [0, 0, 1, 1], [], []>} : vector<10x8xf32>, vector<8x1024xf32>, vector<10x1024xf32> -> vector<10x1024xf32>
    %22 = vector.shape_cast %21 : vector<10x1024xf32> to vector<10x8x128xf32>
    %c0_13 = arith.constant 0 : index
    %c0_14 = arith.constant 0 : index
    %23 = vector.load %arg5[%c0_13, %c0_14] : memref<16x8xf32, #tpu.memory_space<vmem>>, vector<16x8xf32>
    %24 = vector.extract_strided_slice %22 {offsets = [0, 0, 0], sizes = [1, 8, 128], strides = [1, 1, 1]} : vector<10x8x128xf32> to vector<1x8x128xf32>
    %25 = vector.shape_cast %24 : vector<1x8x128xf32> to vector<8x128xf32>
    %cst_15 = arith.constant dense<0.000000e+00> : vector<16x128xf32>
    %26 = tpu.matmul %23, %25, %cst_15 {dimension_numbers = #tpu.dot_dimension_numbers<[1], [0], [0], [1], [0, 0, 1, 1], [], []>} : vector<16x8xf32>, vector<8x128xf32>, vector<16x128xf32> -> vector<16x128xf32>
    %27 = arith.truncf %26 : vector<16x128xf32> to vector<16x128xbf16>
    %c0_16 = arith.constant 0 : index
    %c1_17 = arith.constant 1 : index
    %c128 = arith.constant 128 : index
    %28 = vector.load %arg14[%c0_16, %c1_17, %c128] : memref<10x18x256xbf16, #tpu.memory_space<vmem>>, vector<1x16x128xbf16>
    %29 = vector.shape_cast %28 : vector<1x16x128xbf16> to vector<16x128xbf16>
    %30 = vector.shape_cast %27 : vector<16x128xbf16> to vector<1x16x128xbf16>
    tpu.vector_store %arg14[%c0_16, %c1_17, %c128], %30 {strides = array<i32>} : memref<10x18x256xbf16, #tpu.memory_space<vmem>>, vector<1x16x128xbf16>,
    %31 = vector.extract_strided_slice %22 {offsets = [1, 0, 0], sizes = [1, 8, 128], strides = [1, 1, 1]} : vector<10x8x128xf32> to vector<1x8x128xf32>
    %32 = vector.shape_cast %31 : vector<1x8x128xf32> to vector<8x128xf32>
    %cst_18 = arith.constant dense<0.000000e+00> : vector<16x128xf32>
    %33 = tpu.matmul %23, %32, %cst_18 {dimension_numbers = #tpu.dot_dimension_numbers<[1], [0], [0], [1], [0, 0, 1, 1], [], []>} : vector<16x8xf32>, vector<8x128xf32>, vector<16x128xf32> -> vector<16x128xf32>
    %34 = arith.truncf %33 : vector<16x128xf32> to vector<16x128xbf16>
    %c1_19 = arith.constant 1 : index
    %c1_20 = arith.constant 1 : index
    %c128_21 = arith.constant 128 : index
    %35 = vector.load %arg14[%c1_19, %c1_20, %c128_21] : memref<10x18x256xbf16, #tpu.memory_space<vmem>>, vector<1x16x128xbf16>
    %36 = vector.shape_cast %35 : vector<1x16x128xbf16> to vector<16x128xbf16>
    %37 = vector.shape_cast %34 : vector<16x128xbf16> to vector<1x16x128xbf16>
    tpu.vector_store %arg14[%c1_19, %c1_20, %c128_21], %37 {strides = array<i32>} : memref<10x18x256xbf16, #tpu.memory_space<vmem>>, vector<1x16x128xbf16>,
    %38 = vector.extract_strided_slice %22 {offsets = [2, 0, 0], sizes = [1, 8, 128], strides = [1, 1, 1]} : vector<10x8x128xf32> to vector<1x8x128xf32>
    %39 = vector.shape_cast %38 : vector<1x8x128xf32> to vector<8x128xf32>
    %cst_22 = arith.constant dense<0.000000e+00> : vector<16x128xf32>
    %40 = tpu.matmul %23, %39, %cst_22 {dimension_numbers = #tpu.dot_dimension_numbers<[1], [0], [0], [1], [0, 0, 1, 1], [], []>} : vector<16x8xf32>, vector<8x128xf32>, vector<16x128xf32> -> vector<16x128xf32>
    %41 = arith.truncf %40 : vector<16x128xf32> to vector<16x128xbf16>
    %c2 = arith.constant 2 : index
    %c1_23 = arith.constant 1 : index
    %c128_24 = arith.constant 128 : index
    %42 = vector.load %arg14[%c2, %c1_23, %c128_24] : memref<10x18x256xbf16, #tpu.memory_space<vmem>>, vector<1x16x128xbf16>
    %43 = vector.shape_cast %42 : vector<1x16x128xbf16> to vector<16x128xbf16>
    %44 = vector.shape_cast %41 : vector<16x128xbf16> to vector<1x16x128xbf16>
    tpu.vector_store %arg14[%c2, %c1_23, %c128_24], %44 {strides = array<i32>} : memref<10x18x256xbf16, #tpu.memory_space<vmem>>, vector<1x16x128xbf16>,
    %45 = vector.extract_strided_slice %22 {offsets = [3, 0, 0], sizes = [1, 8, 128], strides = [1, 1, 1]} : vector<10x8x128xf32> to vector<1x8x128xf32>
    %46 = vector.shape_cast %45 : vector<1x8x128xf32> to vector<8x128xf32>
    %cst_25 = arith.constant dense<0.000000e+00> : vector<16x128xf32>
    %47 = tpu.matmul %23, %46, %cst_25 {dimension_numbers = #tpu.dot_dimension_numbers<[1], [0], [0], [1], [0, 0, 1, 1], [], []>} : vector<16x8xf32>, vector<8x128xf32>, vector<16x128xf32> -> vector<16x128xf32>
    %48 = arith.truncf %47 : vector<16x128xf32> to vector<16x128xbf16>
    %c3 = arith.constant 3 : index
    %c1_26 = arith.constant 1 : index
    %c128_27 = arith.constant 128 : index
    %49 = vector.load %arg14[%c3, %c1_26, %c128_27] : memref<10x18x256xbf16, #tpu.memory_space<vmem>>, vector<1x16x128xbf16>
    %50 = vector.shape_cast %49 : vector<1x16x128xbf16> to vector<16x128xbf16>
    %51 = vector.shape_cast %48 : vector<16x128xbf16> to vector<1x16x128xbf16>
    tpu.vector_store %arg14[%c3, %c1_26, %c128_27], %51 {strides = array<i32>} : memref<10x18x256xbf16, #tpu.memory_space<vmem>>, vector<1x16x128xbf16>,
    %52 = vector.extract_strided_slice %22 {offsets = [4, 0, 0], sizes = [1, 8, 128], strides = [1, 1, 1]} : vector<10x8x128xf32> to vector<1x8x128xf32>
    %53 = vector.shape_cast %52 : vector<1x8x128xf32> to vector<8x128xf32>
    %cst_28 = arith.constant dense<0.000000e+00> : vector<16x128xf32>
    %54 = tpu.matmul %23, %53, %cst_28 {dimension_numbers = #tpu.dot_dimension_numbers<[1], [0], [0], [1], [0, 0, 1, 1], [], []>} : vector<16x8xf32>, vector<8x128xf32>, vector<16x128xf32> -> vector<16x128xf32>
    %55 = arith.truncf %54 : vector<16x128xf32> to vector<16x128xbf16>
    %c4 = arith.constant 4 : index
    %c1_29 = arith.constant 1 : index
    %c128_30 = arith.constant 128 : index
    %56 = vector.load %arg14[%c4, %c1_29, %c128_30] : memref<10x18x256xbf16, #tpu.memory_space<vmem>>, vector<1x16x128xbf16>
    %57 = vector.shape_cast %56 : vector<1x16x128xbf16> to vector<16x128xbf16>
    %58 = vector.shape_cast %55 : vector<16x128xbf16> to vector<1x16x128xbf16>
    tpu.vector_store %arg14[%c4, %c1_29, %c128_30], %58 {strides = array<i32>} : memref<10x18x256xbf16, #tpu.memory_space<vmem>>, vector<1x16x128xbf16>,
    %59 = vector.extract_strided_slice %22 {offsets = [5, 0, 0], sizes = [1, 8, 128], strides = [1, 1, 1]} : vector<10x8x128xf32> to vector<1x8x128xf32>
    %60 = vector.shape_cast %59 : vector<1x8x128xf32> to vector<8x128xf32>
    %cst_31 = arith.constant dense<0.000000e+00> : vector<16x128xf32>
    %61 = tpu.matmul %23, %60, %cst_31 {dimension_numbers = #tpu.dot_dimension_numbers<[1], [0], [0], [1], [0, 0, 1, 1], [], []>} : vector<16x8xf32>, vector<8x128xf32>, vector<16x128xf32> -> vector<16x128xf32>
    %62 = arith.truncf %61 : vector<16x128xf32> to vector<16x128xbf16>
    %c5 = arith.constant 5 : index
    %c1_32 = arith.constant 1 : index
    %c128_33 = arith.constant 128 : index
    %63 = vector.load %arg14[%c5, %c1_32, %c128_33] : memref<10x18x256xbf16, #tpu.memory_space<vmem>>, vector<1x16x128xbf16>
    %64 = vector.shape_cast %63 : vector<1x16x128xbf16> to vector<16x128xbf16>
    %65 = vector.shape_cast %62 : vector<16x128xbf16> to vector<1x16x128xbf16>
    tpu.vector_store %arg14[%c5, %c1_32, %c128_33], %65 {strides = array<i32>} : memref<10x18x256xbf16, #tpu.memory_space<vmem>>, vector<1x16x128xbf16>,
    %66 = vector.extract_strided_slice %22 {offsets = [6, 0, 0], sizes = [1, 8, 128], strides = [1, 1, 1]} : vector<10x8x128xf32> to vector<1x8x128xf32>
    %67 = vector.shape_cast %66 : vector<1x8x128xf32> to vector<8x128xf32>
    %cst_34 = arith.constant dense<0.000000e+00> : vector<16x128xf32>
    %68 = tpu.matmul %23, %67, %cst_34 {dimension_numbers = #tpu.dot_dimension_numbers<[1], [0], [0], [1], [0, 0, 1, 1], [], []>} : vector<16x8xf32>, vector<8x128xf32>, vector<16x128xf32> -> vector<16x128xf32>
    %69 = arith.truncf %68 : vector<16x128xf32> to vector<16x128xbf16>
    %c6 = arith.constant 6 : index
    %c1_35 = arith.constant 1 : index
    %c128_36 = arith.constant 128 : index
    %70 = vector.load %arg14[%c6, %c1_35, %c128_36] : memref<10x18x256xbf16, #tpu.memory_space<vmem>>, vector<1x16x128xbf16>
    %71 = vector.shape_cast %70 : vector<1x16x128xbf16> to vector<16x128xbf16>
    %72 = vector.shape_cast %69 : vector<16x128xbf16> to vector<1x16x128xbf16>
    tpu.vector_store %arg14[%c6, %c1_35, %c128_36], %72 {strides = array<i32>} : memref<10x18x256xbf16, #tpu.memory_space<vmem>>, vector<1x16x128xbf16>,
    %73 = vector.extract_strided_slice %22 {offsets = [7, 0, 0], sizes = [1, 8, 128], strides = [1, 1, 1]} : vector<10x8x128xf32> to vector<1x8x128xf32>
    %74 = vector.shape_cast %73 : vector<1x8x128xf32> to vector<8x128xf32>
    %cst_37 = arith.constant dense<0.000000e+00> : vector<16x128xf32>
    %75 = tpu.matmul %23, %74, %cst_37 {dimension_numbers = #tpu.dot_dimension_numbers<[1], [0], [0], [1], [0, 0, 1, 1], [], []>} : vector<16x8xf32>, vector<8x128xf32>, vector<16x128xf32> -> vector<16x128xf32>
    %76 = arith.truncf %75 : vector<16x128xf32> to vector<16x128xbf16>
    %c7 = arith.constant 7 : index
    %c1_38 = arith.constant 1 : index
    %c128_39 = arith.constant 128 : index
    %77 = vector.load %arg14[%c7, %c1_38, %c128_39] : memref<10x18x256xbf16, #tpu.memory_space<vmem>>, vector<1x16x128xbf16>
    %78 = vector.shape_cast %77 : vector<1x16x128xbf16> to vector<16x128xbf16>
    %79 = vector.shape_cast %76 : vector<16x128xbf16> to vector<1x16x128xbf16>
    tpu.vector_store %arg14[%c7, %c1_38, %c128_39], %79 {strides = array<i32>} : memref<10x18x256xbf16, #tpu.memory_space<vmem>>, vector<1x16x128xbf16>,
    %80 = vector.extract_strided_slice %22 {offsets = [8, 0, 0], sizes = [1, 8, 128], strides = [1, 1, 1]} : vector<10x8x128xf32> to vector<1x8x128xf32>
    %81 = vector.shape_cast %80 : vector<1x8x128xf32> to vector<8x128xf32>
    %cst_40 = arith.constant dense<0.000000e+00> : vector<16x128xf32>
    %82 = tpu.matmul %23, %81, %cst_40 {dimension_numbers = #tpu.dot_dimension_numbers<[1], [0], [0], [1], [0, 0, 1, 1], [], []>} : vector<16x8xf32>, vector<8x128xf32>, vector<16x128xf32> -> vector<16x128xf32>
    %83 = arith.truncf %82 : vector<16x128xf32> to vector<16x128xbf16>
    %c8 = arith.constant 8 : index
    %c1_41 = arith.constant 1 : index
    %c128_42 = arith.constant 128 : index
    %84 = vector.load %arg14[%c8, %c1_41, %c128_42] : memref<10x18x256xbf16, #tpu.memory_space<vmem>>, vector<1x16x128xbf16>
    %85 = vector.shape_cast %84 : vector<1x16x128xbf16> to vector<16x128xbf16>
    %86 = vector.shape_cast %83 : vector<16x128xbf16> to vector<1x16x128xbf16>
    tpu.vector_store %arg14[%c8, %c1_41, %c128_42], %86 {strides = array<i32>} : memref<10x18x256xbf16, #tpu.memory_space<vmem>>, vector<1x16x128xbf16>,
    %87 = vector.extract_strided_slice %22 {offsets = [9, 0, 0], sizes = [1, 8, 128], strides = [1, 1, 1]} : vector<10x8x128xf32> to vector<1x8x128xf32>
    %88 = vector.shape_cast %87 : vector<1x8x128xf32> to vector<8x128xf32>
    %cst_43 = arith.constant dense<0.000000e+00> : vector<16x128xf32>
    %89 = tpu.matmul %23, %88, %cst_43 {dimension_numbers = #tpu.dot_dimension_numbers<[1], [0], [0], [1], [0, 0, 1, 1], [], []>} : vector<16x8xf32>, vector<8x128xf32>, vector<16x128xf32> -> vector<16x128xf32>
    %90 = arith.truncf %89 : vector<16x128xf32> to vector<16x128xbf16>
    %c9 = arith.constant 9 : index
    %c1_44 = arith.constant 1 : index
    %c128_45 = arith.constant 128 : index
    %91 = vector.load %arg14[%c9, %c1_44, %c128_45] : memref<10x18x256xbf16, #tpu.memory_space<vmem>>, vector<1x16x128xbf16>
    %92 = vector.shape_cast %91 : vector<1x16x128xbf16> to vector<16x128xbf16>
    %93 = vector.shape_cast %90 : vector<16x128xbf16> to vector<1x16x128xbf16>
    tpu.vector_store %arg14[%c9, %c1_44, %c128_45], %93 {strides = array<i32>} : memref<10x18x256xbf16, #tpu.memory_space<vmem>>, vector<1x16x128xbf16>,
    %cst_46 = arith.constant 0.000000e+00 : bf16
    %94 = vector.broadcast %cst_46 : bf16 to vector<10x256xbf16>
    %c0_47 = arith.constant 0 : index
    %c0_48 = arith.constant 0 : index
    %c0_49 = arith.constant 0 : index
    %95 = vector.load %arg14[%c0_47, %c0_48, %c0_49] : memref<10x18x256xbf16, #tpu.memory_space<vmem>>, vector<10x1x256xbf16>
    %96 = vector.shape_cast %95 : vector<10x1x256xbf16> to vector<10x256xbf16>
    %97 = vector.shape_cast %94 : vector<10x256xbf16> to vector<10x1x256xbf16>
    tpu.vector_store %arg14[%c0_47, %c0_48, %c0_49], %97 {strides = array<i32>} : memref<10x18x256xbf16, #tpu.memory_space<vmem>>, vector<10x1x256xbf16>,
    %cst_50 = arith.constant 0.000000e+00 : bf16
    %98 = vector.broadcast %cst_50 : bf16 to vector<10x256xbf16>
    %c0_51 = arith.constant 0 : index
    %c17 = arith.constant 17 : index
    %c0_52 = arith.constant 0 : index
    %99 = vector.load %arg14[%c0_51, %c17, %c0_52] : memref<10x18x256xbf16, #tpu.memory_space<vmem>>, vector<10x1x256xbf16>
    %100 = vector.shape_cast %99 : vector<10x1x256xbf16> to vector<10x256xbf16>
    %101 = vector.shape_cast %98 : vector<10x256xbf16> to vector<10x1x256xbf16>
    tpu.vector_store %arg14[%c0_51, %c17, %c0_52], %101 {strides = array<i32>} : memref<10x18x256xbf16, #tpu.memory_space<vmem>>, vector<10x1x256xbf16>,
    %c0_i32 = arith.constant 0 : i32
    %102 = arith.cmpi eq, %arg1, %c0_i32 : i32
    %103 = arith.extui %102 : i1 to i32
    %c0_i32_53 = arith.constant 0 : i32
    %104 = arith.cmpi ne, %103, %c0_i32_53 : i32
    scf.if %104 {
      %cst_115 = arith.constant 0.000000e+00 : bf16
      %170 = vector.broadcast %cst_115 : bf16 to vector<18x256xbf16>
      %c0_116 = arith.constant 0 : index
      %c0_117 = arith.constant 0 : index
      %c0_118 = arith.constant 0 : index
      %171 = vector.load %arg14[%c0_116, %c0_117, %c0_118] : memref<10x18x256xbf16, #tpu.memory_space<vmem>>, vector<1x18x256xbf16>
      %172 = vector.shape_cast %171 : vector<1x18x256xbf16> to vector<18x256xbf16>
      %173 = vector.shape_cast %170 : vector<18x256xbf16> to vector<1x18x256xbf16>
      tpu.vector_store %arg14[%c0_116, %c0_117, %c0_118], %173 {strides = array<i32>} : memref<10x18x256xbf16, #tpu.memory_space<vmem>>, vector<1x18x256xbf16>,
    } else {
    }
    %c1_i32 = arith.constant 1 : i32
    %105 = arith.cmpi eq, %arg1, %c1_i32 : i32
    %106 = arith.extui %105 : i1 to i32
    %c0_i32_54 = arith.constant 0 : i32
    %107 = arith.cmpi ne, %106, %c0_i32_54 : i32
    scf.if %107 {
      %cst_115 = arith.constant 0.000000e+00 : bf16
      %170 = vector.broadcast %cst_115 : bf16 to vector<18x256xbf16>
      %c9_116 = arith.constant 9 : index
      %c0_117 = arith.constant 0 : index
      %c0_118 = arith.constant 0 : index
      %171 = vector.load %arg14[%c9_116, %c0_117, %c0_118] : memref<10x18x256xbf16, #tpu.memory_space<vmem>>, vector<1x18x256xbf16>
      %172 = vector.shape_cast %171 : vector<1x18x256xbf16> to vector<18x256xbf16>
      %173 = vector.shape_cast %170 : vector<18x256xbf16> to vector<1x18x256xbf16>
      tpu.vector_store %arg14[%c9_116, %c0_117, %c0_118], %173 {strides = array<i32>} : memref<10x18x256xbf16, #tpu.memory_space<vmem>>, vector<1x18x256xbf16>,
    } else {
    }
    %c0_55 = arith.constant 0 : index
    %c0_56 = arith.constant 0 : index
    %c0_57 = arith.constant 0 : index
    %108 = vector.load %arg14[%c0_55, %c0_56, %c0_57] : memref<10x18x256xbf16, #tpu.memory_space<vmem>>, vector<8x16x256xbf16>
    %109 = vector.shape_cast %108 : vector<8x16x256xbf16> to vector<128x256xbf16>
    %c0_58 = arith.constant 0 : index
    %c0_59 = arith.constant 0 : index
    %110 = vector.load %arg8[%c0_58, %c0_59] : memref<2304x256xbf16, #tpu.memory_space<vmem>>, vector<256x256xbf16>
    %cst_60 = arith.constant dense<0.000000e+00> : vector<128x256xf32>
    %111 = tpu.matmul %109, %110, %cst_60 {dimension_numbers = #tpu.dot_dimension_numbers<[1], [0], [0], [1], [0, 0, 1, 1], [], []>} : vector<128x256xbf16>, vector<256x256xbf16>, vector<128x256xf32> -> vector<128x256xf32>
    %c0_61 = arith.constant 0 : index
    %c1_62 = arith.constant 1 : index
    %c0_63 = arith.constant 0 : index
    %112 = vector.load %arg14[%c0_61, %c1_62, %c0_63] : memref<10x18x256xbf16, #tpu.memory_space<vmem>>, vector<8x16x256xbf16>
    %113 = vector.shape_cast %112 : vector<8x16x256xbf16> to vector<128x256xbf16>
    %c256 = arith.constant 256 : index
    %c0_64 = arith.constant 0 : index
    %114 = vector.load %arg8[%c256, %c0_64] : memref<2304x256xbf16, #tpu.memory_space<vmem>>, vector<256x256xbf16>
    %cst_65 = arith.constant dense<0.000000e+00> : vector<128x256xf32>
    %115 = tpu.matmul %113, %114, %cst_65 {dimension_numbers = #tpu.dot_dimension_numbers<[1], [0], [0], [1], [0, 0, 1, 1], [], []>} : vector<128x256xbf16>, vector<256x256xbf16>, vector<128x256xf32> -> vector<128x256xf32>
    %116 = arith.addf %111, %115 : vector<128x256xf32>
    %c0_66 = arith.constant 0 : index
    %c2_67 = arith.constant 2 : index
    %c0_68 = arith.constant 0 : index
    %117 = vector.load %arg14[%c0_66, %c2_67, %c0_68] : memref<10x18x256xbf16, #tpu.memory_space<vmem>>, vector<8x16x256xbf16>
    %118 = vector.shape_cast %117 : vector<8x16x256xbf16> to vector<128x256xbf16>
    %c512 = arith.constant 512 : index
    %c0_69 = arith.constant 0 : index
    %119 = vector.load %arg8[%c512, %c0_69] : memref<2304x256xbf16, #tpu.memory_space<vmem>>, vector<256x256xbf16>
    %cst_70 = arith.constant dense<0.000000e+00> : vector<128x256xf32>
    %120 = tpu.matmul %118, %119, %cst_70 {dimension_numbers = #tpu.dot_dimension_numbers<[1], [0], [0], [1], [0, 0, 1, 1], [], []>} : vector<128x256xbf16>, vector<256x256xbf16>, vector<128x256xf32> -> vector<128x256xf32>
    %121 = arith.addf %116, %120 : vector<128x256xf32>
    %c1_71 = arith.constant 1 : index
    %c0_72 = arith.constant 0 : index
    %c0_73 = arith.constant 0 : index
    %122 = vector.load %arg14[%c1_71, %c0_72, %c0_73] : memref<10x18x256xbf16, #tpu.memory_space<vmem>>, vector<8x16x256xbf16>
    %123 = vector.shape_cast %122 : vector<8x16x256xbf16> to vector<128x256xbf16>
    %c768 = arith.constant 768 : index
    %c0_74 = arith.constant 0 : index
    %124 = vector.load %arg8[%c768, %c0_74] : memref<2304x256xbf16, #tpu.memory_space<vmem>>, vector<256x256xbf16>
    %cst_75 = arith.constant dense<0.000000e+00> : vector<128x256xf32>
    %125 = tpu.matmul %123, %124, %cst_75 {dimension_numbers = #tpu.dot_dimension_numbers<[1], [0], [0], [1], [0, 0, 1, 1], [], []>} : vector<128x256xbf16>, vector<256x256xbf16>, vector<128x256xf32> -> vector<128x256xf32>
    %126 = arith.addf %121, %125 : vector<128x256xf32>
    %c1_76 = arith.constant 1 : index
    %c1_77 = arith.constant 1 : index
    %c0_78 = arith.constant 0 : index
    %127 = vector.load %arg14[%c1_76, %c1_77, %c0_78] : memref<10x18x256xbf16, #tpu.memory_space<vmem>>, vector<8x16x256xbf16>
    %128 = vector.shape_cast %127 : vector<8x16x256xbf16> to vector<128x256xbf16>
    %c1024 = arith.constant 1024 : index
    %c0_79 = arith.constant 0 : index
    %129 = vector.load %arg8[%c1024, %c0_79] : memref<2304x256xbf16, #tpu.memory_space<vmem>>, vector<256x256xbf16>
    %cst_80 = arith.constant dense<0.000000e+00> : vector<128x256xf32>
    %130 = tpu.matmul %128, %129, %cst_80 {dimension_numbers = #tpu.dot_dimension_numbers<[1], [0], [0], [1], [0, 0, 1, 1], [], []>} : vector<128x256xbf16>, vector<256x256xbf16>, vector<128x256xf32> -> vector<128x256xf32>
    %131 = arith.addf %126, %130 : vector<128x256xf32>
    %c1_81 = arith.constant 1 : index
    %c2_82 = arith.constant 2 : index
    %c0_83 = arith.constant 0 : index
    %132 = vector.load %arg14[%c1_81, %c2_82, %c0_83] : memref<10x18x256xbf16, #tpu.memory_space<vmem>>, vector<8x16x256xbf16>
    %133 = vector.shape_cast %132 : vector<8x16x256xbf16> to vector<128x256xbf16>
    %c1280 = arith.constant 1280 : index
    %c0_84 = arith.constant 0 : index
    %134 = vector.load %arg8[%c1280, %c0_84] : memref<2304x256xbf16, #tpu.memory_space<vmem>>, vector<256x256xbf16>
    %cst_85 = arith.constant dense<0.000000e+00> : vector<128x256xf32>
    %135 = tpu.matmul %133, %134, %cst_85 {dimension_numbers = #tpu.dot_dimension_numbers<[1], [0], [0], [1], [0, 0, 1, 1], [], []>} : vector<128x256xbf16>, vector<256x256xbf16>, vector<128x256xf32> -> vector<128x256xf32>
    %136 = arith.addf %131, %135 : vector<128x256xf32>
    %c2_86 = arith.constant 2 : index
    %c0_87 = arith.constant 0 : index
    %c0_88 = arith.constant 0 : index
    %137 = vector.load %arg14[%c2_86, %c0_87, %c0_88] : memref<10x18x256xbf16, #tpu.memory_space<vmem>>, vector<8x16x256xbf16>
    %138 = vector.shape_cast %137 : vector<8x16x256xbf16> to vector<128x256xbf16>
    %c1536 = arith.constant 1536 : index
    %c0_89 = arith.constant 0 : index
    %139 = vector.load %arg8[%c1536, %c0_89] : memref<2304x256xbf16, #tpu.memory_space<vmem>>, vector<256x256xbf16>
    %cst_90 = arith.constant dense<0.000000e+00> : vector<128x256xf32>
    %140 = tpu.matmul %138, %139, %cst_90 {dimension_numbers = #tpu.dot_dimension_numbers<[1], [0], [0], [1], [0, 0, 1, 1], [], []>} : vector<128x256xbf16>, vector<256x256xbf16>, vector<128x256xf32> -> vector<128x256xf32>
    %141 = arith.addf %136, %140 : vector<128x256xf32>
    %c2_91 = arith.constant 2 : index
    %c1_92 = arith.constant 1 : index
    %c0_93 = arith.constant 0 : index
    %142 = vector.load %arg14[%c2_91, %c1_92, %c0_93] : memref<10x18x256xbf16, #tpu.memory_space<vmem>>, vector<8x16x256xbf16>
    %143 = vector.shape_cast %142 : vector<8x16x256xbf16> to vector<128x256xbf16>
    %c1792 = arith.constant 1792 : index
    %c0_94 = arith.constant 0 : index
    %144 = vector.load %arg8[%c1792, %c0_94] : memref<2304x256xbf16, #tpu.memory_space<vmem>>, vector<256x256xbf16>
    %cst_95 = arith.constant dense<0.000000e+00> : vector<128x256xf32>
    %145 = tpu.matmul %143, %144, %cst_95 {dimension_numbers = #tpu.dot_dimension_numbers<[1], [0], [0], [1], [0, 0, 1, 1], [], []>} : vector<128x256xbf16>, vector<256x256xbf16>, vector<128x256xf32> -> vector<128x256xf32>
    %146 = arith.addf %141, %145 : vector<128x256xf32>
    %c2_96 = arith.constant 2 : index
    %c2_97 = arith.constant 2 : index
    %c0_98 = arith.constant 0 : index
    %147 = vector.load %arg14[%c2_96, %c2_97, %c0_98] : memref<10x18x256xbf16, #tpu.memory_space<vmem>>, vector<8x16x256xbf16>
    %148 = vector.shape_cast %147 : vector<8x16x256xbf16> to vector<128x256xbf16>
    %c2048 = arith.constant 2048 : index
    %c0_99 = arith.constant 0 : index
    %149 = vector.load %arg8[%c2048, %c0_99] : memref<2304x256xbf16, #tpu.memory_space<vmem>>, vector<256x256xbf16>
    %cst_100 = arith.constant dense<0.000000e+00> : vector<128x256xf32>
    %150 = tpu.matmul %148, %149, %cst_100 {dimension_numbers = #tpu.dot_dimension_numbers<[1], [0], [0], [1], [0, 0, 1, 1], [], []>} : vector<128x256xbf16>, vector<256x256xbf16>, vector<128x256xf32> -> vector<128x256xf32>
    %151 = arith.addf %146, %150 : vector<128x256xf32>
    %c0_101 = arith.constant 0 : index
    %c0_102 = arith.constant 0 : index
    %152 = vector.load %arg9[%c0_101, %c0_102] : memref<1x256xf32, #tpu.memory_space<vmem>>, vector<1x256xf32>
    %153 = vector.broadcast %152 : vector<1x256xf32> to vector<128x256xf32>
    %154 = arith.addf %151, %153 : vector<128x256xf32>
    %cst_103 = arith.constant 0.000000e+00 : f32
    %155 = vector.broadcast %cst_103 : f32 to vector<128x256xf32>
    %156 = arith.maximumf %154, %155 : vector<128x256xf32>
    %c0_104 = arith.constant 0 : index
    %c0_105 = arith.constant 0 : index
    %c0_106 = arith.constant 0 : index
    %157 = vector.load %arg13[%c0_104, %c0_105, %c0_106] : memref<1x128x256xf32, #tpu.memory_space<vmem>>, vector<1x128x256xf32>
    %158 = vector.shape_cast %157 : vector<1x128x256xf32> to vector<128x256xf32>
    %159 = vector.shape_cast %156 : vector<128x256xf32> to vector<1x128x256xf32>
    tpu.vector_store %arg13[%c0_104, %c0_105, %c0_106], %159 {strides = array<i32>} : memref<1x128x256xf32, #tpu.memory_space<vmem>>, vector<1x128x256xf32>,
    %160 = arith.truncf %156 : vector<128x256xf32> to vector<128x256xbf16>
    %c0_107 = arith.constant 0 : index
    %c0_108 = arith.constant 0 : index
    %161 = vector.load %arg10[%c0_107, %c0_108] : memref<256x128xbf16, #tpu.memory_space<vmem>>, vector<256x128xbf16>
    %cst_109 = arith.constant dense<0.000000e+00> : vector<128x128xf32>
    %162 = tpu.matmul %160, %161, %cst_109 {dimension_numbers = #tpu.dot_dimension_numbers<[1], [0], [0], [1], [0, 0, 1, 1], [], []>} : vector<128x256xbf16>, vector<256x128xbf16>, vector<128x128xf32> -> vector<128x128xf32>
    %c0_110 = arith.constant 0 : index
    %c0_111 = arith.constant 0 : index
    %163 = vector.load %arg11[%c0_110, %c0_111] : memref<1x128xf32, #tpu.memory_space<vmem>>, vector<1x128xf32>
    %164 = vector.broadcast %163 : vector<1x128xf32> to vector<128x128xf32>
    %165 = arith.addf %162, %164 : vector<128x128xf32>
    %166 = vector.extract_strided_slice %165 {offsets = [0, 0], sizes = [128, 8], strides = [1, 1]} : vector<128x128xf32> to vector<128x8xf32>
    %c0_112 = arith.constant 0 : index
    %c0_113 = arith.constant 0 : index
    %c0_114 = arith.constant 0 : index
    %167 = vector.load %arg12[%c0_112, %c0_113, %c0_114] : memref<1x128x8xf32, #tpu.memory_space<vmem>>, vector<1x128x8xf32>
    %168 = vector.shape_cast %167 : vector<1x128x8xf32> to vector<128x8xf32>
    %169 = vector.shape_cast %166 : vector<128x8xf32> to vector<1x128x8xf32>
    tpu.vector_store %arg12[%c0_112, %c0_113, %c0_114], %169 {strides = array<i32>} : memref<1x128x8xf32, #tpu.memory_space<vmem>>, vector<1x128x8xf32>,
    return
  }
  func.func @transform_0(%arg0: i32, %arg1: i32) -> (i32, i32, i32) {
    %c0_i32 = arith.constant 0 : i32
    %c0_i32_0 = arith.constant 0 : i32
    %c0_i32_1 = arith.constant 0 : i32
    return %arg0, %c0_i32, %c0_i32_0 : i32, i32, i32
  }
  func.func @transform_1(%arg0: i32, %arg1: i32) -> (i32, i32, i32) {
    %c0_i32 = arith.constant 0 : i32
    %c0_i32_0 = arith.constant 0 : i32
    %c0_i32_1 = arith.constant 0 : i32
    return %arg0, %c0_i32, %c0_i32_0 : i32, i32, i32
  }
  func.func @transform_2(%arg0: i32, %arg1: i32) -> (i32, i32) {
    %c0_i32 = arith.constant 0 : i32
    %c0_i32_0 = arith.constant 0 : i32
    %c0_i32_1 = arith.constant 0 : i32
    return %c0_i32, %c0_i32_0 : i32, i32
  }
  func.func @transform_3(%arg0: i32, %arg1: i32) -> (i32, i32) {
    %c0_i32 = arith.constant 0 : i32
    %c0_i32_0 = arith.constant 0 : i32
    %c0_i32_1 = arith.constant 0 : i32
    return %c0_i32, %c0_i32_0 : i32, i32
  }
  func.func @transform_4(%arg0: i32, %arg1: i32) -> (i32, i32) {
    %c0_i32 = arith.constant 0 : i32
    %c0_i32_0 = arith.constant 0 : i32
    %c0_i32_1 = arith.constant 0 : i32
    return %c0_i32, %c0_i32_0 : i32, i32
  }
  func.func @transform_5(%arg0: i32, %arg1: i32) -> (i32, i32) {
    %c0_i32 = arith.constant 0 : i32
    %c0_i32_0 = arith.constant 0 : i32
    %c0_i32_1 = arith.constant 0 : i32
    return %c0_i32, %c0_i32_0 : i32, i32
  }
  func.func @transform_6(%arg0: i32, %arg1: i32) -> (i32, i32) {
    %c0_i32 = arith.constant 0 : i32
    %c0_i32_0 = arith.constant 0 : i32
    %c0_i32_1 = arith.constant 0 : i32
    return %c0_i32, %c0_i32_0 : i32, i32
  }
  func.func @transform_7(%arg0: i32, %arg1: i32) -> (i32, i32) {
    %c0_i32 = arith.constant 0 : i32
    %c0_i32_0 = arith.constant 0 : i32
    %c0_i32_1 = arith.constant 0 : i32
    return %c0_i32, %c0_i32_0 : i32, i32
  }
  func.func @transform_8(%arg0: i32, %arg1: i32) -> (i32, i32) {
    %c0_i32 = arith.constant 0 : i32
    %c0_i32_0 = arith.constant 0 : i32
    %c0_i32_1 = arith.constant 0 : i32
    return %c0_i32, %c0_i32_0 : i32, i32
  }
  func.func @transform_9(%arg0: i32, %arg1: i32) -> (i32, i32) {
    %c0_i32 = arith.constant 0 : i32
    %c0_i32_0 = arith.constant 0 : i32
    %c0_i32_1 = arith.constant 0 : i32
    return %c0_i32, %c0_i32_0 : i32, i32
  }
  func.func @transform_10(%arg0: i32, %arg1: i32) -> (i32, i32, i32) {
    %c0_i32 = arith.constant 0 : i32
    %c0_i32_0 = arith.constant 0 : i32
    return %arg0, %arg1, %c0_i32 : i32, i32, i32
  }
  func.func @transform_11(%arg0: i32, %arg1: i32) -> (i32, i32, i32) {
    %c0_i32 = arith.constant 0 : i32
    %c0_i32_0 = arith.constant 0 : i32
    return %arg0, %arg1, %c0_i32 : i32, i32, i32
  }
}

</mosaic_0001>

<llo_original>
// kernel: decoder_deeplabv3p_forward.1
$region0: #{decoder_deeplabv3p_forward.1}
  #allocation0 [shape = 'u32[]', space=smem, size = 0x4, offset = 0x4, fixed_abs, tag = 'smem constant byte address 0x4 - core index']
  #allocation1 [shape = 'u32[144,128]{1,0:T(1,128)}', space=vmem, size = 0x12000, scoped, tag = 'internal scratch']
  #allocation2 [shape = 'bf16[10,18,256]{2,1,0:T(8,128)(2,1)}', space=vmem, size = 0x1e000, scoped, tag = 'scratch operand']
  %s0 = inlined_call_operand.vmem [shape: bf16[2,288,8], index: 0, kind: input, shape index: {}]
  %s1 = inlined_call_operand.vmem [shape: f32[2,8,1024], index: 1, kind: input, shape index: {}]
  %s2 = inlined_call_operand.vmem [shape: f32[18,8], index: 2, kind: input, shape index: {}]
  %s3 = inlined_call_operand.vmem [shape: f32[16,8], index: 3, kind: input, shape index: {}]
  %s4 = inlined_call_operand.vmem [shape: bf16[8,128], index: 4, kind: input, shape index: {}]
  %s5 = inlined_call_operand.vmem [shape: f32[1,128], index: 5, kind: input, shape index: {}]
  %s6 = inlined_call_operand.vmem [shape: bf16[2304,256], index: 6, kind: input, shape index: {}]
  %s7 = inlined_call_operand.vmem [shape: f32[1,256], index: 7, kind: input, shape index: {}]
  %s8 = inlined_call_operand.vmem [shape: bf16[256,128], index: 8, kind: input, shape index: {}]
  %s9 = inlined_call_operand.vmem [shape: f32[1,128], index: 9, kind: input, shape index: {}]
  %s10 = inlined_call_operand.vmem [shape: f32[2,256,8], index: 10, kind: output, shape index: {0}]
  %s11 = inlined_call_operand.hbm [shape: f32[2,256,256], index: 11, kind: output, shape index: {1}]
  %12 = xla_tuple %s10, %s11
  %s13 = sld [smem:[#allocation0]]
  $region89: #{decoder_deeplabv3p_forward.1} parent=0
    _
  %s15 = ssub.s32 1, %s13
  %s16 = scalar_select 0, %s15, %s13
  $region1: #{decoder_deeplabv3p_forward.1} parent=0
    #allocation3 [shape = 'u8[262144]{0}', space=vmem, size = 0x40000, scoped, tag = 'output window, operand 1']
    #allocation4 [shape = 's32[2]{0}', space=sflag, size = 0x8, scoped, tag = 'scoped memory for decoder_deeplabv3p_forward.1']
    %17 = vsyncpa [#allocation4], 0
    %s18 = scalar_lea.sflag [#allocation4], 1
    %19 = vsyncpa %s18, 0
    loop: start=0, step=1, limit=6
    $region2: #{decoder_deeplabv3p_forward.1} parent=1 // loop_pre_header
      _
    $region3: #{decoder_deeplabv3p_forward.1} parent=1 // loop_header
      %s21 = sphi 0, %s25
      %p22 = scmp.ge.s32.totalorder %s21, 6
      %s28 = sphi 0, %s40
      %s29 = sphi 0, %s36
      %s30 = sphi 0, %s28
      %s31 = sphi 0, %s29
      %s32 = sphi 0, %s30
      %s33 = sphi 0, %s31
      %s43 = sphi 0, %s45
      %s46 = sphi 0, %s43
      %s47 = sphi 0, %s46
      %s63 = sphi 0, %s47
      %s69 = sphi 0, %s71
      %s72 = sphi 0, %s69
      %s73 = sphi 0, %s72
      %s89 = sphi 0, %s73
      %s93 = sphi 0, %s93
      %s95 = sphi 0, %s93
      %s96 = sphi 0, %s95
      %s110 = sphi 0, %s96
      %s114 = sphi 0, %s114
      %s116 = sphi 0, %s114
      %s117 = sphi 0, %s116
      %s131 = sphi 0, %s117
      %s135 = sphi 0, %s135
      %s137 = sphi 0, %s135
      %s138 = sphi 0, %s137
      %s152 = sphi 0, %s138
      %s156 = sphi 0, %s156
      %s158 = sphi 0, %s156
      %s159 = sphi 0, %s158
      %s173 = sphi 0, %s159
      %s177 = sphi 0, %s177
      %s179 = sphi 0, %s177
      %s180 = sphi 0, %s179
      %s194 = sphi 0, %s180
      %s198 = sphi 0, %s198
      %s200 = sphi 0, %s198
      %s201 = sphi 0, %s200
      %s215 = sphi 0, %s201
      %s219 = sphi 0, %s219
      %s221 = sphi 0, %s219
      %s222 = sphi 0, %s221
      %s236 = sphi 0, %s222
      %s240 = sphi 0, %s240
      %s242 = sphi 0, %s240
      %s243 = sphi 0, %s242
      %s257 = sphi 0, %s243
      %s265 = sphi 0, %s267
      %s268 = sphi 0, %s265
      %s269 = sphi 0, %s268
      %s285 = sphi 0, %s269
      %s293 = sphi 0, %s295
      %s296 = sphi 0, %s293
      %s297 = sphi 0, %s296
      %s313 = sphi 0, %s297
    $region4: #{decoder_deeplabv3p_forward.1} parent=1 // loop_header_branch
      %24 = sbr.rel (%p22) target = $region8
    $region5: #{decoder_deeplabv3p_forward.1} parent=1 // loop_body
      %s26 = ssub.s32 %s21, 1
      %s27 = ssub.s32 %s21, 2
      %s34 = sadd.s32 1, %s29
      %p35 = scmp.ge.s32.totalorder %s34, 2
      %s36 = scalar_select %p35, 0, %s34
      %s37 = sadd.s32 1, %s28
      %s38 = scalar_select %p35, %s37, %s28
      %p39 = scmp.ge.s32.totalorder %s38, 2
      %s40 = scalar_select %p39, 0, %s38
      %s41 = ssub.s32 %s28, %s40
      %p42 = scmp.eq.s32.totalorder %s41, 0
      %s44 = sadd.s32 %s43, 1
      %s45 = scalar_select %p42, %s43, %s44
      %p48 = pneg %p42
      %p49 = scmp.eq.s32.totalorder %s21, 3
      %p50 = por %p48, %p49
      %p51 = scmp.ne.s32.totalorder %s43, %s46
      %p52 = scmp.eq.s32.totalorder %s21, 0
      %p53 = por %p51, %p52
      %p54 = scmp.ne.s32.totalorder %s43, %s46
      %p55 = scmp.eq.s32.totalorder %s26, 3
      %p56 = por %p54, %p55
      %p57 = scmp.ne.s32.totalorder %s46, %s47
      %p58 = scmp.eq.s32.totalorder %s26, 0
      %p59 = por %p57, %p58
      %p60 = scmp.ne.s32.totalorder %s46, %s47
      %p61 = scmp.eq.s32.totalorder %s27, 3
      %p62 = por %p60, %p61
      %p64 = scmp.ne.s32.totalorder %s47, %s63
      %p65 = scmp.eq.s32.totalorder %s27, 0
      %p66 = por %p64, %p65
      %s67 = ssub.s32 %s28, %s40
      %p68 = scmp.eq.s32.totalorder %s67, 0
      %s70 = sadd.s32 %s69, 1
      %s71 = scalar_select %p68, %s69, %s70
      %p74 = pneg %p68
      %p75 = scmp.eq.s32.totalorder %s21, 3
      %p76 = por %p74, %p75
      %p77 = scmp.ne.s32.totalorder %s69, %s72
      %p78 = scmp.eq.s32.totalorder %s21, 0
      %p79 = por %p77, %p78
      %p80 = scmp.ne.s32.totalorder %s69, %s72
      %p81 = scmp.eq.s32.totalorder %s26, 3
      %p82 = por %p80, %p81
      %p83 = scmp.ne.s32.totalorder %s72, %s73
      %p84 = scmp.eq.s32.totalorder %s26, 0
      %p85 = por %p83, %p84
      %p86 = scmp.ne.s32.totalorder %s72, %s73
      %p87 = scmp.eq.s32.totalorder %s27, 3
      %p88 = por %p86, %p87
      %p90 = scmp.ne.s32.totalorder %s73, %s89
      %p91 = scmp.eq.s32.totalorder %s27, 0
      %p92 = por %p90, %p91
      %s94 = sadd.s32 %s93, 1
      %p97 = scmp.eq.s32.totalorder %s21, 3
      %p98 = scmp.ne.s32.totalorder %s93, %s95
      %p99 = scmp.eq.s32.totalorder %s21, 0
      %p100 = por %p98, %p99
      %p101 = scmp.ne.s32.totalorder %s93, %s95
      %p102 = scmp.eq.s32.totalorder %s26, 3
      %p103 = por %p101, %p102
      %p104 = scmp.ne.s32.totalorder %s95, %s96
      %p105 = scmp.eq.s32.totalorder %s26, 0
      %p106 = por %p104, %p105
      %p107 = scmp.ne.s32.totalorder %s95, %s96
      %p108 = scmp.eq.s32.totalorder %s27, 3
      %p109 = por %p107, %p108
      %p111 = scmp.ne.s32.totalorder %s96, %s110
      %p112 = scmp.eq.s32.totalorder %s27, 0
      %p113 = por %p111, %p112
      %s115 = sadd.s32 %s114, 1
      %p118 = scmp.eq.s32.totalorder %s21, 3
      %p119 = scmp.ne.s32.totalorder %s114, %s116
      %p120 = scmp.eq.s32.totalorder %s21, 0
      %p121 = por %p119, %p120
      %p122 = scmp.ne.s32.totalorder %s114, %s116
      %p123 = scmp.eq.s32.totalorder %s26, 3
      %p124 = por %p122, %p123
      %p125 = scmp.ne.s32.totalorder %s116, %s117
      %p126 = scmp.eq.s32.totalorder %s26, 0
      %p127 = por %p125, %p126
      %p128 = scmp.ne.s32.totalorder %s116, %s117
      %p129 = scmp.eq.s32.totalorder %s27, 3
      %p130 = por %p128, %p129
      %p132 = scmp.ne.s32.totalorder %s117, %s131
      %p133 = scmp.eq.s32.totalorder %s27, 0
      %p134 = por %p132, %p133
      %s136 = sadd.s32 %s135, 1
      %p139 = scmp.eq.s32.totalorder %s21, 3
      %p140 = scmp.ne.s32.totalorder %s135, %s137
      %p141 = scmp.eq.s32.totalorder %s21, 0
      %p142 = por %p140, %p141
      %p143 = scmp.ne.s32.totalorder %s135, %s137
      %p144 = scmp.eq.s32.totalorder %s26, 3
      %p145 = por %p143, %p144
      %p146 = scmp.ne.s32.totalorder %s137, %s138
      %p147 = scmp.eq.s32.totalorder %s26, 0
      %p148 = por %p146, %p147
      %p149 = scmp.ne.s32.totalorder %s137, %s138
      %p150 = scmp.eq.s32.totalorder %s27, 3
      %p151 = por %p149, %p150
      %p153 = scmp.ne.s32.totalorder %s138, %s152
      %p154 = scmp.eq.s32.totalorder %s27, 0
      %p155 = por %p153, %p154
      %s157 = sadd.s32 %s156, 1
      %p160 = scmp.eq.s32.totalorder %s21, 3
      %p161 = scmp.ne.s32.totalorder %s156, %s158
      %p162 = scmp.eq.s32.totalorder %s21, 0
      %p163 = por %p161, %p162
      %p164 = scmp.ne.s32.totalorder %s156, %s158
      %p165 = scmp.eq.s32.totalorder %s26, 3
      %p166 = por %p164, %p165
      %p167 = scmp.ne.s32.totalorder %s158, %s159
      %p168 = scmp.eq.s32.totalorder %s26, 0
      %p169 = por %p167, %p168
      %p170 = scmp.ne.s32.totalorder %s158, %s159
      %p171 = scmp.eq.s32.totalorder %s27, 3
      %p172 = por %p170, %p171
      %p174 = scmp.ne.s32.totalorder %s159, %s173
      %p175 = scmp.eq.s32.totalorder %s27, 0
      %p176 = por %p174, %p175
      %s178 = sadd.s32 %s177, 1
      %p181 = scmp.eq.s32.totalorder %s21, 3
      %p182 = scmp.ne.s32.totalorder %s177, %s179
      %p183 = scmp.eq.s32.totalorder %s21, 0
      %p184 = por %p182, %p183
      %p185 = scmp.ne.s32.totalorder %s177, %s179
      %p186 = scmp.eq.s32.totalorder %s26, 3
      %p187 = por %p185, %p186
      %p188 = scmp.ne.s32.totalorder %s179, %s180
      %p189 = scmp.eq.s32.totalorder %s26, 0
      %p190 = por %p188, %p189
      %p191 = scmp.ne.s32.totalorder %s179, %s180
      %p192 = scmp.eq.s32.totalorder %s27, 3
      %p193 = por %p191, %p192
      %p195 = scmp.ne.s32.totalorder %s180, %s194
      %p196 = scmp.eq.s32.totalorder %s27, 0
      %p197 = por %p195, %p196
      %s199 = sadd.s32 %s198, 1
      %p202 = scmp.eq.s32.totalorder %s21, 3
      %p203 = scmp.ne.s32.totalorder %s198, %s200
      %p204 = scmp.eq.s32.totalorder %s21, 0
      %p205 = por %p203, %p204
      %p206 = scmp.ne.s32.totalorder %s198, %s200
      %p207 = scmp.eq.s32.totalorder %s26, 3
      %p208 = por %p206, %p207
      %p209 = scmp.ne.s32.totalorder %s200, %s201
      %p210 = scmp.eq.s32.totalorder %s26, 0
      %p211 = por %p209, %p210
      %p212 = scmp.ne.s32.totalorder %s200, %s201
      %p213 = scmp.eq.s32.totalorder %s27, 3
      %p214 = por %p212, %p213
      %p216 = scmp.ne.s32.totalorder %s201, %s215
      %p217 = scmp.eq.s32.totalorder %s27, 0
      %p218 = por %p216, %p217
      %s220 = sadd.s32 %s219, 1
      %p223 = scmp.eq.s32.totalorder %s21, 3
      %p224 = scmp.ne.s32.totalorder %s219, %s221
      %p225 = scmp.eq.s32.totalorder %s21, 0
      %p226 = por %p224, %p225
      %p227 = scmp.ne.s32.totalorder %s219, %s221
      %p228 = scmp.eq.s32.totalorder %s26, 3
      %p229 = por %p227, %p228
      %p230 = scmp.ne.s32.totalorder %s221, %s222
      %p231 = scmp.eq.s32.totalorder %s26, 0
      %p232 = por %p230, %p231
      %p233 = scmp.ne.s32.totalorder %s221, %s222
      %p234 = scmp.eq.s32.totalorder %s27, 3
      %p235 = por %p233, %p234
      %p237 = scmp.ne.s32.totalorder %s222, %s236
      %p238 = scmp.eq.s32.totalorder %s27, 0
      %p239 = por %p237, %p238
      %s241 = sadd.s32 %s240, 1
      %p244 = scmp.eq.s32.totalorder %s21, 3
      %p245 = scmp.ne.s32.totalorder %s240, %s242
      %p246 = scmp.eq.s32.totalorder %s21, 0
      %p247 = por %p245, %p246
      %p248 = scmp.ne.s32.totalorder %s240, %s242
      %p249 = scmp.eq.s32.totalorder %s26, 3
      %p250 = por %p248, %p249
      %p251 = scmp.ne.s32.totalorder %s242, %s243
      %p252 = scmp.eq.s32.totalorder %s26, 0
      %p253 = por %p251, %p252
      %p254 = scmp.ne.s32.totalorder %s242, %s243
      %p255 = scmp.eq.s32.totalorder %s27, 3
      %p256 = por %p254, %p255
      %p258 = scmp.ne.s32.totalorder %s243, %s257
      %p259 = scmp.eq.s32.totalorder %s27, 0
      %p260 = por %p258, %p259
      %s261 = ssub.s32 %s28, %s40
      %s262 = ssub.s32 %s29, %s36
      %s263 = sor.u32 %s261, %s262
      %p264 = scmp.eq.s32.totalorder %s263, 0
      %s266 = sadd.s32 %s265, 1
      %s267 = scalar_select %p264, %s265, %s266
      %p270 = pneg %p264
      %p271 = scmp.eq.s32.totalorder %s21, 3
      %p272 = por %p270, %p271
      %p273 = scmp.ne.s32.totalorder %s265, %s268
      %p274 = scmp.eq.s32.totalorder %s21, 0
      %p275 = por %p273, %p274
      %p276 = scmp.ne.s32.totalorder %s265, %s268
      %p277 = scmp.eq.s32.totalorder %s26, 3
      %p278 = por %p276, %p277
      %p279 = scmp.ne.s32.totalorder %s268, %s269
      %p280 = scmp.eq.s32.totalorder %s26, 0
      %p281 = por %p279, %p280
      %p282 = scmp.ne.s32.totalorder %s268, %s269
      %p283 = scmp.eq.s32.totalorder %s27, 3
      %p284 = por %p282, %p283
      %p286 = scmp.ne.s32.totalorder %s269, %s285
      %p287 = scmp.eq.s32.totalorder %s27, 0
      %p288 = por %p286, %p287
      %s289 = ssub.s32 %s28, %s40
      %s290 = ssub.s32 %s29, %s36
      %s291 = sor.u32 %s289, %s290
      %p292 = scmp.eq.s32.totalorder %s291, 0
      %s294 = sadd.s32 %s293, 1
      %s295 = scalar_select %p292, %s293, %s294
      %p298 = pneg %p292
      %p299 = scmp.eq.s32.totalorder %s21, 3
      %p300 = por %p298, %p299
      %p301 = scmp.ne.s32.totalorder %s293, %s296
      %p302 = scmp.eq.s32.totalorder %s21, 0
      %p303 = por %p301, %p302
      %p304 = scmp.ne.s32.totalorder %s293, %s296
      %p305 = scmp.eq.s32.totalorder %s26, 3
      %p306 = por %p304, %p305
      %p307 = scmp.ne.s32.totalorder %s296, %s297
      %p308 = scmp.eq.s32.totalorder %s26, 0
      %p309 = por %p307, %p308
      %p310 = scmp.ne.s32.totalorder %s296, %s297
      %p311 = scmp.eq.s32.totalorder %s27, 3
      %p312 = por %p310, %p311
      %p314 = scmp.ne.s32.totalorder %s297, %s313
      %p315 = scmp.eq.s32.totalorder %s27, 0
      %p316 = por %p314, %p315
      %p317 = scmp.le.s32.totalorder 1, %s21
      %p318 = scmp.lt.s32.totalorder %s21, 5
      %p319 = pnand %p317, %p318
      %p320 = pneg %p319
      // Predicated region
      $region9: #{decoder_deeplabv3p_forward.1} parent=5 // pred_check
        _
      $region10: #{decoder_deeplabv3p_forward.1} parent=5 // pred_check_branch
        %322 = sbr.rel (%p319) target = $region12
      $region11: #{decoder_deeplabv3p_forward.1} parent=5 // pred_region
        %s323 = ssub.s32 %s21, 1
        // Predicated region
        $region13: #{decoder_deeplabv3p_forward.1} parent=11 // pred_check
          %p324 = pneg %p106
        $region14: #{decoder_deeplabv3p_forward.1} parent=11 // pred_check_branch
          %326 = sbr.rel (%p324) target = $region16
        $region15: #{decoder_deeplabv3p_forward.1} parent=11 // pred_region
          _
        $region16: #{decoder_deeplabv3p_forward.1} parent=11 // pred_fallthru
          _
        // Predicated region
        $region17: #{decoder_deeplabv3p_forward.1} parent=11 // pred_check
          %p327 = pneg %p127
        $region18: #{decoder_deeplabv3p_forward.1} parent=11 // pred_check_branch
          %329 = sbr.rel (%p327) target = $region20
        $region19: #{decoder_deeplabv3p_forward.1} parent=11 // pred_region
          _
        $region20: #{decoder_deeplabv3p_forward.1} parent=11 // pred_fallthru
          _
        // Predicated region
        $region21: #{decoder_deeplabv3p_forward.1} parent=11 // pred_check
          %p330 = pneg %p148
        $region22: #{decoder_deeplabv3p_forward.1} parent=11 // pred_check_branch
          %332 = sbr.rel (%p330) target = $region24
        $region23: #{decoder_deeplabv3p_forward.1} parent=11 // pred_region
          _
        $region24: #{decoder_deeplabv3p_forward.1} parent=11 // pred_fallthru
          _
        // Predicated region
        $region25: #{decoder_deeplabv3p_forward.1} parent=11 // pred_check
          %p333 = pneg %p169
        $region26: #{decoder_deeplabv3p_forward.1} parent=11 // pred_check_branch
          %335 = sbr.rel (%p333) target = $region28
        $region27: #{decoder_deeplabv3p_forward.1} parent=11 // pred_region
          _
        $region28: #{decoder_deeplabv3p_forward.1} parent=11 // pred_fallthru
          _
        // Predicated region
        $region29: #{decoder_deeplabv3p_forward.1} parent=11 // pred_check
          %p336 = pneg %p190
        $region30: #{decoder_deeplabv3p_forward.1} parent=11 // pred_check_branch
          %338 = sbr.rel (%p336) target = $region32
        $region31: #{decoder_deeplabv3p_forward.1} parent=11 // pred_region
          _
        $region32: #{decoder_deeplabv3p_forward.1} parent=11 // pred_fallthru
          _
        // Predicated region
        $region33: #{decoder_deeplabv3p_forward.1} parent=11 // pred_check
          %p339 = pneg %p211
        $region34: #{decoder_deeplabv3p_forward.1} parent=11 // pred_check_branch
          %341 = sbr.rel (%p339) target = $region36
        $region35: #{decoder_deeplabv3p_forward.1} parent=11 // pred_region
          _
        $region36: #{decoder_deeplabv3p_forward.1} parent=11 // pred_fallthru
          _
        // Predicated region
        $region37: #{decoder_deeplabv3p_forward.1} parent=11 // pred_check
          %p342 = pneg %p232
        $region38: #{decoder_deeplabv3p_forward.1} parent=11 // pred_check_branch
          %344 = sbr.rel (%p342) target = $region40
        $region39: #{decoder_deeplabv3p_forward.1} parent=11 // pred_region
          _
        $region40: #{decoder_deeplabv3p_forward.1} parent=11 // pred_fallthru
          _
        // Predicated region
        $region41: #{decoder_deeplabv3p_forward.1} parent=11 // pred_check
          %p345 = pneg %p253
        $region42: #{decoder_deeplabv3p_forward.1} parent=11 // pred_check_branch
          %347 = sbr.rel (%p345) target = $region44
        $region43: #{decoder_deeplabv3p_forward.1} parent=11 // pred_region
          _
        $region44: #{decoder_deeplabv3p_forward.1} parent=11 // pred_fallthru
          _
      $region12: #{decoder_deeplabv3p_forward.1} parent=5 // pred_fallthru
        _
      %p348 = scmp.lt.s32.totalorder %s21, 4
      // Predicated region
      $region45: #{decoder_deeplabv3p_forward.1} parent=5 // pred_check
        %p349 = pneg %p348
      $region46: #{decoder_deeplabv3p_forward.1} parent=5 // pred_check_branch
        %351 = sbr.rel (%p349) target = $region48
      $region47: #{decoder_deeplabv3p_forward.1} parent=5 // pred_region
        // Predicated region
        $region49: #{decoder_deeplabv3p_forward.1} parent=47 // pred_check
          %p352 = pneg %p53
        $region50: #{decoder_deeplabv3p_forward.1} parent=47 // pred_check_branch
          %354 = sbr.rel (%p352) target = $region52
        $region51: #{decoder_deeplabv3p_forward.1} parent=47 // pred_region
          %p355 = scmp.lt.s32.totalorder %s28, 1
          %s356 = scalar_select %p355, %s28, 1
          %s357 = smul.addr %s356, 36
          %s358 = smul.addr %s357, 4
          %s359 = scalar_lea.vmem %s0, %s358
        $region52: #{decoder_deeplabv3p_forward.1} parent=47 // pred_fallthru
          _
        // Predicated region
        $region53: #{decoder_deeplabv3p_forward.1} parent=47 // pred_check
          %p360 = pneg %p79
        $region54: #{decoder_deeplabv3p_forward.1} parent=47 // pred_check_branch
          %362 = sbr.rel (%p360) target = $region56
        $region55: #{decoder_deeplabv3p_forward.1} parent=47 // pred_region
          %p363 = scmp.lt.s32.totalorder %s28, 1
          %s364 = scalar_select %p363, %s28, 1
          %s365 = smul.addr %s364, 8
          %s366 = smul.addr %s365, 8
          %s367 = scalar_lea.vmem %s1, %s366
        $region56: #{decoder_deeplabv3p_forward.1} parent=47 // pred_fallthru
          _
      $region48: #{decoder_deeplabv3p_forward.1} parent=5 // pred_fallthru
        _
      %p368 = scmp.le.s32.totalorder 1, %s21
      %p369 = scmp.lt.s32.totalorder %s21, 5
      %p370 = pnand %p368, %p369
      %p371 = pneg %p370
      // Predicated region
      $region57: #{decoder_deeplabv3p_forward.1} parent=5 // pred_check
        _
      $region58: #{decoder_deeplabv3p_forward.1} parent=5 // pred_check_branch
        %373 = sbr.rel (%p370) target = $region60
      $region59: #{decoder_deeplabv3p_forward.1} parent=5 // pred_region
        %s374 = ssub.s32 %s21, 1
        %p375 = scmp.lt.s32.totalorder %s30, 1
        %s376 = scalar_select %p375, %s30, 1
        %s377 = smul.addr %s376, 36
        %s378 = smul.addr %s377, 4
        %s379 = scalar_lea.vmem %s0, %s378
        %p380 = pneg %p59
        %p381 = pneg %p56
        %p382 = scmp.lt.s32.totalorder %s30, 1
        %s383 = scalar_select %p382, %s30, 1
        %s384 = smul.addr %s383, 8
        %s385 = smul.addr %s384, 8
        %s386 = scalar_lea.vmem %s1, %s385
        %p387 = pneg %p85
        %p388 = pneg %p82
        %p389 = pneg %p106
        %p390 = pneg %p103
        %p391 = pneg %p127
        %p392 = pneg %p124
        %p393 = pneg %p148
        %p394 = pneg %p145
        %p395 = pneg %p169
        %p396 = pneg %p166
        %p397 = pneg %p190
        %p398 = pneg %p187
        %p399 = pneg %p211
        %p400 = pneg %p208
        %p401 = pneg %p232
        %p402 = pneg %p229
        %p403 = pneg %p253
        %p404 = pneg %p250
        %p405 = pneg %p281
        %p406 = pneg %p278
        %s407 = smul.u32 16, %s31
        %p408 = scmp.lt.s32.totalorder %s30, 1
        %s409 = scalar_select %p408, %s30, 1
        %p410 = scmp.lt.s32.totalorder %s407, 31
        %s411 = scalar_select %p410, %s407, 31
        %s412 = smul.addr %s409, 32
        %s413 = sadd.s32 %s411, %s412
        %s414 = smul.addr %s413, 8
        %s415 = scalar_lea.vmem %s10, %s414
        %p416 = pneg %p309
        %p417 = pneg %p306
        %s418 = sand.u32 %s296, 1
        %s419 = scalar_lea.sflag [#allocation4], %s418
        %s420 = sand.u32 %s296, 1
        %s421 = smul.addr %s420, 256
        %s422 = scalar_lea.vmem [#allocation3], %s421
        %p423 = scmp.lt.s32.totalorder %s30, 1
        %s424 = scalar_select %p423, %s30, 1
        %s425 = smul.addr %s424, 36
        %s426 = smul.addr %s425, 4
        %s427 = scalar_lea.vmem %s0, %s426
        %p428 = scmp.lt.s32.totalorder %s30, 1
        %s429 = scalar_select %p428, %s30, 1
        %s430 = smul.addr %s429, 8
        %s431 = smul.addr %s430, 8
        %s432 = scalar_lea.vmem %s1, %s431
        %s433 = smul.u32 16, %s31
        %p434 = scmp.lt.s32.totalorder %s30, 1
        %s435 = scalar_select %p434, %s30, 1
        %p436 = scmp.lt.s32.totalorder %s433, 31
        %s437 = scalar_select %p436, %s433, 31
        %s438 = smul.addr %s435, 32
        %s439 = sadd.s32 %s437, %s438
        %s440 = smul.addr %s439, 8
        %s441 = scalar_lea.vmem %s10, %s440
        %s442 = smul.u32 16, %s31
        %s443 = smul.u32 16, %s31
        %s445 = smul.u32 %s31, 8
        %s446 = smul.u32 %s31, 128
        %s447 = sshra.s32 %s446, 3
        %s448 = sand.u32 %s446, 7
        %s449 = smul.addr %s447, 4
        %s450 = scalar_lea.vmem %s427, %s449
        %v451 = vld [vmem:[%s450] sm:$0xf]
        %v452 = vld [vmem:[%s450 + $0x4] sm:$0xf]
        %v453 = vld [vmem:[%s450 + $0x8] sm:$0xf]
        %v454 = vld [vmem:[%s450 + $0xc] sm:$0xf]
        %v455 = vld [vmem:[%s450 + $0x10] sm:$0xf]
        %v456 = vld [vmem:[%s450 + $0x14] sm:$0xf]
        %v457 = vld [vmem:[%s450 + $0x18] sm:$0xf]
        %v458 = vld [vmem:[%s450 + $0x1c] sm:$0xf]
        %v459 = vld [vmem:[%s450 + $0x20] sm:$0xf]
        %v460 = vld [vmem:[%s450 + $0x24] sm:$0xf]
        %v461 = vld [vmem:[%s450 + $0x28] sm:$0xf]
        %v462 = vld [vmem:[%s450 + $0x2c] sm:$0xf]
        %v463 = vld [vmem:[%s450 + $0x30] sm:$0xf]
        %v464 = vld [vmem:[%s450 + $0x34] sm:$0xf]
        %v465 = vld [vmem:[%s450 + $0x38] sm:$0xf]
        %v466 = vld [vmem:[%s450 + $0x3c] sm:$0xf]
        %v467 = vld [vmem:[%s450 + $0x40] sm:$0xf]
        %v468 = vld [vmem:[%s450 + $0x44] sm:$0xf]
        %v469 = vld [vmem:[%s450 + $0x48] sm:$0xf]
        %v470 = vld [vmem:[%s450 + $0x4c] sm:$0xf]
        %v471 = vld [vmem:[%s4] sm:$0xf]
        %v472 = vld [vmem:[%s5] sm:$0x1]
        %v474 = vlaneseq
        %v475 = vshrl.u32 %v474, 7
        %v476 = vsub.s32 0, %v475
        %v477 = vrot.slane %v472, %v476
        %v499 = vunpack.c.l.b16 %v451
        %v500 = vunpack.c.l.b16 %v452
        %v501 = vunpack.c.l.b16 %v453
        %v502 = vunpack.c.l.b16 %v454
        %v503 = vunpack.c.l.b16 %v455
        %v504 = vunpack.c.l.b16 %v456
        %v505 = vunpack.c.l.b16 %v457
        %v506 = vunpack.c.l.b16 %v458
        %v507 = vunpack.c.l.b16 %v459
        %v508 = vunpack.c.l.b16 %v460
        %v509 = vunpack.c.l.b16 %v461
        %v510 = vunpack.c.l.b16 %v462
        %v511 = vunpack.c.l.b16 %v463
        %v512 = vunpack.c.l.b16 %v464
        %v513 = vunpack.c.l.b16 %v465
        %v514 = vunpack.c.l.b16 %v466
        %v515 = vunpack.c.l.b16 %v467
        %v516 = vunpack.c.l.b16 %v468
        %v517 = vunpack.c.l.b16 %v469
        %v518 = vunpack.c.l.b16 %v470
        %v519 = vpack.c.b16 %v500, %v499
        %v520 = vpack.c.b16 %v502, %v501
        %v521 = vpack.c.b16 %v504, %v503
        %v522 = vpack.c.b16 %v506, %v505
        %v523 = vpack.c.b16 %v508, %v507
        %v524 = vpack.c.b16 %v510, %v509
        %v525 = vpack.c.b16 %v512, %v511
        %v526 = vpack.c.b16 %v514, %v513
        %v527 = vpack.c.b16 %v516, %v515
        %v528 = vpack.c.b16 %v518, %v517
        %vm529 = vcmask 64512
        %v531 = vsel %vm529, %v519, 0
        %v534 = vsel %vm529, %v520, 0
        %v537 = vsel %vm529, %v521, 0
        %v540 = vsel %vm529, %v522, 0
        %v543 = vsel %vm529, %v523, 0
        %v546 = vsel %vm529, %v524, 0
        %v549 = vsel %vm529, %v525, 0
        %v552 = vsel %vm529, %v526, 0
        %v555 = vsel %vm529, %v527, 0
        %v558 = vsel %vm529, %v528, 0
        %vm560 = vcmask 1043456
        %v562 = vsel %vm560, %v471, 0
        %564 = vmatprep.subr.bf16.mxu0 0
        %565 = vmatpush1.bf16.msra.mxu0 %v562
        %566 = vmatprep.subr.bf16.mxu0 0
        %567 = vmatpush1.bf16.msra.mxu0 0
        %568 = vmatprep.subr.bf16.mxu0 0
        %569 = vmatpush1.bf16.msra.mxu0 0
        %570 = vmatprep.subr.bf16.mxu0 0
        %571 = vmatpush1.bf16.msra.mxu0 0
        %572 = vmatprep.subr.bf16.mxu0 0
        %573 = vmatpush1.bf16.msra.mxu0 0
        %574 = vmatprep.subr.bf16.mxu0 0
        %575 = vmatpush1.bf16.msra.mxu0 0
        %576 = vmatprep.subr.bf16.mxu0 0
        %577 = vmatpush1.bf16.msra.mxu0 0
        %578 = vmatprep.subr.bf16.mxu0 0
        %579 = vmatpush1.bf16.msra.mxu0 0
        %580 = vmatprep.subr.bf16.mxu0 0
        %581 = vmatpush1.bf16.msra.mxu0 0
        %582 = vmatprep.subr.bf16.mxu0 0
        %583 = vmatpush1.bf16.msra.mxu0 0
        %584 = vmatprep.subr.bf16.mxu0 0
        %585 = vmatpush1.bf16.msra.mxu0 0
        %586 = vmatprep.subr.bf16.mxu0 0
        %587 = vmatpush1.bf16.msra.mxu0 0
        %588 = vmatprep.subr.bf16.mxu0 0
        %589 = vmatpush1.bf16.msra.mxu0 0
        %590 = vmatprep.subr.bf16.mxu0 0
        %591 = vmatpush1.bf16.msra.mxu0 0
        %592 = vmatprep.subr.bf16.mxu0 0
        %593 = vmatpush1.bf16.msra.mxu0 0
        %594 = vmatprep.subr.bf16.mxu0 0
        %595 = vmatpush1.bf16.msra.mxu0 0
        %596 = vmatprep.mubr.bf16.mxu0 0
        %597 = vmatmul.mubr.bf16.gmra.mrb[0].mxu0 %v531
        %v598 = vpop.f32.mrb[0].mxu0
        %v599 = vadd.f32 %v477, %v598
        %v600 = vpop.f32.mrb[0].mxu0
        %v601 = vpop.f32.mrb[0].mxu0
        %v602 = vadd.f32 %v477, %v601
        %v603 = vpop.f32.mrb[0].mxu0
        %604 = vmatprep.mubr.bf16.mxu0 0
        %605 = vmatmul.mubr.bf16.gmra.mrb[0].mxu0 %v534
        %v606 = vpop.f32.mrb[0].mxu0
        %v607 = vadd.f32 %v477, %v606
        %v608 = vpop.f32.mrb[0].mxu0
        %v609 = vpop.f32.mrb[0].mxu0
        %v610 = vadd.f32 %v477, %v609
        %v611 = vpop.f32.mrb[0].mxu0
        %612 = vmatprep.mubr.bf16.mxu0 0
        %613 = vmatmul.mubr.bf16.gmra.mrb[0].mxu0 %v537
        %v614 = vpop.f32.mrb[0].mxu0
        %v615 = vadd.f32 %v477, %v614
        %v616 = vpop.f32.mrb[0].mxu0
        %v617 = vpop.f32.mrb[0].mxu0
        %v618 = vadd.f32 %v477, %v617
        %v619 = vpop.f32.mrb[0].mxu0
        %620 = vmatprep.mubr.bf16.mxu0 0
        %621 = vmatmul.mubr.bf16.gmra.mrb[0].mxu0 %v540
        %v622 = vpop.f32.mrb[0].mxu0
        %v623 = vadd.f32 %v477, %v622
        %v624 = vpop.f32.mrb[0].mxu0
        %v625 = vpop.f32.mrb[0].mxu0
        %v626 = vadd.f32 %v477, %v625
        %v627 = vpop.f32.mrb[0].mxu0
        %628 = vmatprep.mubr.bf16.mxu0 0
        %629 = vmatmul.mubr.bf16.gmra.mrb[0].mxu0 %v543
        %v630 = vpop.f32.mrb[0].mxu0
        %v631 = vadd.f32 %v477, %v630
        %v632 = vpop.f32.mrb[0].mxu0
        %v633 = vpop.f32.mrb[0].mxu0
        %v634 = vadd.f32 %v477, %v633
        %v635 = vpop.f32.mrb[0].mxu0
        %636 = vmatprep.mubr.bf16.mxu0 0
        %637 = vmatmul.mubr.bf16.gmra.mrb[0].mxu0 %v546
        %v638 = vpop.f32.mrb[0].mxu0
        %v639 = vadd.f32 %v477, %v638
        %v640 = vpop.f32.mrb[0].mxu0
        %v641 = vpop.f32.mrb[0].mxu0
        %v642 = vadd.f32 %v477, %v641
        %v643 = vpop.f32.mrb[0].mxu0
        %644 = vmatprep.mubr.bf16.mxu0 0
        %645 = vmatmul.mubr.bf16.gmra.mrb[0].mxu0 %v549
        %v646 = vpop.f32.mrb[0].mxu0
        %v647 = vadd.f32 %v477, %v646
        %v648 = vpop.f32.mrb[0].mxu0
        %v649 = vpop.f32.mrb[0].mxu0
        %v650 = vadd.f32 %v477, %v649
        %v651 = vpop.f32.mrb[0].mxu0
        %652 = vmatprep.mubr.bf16.mxu0 0
        %653 = vmatmul.mubr.bf16.gmra.mrb[0].mxu0 %v552
        %v654 = vpop.f32.mrb[0].mxu0
        %v655 = vadd.f32 %v477, %v654
        %v656 = vpop.f32.mrb[0].mxu0
        %v657 = vpop.f32.mrb[0].mxu0
        %v658 = vadd.f32 %v477, %v657
        %v659 = vpop.f32.mrb[0].mxu0
        %660 = vmatprep.mubr.bf16.mxu0 0
        %661 = vmatmul.mubr.bf16.gmra.mrb[0].mxu0 %v555
        %v662 = vpop.f32.mrb[0].mxu0
        %v663 = vadd.f32 %v477, %v662
        %v664 = vpop.f32.mrb[0].mxu0
        %v665 = vpop.f32.mrb[0].mxu0
        %v666 = vadd.f32 %v477, %v665
        %v667 = vpop.f32.mrb[0].mxu0
        %668 = vmatprep.mubr.bf16.mxu0 0
        %669 = vmatmul.mubr.bf16.gmra.mrb[0].mxu0 %v558
        %v670 = vpop.f32.mrb[0].mxu0
        %v671 = vadd.f32 %v477, %v670
        %v672 = vpop.f32.mrb[0].mxu0
        %v673 = vpop.f32.mrb[0].mxu0
        %v674 = vadd.f32 %v477, %v673
        %v675 = vpop.f32.mrb[0].mxu0
        %676 = vdwg.mxu0
        %v677 = vmax.f32 %v599, 0.0
        %v678 = vmax.f32 %v602, 0.0
        %v679 = vmax.f32 %v607, 0.0
        %v680 = vmax.f32 %v610, 0.0
        %v681 = vmax.f32 %v615, 0.0
        %v682 = vmax.f32 %v618, 0.0
        %v683 = vmax.f32 %v623, 0.0
        %v684 = vmax.f32 %v626, 0.0
        %v685 = vmax.f32 %v631, 0.0
        %v686 = vmax.f32 %v634, 0.0
        %v687 = vmax.f32 %v639, 0.0
        %v688 = vmax.f32 %v642, 0.0
        %v689 = vmax.f32 %v647, 0.0
        %v690 = vmax.f32 %v650, 0.0
        %v691 = vmax.f32 %v655, 0.0
        %v692 = vmax.f32 %v658, 0.0
        %v693 = vmax.f32 %v663, 0.0
        %v694 = vmax.f32 %v666, 0.0
        %v695 = vmax.f32 %v671, 0.0
        %v696 = vmax.f32 %v674, 0.0
        %v697 = vpack.c.bf16 %v678, %v677
        %v698 = vpack.c.bf16 %v680, %v679
        %v699 = vpack.c.bf16 %v682, %v681
        %v700 = vpack.c.bf16 %v684, %v683
        %v701 = vpack.c.bf16 %v686, %v685
        %v702 = vpack.c.bf16 %v688, %v687
        %v703 = vpack.c.bf16 %v690, %v689
        %v704 = vpack.c.bf16 %v692, %v691
        %v705 = vpack.c.bf16 %v694, %v693
        %v706 = vpack.c.bf16 %v696, %v695
        %v717 = vunpack.c.l.b16 %v697
        %v718 = vunpack.c.h.b16 %v697
        %v719 = vunpack.c.l.b16 %v698
        %v720 = vunpack.c.h.b16 %v698
        %v721 = vunpack.c.l.b16 %v699
        %v722 = vunpack.c.h.b16 %v699
        %v723 = vunpack.c.l.b16 %v700
        %v724 = vunpack.c.h.b16 %v700
        %v725 = vunpack.c.l.b16 %v701
        %v726 = vunpack.c.h.b16 %v701
        %v727 = vunpack.c.l.b16 %v702
        %v728 = vunpack.c.h.b16 %v702
        %v729 = vunpack.c.l.b16 %v703
        %v730 = vunpack.c.h.b16 %v703
        %v731 = vunpack.c.l.b16 %v704
        %v732 = vunpack.c.h.b16 %v704
        %v733 = vunpack.c.l.b16 %v705
        %v734 = vunpack.c.h.b16 %v705
        %v735 = vunpack.c.l.b16 %v706
        %v736 = vunpack.c.h.b16 %v706
        %v737 = vpack.c.b16 %v717, %v717
        %v738 = vpack.c.b16 %v718, %v718
        %v739 = vpack.c.b16 %v719, %v719
        %v740 = vpack.c.b16 %v720, %v720
        %v741 = vpack.c.b16 %v721, %v721
        %v742 = vpack.c.b16 %v722, %v722
        %v743 = vpack.c.b16 %v723, %v723
        %v744 = vpack.c.b16 %v724, %v724
        %v745 = vpack.c.b16 %v725, %v725
        %v746 = vpack.c.b16 %v726, %v726
        %v747 = vpack.c.b16 %v727, %v727
        %v748 = vpack.c.b16 %v728, %v728
        %v749 = vpack.c.b16 %v729, %v729
        %v750 = vpack.c.b16 %v730, %v730
        %v751 = vpack.c.b16 %v731, %v731
        %v752 = vpack.c.b16 %v732, %v732
        %v753 = vpack.c.b16 %v733, %v733
        %v754 = vpack.c.b16 %v734, %v734
        %v755 = vpack.c.b16 %v735, %v735
        %v756 = vpack.c.b16 %v736, %v736
        %vm757 = vsmask.f32 256
        %vm758 = vsmask.f32 4368
        %vm759 = vmor %vm757, %vm758
        %v761 = vshrl.u32 %v737, 16
        %v763 = vrot.slane %v761, 7
        %v764 = vshll.u32 %v737, 16
        %v766 = vor.u32 %v763, %v764
        %v767 = vrot.slane %v763, 4
        %v769 = vshrl.u32 %v738, 16
        %v771 = vrot.slane %v769, 7
        %v772 = vshll.u32 %v738, 16
        %v774 = vor.u32 %v771, %v772
        %v775 = vsel %vm759, %v767, %v774
        %v776 = vrot.slane %v771, 4
        %v778 = vshrl.u32 %v739, 16
        %v780 = vrot.slane %v778, 7
        %v781 = vshll.u32 %v739, 16
        %v783 = vor.u32 %v780, %v781
        %v784 = vrot.slane %v780, 4
        %v786 = vshrl.u32 %v740, 16
        %v788 = vrot.slane %v786, 7
        %v789 = vshll.u32 %v740, 16
        %v791 = vor.u32 %v788, %v789
        %v792 = vsel %vm759, %v784, %v791
        %v793 = vrot.slane %v788, 4
        %v795 = vshrl.u32 %v741, 16
        %v797 = vrot.slane %v795, 7
        %v798 = vshll.u32 %v741, 16
        %v800 = vor.u32 %v797, %v798
        %v801 = vrot.slane %v797, 4
        %v803 = vshrl.u32 %v742, 16
        %v805 = vrot.slane %v803, 7
        %v806 = vshll.u32 %v742, 16
        %v808 = vor.u32 %v805, %v806
        %v809 = vsel %vm759, %v801, %v808
        %v810 = vrot.slane %v805, 4
        %v812 = vshrl.u32 %v743, 16
        %v814 = vrot.slane %v812, 7
        %v815 = vshll.u32 %v743, 16
        %v817 = vor.u32 %v814, %v815
        %v818 = vrot.slane %v814, 4
        %v820 = vshrl.u32 %v744, 16
        %v822 = vrot.slane %v820, 7
        %v823 = vshll.u32 %v744, 16
        %v825 = vor.u32 %v822, %v823
        %v826 = vsel %vm759, %v818, %v825
        %v827 = vrot.slane %v822, 4
        %v829 = vshrl.u32 %v745, 16
        %v831 = vrot.slane %v829, 7
        %v832 = vshll.u32 %v745, 16
        %v834 = vor.u32 %v831, %v832
        %v835 = vrot.slane %v831, 4
        %v837 = vshrl.u32 %v746, 16
        %v839 = vrot.slane %v837, 7
        %v840 = vshll.u32 %v746, 16
        %v842 = vor.u32 %v839, %v840
        %v843 = vsel %vm759, %v835, %v842
        %v844 = vrot.slane %v839, 4
        %v846 = vshrl.u32 %v747, 16
        %v848 = vrot.slane %v846, 7
        %v849 = vshll.u32 %v747, 16
        %v851 = vor.u32 %v848, %v849
        %v852 = vrot.slane %v848, 4
        %v854 = vshrl.u32 %v748, 16
        %v856 = vrot.slane %v854, 7
        %v857 = vshll.u32 %v748, 16
        %v859 = vor.u32 %v856, %v857
        %v860 = vsel %vm759, %v852, %v859
        %v861 = vrot.slane %v856, 4
        %v863 = vshrl.u32 %v749, 16
        %v865 = vrot.slane %v863, 7
        %v866 = vshll.u32 %v749, 16
        %v868 = vor.u32 %v865, %v866
        %v869 = vrot.slane %v865, 4
        %v871 = vshrl.u32 %v750, 16
        %v873 = vrot.slane %v871, 7
        %v874 = vshll.u32 %v750, 16
        %v876 = vor.u32 %v873, %v874
        %v877 = vsel %vm759, %v869, %v876
        %v878 = vrot.slane %v873, 4
        %v880 = vshrl.u32 %v751, 16
        %v882 = vrot.slane %v880, 7
        %v883 = vshll.u32 %v751, 16
        %v885 = vor.u32 %v882, %v883
        %v886 = vrot.slane %v882, 4
        %v888 = vshrl.u32 %v752, 16
        %v890 = vrot.slane %v888, 7
        %v891 = vshll.u32 %v752, 16
        %v893 = vor.u32 %v890, %v891
        %v894 = vsel %vm759, %v886, %v893
        %v895 = vrot.slane %v890, 4
        %v897 = vshrl.u32 %v753, 16
        %v899 = vrot.slane %v897, 7
        %v900 = vshll.u32 %v753, 16
        %v902 = vor.u32 %v899, %v900
        %v903 = vrot.slane %v899, 4
        %v905 = vshrl.u32 %v754, 16
        %v907 = vrot.slane %v905, 7
        %v908 = vshll.u32 %v754, 16
        %v910 = vor.u32 %v907, %v908
        %v911 = vsel %vm759, %v903, %v910
        %v912 = vrot.slane %v907, 4
        %v914 = vshrl.u32 %v755, 16
        %v916 = vrot.slane %v914, 7
        %v917 = vshll.u32 %v755, 16
        %v919 = vor.u32 %v916, %v917
        %v920 = vrot.slane %v916, 4
        %v922 = vshrl.u32 %v756, 16
        %v924 = vrot.slane %v922, 7
        %v925 = vshll.u32 %v756, 16
        %v927 = vor.u32 %v924, %v925
        %v928 = vsel %vm759, %v920, %v927
        %v929 = vrot.slane %v924, 4
        %vm960 = vcmask 1043456
        %vm961 = vsmask.f32 7938
        %vm962 = vmand %vm960, %vm961
        %v963 = vld [vmem:[#allocation2] sm:$0xf]
        %v964 = vsel %vm962, %v766, %v963
        %965 = vst [vmem:[#allocation2] sm:$0xf] %v964
        %966 = vst [vmem:[#allocation2 + $0x8] sm:$0xf] %v775
        %vm967 = vcmask 1040384
        %vm968 = vmand %vm967, %vm757
        %v969 = vld [vmem:[#allocation2 + $0x10] sm:$0x1]
        %v970 = vsel %vm968, %v776, %v969
        %971 = vst [vmem:[#allocation2 + $0x10] sm:$0x1] %v970
        %v972 = vld [vmem:[#allocation2 + $0x18] sm:$0xf]
        %v973 = vsel %vm962, %v783, %v972
        %974 = vst [vmem:[#allocation2 + $0x18] sm:$0xf] %v973
        %975 = vst [vmem:[#allocation2 + $0x20] sm:$0xf] %v792
        %v976 = vld [vmem:[#allocation2 + $0x28] sm:$0x1]
        %v977 = vsel %vm968, %v793, %v976
        %978 = vst [vmem:[#allocation2 + $0x28] sm:$0x1] %v977
        %v979 = vld [vmem:[#allocation2 + $0x30] sm:$0xf]
        %v980 = vsel %vm962, %v800, %v979
        %981 = vst [vmem:[#allocation2 + $0x30] sm:$0xf] %v980
        %982 = vst [vmem:[#allocation2 + $0x38] sm:$0xf] %v809
        %v983 = vld [vmem:[#allocation2 + $0x40] sm:$0x1]
        %v984 = vsel %vm968, %v810, %v983
        %985 = vst [vmem:[#allocation2 + $0x40] sm:$0x1] %v984
        %v986 = vld [vmem:[#allocation2 + $0x48] sm:$0xf]
        %v987 = vsel %vm962, %v817, %v986
        %988 = vst [vmem:[#allocation2 + $0x48] sm:$0xf] %v987
        %989 = vst [vmem:[#allocation2 + $0x50] sm:$0xf] %v826
        %v990 = vld [vmem:[#allocation2 + $0x58] sm:$0x1]
        %v991 = vsel %vm968, %v827, %v990
        %992 = vst [vmem:[#allocation2 + $0x58] sm:$0x1] %v991
        %v993 = vld [vmem:[#allocation2 + $0x60] sm:$0xf]
        %v994 = vsel %vm962, %v834, %v993
        %995 = vst [vmem:[#allocation2 + $0x60] sm:$0xf] %v994
        %996 = vst [vmem:[#allocation2 + $0x68] sm:$0xf] %v843
        %v997 = vld [vmem:[#allocation2 + $0x70] sm:$0x1]
        %v998 = vsel %vm968, %v844, %v997
        %999 = vst [vmem:[#allocation2 + $0x70] sm:$0x1] %v998
        %v1000 = vld [vmem:[#allocation2 + $0x78] sm:$0xf]
        %v1001 = vsel %vm962, %v851, %v1000
        %1002 = vst [vmem:[#allocation2 + $0x78] sm:$0xf] %v1001
        %1003 = vst [vmem:[#allocation2 + $0x80] sm:$0xf] %v860
        %v1004 = vld [vmem:[#allocation2 + $0x88] sm:$0x1]
        %v1005 = vsel %vm968, %v861, %v1004
        %1006 = vst [vmem:[#allocation2 + $0x88] sm:$0x1] %v1005
        %v1007 = vld [vmem:[#allocation2 + $0x90] sm:$0xf]
        %v1008 = vsel %vm962, %v868, %v1007
        %1009 = vst [vmem:[#allocation2 + $0x90] sm:$0xf] %v1008
        %1010 = vst [vmem:[#allocation2 + $0x98] sm:$0xf] %v877
        %v1011 = vld [vmem:[#allocation2 + $0xa0] sm:$0x1]
        %v1012 = vsel %vm968, %v878, %v1011
        %1013 = vst [vmem:[#allocation2 + $0xa0] sm:$0x1] %v1012
        %v1014 = vld [vmem:[#allocation2 + $0xa8] sm:$0xf]
        %v1015 = vsel %vm962, %v885, %v1014
        %1016 = vst [vmem:[#allocation2 + $0xa8] sm:$0xf] %v1015
        %1017 = vst [vmem:[#allocation2 + $0xb0] sm:$0xf] %v894
        %v1018 = vld [vmem:[#allocation2 + $0xb8] sm:$0x1]
        %v1019 = vsel %vm968, %v895, %v1018
        %1020 = vst [vmem:[#allocation2 + $0xb8] sm:$0x1] %v1019
        %v1021 = vld [vmem:[#allocation2 + $0xc0] sm:$0xf]
        %v1022 = vsel %vm962, %v902, %v1021
        %1023 = vst [vmem:[#allocation2 + $0xc0] sm:$0xf] %v1022
        %1024 = vst [vmem:[#allocation2 + $0xc8] sm:$0xf] %v911
        %v1025 = vld [vmem:[#allocation2 + $0xd0] sm:$0x1]
        %v1026 = vsel %vm968, %v912, %v1025
        %1027 = vst [vmem:[#allocation2 + $0xd0] sm:$0x1] %v1026
        %v1028 = vld [vmem:[#allocation2 + $0xd8] sm:$0xf]
        %v1029 = vsel %vm962, %v919, %v1028
        %1030 = vst [vmem:[#allocation2 + $0xd8] sm:$0xf] %v1029
        %1031 = vst [vmem:[#allocation2 + $0xe0] sm:$0xf] %v928
        %v1032 = vld [vmem:[#allocation2 + $0xe8] sm:$0x1]
        %v1033 = vsel %vm968, %v929, %v1032
        %1034 = vst [vmem:[#allocation2 + $0xe8] sm:$0x1] %v1033
        %s1035 = scalar_lea.vmem %s2, %s445
        %v1036 = vld [vmem:[%s1035] sm:$0xff]
        %v1037 = vld [vmem:[%s1035 + $0x8] sm:$0x3]
        %v1038 = vld [vmem:[%s432] sm:$0xff]
        %v1039 = vld [vmem:[%s432 + $0x8] sm:$0xff]
        %v1040 = vld [vmem:[%s432 + $0x10] sm:$0xff]
        %v1041 = vld [vmem:[%s432 + $0x18] sm:$0xff]
        %v1042 = vld [vmem:[%s432 + $0x20] sm:$0xff]
        %v1043 = vld [vmem:[%s432 + $0x28] sm:$0xff]
        %v1044 = vld [vmem:[%s432 + $0x30] sm:$0xff]
        %v1045 = vld [vmem:[%s432 + $0x38] sm:$0xff]
        %v1047 = vsel %vm529, %v1036, 0
        %v1050 = vsel %vm529, %v1037, 0
        %1052 = vmatprep.subr.mxu0 %v1039
        %1053 = vmatpush1.msra.mxu0 %v1038
        %1054 = vmatprep.subr.mxu0 0.0
        %1055 = vmatpush1.msra.mxu0 0.0
        %1056 = vmatprep.subr.mxu0 0.0
        %1057 = vmatpush1.msra.mxu0 0.0
        %1058 = vmatprep.subr.mxu0 0.0
        %1059 = vmatpush1.msra.mxu0 0.0
        %1060 = vmatprep.subr.mxu0 0.0
        %1061 = vmatpush1.msra.mxu0 0.0
        %1062 = vmatprep.subr.mxu0 0.0
        %1063 = vmatpush1.msra.mxu0 0.0
        %1064 = vmatprep.subr.mxu0 0.0
        %1065 = vmatpush1.msra.mxu0 0.0
        %1066 = vmatprep.subr.mxu0 0.0
        %1067 = vmatpush1.msra.mxu0 0.0
        %1068 = vmatprep.subr.mxu0 0.0
        %1069 = vmatpush1.msra.mxu0 0.0
        %1070 = vmatprep.subr.mxu0 0.0
        %1071 = vmatpush1.msra.mxu0 0.0
        %1072 = vmatprep.subr.mxu0 0.0
        %1073 = vmatpush1.msra.mxu0 0.0
        %1074 = vmatprep.subr.mxu0 0.0
        %1075 = vmatpush1.msra.mxu0 0.0
        %1076 = vmatprep.subr.mxu0 0.0
        %1077 = vmatpush1.msra.mxu0 0.0
        %1078 = vmatprep.subr.mxu0 0.0
        %1079 = vmatpush1.msra.mxu0 0.0
        %1080 = vmatprep.subr.mxu0 0.0
        %1081 = vmatpush1.msra.mxu0 0.0
        %1082 = vmatprep.subr.mxu0 0.0
        %1083 = vmatpush1.msra.mxu0 0.0
        %1084 = vmatprep.subr.mxu0 0.0
        %1085 = vmatpush1.msra.mxu0 0.0
        %1086 = vmatprep.subr.mxu0 0.0
        %1087 = vmatpush1.msra.mxu0 0.0
        %1088 = vmatprep.subr.mxu0 0.0
        %1089 = vmatpush1.msra.mxu0 0.0
        %1090 = vmatprep.subr.mxu0 0.0
        %1091 = vmatpush1.msra.mxu0 0.0
        %1092 = vmatprep.subr.mxu0 0.0
        %1093 = vmatpush1.msra.mxu0 0.0
        %1094 = vmatprep.subr.mxu0 0.0
        %1095 = vmatpush1.msra.mxu0 0.0
        %1096 = vmatprep.subr.mxu0 0.0
        %1097 = vmatpush1.msra.mxu0 0.0
        %1098 = vmatprep.subr.mxu0 0.0
        %1099 = vmatpush1.msra.mxu0 0.0
        %1100 = vmatprep.subr.mxu0 0.0
        %1101 = vmatpush1.msra.mxu0 0.0
        %1102 = vmatprep.subr.mxu0 0.0
        %1103 = vmatpush1.msra.mxu0 0.0
        %1104 = vmatprep.subr.mxu0 0.0
        %1105 = vmatpush1.msra.mxu0 0.0
        %1106 = vmatprep.subr.mxu0 0.0
        %1107 = vmatpush1.msra.mxu0 0.0
        %1108 = vmatprep.subr.mxu0 0.0
        %1109 = vmatpush1.msra.mxu0 0.0
        %1110 = vmatprep.subr.mxu0 0.0
        %1111 = vmatpush1.msra.mxu0 0.0
        %1112 = vmatprep.subr.mxu0 0.0
        %1113 = vmatpush1.msra.mxu0 0.0
        %1114 = vmatprep.subr.mxu0 0.0
        %1115 = vmatpush1.msra.mxu0 0.0
        %1116 = vmatprep.mubr.f32.mxu0 0.0
        %1117 = vmatmul.mubr.f32.gmra.mrb[0].mxu0 %v1047
        %v1118 = vpop.f32.mrb[0].mxu0
        %v1119 = vadd.f32 0.0, %v1118
        %v1120 = vpop.f32.mrb[0].mxu0
        %v1121 = vadd.f32 0.0, %v1120
        %1122 = vmatprep.mubr.f32.mxu0 0.0
        %1123 = vmatmul.mubr.f32.gmra.mrb[0].mxu0 %v1050
        %v1124 = vpop.f32.mrb[0].mxu0
        %v1125 = vadd.f32 0.0, %v1124
        %v1126 = vpop.f32.mrb[0].mxu0
        %v1127 = vadd.f32 0.0, %v1126
        %1128 = vdwg.mxu0
        %1129 = vmatprep.subr.mxu0 %v1041
        %1130 = vmatpush1.msra.mxu0 %v1040
        %1131 = vmatprep.subr.mxu0 0.0
        %1132 = vmatpush1.msra.mxu0 0.0
        %1133 = vmatprep.subr.mxu0 0.0
        %1134 = vmatpush1.msra.mxu0 0.0
        %1135 = vmatprep.subr.mxu0 0.0
        %1136 = vmatpush1.msra.mxu0 0.0
        %1137 = vmatprep.subr.mxu0 0.0
        %1138 = vmatpush1.msra.mxu0 0.0
        %1139 = vmatprep.subr.mxu0 0.0
        %1140 = vmatpush1.msra.mxu0 0.0
        %1141 = vmatprep.subr.mxu0 0.0
        %1142 = vmatpush1.msra.mxu0 0.0
        %1143 = vmatprep.subr.mxu0 0.0
        %1144 = vmatpush1.msra.mxu0 0.0
        %1145 = vmatprep.subr.mxu0 0.0
        %1146 = vmatpush1.msra.mxu0 0.0
        %1147 = vmatprep.subr.mxu0 0.0
        %1148 = vmatpush1.msra.mxu0 0.0
        %1149 = vmatprep.subr.mxu0 0.0
        %1150 = vmatpush1.msra.mxu0 0.0
        %1151 = vmatprep.subr.mxu0 0.0
        %1152 = vmatpush1.msra.mxu0 0.0
        %1153 = vmatprep.subr.mxu0 0.0
        %1154 = vmatpush1.msra.mxu0 0.0
        %1155 = vmatprep.subr.mxu0 0.0
        %1156 = vmatpush1.msra.mxu0 0.0
        %1157 = vmatprep.subr.mxu0 0.0
        %1158 = vmatpush1.msra.mxu0 0.0
        %1159 = vmatprep.subr.mxu0 0.0
        %1160 = vmatpush1.msra.mxu0 0.0
        %1161 = vmatprep.subr.mxu0 0.0
        %1162 = vmatpush1.msra.mxu0 0.0
        %1163 = vmatprep.subr.mxu0 0.0
        %1164 = vmatpush1.msra.mxu0 0.0
        %1165 = vmatprep.subr.mxu0 0.0
        %1166 = vmatpush1.msra.mxu0 0.0
        %1167 = vmatprep.subr.mxu0 0.0
        %1168 = vmatpush1.msra.mxu0 0.0
        %1169 = vmatprep.subr.mxu0 0.0
        %1170 = vmatpush1.msra.mxu0 0.0
        %1171 = vmatprep.subr.mxu0 0.0
        %1172 = vmatpush1.msra.mxu0 0.0
        %1173 = vmatprep.subr.mxu0 0.0
        %1174 = vmatpush1.msra.mxu0 0.0
        %1175 = vmatprep.subr.mxu0 0.0
        %1176 = vmatpush1.msra.mxu0 0.0
        %1177 = vmatprep.subr.mxu0 0.0
        %1178 = vmatpush1.msra.mxu0 0.0
        %1179 = vmatprep.subr.mxu0 0.0
        %1180 = vmatpush1.msra.mxu0 0.0
        %1181 = vmatprep.subr.mxu0 0.0
        %1182 = vmatpush1.msra.mxu0 0.0
        %1183 = vmatprep.subr.mxu0 0.0
        %1184 = vmatpush1.msra.mxu0 0.0
        %1185 = vmatprep.subr.mxu0 0.0
        %1186 = vmatpush1.msra.mxu0 0.0
        %1187 = vmatprep.subr.mxu0 0.0
        %1188 = vmatpush1.msra.mxu0 0.0
        %1189 = vmatprep.subr.mxu0 0.0
        %1190 = vmatpush1.msra.mxu0 0.0
        %1191 = vmatprep.subr.mxu0 0.0
        %1192 = vmatpush1.msra.mxu0 0.0
        %1193 = vmatprep.mubr.f32.mxu0 0.0
        %1194 = vmatmul.mubr.f32.gmra.mrb[0].mxu0 %v1047
        %v1195 = vpop.f32.mrb[0].mxu0
        %v1196 = vadd.f32 0.0, %v1195
        %v1197 = vpop.f32.mrb[0].mxu0
        %v1198 = vadd.f32 0.0, %v1197
        %1199 = vmatprep.mubr.f32.mxu0 0.0
        %1200 = vmatmul.mubr.f32.gmra.mrb[0].mxu0 %v1050
        %v1201 = vpop.f32.mrb[0].mxu0
        %v1202 = vadd.f32 0.0, %v1201
        %v1203 = vpop.f32.mrb[0].mxu0
        %v1204 = vadd.f32 0.0, %v1203
        %1205 = vdwg.mxu0
        %1206 = vmatprep.subr.mxu0 %v1043
        %1207 = vmatpush1.msra.mxu0 %v1042
        %1208 = vmatprep.subr.mxu0 0.0
        %1209 = vmatpush1.msra.mxu0 0.0
        %1210 = vmatprep.subr.mxu0 0.0
        %1211 = vmatpush1.msra.mxu0 0.0
        %1212 = vmatprep.subr.mxu0 0.0
        %1213 = vmatpush1.msra.mxu0 0.0
        %1214 = vmatprep.subr.mxu0 0.0
        %1215 = vmatpush1.msra.mxu0 0.0
        %1216 = vmatprep.subr.mxu0 0.0
        %1217 = vmatpush1.msra.mxu0 0.0
        %1218 = vmatprep.subr.mxu0 0.0
        %1219 = vmatpush1.msra.mxu0 0.0
        %1220 = vmatprep.subr.mxu0 0.0
        %1221 = vmatpush1.msra.mxu0 0.0
        %1222 = vmatprep.subr.mxu0 0.0
        %1223 = vmatpush1.msra.mxu0 0.0
        %1224 = vmatprep.subr.mxu0 0.0
        %1225 = vmatpush1.msra.mxu0 0.0
        %1226 = vmatprep.subr.mxu0 0.0
        %1227 = vmatpush1.msra.mxu0 0.0
        %1228 = vmatprep.subr.mxu0 0.0
        %1229 = vmatpush1.msra.mxu0 0.0
        %1230 = vmatprep.subr.mxu0 0.0
        %1231 = vmatpush1.msra.mxu0 0.0
        %1232 = vmatprep.subr.mxu0 0.0
        %1233 = vmatpush1.msra.mxu0 0.0
        %1234 = vmatprep.subr.mxu0 0.0
        %1235 = vmatpush1.msra.mxu0 0.0
        %1236 = vmatprep.subr.mxu0 0.0
        %1237 = vmatpush1.msra.mxu0 0.0
        %1238 = vmatprep.subr.mxu0 0.0
        %1239 = vmatpush1.msra.mxu0 0.0
        %1240 = vmatprep.subr.mxu0 0.0
        %1241 = vmatpush1.msra.mxu0 0.0
        %1242 = vmatprep.subr.mxu0 0.0
        %1243 = vmatpush1.msra.mxu0 0.0
        %1244 = vmatprep.subr.mxu0 0.0
        %1245 = vmatpush1.msra.mxu0 0.0
        %1246 = vmatprep.subr.mxu0 0.0
        %1247 = vmatpush1.msra.mxu0 0.0
        %1248 = vmatprep.subr.mxu0 0.0
        %1249 = vmatpush1.msra.mxu0 0.0
        %1250 = vmatprep.subr.mxu0 0.0
        %1251 = vmatpush1.msra.mxu0 0.0
        %1252 = vmatprep.subr.mxu0 0.0
        %1253 = vmatpush1.msra.mxu0 0.0
        %1254 = vmatprep.subr.mxu0 0.0
        %1255 = vmatpush1.msra.mxu0 0.0
        %1256 = vmatprep.subr.mxu0 0.0
        %1257 = vmatpush1.msra.mxu0 0.0
        %1258 = vmatprep.subr.mxu0 0.0
        %1259 = vmatpush1.msra.mxu0 0.0
        %1260 = vmatprep.subr.mxu0 0.0
        %1261 = vmatpush1.msra.mxu0 0.0
        %1262 = vmatprep.subr.mxu0 0.0
        %1263 = vmatpush1.msra.mxu0 0.0
        %1264 = vmatprep.subr.mxu0 0.0
        %1265 = vmatpush1.msra.mxu0 0.0
        %1266 = vmatprep.subr.mxu0 0.0
        %1267 = vmatpush1.msra.mxu0 0.0
        %1268 = vmatprep.subr.mxu0 0.0
        %1269 = vmatpush1.msra.mxu0 0.0
        %1270 = vmatprep.mubr.f32.mxu0 0.0
        %1271 = vmatmul.mubr.f32.gmra.mrb[0].mxu0 %v1047
        %v1272 = vpop.f32.mrb[0].mxu0
        %v1273 = vadd.f32 0.0, %v1272
        %v1274 = vpop.f32.mrb[0].mxu0
        %v1275 = vadd.f32 0.0, %v1274
        %1276 = vmatprep.mubr.f32.mxu0 0.0
        %1277 = vmatmul.mubr.f32.gmra.mrb[0].mxu0 %v1050
        %v1278 = vpop.f32.mrb[0].mxu0
        %v1279 = vadd.f32 0.0, %v1278
        %v1280 = vpop.f32.mrb[0].mxu0
        %v1281 = vadd.f32 0.0, %v1280
        %1282 = vdwg.mxu0
        %1283 = vmatprep.subr.mxu0 %v1045
        %1284 = vmatpush1.msra.mxu0 %v1044
        %1285 = vmatprep.subr.mxu0 0.0
        %1286 = vmatpush1.msra.mxu0 0.0
        %1287 = vmatprep.subr.mxu0 0.0
        %1288 = vmatpush1.msra.mxu0 0.0
        %1289 = vmatprep.subr.mxu0 0.0
        %1290 = vmatpush1.msra.mxu0 0.0
        %1291 = vmatprep.subr.mxu0 0.0
        %1292 = vmatpush1.msra.mxu0 0.0
        %1293 = vmatprep.subr.mxu0 0.0
        %1294 = vmatpush1.msra.mxu0 0.0
        %1295 = vmatprep.subr.mxu0 0.0
        %1296 = vmatpush1.msra.mxu0 0.0
        %1297 = vmatprep.subr.mxu0 0.0
        %1298 = vmatpush1.msra.mxu0 0.0
        %1299 = vmatprep.subr.mxu0 0.0
        %1300 = vmatpush1.msra.mxu0 0.0
        %1301 = vmatprep.subr.mxu0 0.0
        %1302 = vmatpush1.msra.mxu0 0.0
        %1303 = vmatprep.subr.mxu0 0.0
        %1304 = vmatpush1.msra.mxu0 0.0
        %1305 = vmatprep.subr.mxu0 0.0
        %1306 = vmatpush1.msra.mxu0 0.0
        %1307 = vmatprep.subr.mxu0 0.0
        %1308 = vmatpush1.msra.mxu0 0.0
        %1309 = vmatprep.subr.mxu0 0.0
        %1310 = vmatpush1.msra.mxu0 0.0
        %1311 = vmatprep.subr.mxu0 0.0
        %1312 = vmatpush1.msra.mxu0 0.0
        %1313 = vmatprep.subr.mxu0 0.0
        %1314 = vmatpush1.msra.mxu0 0.0
        %1315 = vmatprep.subr.mxu0 0.0
        %1316 = vmatpush1.msra.mxu0 0.0
        %1317 = vmatprep.subr.mxu0 0.0
        %1318 = vmatpush1.msra.mxu0 0.0
        %1319 = vmatprep.subr.mxu0 0.0
        %1320 = vmatpush1.msra.mxu0 0.0
        %1321 = vmatprep.subr.mxu0 0.0
        %1322 = vmatpush1.msra.mxu0 0.0
        %1323 = vmatprep.subr.mxu0 0.0
        %1324 = vmatpush1.msra.mxu0 0.0
        %1325 = vmatprep.subr.mxu0 0.0
        %1326 = vmatpush1.msra.mxu0 0.0
        %1327 = vmatprep.subr.mxu0 0.0
        %1328 = vmatpush1.msra.mxu0 0.0
        %1329 = vmatprep.subr.mxu0 0.0
        %1330 = vmatpush1.msra.mxu0 0.0
        %1331 = vmatprep.subr.mxu0 0.0
        %1332 = vmatpush1.msra.mxu0 0.0
        %1333 = vmatprep.subr.mxu0 0.0
        %1334 = vmatpush1.msra.mxu0 0.0
        %1335 = vmatprep.subr.mxu0 0.0
        %1336 = vmatpush1.msra.mxu0 0.0
        %1337 = vmatprep.subr.mxu0 0.0
        %1338 = vmatpush1.msra.mxu0 0.0
        %1339 = vmatprep.subr.mxu0 0.0
        %1340 = vmatpush1.msra.mxu0 0.0
        %1341 = vmatprep.subr.mxu0 0.0
        %1342 = vmatpush1.msra.mxu0 0.0
        %1343 = vmatprep.subr.mxu0 0.0
        %1344 = vmatpush1.msra.mxu0 0.0
        %1345 = vmatprep.subr.mxu0 0.0
        %1346 = vmatpush1.msra.mxu0 0.0
        %1347 = vmatprep.mubr.f32.mxu0 0.0
        %1348 = vmatmul.mubr.f32.gmra.mrb[0].mxu0 %v1047
        %v1349 = vpop.f32.mrb[0].mxu0
        %v1350 = vadd.f32 0.0, %v1349
        %v1351 = vpop.f32.mrb[0].mxu0
        %v1352 = vadd.f32 0.0, %v1351
        %1353 = vmatprep.mubr.f32.mxu0 0.0
        %1354 = vmatmul.mubr.f32.gmra.mrb[0].mxu0 %v1050
        %v1355 = vpop.f32.mrb[0].mxu0
        %v1356 = vadd.f32 0.0, %v1355
        %v1357 = vpop.f32.mrb[0].mxu0
        %v1358 = vadd.f32 0.0, %v1357
        %1359 = vdwg.mxu0
        %v1360 = vcombine.low %v1119, %v1196
        %v1361 = vcombine.high %v1119, %v1196
        %v1363 = vunpack.c.l.s4 1983009808
        %v1364 = vunpack.c.0.s8 %v1363
        %v1365 = vlaneseq
        %v1366 = vshrl.u32 %v1365, 7
        %v1367 = vsub.s32 %v1364, %v1366
        %v1368 = vrot.slane %v1360, %v1367
        %v1370 = vunpack.c.l.s4 1983009808
        %v1371 = vunpack.c.0.s8 %v1370
        %v1372 = vlaneseq
        %v1373 = vshrl.u32 %v1372, 7
        %v1374 = vsub.s32 %v1371, %v1373
        %v1375 = vrot.slane %v1361, %v1374
        %v1376 = vcombine.low %v1121, %v1198
        %v1377 = vcombine.high %v1121, %v1198
        %v1379 = vunpack.c.l.s4 1983009808
        %v1380 = vunpack.c.0.s8 %v1379
        %v1381 = vlaneseq
        %v1382 = vshrl.u32 %v1381, 7
        %v1383 = vsub.s32 %v1380, %v1382
        %v1384 = vrot.slane %v1376, %v1383
        %v1386 = vunpack.c.l.s4 1983009808
        %v1387 = vunpack.c.0.s8 %v1386
        %v1388 = vlaneseq
        %v1389 = vshrl.u32 %v1388, 7
        %v1390 = vsub.s32 %v1387, %v1389
        %v1391 = vrot.slane %v1377, %v1390
        %v1392 = vcombine.low %v1273, %v1350
        %v1393 = vcombine.high %v1273, %v1350
        %v1395 = vunpack.c.l.s4 1983009808
        %v1396 = vunpack.c.0.s8 %v1395
        %v1397 = vlaneseq
        %v1398 = vshrl.u32 %v1397, 7
        %v1399 = vsub.s32 %v1396, %v1398
        %v1400 = vrot.slane %v1392, %v1399
        %v1402 = vunpack.c.l.s4 1983009808
        %v1403 = vunpack.c.0.s8 %v1402
        %v1404 = vlaneseq
        %v1405 = vshrl.u32 %v1404, 7
        %v1406 = vsub.s32 %v1403, %v1405
        %v1407 = vrot.slane %v1393, %v1406
        %v1408 = vcombine.low %v1275, %v1352
        %v1409 = vcombine.high %v1275, %v1352
        %v1411 = vunpack.c.l.s4 1983009808
        %v1412 = vunpack.c.0.s8 %v1411
        %v1413 = vlaneseq
        %v1414 = vshrl.u32 %v1413, 7
        %v1415 = vsub.s32 %v1412, %v1414
        %v1416 = vrot.slane %v1408, %v1415
        %v1418 = vunpack.c.l.s4 1983009808
        %v1419 = vunpack.c.0.s8 %v1418
        %v1420 = vlaneseq
        %v1421 = vshrl.u32 %v1420, 7
        %v1422 = vsub.s32 %v1419, %v1421
        %v1423 = vrot.slane %v1409, %v1422
        %v1424 = vcombine.low %v1368, %v1384
        %v1425 = vcombine.high %v1368, %v1384
        %v1427 = vunpack.c.l.s4 1934713408
        %v1428 = vunpack.c.0.s8 %v1427
        %v1429 = vlaneseq
        %v1430 = vshrl.u32 %v1429, 7
        %v1431 = vsub.s32 %v1428, %v1430
        %v1432 = vrot.slane %v1424, %v1431
        %v1434 = vunpack.c.l.s4 1934713408
        %v1435 = vunpack.c.0.s8 %v1434
        %v1436 = vlaneseq
        %v1437 = vshrl.u32 %v1436, 7
        %v1438 = vsub.s32 %v1435, %v1437
        %v1439 = vrot.slane %v1425, %v1438
        %v1440 = vcombine.low %v1375, %v1391
        %v1441 = vcombine.high %v1375, %v1391
        %v1443 = vunpack.c.l.s4 1934713408
        %v1444 = vunpack.c.0.s8 %v1443
        %v1445 = vlaneseq
        %v1446 = vshrl.u32 %v1445, 7
        %v1447 = vsub.s32 %v1444, %v1446
        %v1448 = vrot.slane %v1440, %v1447
        %v1450 = vunpack.c.l.s4 1934713408
        %v1451 = vunpack.c.0.s8 %v1450
        %v1452 = vlaneseq
        %v1453 = vshrl.u32 %v1452, 7
        %v1454 = vsub.s32 %v1451, %v1453
        %v1455 = vrot.slane %v1441, %v1454
        %v1456 = vcombine.low %v1400, %v1416
        %v1457 = vcombine.high %v1400, %v1416
        %v1459 = vunpack.c.l.s4 1934713408
        %v1460 = vunpack.c.0.s8 %v1459
        %v1461 = vlaneseq
        %v1462 = vshrl.u32 %v1461, 7
        %v1463 = vsub.s32 %v1460, %v1462
        %v1464 = vrot.slane %v1456, %v1463
        %v1466 = vunpack.c.l.s4 1934713408
        %v1467 = vunpack.c.0.s8 %v1466
        %v1468 = vlaneseq
        %v1469 = vshrl.u32 %v1468, 7
        %v1470 = vsub.s32 %v1467, %v1469
        %v1471 = vrot.slane %v1457, %v1470
        %v1472 = vcombine.low %v1407, %v1423
        %v1473 = vcombine.high %v1407, %v1423
        %v1475 = vunpack.c.l.s4 1934713408
        %v1476 = vunpack.c.0.s8 %v1475
        %v1477 = vlaneseq
        %v1478 = vshrl.u32 %v1477, 7
        %v1479 = vsub.s32 %v1476, %v1478
        %v1480 = vrot.slane %v1472, %v1479
        %v1482 = vunpack.c.l.s4 1934713408
        %v1483 = vunpack.c.0.s8 %v1482
        %v1484 = vlaneseq
        %v1485 = vshrl.u32 %v1484, 7
        %v1486 = vsub.s32 %v1483, %v1485
        %v1487 = vrot.slane %v1473, %v1486
        %v1488 = vcombine.low %v1432, %v1464
        %v1489 = vcombine.high %v1432, %v1464
        %v1490 = vcombine.low %v1439, %v1471
        %v1491 = vcombine.high %v1439, %v1471
        %v1492 = vcombine.low %v1448, %v1480
        %v1493 = vcombine.high %v1448, %v1480
        %v1494 = vcombine.low %v1455, %v1487
        %v1495 = vcombine.high %v1455, %v1487
        %v1496 = vcombine.low %v1125, %v1202
        %v1498 = vunpack.c.l.s4 1983009808
        %v1499 = vunpack.c.0.s8 %v1498
        %v1500 = vlaneseq
        %v1501 = vshrl.u32 %v1500, 7
        %v1502 = vsub.s32 %v1499, %v1501
        %v1503 = vrot.slane %v1496, %v1502
        %v1504 = vcombine.low %v1127, %v1204
        %v1506 = vunpack.c.l.s4 1983009808
        %v1507 = vunpack.c.0.s8 %v1506
        %v1508 = vlaneseq
        %v1509 = vshrl.u32 %v1508, 7
        %v1510 = vsub.s32 %v1507, %v1509
        %v1511 = vrot.slane %v1504, %v1510
        %v1512 = vcombine.low %v1279, %v1356
        %v1514 = vunpack.c.l.s4 1983009808
        %v1515 = vunpack.c.0.s8 %v1514
        %v1516 = vlaneseq
        %v1517 = vshrl.u32 %v1516, 7
        %v1518 = vsub.s32 %v1515, %v1517
        %v1519 = vrot.slane %v1512, %v1518
        %v1520 = vcombine.low %v1281, %v1358
        %v1522 = vunpack.c.l.s4 1983009808
        %v1523 = vunpack.c.0.s8 %v1522
        %v1524 = vlaneseq
        %v1525 = vshrl.u32 %v1524, 7
        %v1526 = vsub.s32 %v1523, %v1525
        %v1527 = vrot.slane %v1520, %v1526
        %v1528 = vcombine.low %v1503, %v1511
        %v1530 = vunpack.c.l.s4 1934713408
        %v1531 = vunpack.c.0.s8 %v1530
        %v1532 = vlaneseq
        %v1533 = vshrl.u32 %v1532, 7
        %v1534 = vsub.s32 %v1531, %v1533
        %v1535 = vrot.slane %v1528, %v1534
        %v1536 = vcombine.low %v1519, %v1527
        %v1538 = vunpack.c.l.s4 1934713408
        %v1539 = vunpack.c.0.s8 %v1538
        %v1540 = vlaneseq
        %v1541 = vshrl.u32 %v1540, 7
        %v1542 = vsub.s32 %v1539, %v1541
        %v1543 = vrot.slane %v1536, %v1542
        %v1544 = vcombine.low %v1535, %v1543
        %v1545 = vcombine.high %v1535, %v1543
        %v1546 = vld [vmem:[%s3] sm:$0xff]
        %v1547 = vld [vmem:[%s3 + $0x8] sm:$0xff]
        %v1549 = vsel %vm529, %v1546, 0
        %v1552 = vsel %vm529, %v1547, 0
        %1554 = vmatprep.subr.mxu0 0.0
        %1555 = vmatpush1.msra.mxu0 %v1488
        %1556 = vmatprep.subr.mxu0 0.0
        %1557 = vmatpush1.msra.mxu0 0.0
        %1558 = vmatprep.subr.mxu0 0.0
        %1559 = vmatpush1.msra.mxu0 0.0
        %1560 = vmatprep.subr.mxu0 0.0
        %1561 = vmatpush1.msra.mxu0 0.0
        %1562 = vmatprep.subr.mxu0 0.0
        %1563 = vmatpush1.msra.mxu0 0.0
        %1564 = vmatprep.subr.mxu0 0.0
        %1565 = vmatpush1.msra.mxu0 0.0
        %1566 = vmatprep.subr.mxu0 0.0
        %1567 = vmatpush1.msra.mxu0 0.0
        %1568 = vmatprep.subr.mxu0 0.0
        %1569 = vmatpush1.msra.mxu0 0.0
        %1570 = vmatprep.subr.mxu0 0.0
        %1571 = vmatpush1.msra.mxu0 0.0
        %1572 = vmatprep.subr.mxu0 0.0
        %1573 = vmatpush1.msra.mxu0 0.0
        %1574 = vmatprep.subr.mxu0 0.0
        %1575 = vmatpush1.msra.mxu0 0.0
        %1576 = vmatprep.subr.mxu0 0.0
        %1577 = vmatpush1.msra.mxu0 0.0
        %1578 = vmatprep.subr.mxu0 0.0
        %1579 = vmatpush1.msra.mxu0 0.0
        %1580 = vmatprep.subr.mxu0 0.0
        %1581 = vmatpush1.msra.mxu0 0.0
        %1582 = vmatprep.subr.mxu0 0.0
        %1583 = vmatpush1.msra.mxu0 0.0
        %1584 = vmatprep.subr.mxu0 0.0
        %1585 = vmatpush1.msra.mxu0 0.0
        %1586 = vmatprep.subr.mxu0 0.0
        %1587 = vmatpush1.msra.mxu0 0.0
        %1588 = vmatprep.subr.mxu0 0.0
        %1589 = vmatpush1.msra.mxu0 0.0
        %1590 = vmatprep.subr.mxu0 0.0
        %1591 = vmatpush1.msra.mxu0 0.0
        %1592 = vmatprep.subr.mxu0 0.0
        %1593 = vmatpush1.msra.mxu0 0.0
        %1594 = vmatprep.subr.mxu0 0.0
        %1595 = vmatpush1.msra.mxu0 0.0
        %1596 = vmatprep.subr.mxu0 0.0
        %1597 = vmatpush1.msra.mxu0 0.0
        %1598 = vmatprep.subr.mxu0 0.0
        %1599 = vmatpush1.msra.mxu0 0.0
        %1600 = vmatprep.subr.mxu0 0.0
        %1601 = vmatpush1.msra.mxu0 0.0
        %1602 = vmatprep.subr.mxu0 0.0
        %1603 = vmatpush1.msra.mxu0 0.0
        %1604 = vmatprep.subr.mxu0 0.0
        %1605 = vmatpush1.msra.mxu0 0.0
        %1606 = vmatprep.subr.mxu0 0.0
        %1607 = vmatpush1.msra.mxu0 0.0
        %1608 = vmatprep.subr.mxu0 0.0
        %1609 = vmatpush1.msra.mxu0 0.0
        %1610 = vmatprep.subr.mxu0 0.0
        %1611 = vmatpush1.msra.mxu0 0.0
        %1612 = vmatprep.subr.mxu0 0.0
        %1613 = vmatpush1.msra.mxu0 0.0
        %1614 = vmatprep.subr.mxu0 0.0
        %1615 = vmatpush1.msra.mxu0 0.0
        %1616 = vmatprep.subr.mxu0 0.0
        %1617 = vmatpush1.msra.mxu0 0.0
        %1618 = vmatprep.mubr.f32.mxu0 0.0
        %1619 = vmatmul.mubr.f32.gmra.mrb[0].mxu0 %v1549
        %v1620 = vpop.f32.mrb[0].mxu0
        %v1621 = vadd.f32 0.0, %v1620
        %v1622 = vpop.f32.mrb[0].mxu0
        %1623 = vmatprep.mubr.f32.mxu0 0.0
        %1624 = vmatmul.mubr.f32.gmra.mrb[0].mxu0 %v1552
        %v1625 = vpop.f32.mrb[0].mxu0
        %v1626 = vadd.f32 0.0, %v1625
        %v1627 = vpop.f32.mrb[0].mxu0
        %1628 = vdwg.mxu0
        %v1629 = vpack.c.bf16 %v1626, %v1621
        %v1631 = vunpack.c.l.b16 %v1629
        %v1632 = vunpack.c.h.b16 %v1629
        %v1633 = vpack.c.b16 %v1631, %v1631
        %v1634 = vpack.c.b16 %v1632, %v1632
        %v1636 = vshrl.u32 %v1633, 16
        %v1638 = vrot.slane %v1636, 7
        %v1639 = vshll.u32 %v1633, 16
        %v1641 = vor.u32 %v1638, %v1639
        %v1642 = vrot.slane %v1638, 4
        %v1644 = vshrl.u32 %v1634, 16
        %v1646 = vrot.slane %v1644, 7
        %v1647 = vshll.u32 %v1634, 16
        %v1649 = vor.u32 %v1646, %v1647
        %v1650 = vsel %vm759, %v1642, %v1649
        %v1651 = vrot.slane %v1646, 4
        %v1655 = vld [vmem:[#allocation2 + $0x4] sm:$0xf]
        %v1656 = vsel %vm962, %v1641, %v1655
        %1657 = vst [vmem:[#allocation2 + $0x4] sm:$0xf] %v1656
        %1658 = vst [vmem:[#allocation2 + $0xc] sm:$0xf] %v1650
        %v1659 = vld [vmem:[#allocation2 + $0x14] sm:$0x1]
        %v1660 = vsel %vm968, %v1651, %v1659
        %1661 = vst [vmem:[#allocation2 + $0x14] sm:$0x1] %v1660
        %1662 = vmatprep.subr.mxu0 0.0
        %1663 = vmatpush1.msra.mxu0 %v1489
        %1664 = vmatprep.subr.mxu0 0.0
        %1665 = vmatpush1.msra.mxu0 0.0
        %1666 = vmatprep.subr.mxu0 0.0
        %1667 = vmatpush1.msra.mxu0 0.0
        %1668 = vmatprep.subr.mxu0 0.0
        %1669 = vmatpush1.msra.mxu0 0.0
        %1670 = vmatprep.subr.mxu0 0.0
        %1671 = vmatpush1.msra.mxu0 0.0
        %1672 = vmatprep.subr.mxu0 0.0
        %1673 = vmatpush1.msra.mxu0 0.0
        %1674 = vmatprep.subr.mxu0 0.0
        %1675 = vmatpush1.msra.mxu0 0.0
        %1676 = vmatprep.subr.mxu0 0.0
        %1677 = vmatpush1.msra.mxu0 0.0
        %1678 = vmatprep.subr.mxu0 0.0
        %1679 = vmatpush1.msra.mxu0 0.0
        %1680 = vmatprep.subr.mxu0 0.0
        %1681 = vmatpush1.msra.mxu0 0.0
        %1682 = vmatprep.subr.mxu0 0.0
        %1683 = vmatpush1.msra.mxu0 0.0
        %1684 = vmatprep.subr.mxu0 0.0
        %1685 = vmatpush1.msra.mxu0 0.0
        %1686 = vmatprep.subr.mxu0 0.0
        %1687 = vmatpush1.msra.mxu0 0.0
        %1688 = vmatprep.subr.mxu0 0.0
        %1689 = vmatpush1.msra.mxu0 0.0
        %1690 = vmatprep.subr.mxu0 0.0
        %1691 = vmatpush1.msra.mxu0 0.0
        %1692 = vmatprep.subr.mxu0 0.0
        %1693 = vmatpush1.msra.mxu0 0.0
        %1694 = vmatprep.subr.mxu0 0.0
        %1695 = vmatpush1.msra.mxu0 0.0
        %1696 = vmatprep.subr.mxu0 0.0
        %1697 = vmatpush1.msra.mxu0 0.0
        %1698 = vmatprep.subr.mxu0 0.0
        %1699 = vmatpush1.msra.mxu0 0.0
        %1700 = vmatprep.subr.mxu0 0.0
        %1701 = vmatpush1.msra.mxu0 0.0
        %1702 = vmatprep.subr.mxu0 0.0
        %1703 = vmatpush1.msra.mxu0 0.0
        %1704 = vmatprep.subr.mxu0 0.0
        %1705 = vmatpush1.msra.mxu0 0.0
        %1706 = vmatprep.subr.mxu0 0.0
        %1707 = vmatpush1.msra.mxu0 0.0
        %1708 = vmatprep.subr.mxu0 0.0
        %1709 = vmatpush1.msra.mxu0 0.0
        %1710 = vmatprep.subr.mxu0 0.0
        %1711 = vmatpush1.msra.mxu0 0.0
        %1712 = vmatprep.subr.mxu0 0.0
        %1713 = vmatpush1.msra.mxu0 0.0
        %1714 = vmatprep.subr.mxu0 0.0
        %1715 = vmatpush1.msra.mxu0 0.0
        %1716 = vmatprep.subr.mxu0 0.0
        %1717 = vmatpush1.msra.mxu0 0.0
        %1718 = vmatprep.subr.mxu0 0.0
        %1719 = vmatpush1.msra.mxu0 0.0
        %1720 = vmatprep.subr.mxu0 0.0
        %1721 = vmatpush1.msra.mxu0 0.0
        %1722 = vmatprep.subr.mxu0 0.0
        %1723 = vmatpush1.msra.mxu0 0.0
        %1724 = vmatprep.subr.mxu0 0.0
        %1725 = vmatpush1.msra.mxu0 0.0
        %1726 = vmatprep.mubr.f32.mxu0 0.0
        %1727 = vmatmul.mubr.f32.gmra.mrb[0].mxu0 %v1549
        %v1728 = vpop.f32.mrb[0].mxu0
        %v1729 = vadd.f32 0.0, %v1728
        %v1730 = vpop.f32.mrb[0].mxu0
        %1731 = vmatprep.mubr.f32.mxu0 0.0
        %1732 = vmatmul.mubr.f32.gmra.mrb[0].mxu0 %v1552
        %v1733 = vpop.f32.mrb[0].mxu0
        %v1734 = vadd.f32 0.0, %v1733
        %v1735 = vpop.f32.mrb[0].mxu0
        %1736 = vdwg.mxu0
        %v1737 = vpack.c.bf16 %v1734, %v1729
        %v1739 = vunpack.c.l.b16 %v1737
        %v1740 = vunpack.c.h.b16 %v1737
        %v1741 = vpack.c.b16 %v1739, %v1739
        %v1742 = vpack.c.b16 %v1740, %v1740
        %v1744 = vshrl.u32 %v1741, 16
        %v1746 = vrot.slane %v1744, 7
        %v1747 = vshll.u32 %v1741, 16
        %v1749 = vor.u32 %v1746, %v1747
        %v1750 = vrot.slane %v1746, 4
        %v1752 = vshrl.u32 %v1742, 16
        %v1754 = vrot.slane %v1752, 7
        %v1755 = vshll.u32 %v1742, 16
        %v1757 = vor.u32 %v1754, %v1755
        %v1758 = vsel %vm759, %v1750, %v1757
        %v1759 = vrot.slane %v1754, 4
        %s1763 = scalar_lea.vmem [#allocation2], 24
        %v1764 = vld [vmem:[%s1763 + $0x4] sm:$0xf]
        %v1765 = vsel %vm962, %v1749, %v1764
        %1766 = vst [vmem:[%s1763 + $0x4] sm:$0xf] %v1765
        %1767 = vst [vmem:[%s1763 + $0xc] sm:$0xf] %v1758
        %v1768 = vld [vmem:[%s1763 + $0x14] sm:$0x1]
        %v1769 = vsel %vm968, %v1759, %v1768
        %1770 = vst [vmem:[%s1763 + $0x14] sm:$0x1] %v1769
        %1771 = vmatprep.subr.mxu0 0.0
        %1772 = vmatpush1.msra.mxu0 %v1490
        %1773 = vmatprep.subr.mxu0 0.0
        %1774 = vmatpush1.msra.mxu0 0.0
        %1775 = vmatprep.subr.mxu0 0.0
        %1776 = vmatpush1.msra.mxu0 0.0
        %1777 = vmatprep.subr.mxu0 0.0
        %1778 = vmatpush1.msra.mxu0 0.0
        %1779 = vmatprep.subr.mxu0 0.0
        %1780 = vmatpush1.msra.mxu0 0.0
        %1781 = vmatprep.subr.mxu0 0.0
        %1782 = vmatpush1.msra.mxu0 0.0
        %1783 = vmatprep.subr.mxu0 0.0
        %1784 = vmatpush1.msra.mxu0 0.0
        %1785 = vmatprep.subr.mxu0 0.0
        %1786 = vmatpush1.msra.mxu0 0.0
        %1787 = vmatprep.subr.mxu0 0.0
        %1788 = vmatpush1.msra.mxu0 0.0
        %1789 = vmatprep.subr.mxu0 0.0
        %1790 = vmatpush1.msra.mxu0 0.0
        %1791 = vmatprep.subr.mxu0 0.0
        %1792 = vmatpush1.msra.mxu0 0.0
        %1793 = vmatprep.subr.mxu0 0.0
        %1794 = vmatpush1.msra.mxu0 0.0
        %1795 = vmatprep.subr.mxu0 0.0
        %1796 = vmatpush1.msra.mxu0 0.0
        %1797 = vmatprep.subr.mxu0 0.0
        %1798 = vmatpush1.msra.mxu0 0.0
        %1799 = vmatprep.subr.mxu0 0.0
        %1800 = vmatpush1.msra.mxu0 0.0
        %1801 = vmatprep.subr.mxu0 0.0
        %1802 = vmatpush1.msra.mxu0 0.0
        %1803 = vmatprep.subr.mxu0 0.0
        %1804 = vmatpush1.msra.mxu0 0.0
        %1805 = vmatprep.subr.mxu0 0.0
        %1806 = vmatpush1.msra.mxu0 0.0
        %1807 = vmatprep.subr.mxu0 0.0
        %1808 = vmatpush1.msra.mxu0 0.0
        %1809 = vmatprep.subr.mxu0 0.0
        %1810 = vmatpush1.msra.mxu0 0.0
        %1811 = vmatprep.subr.mxu0 0.0
        %1812 = vmatpush1.msra.mxu0 0.0
        %1813 = vmatprep.subr.mxu0 0.0
        %1814 = vmatpush1.msra.mxu0 0.0
        %1815 = vmatprep.subr.mxu0 0.0
        %1816 = vmatpush1.msra.mxu0 0.0
        %1817 = vmatprep.subr.mxu0 0.0
        %1818 = vmatpush1.msra.mxu0 0.0
        %1819 = vmatprep.subr.mxu0 0.0
        %1820 = vmatpush1.msra.mxu0 0.0
        %1821 = vmatprep.subr.mxu0 0.0
        %1822 = vmatpush1.msra.mxu0 0.0
        %1823 = vmatprep.subr.mxu0 0.0
        %1824 = vmatpush1.msra.mxu0 0.0
        %1825 = vmatprep.subr.mxu0 0.0
        %1826 = vmatpush1.msra.mxu0 0.0
        %1827 = vmatprep.subr.mxu0 0.0
        %1828 = vmatpush1.msra.mxu0 0.0
        %1829 = vmatprep.subr.mxu0 0.0
        %1830 = vmatpush1.msra.mxu0 0.0
        %1831 = vmatprep.subr.mxu0 0.0
        %1832 = vmatpush1.msra.mxu0 0.0
        %1833 = vmatprep.subr.mxu0 0.0
        %1834 = vmatpush1.msra.mxu0 0.0
        %1835 = vmatprep.mubr.f32.mxu0 0.0
        %1836 = vmatmul.mubr.f32.gmra.mrb[0].mxu0 %v1549
        %v1837 = vpop.f32.mrb[0].mxu0
        %v1838 = vadd.f32 0.0, %v1837
        %v1839 = vpop.f32.mrb[0].mxu0
        %1840 = vmatprep.mubr.f32.mxu0 0.0
        %1841 = vmatmul.mubr.f32.gmra.mrb[0].mxu0 %v1552
        %v1842 = vpop.f32.mrb[0].mxu0
        %v1843 = vadd.f32 0.0, %v1842
        %v1844 = vpop.f32.mrb[0].mxu0
        %1845 = vdwg.mxu0
        %v1846 = vpack.c.bf16 %v1843, %v1838
        %v1848 = vunpack.c.l.b16 %v1846
        %v1849 = vunpack.c.h.b16 %v1846
        %v1850 = vpack.c.b16 %v1848, %v1848
        %v1851 = vpack.c.b16 %v1849, %v1849
        %v1853 = vshrl.u32 %v1850, 16
        %v1855 = vrot.slane %v1853, 7
        %v1856 = vshll.u32 %v1850, 16
        %v1858 = vor.u32 %v1855, %v1856
        %v1859 = vrot.slane %v1855, 4
        %v1861 = vshrl.u32 %v1851, 16
        %v1863 = vrot.slane %v1861, 7
        %v1864 = vshll.u32 %v1851, 16
        %v1866 = vor.u32 %v1863, %v1864
        %v1867 = vsel %vm759, %v1859, %v1866
        %v1868 = vrot.slane %v1863, 4
        %s1872 = scalar_lea.vmem [#allocation2], 48
        %v1873 = vld [vmem:[%s1872 + $0x4] sm:$0xf]
        %v1874 = vsel %vm962, %v1858, %v1873
        %1875 = vst [vmem:[%s1872 + $0x4] sm:$0xf] %v1874
        %1876 = vst [vmem:[%s1872 + $0xc] sm:$0xf] %v1867
        %v1877 = vld [vmem:[%s1872 + $0x14] sm:$0x1]
        %v1878 = vsel %vm968, %v1868, %v1877
        %1879 = vst [vmem:[%s1872 + $0x14] sm:$0x1] %v1878
        %1880 = vmatprep.subr.mxu0 0.0
        %1881 = vmatpush1.msra.mxu0 %v1491
        %1882 = vmatprep.subr.mxu0 0.0
        %1883 = vmatpush1.msra.mxu0 0.0
        %1884 = vmatprep.subr.mxu0 0.0
        %1885 = vmatpush1.msra.mxu0 0.0
        %1886 = vmatprep.subr.mxu0 0.0
        %1887 = vmatpush1.msra.mxu0 0.0
        %1888 = vmatprep.subr.mxu0 0.0
        %1889 = vmatpush1.msra.mxu0 0.0
        %1890 = vmatprep.subr.mxu0 0.0
        %1891 = vmatpush1.msra.mxu0 0.0
        %1892 = vmatprep.subr.mxu0 0.0
        %1893 = vmatpush1.msra.mxu0 0.0
        %1894 = vmatprep.subr.mxu0 0.0
        %1895 = vmatpush1.msra.mxu0 0.0
        %1896 = vmatprep.subr.mxu0 0.0
        %1897 = vmatpush1.msra.mxu0 0.0
        %1898 = vmatprep.subr.mxu0 0.0
        %1899 = vmatpush1.msra.mxu0 0.0
        %1900 = vmatprep.subr.mxu0 0.0
        %1901 = vmatpush1.msra.mxu0 0.0
        %1902 = vmatprep.subr.mxu0 0.0
        %1903 = vmatpush1.msra.mxu0 0.0
        %1904 = vmatprep.subr.mxu0 0.0
        %1905 = vmatpush1.msra.mxu0 0.0
        %1906 = vmatprep.subr.mxu0 0.0
        %1907 = vmatpush1.msra.mxu0 0.0
        %1908 = vmatprep.subr.mxu0 0.0
        %1909 = vmatpush1.msra.mxu0 0.0
        %1910 = vmatprep.subr.mxu0 0.0
        %1911 = vmatpush1.msra.mxu0 0.0
        %1912 = vmatprep.subr.mxu0 0.0
        %1913 = vmatpush1.msra.mxu0 0.0
        %1914 = vmatprep.subr.mxu0 0.0
        %1915 = vmatpush1.msra.mxu0 0.0
        %1916 = vmatprep.subr.mxu0 0.0
        %1917 = vmatpush1.msra.mxu0 0.0
        %1918 = vmatprep.subr.mxu0 0.0
        %1919 = vmatpush1.msra.mxu0 0.0
        %1920 = vmatprep.subr.mxu0 0.0
        %1921 = vmatpush1.msra.mxu0 0.0
        %1922 = vmatprep.subr.mxu0 0.0
        %1923 = vmatpush1.msra.mxu0 0.0
        %1924 = vmatprep.subr.mxu0 0.0
        %1925 = vmatpush1.msra.mxu0 0.0
        %1926 = vmatprep.subr.mxu0 0.0
        %1927 = vmatpush1.msra.mxu0 0.0
        %1928 = vmatprep.subr.mxu0 0.0
        %1929 = vmatpush1.msra.mxu0 0.0
        %1930 = vmatprep.subr.mxu0 0.0
        %1931 = vmatpush1.msra.mxu0 0.0
        %1932 = vmatprep.subr.mxu0 0.0
        %1933 = vmatpush1.msra.mxu0 0.0
        %1934 = vmatprep.subr.mxu0 0.0
        %1935 = vmatpush1.msra.mxu0 0.0
        %1936 = vmatprep.subr.mxu0 0.0
        %1937 = vmatpush1.msra.mxu0 0.0
        %1938 = vmatprep.subr.mxu0 0.0
        %1939 = vmatpush1.msra.mxu0 0.0
        %1940 = vmatprep.subr.mxu0 0.0
        %1941 = vmatpush1.msra.mxu0 0.0
        %1942 = vmatprep.subr.mxu0 0.0
        %1943 = vmatpush1.msra.mxu0 0.0
        %1944 = vmatprep.mubr.f32.mxu0 0.0
        %1945 = vmatmul.mubr.f32.gmra.mrb[0].mxu0 %v1549
        %v1946 = vpop.f32.mrb[0].mxu0
        %v1947 = vadd.f32 0.0, %v1946
        %v1948 = vpop.f32.mrb[0].mxu0
        %1949 = vmatprep.mubr.f32.mxu0 0.0
        %1950 = vmatmul.mubr.f32.gmra.mrb[0].mxu0 %v1552
        %v1951 = vpop.f32.mrb[0].mxu0
        %v1952 = vadd.f32 0.0, %v1951
        %v1953 = vpop.f32.mrb[0].mxu0
        %1954 = vdwg.mxu0
        %v1955 = vpack.c.bf16 %v1952, %v1947
        %v1957 = vunpack.c.l.b16 %v1955
        %v1958 = vunpack.c.h.b16 %v1955
        %v1959 = vpack.c.b16 %v1957, %v1957
        %v1960 = vpack.c.b16 %v1958, %v1958
        %v1962 = vshrl.u32 %v1959, 16
        %v1964 = vrot.slane %v1962, 7
        %v1965 = vshll.u32 %v1959, 16
        %v1967 = vor.u32 %v1964, %v1965
        %v1968 = vrot.slane %v1964, 4
        %v1970 = vshrl.u32 %v1960, 16
        %v1972 = vrot.slane %v1970, 7
        %v1973 = vshll.u32 %v1960, 16
        %v1975 = vor.u32 %v1972, %v1973
        %v1976 = vsel %vm759, %v1968, %v1975
        %v1977 = vrot.slane %v1972, 4
        %s1981 = scalar_lea.vmem [#allocation2], 72
        %v1982 = vld [vmem:[%s1981 + $0x4] sm:$0xf]
        %v1983 = vsel %vm962, %v1967, %v1982
        %1984 = vst [vmem:[%s1981 + $0x4] sm:$0xf] %v1983
        %1985 = vst [vmem:[%s1981 + $0xc] sm:$0xf] %v1976
        %v1986 = vld [vmem:[%s1981 + $0x14] sm:$0x1]
        %v1987 = vsel %vm968, %v1977, %v1986
        %1988 = vst [vmem:[%s1981 + $0x14] sm:$0x1] %v1987
        %1989 = vmatprep.subr.mxu0 0.0
        %1990 = vmatpush1.msra.mxu0 %v1492
        %1991 = vmatprep.subr.mxu0 0.0
        %1992 = vmatpush1.msra.mxu0 0.0
        %1993 = vmatprep.subr.mxu0 0.0
        %1994 = vmatpush1.msra.mxu0 0.0
        %1995 = vmatprep.subr.mxu0 0.0
        %1996 = vmatpush1.msra.mxu0 0.0
        %1997 = vmatprep.subr.mxu0 0.0
        %1998 = vmatpush1.msra.mxu0 0.0
        %1999 = vmatprep.subr.mxu0 0.0
        %2000 = vmatpush1.msra.mxu0 0.0
        %2001 = vmatprep.subr.mxu0 0.0
        %2002 = vmatpush1.msra.mxu0 0.0
        %2003 = vmatprep.subr.mxu0 0.0
        %2004 = vmatpush1.msra.mxu0 0.0
        %2005 = vmatprep.subr.mxu0 0.0
        %2006 = vmatpush1.msra.mxu0 0.0
        %2007 = vmatprep.subr.mxu0 0.0
        %2008 = vmatpush1.msra.mxu0 0.0
        %2009 = vmatprep.subr.mxu0 0.0
        %2010 = vmatpush1.msra.mxu0 0.0
        %2011 = vmatprep.subr.mxu0 0.0
        %2012 = vmatpush1.msra.mxu0 0.0
        %2013 = vmatprep.subr.mxu0 0.0
        %2014 = vmatpush1.msra.mxu0 0.0
        %2015 = vmatprep.subr.mxu0 0.0
        %2016 = vmatpush1.msra.mxu0 0.0
        %2017 = vmatprep.subr.mxu0 0.0
        %2018 = vmatpush1.msra.mxu0 0.0
        %2019 = vmatprep.subr.mxu0 0.0
        %2020 = vmatpush1.msra.mxu0 0.0
        %2021 = vmatprep.subr.mxu0 0.0
        %2022 = vmatpush1.msra.mxu0 0.0
        %2023 = vmatprep.subr.mxu0 0.0
        %2024 = vmatpush1.msra.mxu0 0.0
        %2025 = vmatprep.subr.mxu0 0.0
        %2026 = vmatpush1.msra.mxu0 0.0
        %2027 = vmatprep.subr.mxu0 0.0
        %2028 = vmatpush1.msra.mxu0 0.0
        %2029 = vmatprep.subr.mxu0 0.0
        %2030 = vmatpush1.msra.mxu0 0.0
        %2031 = vmatprep.subr.mxu0 0.0
        %2032 = vmatpush1.msra.mxu0 0.0
        %2033 = vmatprep.subr.mxu0 0.0
        %2034 = vmatpush1.msra.mxu0 0.0
        %2035 = vmatprep.subr.mxu0 0.0
        %2036 = vmatpush1.msra.mxu0 0.0
        %2037 = vmatprep.subr.mxu0 0.0
        %2038 = vmatpush1.msra.mxu0 0.0
        %2039 = vmatprep.subr.mxu0 0.0
        %2040 = vmatpush1.msra.mxu0 0.0
        %2041 = vmatprep.subr.mxu0 0.0
        %2042 = vmatpush1.msra.mxu0 0.0
        %2043 = vmatprep.subr.mxu0 0.0
        %2044 = vmatpush1.msra.mxu0 0.0
        %2045 = vmatprep.subr.mxu0 0.0
        %2046 = vmatpush1.msra.mxu0 0.0
        %2047 = vmatprep.subr.mxu0 0.0
        %2048 = vmatpush1.msra.mxu0 0.0
        %2049 = vmatprep.subr.mxu0 0.0
        %2050 = vmatpush1.msra.mxu0 0.0
        %2051 = vmatprep.subr.mxu0 0.0
        %2052 = vmatpush1.msra.mxu0 0.0
        %2053 = vmatprep.mubr.f32.mxu0 0.0
        %2054 = vmatmul.mubr.f32.gmra.mrb[0].mxu0 %v1549
        %v2055 = vpop.f32.mrb[0].mxu0
        %v2056 = vadd.f32 0.0, %v2055
        %v2057 = vpop.f32.mrb[0].mxu0
        %2058 = vmatprep.mubr.f32.mxu0 0.0
        %2059 = vmatmul.mubr.f32.gmra.mrb[0].mxu0 %v1552
        %v2060 = vpop.f32.mrb[0].mxu0
        %v2061 = vadd.f32 0.0, %v2060
        %v2062 = vpop.f32.mrb[0].mxu0
        %2063 = vdwg.mxu0
        %v2064 = vpack.c.bf16 %v2061, %v2056
        %v2066 = vunpack.c.l.b16 %v2064
        %v2067 = vunpack.c.h.b16 %v2064
        %v2068 = vpack.c.b16 %v2066, %v2066
        %v2069 = vpack.c.b16 %v2067, %v2067
        %v2071 = vshrl.u32 %v2068, 16
        %v2073 = vrot.slane %v2071, 7
        %v2074 = vshll.u32 %v2068, 16
        %v2076 = vor.u32 %v2073, %v2074
        %v2077 = vrot.slane %v2073, 4
        %v2079 = vshrl.u32 %v2069, 16
        %v2081 = vrot.slane %v2079, 7
        %v2082 = vshll.u32 %v2069, 16
        %v2084 = vor.u32 %v2081, %v2082
        %v2085 = vsel %vm759, %v2077, %v2084
        %v2086 = vrot.slane %v2081, 4
        %s2090 = scalar_lea.vmem [#allocation2], 96
        %v2091 = vld [vmem:[%s2090 + $0x4] sm:$0xf]
        %v2092 = vsel %vm962, %v2076, %v2091
        %2093 = vst [vmem:[%s2090 + $0x4] sm:$0xf] %v2092
        %2094 = vst [vmem:[%s2090 + $0xc] sm:$0xf] %v2085
        %v2095 = vld [vmem:[%s2090 + $0x14] sm:$0x1]
        %v2096 = vsel %vm968, %v2086, %v2095
        %2097 = vst [vmem:[%s2090 + $0x14] sm:$0x1] %v2096
        %2098 = vmatprep.subr.mxu0 0.0
        %2099 = vmatpush1.msra.mxu0 %v1493
        %2100 = vmatprep.subr.mxu0 0.0
        %2101 = vmatpush1.msra.mxu0 0.0
        %2102 = vmatprep.subr.mxu0 0.0
        %2103 = vmatpush1.msra.mxu0 0.0
        %2104 = vmatprep.subr.mxu0 0.0
        %2105 = vmatpush1.msra.mxu0 0.0
        %2106 = vmatprep.subr.mxu0 0.0
        %2107 = vmatpush1.msra.mxu0 0.0
        %2108 = vmatprep.subr.mxu0 0.0
        %2109 = vmatpush1.msra.mxu0 0.0
        %2110 = vmatprep.subr.mxu0 0.0
        %2111 = vmatpush1.msra.mxu0 0.0
        %2112 = vmatprep.subr.mxu0 0.0
        %2113 = vmatpush1.msra.mxu0 0.0
        %2114 = vmatprep.subr.mxu0 0.0
        %2115 = vmatpush1.msra.mxu0 0.0
        %2116 = vmatprep.subr.mxu0 0.0
        %2117 = vmatpush1.msra.mxu0 0.0
        %2118 = vmatprep.subr.mxu0 0.0
        %2119 = vmatpush1.msra.mxu0 0.0
        %2120 = vmatprep.subr.mxu0 0.0
        %2121 = vmatpush1.msra.mxu0 0.0
        %2122 = vmatprep.subr.mxu0 0.0
        %2123 = vmatpush1.msra.mxu0 0.0
        %2124 = vmatprep.subr.mxu0 0.0
        %2125 = vmatpush1.msra.mxu0 0.0
        %2126 = vmatprep.subr.mxu0 0.0
        %2127 = vmatpush1.msra.mxu0 0.0
        %2128 = vmatprep.subr.mxu0 0.0
        %2129 = vmatpush1.msra.mxu0 0.0
        %2130 = vmatprep.subr.mxu0 0.0
        %2131 = vmatpush1.msra.mxu0 0.0
        %2132 = vmatprep.subr.mxu0 0.0
        %2133 = vmatpush1.msra.mxu0 0.0
        %2134 = vmatprep.subr.mxu0 0.0
        %2135 = vmatpush1.msra.mxu0 0.0
        %2136 = vmatprep.subr.mxu0 0.0
        %2137 = vmatpush1.msra.mxu0 0.0
        %2138 = vmatprep.subr.mxu0 0.0
        %2139 = vmatpush1.msra.mxu0 0.0
        %2140 = vmatprep.subr.mxu0 0.0
        %2141 = vmatpush1.msra.mxu0 0.0
        %2142 = vmatprep.subr.mxu0 0.0
        %2143 = vmatpush1.msra.mxu0 0.0
        %2144 = vmatprep.subr.mxu0 0.0
        %2145 = vmatpush1.msra.mxu0 0.0
        %2146 = vmatprep.subr.mxu0 0.0
        %2147 = vmatpush1.msra.mxu0 0.0
        %2148 = vmatprep.subr.mxu0 0.0
        %2149 = vmatpush1.msra.mxu0 0.0
        %2150 = vmatprep.subr.mxu0 0.0
        %2151 = vmatpush1.msra.mxu0 0.0
        %2152 = vmatprep.subr.mxu0 0.0
        %2153 = vmatpush1.msra.mxu0 0.0
        %2154 = vmatprep.subr.mxu0 0.0
        %2155 = vmatpush1.msra.mxu0 0.0
        %2156 = vmatprep.subr.mxu0 0.0
        %2157 = vmatpush1.msra.mxu0 0.0
        %2158 = vmatprep.subr.mxu0 0.0
        %2159 = vmatpush1.msra.mxu0 0.0
        %2160 = vmatprep.subr.mxu0 0.0
        %2161 = vmatpush1.msra.mxu0 0.0
        %2162 = vmatprep.mubr.f32.mxu0 0.0
        %2163 = vmatmul.mubr.f32.gmra.mrb[0].mxu0 %v1549
        %v2164 = vpop.f32.mrb[0].mxu0
        %v2165 = vadd.f32 0.0, %v2164
        %v2166 = vpop.f32.mrb[0].mxu0
        %2167 = vmatprep.mubr.f32.mxu0 0.0
        %2168 = vmatmul.mubr.f32.gmra.mrb[0].mxu0 %v1552
        %v2169 = vpop.f32.mrb[0].mxu0
        %v2170 = vadd.f32 0.0, %v2169
        %v2171 = vpop.f32.mrb[0].mxu0
        %2172 = vdwg.mxu0
        %v2173 = vpack.c.bf16 %v2170, %v2165
        %v2175 = vunpack.c.l.b16 %v2173
        %v2176 = vunpack.c.h.b16 %v2173
        %v2177 = vpack.c.b16 %v2175, %v2175
        %v2178 = vpack.c.b16 %v2176, %v2176
        %v2180 = vshrl.u32 %v2177, 16
        %v2182 = vrot.slane %v2180, 7
        %v2183 = vshll.u32 %v2177, 16
        %v2185 = vor.u32 %v2182, %v2183
        %v2186 = vrot.slane %v2182, 4
        %v2188 = vshrl.u32 %v2178, 16
        %v2190 = vrot.slane %v2188, 7
        %v2191 = vshll.u32 %v2178, 16
        %v2193 = vor.u32 %v2190, %v2191
        %v2194 = vsel %vm759, %v2186, %v2193
        %v2195 = vrot.slane %v2190, 4
        %s2199 = scalar_lea.vmem [#allocation2], 120
        %v2200 = vld [vmem:[%s2199 + $0x4] sm:$0xf]
        %v2201 = vsel %vm962, %v2185, %v2200
        %2202 = vst [vmem:[%s2199 + $0x4] sm:$0xf] %v2201
        %2203 = vst [vmem:[%s2199 + $0xc] sm:$0xf] %v2194
        %v2204 = vld [vmem:[%s2199 + $0x14] sm:$0x1]
        %v2205 = vsel %vm968, %v2195, %v2204
        %2206 = vst [vmem:[%s2199 + $0x14] sm:$0x1] %v2205
        %2207 = vmatprep.subr.mxu0 0.0
        %2208 = vmatpush1.msra.mxu0 %v1494
        %2209 = vmatprep.subr.mxu0 0.0
        %2210 = vmatpush1.msra.mxu0 0.0
        %2211 = vmatprep.subr.mxu0 0.0
        %2212 = vmatpush1.msra.mxu0 0.0
        %2213 = vmatprep.subr.mxu0 0.0
        %2214 = vmatpush1.msra.mxu0 0.0
        %2215 = vmatprep.subr.mxu0 0.0
        %2216 = vmatpush1.msra.mxu0 0.0
        %2217 = vmatprep.subr.mxu0 0.0
        %2218 = vmatpush1.msra.mxu0 0.0
        %2219 = vmatprep.subr.mxu0 0.0
        %2220 = vmatpush1.msra.mxu0 0.0
        %2221 = vmatprep.subr.mxu0 0.0
        %2222 = vmatpush1.msra.mxu0 0.0
        %2223 = vmatprep.subr.mxu0 0.0
        %2224 = vmatpush1.msra.mxu0 0.0
        %2225 = vmatprep.subr.mxu0 0.0
        %2226 = vmatpush1.msra.mxu0 0.0
        %2227 = vmatprep.subr.mxu0 0.0
        %2228 = vmatpush1.msra.mxu0 0.0
        %2229 = vmatprep.subr.mxu0 0.0
        %2230 = vmatpush1.msra.mxu0 0.0
        %2231 = vmatprep.subr.mxu0 0.0
        %2232 = vmatpush1.msra.mxu0 0.0
        %2233 = vmatprep.subr.mxu0 0.0
        %2234 = vmatpush1.msra.mxu0 0.0
        %2235 = vmatprep.subr.mxu0 0.0
        %2236 = vmatpush1.msra.mxu0 0.0
        %2237 = vmatprep.subr.mxu0 0.0
        %2238 = vmatpush1.msra.mxu0 0.0
        %2239 = vmatprep.subr.mxu0 0.0
        %2240 = vmatpush1.msra.mxu0 0.0
        %2241 = vmatprep.subr.mxu0 0.0
        %2242 = vmatpush1.msra.mxu0 0.0
        %2243 = vmatprep.subr.mxu0 0.0
        %2244 = vmatpush1.msra.mxu0 0.0
        %2245 = vmatprep.subr.mxu0 0.0
        %2246 = vmatpush1.msra.mxu0 0.0
        %2247 = vmatprep.subr.mxu0 0.0
        %2248 = vmatpush1.msra.mxu0 0.0
        %2249 = vmatprep.subr.mxu0 0.0
        %2250 = vmatpush1.msra.mxu0 0.0
        %2251 = vmatprep.subr.mxu0 0.0
        %2252 = vmatpush1.msra.mxu0 0.0
        %2253 = vmatprep.subr.mxu0 0.0
        %2254 = vmatpush1.msra.mxu0 0.0
        %2255 = vmatprep.subr.mxu0 0.0
        %2256 = vmatpush1.msra.mxu0 0.0
        %2257 = vmatprep.subr.mxu0 0.0
        %2258 = vmatpush1.msra.mxu0 0.0
        %2259 = vmatprep.subr.mxu0 0.0
        %2260 = vmatpush1.msra.mxu0 0.0
        %2261 = vmatprep.subr.mxu0 0.0
        %2262 = vmatpush1.msra.mxu0 0.0
        %2263 = vmatprep.subr.mxu0 0.0
        %2264 = vmatpush1.msra.mxu0 0.0
        %2265 = vmatprep.subr.mxu0 0.0
        %2266 = vmatpush1.msra.mxu0 0.0
        %2267 = vmatprep.subr.mxu0 0.0
        %2268 = vmatpush1.msra.mxu0 0.0
        %2269 = vmatprep.subr.mxu0 0.0
        %2270 = vmatpush1.msra.mxu0 0.0
        %2271 = vmatprep.mubr.f32.mxu0 0.0
        %2272 = vmatmul.mubr.f32.gmra.mrb[0].mxu0 %v1549
        %v2273 = vpop.f32.mrb[0].mxu0
        %v2274 = vadd.f32 0.0, %v2273
        %v2275 = vpop.f32.mrb[0].mxu0
        %2276 = vmatprep.mubr.f32.mxu0 0.0
        %2277 = vmatmul.mubr.f32.gmra.mrb[0].mxu0 %v1552
        %v2278 = vpop.f32.mrb[0].mxu0
        %v2279 = vadd.f32 0.0, %v2278
        %v2280 = vpop.f32.mrb[0].mxu0
        %2281 = vdwg.mxu0
        %v2282 = vpack.c.bf16 %v2279, %v2274
        %v2284 = vunpack.c.l.b16 %v2282
        %v2285 = vunpack.c.h.b16 %v2282
        %v2286 = vpack.c.b16 %v2284, %v2284
        %v2287 = vpack.c.b16 %v2285, %v2285
        %v2289 = vshrl.u32 %v2286, 16
        %v2291 = vrot.slane %v2289, 7
        %v2292 = vshll.u32 %v2286, 16
        %v2294 = vor.u32 %v2291, %v2292
        %v2295 = vrot.slane %v2291, 4
        %v2297 = vshrl.u32 %v2287, 16
        %v2299 = vrot.slane %v2297, 7
        %v2300 = vshll.u32 %v2287, 16
        %v2302 = vor.u32 %v2299, %v2300
        %v2303 = vsel %vm759, %v2295, %v2302
        %v2304 = vrot.slane %v2299, 4
        %s2308 = scalar_lea.vmem [#allocation2], 144
        %v2309 = vld [vmem:[%s2308 + $0x4] sm:$0xf]
        %v2310 = vsel %vm962, %v2294, %v2309
        %2311 = vst [vmem:[%s2308 + $0x4] sm:$0xf] %v2310
        %2312 = vst [vmem:[%s2308 + $0xc] sm:$0xf] %v2303
        %v2313 = vld [vmem:[%s2308 + $0x14] sm:$0x1]
        %v2314 = vsel %vm968, %v2304, %v2313
        %2315 = vst [vmem:[%s2308 + $0x14] sm:$0x1] %v2314
        %2316 = vmatprep.subr.mxu0 0.0
        %2317 = vmatpush1.msra.mxu0 %v1495
        %2318 = vmatprep.subr.mxu0 0.0
        %2319 = vmatpush1.msra.mxu0 0.0
        %2320 = vmatprep.subr.mxu0 0.0
        %2321 = vmatpush1.msra.mxu0 0.0
        %2322 = vmatprep.subr.mxu0 0.0
        %2323 = vmatpush1.msra.mxu0 0.0
        %2324 = vmatprep.subr.mxu0 0.0
        %2325 = vmatpush1.msra.mxu0 0.0
        %2326 = vmatprep.subr.mxu0 0.0
        %2327 = vmatpush1.msra.mxu0 0.0
        %2328 = vmatprep.subr.mxu0 0.0
        %2329 = vmatpush1.msra.mxu0 0.0
        %2330 = vmatprep.subr.mxu0 0.0
        %2331 = vmatpush1.msra.mxu0 0.0
        %2332 = vmatprep.subr.mxu0 0.0
        %2333 = vmatpush1.msra.mxu0 0.0
        %2334 = vmatprep.subr.mxu0 0.0
        %2335 = vmatpush1.msra.mxu0 0.0
        %2336 = vmatprep.subr.mxu0 0.0
        %2337 = vmatpush1.msra.mxu0 0.0
        %2338 = vmatprep.subr.mxu0 0.0
        %2339 = vmatpush1.msra.mxu0 0.0
        %2340 = vmatprep.subr.mxu0 0.0
        %2341 = vmatpush1.msra.mxu0 0.0
        %2342 = vmatprep.subr.mxu0 0.0
        %2343 = vmatpush1.msra.mxu0 0.0
        %2344 = vmatprep.subr.mxu0 0.0
        %2345 = vmatpush1.msra.mxu0 0.0
        %2346 = vmatprep.subr.mxu0 0.0
        %2347 = vmatpush1.msra.mxu0 0.0
        %2348 = vmatprep.subr.mxu0 0.0
        %2349 = vmatpush1.msra.mxu0 0.0
        %2350 = vmatprep.subr.mxu0 0.0
        %2351 = vmatpush1.msra.mxu0 0.0
        %2352 = vmatprep.subr.mxu0 0.0
        %2353 = vmatpush1.msra.mxu0 0.0
        %2354 = vmatprep.subr.mxu0 0.0
        %2355 = vmatpush1.msra.mxu0 0.0
        %2356 = vmatprep.subr.mxu0 0.0
        %2357 = vmatpush1.msra.mxu0 0.0
        %2358 = vmatprep.subr.mxu0 0.0
        %2359 = vmatpush1.msra.mxu0 0.0
        %2360 = vmatprep.subr.mxu0 0.0
        %2361 = vmatpush1.msra.mxu0 0.0
        %2362 = vmatprep.subr.mxu0 0.0
        %2363 = vmatpush1.msra.mxu0 0.0
        %2364 = vmatprep.subr.mxu0 0.0
        %2365 = vmatpush1.msra.mxu0 0.0
        %2366 = vmatprep.subr.mxu0 0.0
        %2367 = vmatpush1.msra.mxu0 0.0
        %2368 = vmatprep.subr.mxu0 0.0
        %2369 = vmatpush1.msra.mxu0 0.0
        %2370 = vmatprep.subr.mxu0 0.0
        %2371 = vmatpush1.msra.mxu0 0.0
        %2372 = vmatprep.subr.mxu0 0.0
        %2373 = vmatpush1.msra.mxu0 0.0
        %2374 = vmatprep.subr.mxu0 0.0
        %2375 = vmatpush1.msra.mxu0 0.0
        %2376 = vmatprep.subr.mxu0 0.0
        %2377 = vmatpush1.msra.mxu0 0.0
        %2378 = vmatprep.subr.mxu0 0.0
        %2379 = vmatpush1.msra.mxu0 0.0
        %2380 = vmatprep.mubr.f32.mxu0 0.0
        %2381 = vmatmul.mubr.f32.gmra.mrb[0].mxu0 %v1549
        %v2382 = vpop.f32.mrb[0].mxu0
        %v2383 = vadd.f32 0.0, %v2382
        %v2384 = vpop.f32.mrb[0].mxu0
        %2385 = vmatprep.mubr.f32.mxu0 0.0
        %2386 = vmatmul.mubr.f32.gmra.mrb[0].mxu0 %v1552
        %v2387 = vpop.f32.mrb[0].mxu0
        %v2388 = vadd.f32 0.0, %v2387
        %v2389 = vpop.f32.mrb[0].mxu0
        %2390 = vdwg.mxu0
        %v2391 = vpack.c.bf16 %v2388, %v2383
        %v2393 = vunpack.c.l.b16 %v2391
        %v2394 = vunpack.c.h.b16 %v2391
        %v2395 = vpack.c.b16 %v2393, %v2393
        %v2396 = vpack.c.b16 %v2394, %v2394
        %v2398 = vshrl.u32 %v2395, 16
        %v2400 = vrot.slane %v2398, 7
        %v2401 = vshll.u32 %v2395, 16
        %v2403 = vor.u32 %v2400, %v2401
        %v2404 = vrot.slane %v2400, 4
        %v2406 = vshrl.u32 %v2396, 16
        %v2408 = vrot.slane %v2406, 7
        %v2409 = vshll.u32 %v2396, 16
        %v2411 = vor.u32 %v2408, %v2409
        %v2412 = vsel %vm759, %v2404, %v2411
        %v2413 = vrot.slane %v2408, 4
        %s2417 = scalar_lea.vmem [#allocation2], 168
        %v2418 = vld [vmem:[%s2417 + $0x4] sm:$0xf]
        %v2419 = vsel %vm962, %v2403, %v2418
        %2420 = vst [vmem:[%s2417 + $0x4] sm:$0xf] %v2419
        %2421 = vst [vmem:[%s2417 + $0xc] sm:$0xf] %v2412
        %v2422 = vld [vmem:[%s2417 + $0x14] sm:$0x1]
        %v2423 = vsel %vm968, %v2413, %v2422
        %2424 = vst [vmem:[%s2417 + $0x14] sm:$0x1] %v2423
        %2425 = vmatprep.subr.mxu0 0.0
        %2426 = vmatpush1.msra.mxu0 %v1544
        %2427 = vmatprep.subr.mxu0 0.0
        %2428 = vmatpush1.msra.mxu0 0.0
        %2429 = vmatprep.subr.mxu0 0.0
        %2430 = vmatpush1.msra.mxu0 0.0
        %2431 = vmatprep.subr.mxu0 0.0
        %2432 = vmatpush1.msra.mxu0 0.0
        %2433 = vmatprep.subr.mxu0 0.0
        %2434 = vmatpush1.msra.mxu0 0.0
        %2435 = vmatprep.subr.mxu0 0.0
        %2436 = vmatpush1.msra.mxu0 0.0
        %2437 = vmatprep.subr.mxu0 0.0
        %2438 = vmatpush1.msra.mxu0 0.0
        %2439 = vmatprep.subr.mxu0 0.0
        %2440 = vmatpush1.msra.mxu0 0.0
        %2441 = vmatprep.subr.mxu0 0.0
        %2442 = vmatpush1.msra.mxu0 0.0
        %2443 = vmatprep.subr.mxu0 0.0
        %2444 = vmatpush1.msra.mxu0 0.0
        %2445 = vmatprep.subr.mxu0 0.0
        %2446 = vmatpush1.msra.mxu0 0.0
        %2447 = vmatprep.subr.mxu0 0.0
        %2448 = vmatpush1.msra.mxu0 0.0
        %2449 = vmatprep.subr.mxu0 0.0
        %2450 = vmatpush1.msra.mxu0 0.0
        %2451 = vmatprep.subr.mxu0 0.0
        %2452 = vmatpush1.msra.mxu0 0.0
        %2453 = vmatprep.subr.mxu0 0.0
        %2454 = vmatpush1.msra.mxu0 0.0
        %2455 = vmatprep.subr.mxu0 0.0
        %2456 = vmatpush1.msra.mxu0 0.0
        %2457 = vmatprep.subr.mxu0 0.0
        %2458 = vmatpush1.msra.mxu0 0.0
        %2459 = vmatprep.subr.mxu0 0.0
        %2460 = vmatpush1.msra.mxu0 0.0
        %2461 = vmatprep.subr.mxu0 0.0
        %2462 = vmatpush1.msra.mxu0 0.0
        %2463 = vmatprep.subr.mxu0 0.0
        %2464 = vmatpush1.msra.mxu0 0.0
        %2465 = vmatprep.subr.mxu0 0.0
        %2466 = vmatpush1.msra.mxu0 0.0
        %2467 = vmatprep.subr.mxu0 0.0
        %2468 = vmatpush1.msra.mxu0 0.0
        %2469 = vmatprep.subr.mxu0 0.0
        %2470 = vmatpush1.msra.mxu0 0.0
        %2471 = vmatprep.subr.mxu0 0.0
        %2472 = vmatpush1.msra.mxu0 0.0
        %2473 = vmatprep.subr.mxu0 0.0
        %2474 = vmatpush1.msra.mxu0 0.0
        %2475 = vmatprep.subr.mxu0 0.0
        %2476 = vmatpush1.msra.mxu0 0.0
        %2477 = vmatprep.subr.mxu0 0.0
        %2478 = vmatpush1.msra.mxu0 0.0
        %2479 = vmatprep.subr.mxu0 0.0
        %2480 = vmatpush1.msra.mxu0 0.0
        %2481 = vmatprep.subr.mxu0 0.0
        %2482 = vmatpush1.msra.mxu0 0.0
        %2483 = vmatprep.subr.mxu0 0.0
        %2484 = vmatpush1.msra.mxu0 0.0
        %2485 = vmatprep.subr.mxu0 0.0
        %2486 = vmatpush1.msra.mxu0 0.0
        %2487 = vmatprep.subr.mxu0 0.0
        %2488 = vmatpush1.msra.mxu0 0.0
        %2489 = vmatprep.mubr.f32.mxu0 0.0
        %2490 = vmatmul.mubr.f32.gmra.mrb[0].mxu0 %v1549
        %v2491 = vpop.f32.mrb[0].mxu0
        %v2492 = vadd.f32 0.0, %v2491
        %v2493 = vpop.f32.mrb[0].mxu0
        %2494 = vmatprep.mubr.f32.mxu0 0.0
        %2495 = vmatmul.mubr.f32.gmra.mrb[0].mxu0 %v1552
        %v2496 = vpop.f32.mrb[0].mxu0
        %v2497 = vadd.f32 0.0, %v2496
        %v2498 = vpop.f32.mrb[0].mxu0
        %2499 = vdwg.mxu0
        %v2500 = vpack.c.bf16 %v2497, %v2492
        %v2502 = vunpack.c.l.b16 %v2500
        %v2503 = vunpack.c.h.b16 %v2500
        %v2504 = vpack.c.b16 %v2502, %v2502
        %v2505 = vpack.c.b16 %v2503, %v2503
        %v2507 = vshrl.u32 %v2504, 16
        %v2509 = vrot.slane %v2507, 7
        %v2510 = vshll.u32 %v2504, 16
        %v2512 = vor.u32 %v2509, %v2510
        %v2513 = vrot.slane %v2509, 4
        %v2515 = vshrl.u32 %v2505, 16
        %v2517 = vrot.slane %v2515, 7
        %v2518 = vshll.u32 %v2505, 16
        %v2520 = vor.u32 %v2517, %v2518
        %v2521 = vsel %vm759, %v2513, %v2520
        %v2522 = vrot.slane %v2517, 4
        %s2526 = scalar_lea.vmem [#allocation2], 192
        %v2527 = vld [vmem:[%s2526 + $0x4] sm:$0xf]
        %v2528 = vsel %vm962, %v2512, %v2527
        %2529 = vst [vmem:[%s2526 + $0x4] sm:$0xf] %v2528
        %2530 = vst [vmem:[%s2526 + $0xc] sm:$0xf] %v2521
        %v2531 = vld [vmem:[%s2526 + $0x14] sm:$0x1]
        %v2532 = vsel %vm968, %v2522, %v2531
        %2533 = vst [vmem:[%s2526 + $0x14] sm:$0x1] %v2532
        %2534 = vmatprep.subr.mxu0 0.0
        %2535 = vmatpush1.msra.mxu0 %v1545
        %2536 = vmatprep.subr.mxu0 0.0
        %2537 = vmatpush1.msra.mxu0 0.0
        %2538 = vmatprep.subr.mxu0 0.0
        %2539 = vmatpush1.msra.mxu0 0.0
        %2540 = vmatprep.subr.mxu0 0.0
        %2541 = vmatpush1.msra.mxu0 0.0
        %2542 = vmatprep.subr.mxu0 0.0
        %2543 = vmatpush1.msra.mxu0 0.0
        %2544 = vmatprep.subr.mxu0 0.0
        %2545 = vmatpush1.msra.mxu0 0.0
        %2546 = vmatprep.subr.mxu0 0.0
        %2547 = vmatpush1.msra.mxu0 0.0
        %2548 = vmatprep.subr.mxu0 0.0
        %2549 = vmatpush1.msra.mxu0 0.0
        %2550 = vmatprep.subr.mxu0 0.0
        %2551 = vmatpush1.msra.mxu0 0.0
        %2552 = vmatprep.subr.mxu0 0.0
        %2553 = vmatpush1.msra.mxu0 0.0
        %2554 = vmatprep.subr.mxu0 0.0
        %2555 = vmatpush1.msra.mxu0 0.0
        %2556 = vmatprep.subr.mxu0 0.0
        %2557 = vmatpush1.msra.mxu0 0.0
        %2558 = vmatprep.subr.mxu0 0.0
        %2559 = vmatpush1.msra.mxu0 0.0
        %2560 = vmatprep.subr.mxu0 0.0
        %2561 = vmatpush1.msra.mxu0 0.0
        %2562 = vmatprep.subr.mxu0 0.0
        %2563 = vmatpush1.msra.mxu0 0.0
        %2564 = vmatprep.subr.mxu0 0.0
        %2565 = vmatpush1.msra.mxu0 0.0
        %2566 = vmatprep.subr.mxu0 0.0
        %2567 = vmatpush1.msra.mxu0 0.0
        %2568 = vmatprep.subr.mxu0 0.0
        %2569 = vmatpush1.msra.mxu0 0.0
        %2570 = vmatprep.subr.mxu0 0.0
        %2571 = vmatpush1.msra.mxu0 0.0
        %2572 = vmatprep.subr.mxu0 0.0
        %2573 = vmatpush1.msra.mxu0 0.0
        %2574 = vmatprep.subr.mxu0 0.0
        %2575 = vmatpush1.msra.mxu0 0.0
        %2576 = vmatprep.subr.mxu0 0.0
        %2577 = vmatpush1.msra.mxu0 0.0
        %2578 = vmatprep.subr.mxu0 0.0
        %2579 = vmatpush1.msra.mxu0 0.0
        %2580 = vmatprep.subr.mxu0 0.0
        %2581 = vmatpush1.msra.mxu0 0.0
        %2582 = vmatprep.subr.mxu0 0.0
        %2583 = vmatpush1.msra.mxu0 0.0
        %2584 = vmatprep.subr.mxu0 0.0
        %2585 = vmatpush1.msra.mxu0 0.0
        %2586 = vmatprep.subr.mxu0 0.0
        %2587 = vmatpush1.msra.mxu0 0.0
        %2588 = vmatprep.subr.mxu0 0.0
        %2589 = vmatpush1.msra.mxu0 0.0
        %2590 = vmatprep.subr.mxu0 0.0
        %2591 = vmatpush1.msra.mxu0 0.0
        %2592 = vmatprep.subr.mxu0 0.0
        %2593 = vmatpush1.msra.mxu0 0.0
        %2594 = vmatprep.subr.mxu0 0.0
        %2595 = vmatpush1.msra.mxu0 0.0
        %2596 = vmatprep.subr.mxu0 0.0
        %2597 = vmatpush1.msra.mxu0 0.0
        %2598 = vmatprep.mubr.f32.mxu0 0.0
        %2599 = vmatmul.mubr.f32.gmra.mrb[0].mxu0 %v1549
        %v2600 = vpop.f32.mrb[0].mxu0
        %v2601 = vadd.f32 0.0, %v2600
        %v2602 = vpop.f32.mrb[0].mxu0
        %2603 = vmatprep.mubr.f32.mxu0 0.0
        %2604 = vmatmul.mubr.f32.gmra.mrb[0].mxu0 %v1552
        %v2605 = vpop.f32.mrb[0].mxu0
        %v2606 = vadd.f32 0.0, %v2605
        %v2607 = vpop.f32.mrb[0].mxu0
        %2608 = vdwg.mxu0
        %v2609 = vpack.c.bf16 %v2606, %v2601
        %v2611 = vunpack.c.l.b16 %v2609
        %v2612 = vunpack.c.h.b16 %v2609
        %v2613 = vpack.c.b16 %v2611, %v2611
        %v2614 = vpack.c.b16 %v2612, %v2612
        %v2616 = vshrl.u32 %v2613, 16
        %v2618 = vrot.slane %v2616, 7
        %v2619 = vshll.u32 %v2613, 16
        %v2621 = vor.u32 %v2618, %v2619
        %v2622 = vrot.slane %v2618, 4
        %v2624 = vshrl.u32 %v2614, 16
        %v2626 = vrot.slane %v2624, 7
        %v2627 = vshll.u32 %v2614, 16
        %v2629 = vor.u32 %v2626, %v2627
        %v2630 = vsel %vm759, %v2622, %v2629
        %v2631 = vrot.slane %v2626, 4
        %s2635 = scalar_lea.vmem [#allocation2], 216
        %v2636 = vld [vmem:[%s2635 + $0x4] sm:$0xf]
        %v2637 = vsel %vm962, %v2621, %v2636
        %2638 = vst [vmem:[%s2635 + $0x4] sm:$0xf] %v2637
        %2639 = vst [vmem:[%s2635 + $0xc] sm:$0xf] %v2630
        %v2640 = vld [vmem:[%s2635 + $0x14] sm:$0x1]
        %v2641 = vsel %vm968, %v2631, %v2640
        %2642 = vst [vmem:[%s2635 + $0x14] sm:$0x1] %v2641
        %vm2643 = vcmask 1044484
        %vm2644 = vsmask.f32 4352
        %vm2645 = vmand %vm2643, %vm2644
        %vm2646 = vmor %vm2645, %vm968
        %v2647 = vld [vmem:[#allocation2] sm:$0x11]
        %v2648 = vsel %vm2646, 0, %v2647
        %2649 = vst [vmem:[#allocation2] sm:$0x11] %v2648
        %v2650 = vld [vmem:[#allocation2 + $0x18] sm:$0x11]
        %v2651 = vsel %vm2646, 0, %v2650
        %2652 = vst [vmem:[#allocation2 + $0x18] sm:$0x11] %v2651
        %v2653 = vld [vmem:[#allocation2 + $0x30] sm:$0x11]
        %v2654 = vsel %vm2646, 0, %v2653
        %2655 = vst [vmem:[#allocation2 + $0x30] sm:$0x11] %v2654
        %v2656 = vld [vmem:[#allocation2 + $0x48] sm:$0x11]
        %v2657 = vsel %vm2646, 0, %v2656
        %2658 = vst [vmem:[#allocation2 + $0x48] sm:$0x11] %v2657
        %v2659 = vld [vmem:[#allocation2 + $0x60] sm:$0x11]
        %v2660 = vsel %vm2646, 0, %v2659
        %2661 = vst [vmem:[#allocation2 + $0x60] sm:$0x11] %v2660
        %v2662 = vld [vmem:[#allocation2 + $0x78] sm:$0x11]
        %v2663 = vsel %vm2646, 0, %v2662
        %2664 = vst [vmem:[#allocation2 + $0x78] sm:$0x11] %v2663
        %v2665 = vld [vmem:[#allocation2 + $0x90] sm:$0x11]
        %v2666 = vsel %vm2646, 0, %v2665
        %2667 = vst [vmem:[#allocation2 + $0x90] sm:$0x11] %v2666
        %v2668 = vld [vmem:[#allocation2 + $0xa8] sm:$0x11]
        %v2669 = vsel %vm2646, 0, %v2668
        %2670 = vst [vmem:[#allocation2 + $0xa8] sm:$0x11] %v2669
        %v2671 = vld [vmem:[#allocation2 + $0xc0] sm:$0x11]
        %v2672 = vsel %vm2646, 0, %v2671
        %2673 = vst [vmem:[#allocation2 + $0xc0] sm:$0x11] %v2672
        %v2674 = vld [vmem:[#allocation2 + $0xd8] sm:$0x11]
        %v2675 = vsel %vm2646, 0, %v2674
        %2676 = vst [vmem:[#allocation2 + $0xd8] sm:$0x11] %v2675
        %vm2677 = vmand %vm967, %vm961
        %vm2678 = vsmask.f32 7954
        %vm2679 = vmand %vm2643, %vm2678
        %vm2680 = vmor %vm2679, %vm2677
        %v2681 = vld [vmem:[#allocation2 + $0x10] sm:$0x11]
        %v2682 = vsel %vm2680, 0, %v2681
        %2683 = vst [vmem:[#allocation2 + $0x10] sm:$0x11] %v2682
        %v2684 = vld [vmem:[#allocation2 + $0x28] sm:$0x11]
        %v2685 = vsel %vm2680, 0, %v2684
        %2686 = vst [vmem:[#allocation2 + $0x28] sm:$0x11] %v2685
        %v2687 = vld [vmem:[#allocation2 + $0x40] sm:$0x11]
        %v2688 = vsel %vm2680, 0, %v2687
        %2689 = vst [vmem:[#allocation2 + $0x40] sm:$0x11] %v2688
        %v2690 = vld [vmem:[#allocation2 + $0x58] sm:$0x11]
        %v2691 = vsel %vm2680, 0, %v2690
        %2692 = vst [vmem:[#allocation2 + $0x58] sm:$0x11] %v2691
        %v2693 = vld [vmem:[#allocation2 + $0x70] sm:$0x11]
        %v2694 = vsel %vm2680, 0, %v2693
        %2695 = vst [vmem:[#allocation2 + $0x70] sm:$0x11] %v2694
        %v2696 = vld [vmem:[#allocation2 + $0x88] sm:$0x11]
        %v2697 = vsel %vm2680, 0, %v2696
        %2698 = vst [vmem:[#allocation2 + $0x88] sm:$0x11] %v2697
        %v2699 = vld [vmem:[#allocation2 + $0xa0] sm:$0x11]
        %v2700 = vsel %vm2680, 0, %v2699
        %2701 = vst [vmem:[#allocation2 + $0xa0] sm:$0x11] %v2700
        %v2702 = vld [vmem:[#allocation2 + $0xb8] sm:$0x11]
        %v2703 = vsel %vm2680, 0, %v2702
        %2704 = vst [vmem:[#allocation2 + $0xb8] sm:$0x11] %v2703
        %v2705 = vld [vmem:[#allocation2 + $0xd0] sm:$0x11]
        %v2706 = vsel %vm2680, 0, %v2705
        %2707 = vst [vmem:[#allocation2 + $0xd0] sm:$0x11] %v2706
        %v2708 = vld [vmem:[#allocation2 + $0xe8] sm:$0x11]
        %v2709 = vsel %vm2680, 0, %v2708
        %2710 = vst [vmem:[#allocation2 + $0xe8] sm:$0x11] %v2709
        %p2711 = scmp.eq.s32.totalorder %s31, 0
        // Predicated region
        $region61: #{decoder_deeplabv3p_forward.1} parent=59 // pred_check
          %p2712 = pneg %p2711
        $region62: #{decoder_deeplabv3p_forward.1} parent=59 // pred_check_branch
          %2714 = sbr.rel (%p2712) target = $region64
        $region63: #{decoder_deeplabv3p_forward.1} parent=59 // pred_region
          %2715 = vst [vmem:[#allocation2] sm:$0xff] 0
          %2716 = vst [vmem:[#allocation2 + $0x8] sm:$0xff] 0
          %2717 = vst [vmem:[#allocation2 + $0x10] sm:$0x11] 0
        $region64: #{decoder_deeplabv3p_forward.1} parent=59 // pred_fallthru
          _
        %p2718 = scmp.eq.s32.totalorder %s31, 1
        // Predicated region
        $region65: #{decoder_deeplabv3p_forward.1} parent=59 // pred_check
          %p2719 = pneg %p2718
        $region66: #{decoder_deeplabv3p_forward.1} parent=59 // pred_check_branch
          %2721 = sbr.rel (%p2719) target = $region68
        $region67: #{decoder_deeplabv3p_forward.1} parent=59 // pred_region
          %2722 = vst [vmem:[%s2635] sm:$0xff] 0
          %2723 = vst [vmem:[%s2635 + $0x8] sm:$0xff] 0
          %2724 = vst [vmem:[%s2635 + $0x10] sm:$0x11] 0
        $region68: #{decoder_deeplabv3p_forward.1} parent=59 // pred_fallthru
          _
        %v2725 = vld [vmem:[#allocation2] sm:$0xff]
        %v2726 = vld [vmem:[#allocation2 + $0x8] sm:$0xff]
        %v2727 = vld [vmem:[#allocation2 + $0x18] sm:$0xff]
        %v2728 = vld [vmem:[#allocation2 + $0x20] sm:$0xff]
        %v2729 = vld [vmem:[#allocation2 + $0x30] sm:$0xff]
        %v2730 = vld [vmem:[#allocation2 + $0x38] sm:$0xff]
        %v2731 = vld [vmem:[#allocation2 + $0x48] sm:$0xff]
        %v2732 = vld [vmem:[#allocation2 + $0x50] sm:$0xff]
        %v2733 = vld [vmem:[#allocation2 + $0x60] sm:$0xff]
        %v2734 = vld [vmem:[#allocation2 + $0x68] sm:$0xff]
        %v2735 = vld [vmem:[#allocation2 + $0x78] sm:$0xff]
        %v2736 = vld [vmem:[#allocation2 + $0x80] sm:$0xff]
        %v2737 = vld [vmem:[#allocation2 + $0x90] sm:$0xff]
        %v2738 = vld [vmem:[#allocation2 + $0x98] sm:$0xff]
        %v2739 = vld [vmem:[#allocation2 + $0xa8] sm:$0xff]
        %v2740 = vld [vmem:[#allocation2 + $0xb0] sm:$0xff]
        %v2741 = vld [vmem:[%s6] sm:$0xff]
        %v2742 = vld [vmem:[%s6 + $0x8] sm:$0xff]
        %v2743 = vld [vmem:[%s6 + $0x10] sm:$0xff]
        %v2744 = vld [vmem:[%s6 + $0x18] sm:$0xff]
        %v2745 = vld [vmem:[%s6 + $0x20] sm:$0xff]
        %v2746 = vld [vmem:[%s6 + $0x28] sm:$0xff]
        %v2747 = vld [vmem:[%s6 + $0x30] sm:$0xff]
        %v2748 = vld [vmem:[%s6 + $0x38] sm:$0xff]
        %v2749 = vld [vmem:[%s6 + $0x40] sm:$0xff]
        %v2750 = vld [vmem:[%s6 + $0x48] sm:$0xff]
        %v2751 = vld [vmem:[%s6 + $0x50] sm:$0xff]
        %v2752 = vld [vmem:[%s6 + $0x58] sm:$0xff]
        %v2753 = vld [vmem:[%s6 + $0x60] sm:$0xff]
        %v2754 = vld [vmem:[%s6 + $0x68] sm:$0xff]
        %v2755 = vld [vmem:[%s6 + $0x70] sm:$0xff]
        %v2756 = vld [vmem:[%s6 + $0x78] sm:$0xff]
        %v2757 = vld [vmem:[%s6 + $0x80] sm:$0xff]
        %v2758 = vld [vmem:[%s6 + $0x88] sm:$0xff]
        %v2759 = vld [vmem:[%s6 + $0x90] sm:$0xff]
        %v2760 = vld [vmem:[%s6 + $0x98] sm:$0xff]
        %v2761 = vld [vmem:[%s6 + $0xa0] sm:$0xff]
        %v2762 = vld [vmem:[%s6 + $0xa8] sm:$0xff]
        %v2763 = vld [vmem:[%s6 + $0xb0] sm:$0xff]
        %v2764 = vld [vmem:[%s6 + $0xb8] sm:$0xff]
        %v2765 = vld [vmem:[%s6 + $0xc0] sm:$0xff]
        %v2766 = vld [vmem:[%s6 + $0xc8] sm:$0xff]
        %v2767 = vld [vmem:[%s6 + $0xd0] sm:$0xff]
        %v2768 = vld [vmem:[%s6 + $0xd8] sm:$0xff]
        %v2769 = vld [vmem:[%s6 + $0xe0] sm:$0xff]
        %v2770 = vld [vmem:[%s6 + $0xe8] sm:$0xff]
        %v2771 = vld [vmem:[%s6 + $0xf0] sm:$0xff]
        %v2772 = vld [vmem:[%s6 + $0xf8] sm:$0xff]
        %v2773 = vld [vmem:[#allocation2 + $0x10] sm:$0x11]
        %v2774 = vld [vmem:[#allocation2 + $0x28] sm:$0x11]
        %v2775 = vld [vmem:[#allocation2 + $0x40] sm:$0x11]
        %v2776 = vld [vmem:[#allocation2 + $0x58] sm:$0x11]
        %v2777 = vld [vmem:[#allocation2 + $0x70] sm:$0x11]
        %v2778 = vld [vmem:[#allocation2 + $0x88] sm:$0x11]
        %v2779 = vld [vmem:[#allocation2 + $0xa0] sm:$0x11]
        %v2780 = vld [vmem:[#allocation2 + $0xb8] sm:$0x11]
        %vm2781 = vsmask.f32 3328
        %vm2782 = vsmask.f32 7440
        %vm2783 = vmor %vm2781, %vm2782
        %v2785 = vshrl.u32 %v2725, 16
        %v2787 = vrot.slane %v2785, 4
        %v2788 = vshll.u32 %v2725, 16
        %v2790 = vrot.slane %v2788, 5
        %v2791 = vor.u32 %v2787, %v2790
        %v2792 = vrot.slane %v2791, 4
        %v2794 = vshll.u32 %v2726, 16
        %v2796 = vrot.slane %v2794, 5
        %v2797 = vsel %vm2783, %v2792, %v2796
        %v2798 = vshrl.u32 %v2726, 16
        %v2800 = vrot.slane %v2798, 4
        %v2801 = vor.u32 %v2800, %v2796
        %v2802 = vrot.slane %v2801, 4
        %v2804 = vshll.u32 %v2773, 16
        %v2806 = vrot.slane %v2804, 5
        %v2807 = vsel %vm2783, %v2802, %v2806
        %v2809 = vshrl.u32 %v2727, 16
        %v2811 = vrot.slane %v2809, 4
        %v2812 = vshll.u32 %v2727, 16
        %v2814 = vrot.slane %v2812, 5
        %v2815 = vor.u32 %v2811, %v2814
        %v2816 = vrot.slane %v2815, 4
        %v2818 = vshll.u32 %v2728, 16
        %v2820 = vrot.slane %v2818, 5
        %v2821 = vsel %vm2783, %v2816, %v2820
        %v2822 = vshrl.u32 %v2728, 16
        %v2824 = vrot.slane %v2822, 4
        %v2825 = vor.u32 %v2824, %v2820
        %v2826 = vrot.slane %v2825, 4
        %v2828 = vshll.u32 %v2774, 16
        %v2830 = vrot.slane %v2828, 5
        %v2831 = vsel %vm2783, %v2826, %v2830
        %v2833 = vshrl.u32 %v2729, 16
        %v2835 = vrot.slane %v2833, 4
        %v2836 = vshll.u32 %v2729, 16
        %v2838 = vrot.slane %v2836, 5
        %v2839 = vor.u32 %v2835, %v2838
        %v2840 = vrot.slane %v2839, 4
        %v2842 = vshll.u32 %v2730, 16
        %v2844 = vrot.slane %v2842, 5
        %v2845 = vsel %vm2783, %v2840, %v2844
        %v2846 = vshrl.u32 %v2730, 16
        %v2848 = vrot.slane %v2846, 4
        %v2849 = vor.u32 %v2848, %v2844
        %v2850 = vrot.slane %v2849, 4
        %v2852 = vshll.u32 %v2775, 16
        %v2854 = vrot.slane %v2852, 5
        %v2855 = vsel %vm2783, %v2850, %v2854
        %v2857 = vshrl.u32 %v2731, 16
        %v2859 = vrot.slane %v2857, 4
        %v2860 = vshll.u32 %v2731, 16
        %v2862 = vrot.slane %v2860, 5
        %v2863 = vor.u32 %v2859, %v2862
        %v2864 = vrot.slane %v2863, 4
        %v2866 = vshll.u32 %v2732, 16
        %v2868 = vrot.slane %v2866, 5
        %v2869 = vsel %vm2783, %v2864, %v2868
        %v2870 = vshrl.u32 %v2732, 16
        %v2872 = vrot.slane %v2870, 4
        %v2873 = vor.u32 %v2872, %v2868
        %v2874 = vrot.slane %v2873, 4
        %v2876 = vshll.u32 %v2776, 16
        %v2878 = vrot.slane %v2876, 5
        %v2879 = vsel %vm2783, %v2874, %v2878
        %v2881 = vshrl.u32 %v2733, 16
        %v2883 = vrot.slane %v2881, 4
        %v2884 = vshll.u32 %v2733, 16
        %v2886 = vrot.slane %v2884, 5
        %v2887 = vor.u32 %v2883, %v2886
        %v2888 = vrot.slane %v2887, 4
        %v2890 = vshll.u32 %v2734, 16
        %v2892 = vrot.slane %v2890, 5
        %v2893 = vsel %vm2783, %v2888, %v2892
        %v2894 = vshrl.u32 %v2734, 16
        %v2896 = vrot.slane %v2894, 4
        %v2897 = vor.u32 %v2896, %v2892
        %v2898 = vrot.slane %v2897, 4
        %v2900 = vshll.u32 %v2777, 16
        %v2902 = vrot.slane %v2900, 5
        %v2903 = vsel %vm2783, %v2898, %v2902
        %v2905 = vshrl.u32 %v2735, 16
        %v2907 = vrot.slane %v2905, 4
        %v2908 = vshll.u32 %v2735, 16
        %v2910 = vrot.slane %v2908, 5
        %v2911 = vor.u32 %v2907, %v2910
        %v2912 = vrot.slane %v2911, 4
        %v2914 = vshll.u32 %v2736, 16
        %v2916 = vrot.slane %v2914, 5
        %v2917 = vsel %vm2783, %v2912, %v2916
        %v2918 = vshrl.u32 %v2736, 16
        %v2920 = vrot.slane %v2918, 4
        %v2921 = vor.u32 %v2920, %v2916
        %v2922 = vrot.slane %v2921, 4
        %v2924 = vshll.u32 %v2778, 16
        %v2926 = vrot.slane %v2924, 5
        %v2927 = vsel %vm2783, %v2922, %v2926
        %v2929 = vshrl.u32 %v2737, 16
        %v2931 = vrot.slane %v2929, 4
        %v2932 = vshll.u32 %v2737, 16
        %v2934 = vrot.slane %v2932, 5
        %v2935 = vor.u32 %v2931, %v2934
        %v2936 = vrot.slane %v2935, 4
        %v2938 = vshll.u32 %v2738, 16
        %v2940 = vrot.slane %v2938, 5
        %v2941 = vsel %vm2783, %v2936, %v2940
        %v2942 = vshrl.u32 %v2738, 16
        %v2944 = vrot.slane %v2942, 4
        %v2945 = vor.u32 %v2944, %v2940
        %v2946 = vrot.slane %v2945, 4
        %v2948 = vshll.u32 %v2779, 16
        %v2950 = vrot.slane %v2948, 5
        %v2951 = vsel %vm2783, %v2946, %v2950
        %v2953 = vshrl.u32 %v2739, 16
        %v2955 = vrot.slane %v2953, 4
        %v2956 = vshll.u32 %v2739, 16
        %v2958 = vrot.slane %v2956, 5
        %v2959 = vor.u32 %v2955, %v2958
        %v2960 = vrot.slane %v2959, 4
        %v2962 = vshll.u32 %v2740, 16
        %v2964 = vrot.slane %v2962, 5
        %v2965 = vsel %vm2783, %v2960, %v2964
        %v2966 = vshrl.u32 %v2740, 16
        %v2968 = vrot.slane %v2966, 4
        %v2969 = vor.u32 %v2968, %v2964
        %v2970 = vrot.slane %v2969, 4
        %v2972 = vshll.u32 %v2780, 16
        %v2974 = vrot.slane %v2972, 5
        %v2975 = vsel %vm2783, %v2970, %v2974
        %v2976 = vld [vmem:[%s6 + $0x100] sm:$0xff]
        %v2977 = vld [vmem:[%s6 + $0x108] sm:$0xff]
        %v2978 = vld [vmem:[%s6 + $0x110] sm:$0xff]
        %v2979 = vld [vmem:[%s6 + $0x118] sm:$0xff]
        %v2980 = vld [vmem:[%s6 + $0x120] sm:$0xff]
        %v2981 = vld [vmem:[%s6 + $0x128] sm:$0xff]
        %v2982 = vld [vmem:[%s6 + $0x130] sm:$0xff]
        %v2983 = vld [vmem:[%s6 + $0x138] sm:$0xff]
        %v2984 = vld [vmem:[%s6 + $0x140] sm:$0xff]
        %v2985 = vld [vmem:[%s6 + $0x148] sm:$0xff]
        %v2986 = vld [vmem:[%s6 + $0x150] sm:$0xff]
        %v2987 = vld [vmem:[%s6 + $0x158] sm:$0xff]
        %v2988 = vld [vmem:[%s6 + $0x160] sm:$0xff]
        %v2989 = vld [vmem:[%s6 + $0x168] sm:$0xff]
        %v2990 = vld [vmem:[%s6 + $0x170] sm:$0xff]
        %v2991 = vld [vmem:[%s6 + $0x178] sm:$0xff]
        %v2992 = vld [vmem:[%s6 + $0x180] sm:$0xff]
        %v2993 = vld [vmem:[%s6 + $0x188] sm:$0xff]
        %v2994 = vld [vmem:[%s6 + $0x190] sm:$0xff]
        %v2995 = vld [vmem:[%s6 + $0x198] sm:$0xff]
        %v2996 = vld [vmem:[%s6 + $0x1a0] sm:$0xff]
        %v2997 = vld [vmem:[%s6 + $0x1a8] sm:$0xff]
        %v2998 = vld [vmem:[%s6 + $0x1b0] sm:$0xff]
        %v2999 = vld [vmem:[%s6 + $0x1b8] sm:$0xff]
        %v3000 = vld [vmem:[%s6 + $0x1c0] sm:$0xff]
        %v3001 = vld [vmem:[%s6 + $0x1c8] sm:$0xff]
        %v3002 = vld [vmem:[%s6 + $0x1d0] sm:$0xff]
        %v3003 = vld [vmem:[%s6 + $0x1d8] sm:$0xff]
        %v3004 = vld [vmem:[%s6 + $0x1e0] sm:$0xff]
        %v3005 = vld [vmem:[%s6 + $0x1e8] sm:$0xff]
        %v3006 = vld [vmem:[%s6 + $0x1f0] sm:$0xff]
        %v3007 = vld [vmem:[%s6 + $0x1f8] sm:$0xff]
        %v3008 = vunpack.c.l.b16 %v2797
        %v3009 = vunpack.c.h.b16 %v2797
        %v3010 = vunpack.c.l.b16 %v2807
        %v3011 = vunpack.c.h.b16 %v2807
        %v3012 = vunpack.c.l.b16 %v2821
        %v3013 = vunpack.c.h.b16 %v2821
        %v3014 = vunpack.c.l.b16 %v2831
        %v3015 = vunpack.c.h.b16 %v2831
        %v3016 = vunpack.c.l.b16 %v2845
        %v3017 = vunpack.c.h.b16 %v2845
        %v3018 = vunpack.c.l.b16 %v2855
        %v3019 = vunpack.c.h.b16 %v2855
        %v3020 = vunpack.c.l.b16 %v2869
        %v3021 = vunpack.c.h.b16 %v2869
        %v3022 = vunpack.c.l.b16 %v2879
        %v3023 = vunpack.c.h.b16 %v2879
        %v3024 = vunpack.c.l.b16 %v2893
        %v3025 = vunpack.c.h.b16 %v2893
        %v3026 = vunpack.c.l.b16 %v2903
        %v3027 = vunpack.c.h.b16 %v2903
        %v3028 = vunpack.c.l.b16 %v2917
        %v3029 = vunpack.c.h.b16 %v2917
        %v3030 = vunpack.c.l.b16 %v2927
        %v3031 = vunpack.c.h.b16 %v2927
        %v3032 = vunpack.c.l.b16 %v2941
        %v3033 = vunpack.c.h.b16 %v2941
        %v3034 = vunpack.c.l.b16 %v2951
        %v3035 = vunpack.c.h.b16 %v2951
        %v3036 = vunpack.c.l.b16 %v2965
        %v3037 = vunpack.c.h.b16 %v2965
        %v3038 = vunpack.c.l.b16 %v2975
        %v3039 = vunpack.c.h.b16 %v2975
        %v3040 = vpack.c.b16 %v3010, %v3008
        %v3041 = vpack.c.b16 %v3011, %v3009
        %v3042 = vpack.c.b16 %v3014, %v3012
        %v3043 = vpack.c.b16 %v3015, %v3013
        %v3044 = vpack.c.b16 %v3018, %v3016
        %v3045 = vpack.c.b16 %v3019, %v3017
        %v3046 = vpack.c.b16 %v3022, %v3020
        %v3047 = vpack.c.b16 %v3023, %v3021
        %v3048 = vpack.c.b16 %v3026, %v3024
        %v3049 = vpack.c.b16 %v3027, %v3025
        %v3050 = vpack.c.b16 %v3030, %v3028
        %v3051 = vpack.c.b16 %v3031, %v3029
        %v3052 = vpack.c.b16 %v3034, %v3032
        %v3053 = vpack.c.b16 %v3035, %v3033
        %v3054 = vpack.c.b16 %v3038, %v3036
        %v3055 = vpack.c.b16 %v3039, %v3037
        %v3104 = vunpack.c.l.b16 %v2976
        %v3105 = vunpack.c.h.b16 %v2976
        %v3106 = vunpack.c.l.b16 %v2977
        %v3107 = vunpack.c.h.b16 %v2977
        %v3108 = vunpack.c.l.b16 %v2978
        %v3109 = vunpack.c.h.b16 %v2978
        %v3110 = vunpack.c.l.b16 %v2979
        %v3111 = vunpack.c.h.b16 %v2979
        %v3112 = vunpack.c.l.b16 %v2980
        %v3113 = vunpack.c.h.b16 %v2980
        %v3114 = vunpack.c.l.b16 %v2981
        %v3115 = vunpack.c.h.b16 %v2981
        %v3116 = vunpack.c.l.b16 %v2982
        %v3117 = vunpack.c.h.b16 %v2982
        %v3118 = vunpack.c.l.b16 %v2983
        %v3119 = vunpack.c.h.b16 %v2983
        %v3120 = vunpack.c.l.b16 %v2984
        %v3121 = vunpack.c.h.b16 %v2984
        %v3122 = vunpack.c.l.b16 %v2985
        %v3123 = vunpack.c.h.b16 %v2985
        %v3124 = vunpack.c.l.b16 %v2986
        %v3125 = vunpack.c.h.b16 %v2986
        %v3126 = vunpack.c.l.b16 %v2987
        %v3127 = vunpack.c.h.b16 %v2987
        %v3128 = vunpack.c.l.b16 %v2988
        %v3129 = vunpack.c.h.b16 %v2988
        %v3130 = vunpack.c.l.b16 %v2989
        %v3131 = vunpack.c.h.b16 %v2989
        %v3132 = vunpack.c.l.b16 %v2990
        %v3133 = vunpack.c.h.b16 %v2990
        %v3134 = vunpack.c.l.b16 %v2991
        %v3135 = vunpack.c.h.b16 %v2991
        %v3136 = vunpack.c.l.b16 %v2992
        %v3137 = vunpack.c.h.b16 %v2992
        %v3138 = vunpack.c.l.b16 %v2993
        %v3139 = vunpack.c.h.b16 %v2993
        %v3140 = vunpack.c.l.b16 %v2994
        %v3141 = vunpack.c.h.b16 %v2994
        %v3142 = vunpack.c.l.b16 %v2995
        %v3143 = vunpack.c.h.b16 %v2995
        %v3144 = vunpack.c.l.b16 %v2996
        %v3145 = vunpack.c.h.b16 %v2996
        %v3146 = vunpack.c.l.b16 %v2997
        %v3147 = vunpack.c.h.b16 %v2997
        %v3148 = vunpack.c.l.b16 %v2998
        %v3149 = vunpack.c.h.b16 %v2998
        %v3150 = vunpack.c.l.b16 %v2999
        %v3151 = vunpack.c.h.b16 %v2999
        %v3152 = vunpack.c.l.b16 %v3000
        %v3153 = vunpack.c.h.b16 %v3000
        %v3154 = vunpack.c.l.b16 %v3001
        %v3155 = vunpack.c.h.b16 %v3001
        %v3156 = vunpack.c.l.b16 %v3002
        %v3157 = vunpack.c.h.b16 %v3002
        %v3158 = vunpack.c.l.b16 %v3003
        %v3159 = vunpack.c.h.b16 %v3003
        %v3160 = vunpack.c.l.b16 %v3004
        %v3161 = vunpack.c.h.b16 %v3004
        %v3162 = vunpack.c.l.b16 %v3005
        %v3163 = vunpack.c.h.b16 %v3005
        %v3164 = vunpack.c.l.b16 %v3006
        %v3165 = vunpack.c.h.b16 %v3006
        %v3166 = vunpack.c.l.b16 %v3007
        %v3167 = vunpack.c.h.b16 %v3007
        %v3168 = vpack.c.b16 %v3106, %v3104
        %v3169 = vpack.c.b16 %v3107, %v3105
        %v3170 = vpack.c.b16 %v3110, %v3108
        %v3171 = vpack.c.b16 %v3111, %v3109
        %v3172 = vpack.c.b16 %v3114, %v3112
        %v3173 = vpack.c.b16 %v3115, %v3113
        %v3174 = vpack.c.b16 %v3118, %v3116
        %v3175 = vpack.c.b16 %v3119, %v3117
        %v3176 = vpack.c.b16 %v3122, %v3120
        %v3177 = vpack.c.b16 %v3123, %v3121
        %v3178 = vpack.c.b16 %v3126, %v3124
        %v3179 = vpack.c.b16 %v3127, %v3125
        %v3180 = vpack.c.b16 %v3130, %v3128
        %v3181 = vpack.c.b16 %v3131, %v3129
        %v3182 = vpack.c.b16 %v3134, %v3132
        %v3183 = vpack.c.b16 %v3135, %v3133
        %v3184 = vpack.c.b16 %v3138, %v3136
        %v3185 = vpack.c.b16 %v3139, %v3137
        %v3186 = vpack.c.b16 %v3142, %v3140
        %v3187 = vpack.c.b16 %v3143, %v3141
        %v3188 = vpack.c.b16 %v3146, %v3144
        %v3189 = vpack.c.b16 %v3147, %v3145
        %v3190 = vpack.c.b16 %v3150, %v3148
        %v3191 = vpack.c.b16 %v3151, %v3149
        %v3192 = vpack.c.b16 %v3154, %v3152
        %v3193 = vpack.c.b16 %v3155, %v3153
        %v3194 = vpack.c.b16 %v3158, %v3156
        %v3195 = vpack.c.b16 %v3159, %v3157
        %v3196 = vpack.c.b16 %v3162, %v3160
        %v3197 = vpack.c.b16 %v3163, %v3161
        %v3198 = vpack.c.b16 %v3166, %v3164
        %v3199 = vpack.c.b16 %v3167, %v3165
        %3232 = vmatprep.subr.bf16.mxu0 %v3169
        %3233 = vmatpush1.bf16.msra.mxu0 %v3168
        %3234 = vmatprep.subr.bf16.mxu0 %v3171
        %3235 = vmatpush1.bf16.msra.mxu0 %v3170
        %3236 = vmatprep.subr.bf16.mxu0 %v3173
        %3237 = vmatpush1.bf16.msra.mxu0 %v3172
        %3238 = vmatprep.subr.bf16.mxu0 %v3175
        %3239 = vmatpush1.bf16.msra.mxu0 %v3174
        %3240 = vmatprep.subr.bf16.mxu0 %v3177
        %3241 = vmatpush1.bf16.msra.mxu0 %v3176
        %3242 = vmatprep.subr.bf16.mxu0 %v3179
        %3243 = vmatpush1.bf16.msra.mxu0 %v3178
        %3244 = vmatprep.subr.bf16.mxu0 %v3181
        %3245 = vmatpush1.bf16.msra.mxu0 %v3180
        %3246 = vmatprep.subr.bf16.mxu0 %v3183
        %3247 = vmatpush1.bf16.msra.mxu0 %v3182
        %3248 = vmatprep.subr.bf16.mxu0 %v3185
        %3249 = vmatpush1.bf16.msra.mxu0 %v3184
        %3250 = vmatprep.subr.bf16.mxu0 %v3187
        %3251 = vmatpush1.bf16.msra.mxu0 %v3186
        %3252 = vmatprep.subr.bf16.mxu0 %v3189
        %3253 = vmatpush1.bf16.msra.mxu0 %v3188
        %3254 = vmatprep.subr.bf16.mxu0 %v3191
        %3255 = vmatpush1.bf16.msra.mxu0 %v3190
        %3256 = vmatprep.subr.bf16.mxu0 %v3193
        %3257 = vmatpush1.bf16.msra.mxu0 %v3192
        %3258 = vmatprep.subr.bf16.mxu0 %v3195
        %3259 = vmatpush1.bf16.msra.mxu0 %v3194
        %3260 = vmatprep.subr.bf16.mxu0 %v3197
        %3261 = vmatpush1.bf16.msra.mxu0 %v3196
        %3262 = vmatprep.subr.bf16.mxu0 %v3199
        %3263 = vmatpush1.bf16.msra.mxu0 %v3198
        %3264 = vmatprep.mubr.bf16.mxu0 %v3041
        %3265 = vmatmul.mubr.bf16.gmra.mrb[0].mxu0 %v3040
        %v3266 = vpop.f32.mrb[0].mxu0
        %v3267 = vadd.f32 0.0, %v3266
        %v3268 = vpop.f32.mrb[0].mxu0
        %v3269 = vadd.f32 0.0, %v3268
        %v3270 = vpop.f32.mrb[0].mxu0
        %v3271 = vadd.f32 0.0, %v3270
        %v3272 = vpop.f32.mrb[0].mxu0
        %v3273 = vadd.f32 0.0, %v3272
        %3274 = vmatprep.mubr.bf16.mxu0 %v3043
        %3275 = vmatmul.mubr.bf16.gmra.mrb[0].mxu0 %v3042
        %v3276 = vpop.f32.mrb[0].mxu0
        %v3277 = vadd.f32 0.0, %v3276
        %v3278 = vpop.f32.mrb[0].mxu0
        %v3279 = vadd.f32 0.0, %v3278
        %v3280 = vpop.f32.mrb[0].mxu0
        %v3281 = vadd.f32 0.0, %v3280
        %v3282 = vpop.f32.mrb[0].mxu0
        %v3283 = vadd.f32 0.0, %v3282
        %3284 = vmatprep.mubr.bf16.mxu0 %v3045
        %3285 = vmatmul.mubr.bf16.gmra.mrb[0].mxu0 %v3044
        %v3286 = vpop.f32.mrb[0].mxu0
        %v3287 = vadd.f32 0.0, %v3286
        %v3288 = vpop.f32.mrb[0].mxu0
        %v3289 = vadd.f32 0.0, %v3288
        %v3290 = vpop.f32.mrb[0].mxu0
        %v3291 = vadd.f32 0.0, %v3290
        %v3292 = vpop.f32.mrb[0].mxu0
        %v3293 = vadd.f32 0.0, %v3292
        %3294 = vmatprep.mubr.bf16.mxu0 %v3047
        %3295 = vmatmul.mubr.bf16.gmra.mrb[0].mxu0 %v3046
        %v3296 = vpop.f32.mrb[0].mxu0
        %v3297 = vadd.f32 0.0, %v3296
        %v3298 = vpop.f32.mrb[0].mxu0
        %v3299 = vadd.f32 0.0, %v3298
        %v3300 = vpop.f32.mrb[0].mxu0
        %v3301 = vadd.f32 0.0, %v3300
        %v3302 = vpop.f32.mrb[0].mxu0
        %v3303 = vadd.f32 0.0, %v3302
        %3304 = vmatprep.mubr.bf16.mxu0 %v3049
        %3305 = vmatmul.mubr.bf16.gmra.mrb[0].mxu0 %v3048
        %v3306 = vpop.f32.mrb[0].mxu0
        %v3307 = vadd.f32 0.0, %v3306
        %v3308 = vpop.f32.mrb[0].mxu0
        %v3309 = vadd.f32 0.0, %v3308
        %v3310 = vpop.f32.mrb[0].mxu0
        %v3311 = vadd.f32 0.0, %v3310
        %v3312 = vpop.f32.mrb[0].mxu0
        %v3313 = vadd.f32 0.0, %v3312
        %3314 = vmatprep.mubr.bf16.mxu0 %v3051
        %3315 = vmatmul.mubr.bf16.gmra.mrb[0].mxu0 %v3050
        %v3316 = vpop.f32.mrb[0].mxu0
        %v3317 = vadd.f32 0.0, %v3316
        %v3318 = vpop.f32.mrb[0].mxu0
        %v3319 = vadd.f32 0.0, %v3318
        %v3320 = vpop.f32.mrb[0].mxu0
        %v3321 = vadd.f32 0.0, %v3320
        %v3322 = vpop.f32.mrb[0].mxu0
        %v3323 = vadd.f32 0.0, %v3322
        %3324 = vmatprep.mubr.bf16.mxu0 %v3053
        %3325 = vmatmul.mubr.bf16.gmra.mrb[0].mxu0 %v3052
        %v3326 = vpop.f32.mrb[0].mxu0
        %v3327 = vadd.f32 0.0, %v3326
        %v3328 = vpop.f32.mrb[0].mxu0
        %v3329 = vadd.f32 0.0, %v3328
        %v3330 = vpop.f32.mrb[0].mxu0
        %v3331 = vadd.f32 0.0, %v3330
        %v3332 = vpop.f32.mrb[0].mxu0
        %v3333 = vadd.f32 0.0, %v3332
        %3334 = vmatprep.mubr.bf16.mxu0 %v3055
        %3335 = vmatmul.mubr.bf16.gmra.mrb[0].mxu0 %v3054
        %v3336 = vpop.f32.mrb[0].mxu0
        %v3337 = vadd.f32 0.0, %v3336
        %v3338 = vpop.f32.mrb[0].mxu0
        %v3339 = vadd.f32 0.0, %v3338
        %v3340 = vpop.f32.mrb[0].mxu0
        %v3341 = vadd.f32 0.0, %v3340
        %v3342 = vpop.f32.mrb[0].mxu0
        %v3343 = vadd.f32 0.0, %v3342
        %3344 = vdwg.mxu0
        %v3361 = vunpack.c.l.b16 %v2725
        %v3362 = vunpack.c.h.b16 %v2725
        %v3363 = vunpack.c.l.b16 %v2726
        %v3364 = vunpack.c.h.b16 %v2726
        %v3365 = vunpack.c.l.b16 %v2727
        %v3366 = vunpack.c.h.b16 %v2727
        %v3367 = vunpack.c.l.b16 %v2728
        %v3368 = vunpack.c.h.b16 %v2728
        %v3369 = vunpack.c.l.b16 %v2729
        %v3370 = vunpack.c.h.b16 %v2729
        %v3371 = vunpack.c.l.b16 %v2730
        %v3372 = vunpack.c.h.b16 %v2730
        %v3373 = vunpack.c.l.b16 %v2731
        %v3374 = vunpack.c.h.b16 %v2731
        %v3375 = vunpack.c.l.b16 %v2732
        %v3376 = vunpack.c.h.b16 %v2732
        %v3377 = vunpack.c.l.b16 %v2733
        %v3378 = vunpack.c.h.b16 %v2733
        %v3379 = vunpack.c.l.b16 %v2734
        %v3380 = vunpack.c.h.b16 %v2734
        %v3381 = vunpack.c.l.b16 %v2735
        %v3382 = vunpack.c.h.b16 %v2735
        %v3383 = vunpack.c.l.b16 %v2736
        %v3384 = vunpack.c.h.b16 %v2736
        %v3385 = vunpack.c.l.b16 %v2737
        %v3386 = vunpack.c.h.b16 %v2737
        %v3387 = vunpack.c.l.b16 %v2738
        %v3388 = vunpack.c.h.b16 %v2738
        %v3389 = vunpack.c.l.b16 %v2739
        %v3390 = vunpack.c.h.b16 %v2739
        %v3391 = vunpack.c.l.b16 %v2740
        %v3392 = vunpack.c.h.b16 %v2740
        %v3393 = vpack.c.b16 %v3363, %v3361
        %v3394 = vpack.c.b16 %v3364, %v3362
        %v3395 = vpack.c.b16 %v3367, %v3365
        %v3396 = vpack.c.b16 %v3368, %v3366
        %v3397 = vpack.c.b16 %v3371, %v3369
        %v3398 = vpack.c.b16 %v3372, %v3370
        %v3399 = vpack.c.b16 %v3375, %v3373
        %v3400 = vpack.c.b16 %v3376, %v3374
        %v3401 = vpack.c.b16 %v3379, %v3377
        %v3402 = vpack.c.b16 %v3380, %v3378
        %v3403 = vpack.c.b16 %v3383, %v3381
        %v3404 = vpack.c.b16 %v3384, %v3382
        %v3405 = vpack.c.b16 %v3387, %v3385
        %v3406 = vpack.c.b16 %v3388, %v3386
        %v3407 = vpack.c.b16 %v3391, %v3389
        %v3408 = vpack.c.b16 %v3392, %v3390
        %v3457 = vunpack.c.l.b16 %v2741
        %v3458 = vunpack.c.h.b16 %v2741
        %v3459 = vunpack.c.l.b16 %v2742
        %v3460 = vunpack.c.h.b16 %v2742
        %v3461 = vunpack.c.l.b16 %v2743
        %v3462 = vunpack.c.h.b16 %v2743
        %v3463 = vunpack.c.l.b16 %v2744
        %v3464 = vunpack.c.h.b16 %v2744
        %v3465 = vunpack.c.l.b16 %v2745
        %v3466 = vunpack.c.h.b16 %v2745
        %v3467 = vunpack.c.l.b16 %v2746
        %v3468 = vunpack.c.h.b16 %v2746
        %v3469 = vunpack.c.l.b16 %v2747
        %v3470 = vunpack.c.h.b16 %v2747
        %v3471 = vunpack.c.l.b16 %v2748
        %v3472 = vunpack.c.h.b16 %v2748
        %v3473 = vunpack.c.l.b16 %v2749
        %v3474 = vunpack.c.h.b16 %v2749
        %v3475 = vunpack.c.l.b16 %v2750
        %v3476 = vunpack.c.h.b16 %v2750
        %v3477 = vunpack.c.l.b16 %v2751
        %v3478 = vunpack.c.h.b16 %v2751
        %v3479 = vunpack.c.l.b16 %v2752
        %v3480 = vunpack.c.h.b16 %v2752
        %v3481 = vunpack.c.l.b16 %v2753
        %v3482 = vunpack.c.h.b16 %v2753
        %v3483 = vunpack.c.l.b16 %v2754
        %v3484 = vunpack.c.h.b16 %v2754
        %v3485 = vunpack.c.l.b16 %v2755
        %v3486 = vunpack.c.h.b16 %v2755
        %v3487 = vunpack.c.l.b16 %v2756
        %v3488 = vunpack.c.h.b16 %v2756
        %v3489 = vunpack.c.l.b16 %v2757
        %v3490 = vunpack.c.h.b16 %v2757
        %v3491 = vunpack.c.l.b16 %v2758
        %v3492 = vunpack.c.h.b16 %v2758
        %v3493 = vunpack.c.l.b16 %v2759
        %v3494 = vunpack.c.h.b16 %v2759
        %v3495 = vunpack.c.l.b16 %v2760
        %v3496 = vunpack.c.h.b16 %v2760
        %v3497 = vunpack.c.l.b16 %v2761
        %v3498 = vunpack.c.h.b16 %v2761
        %v3499 = vunpack.c.l.b16 %v2762
        %v3500 = vunpack.c.h.b16 %v2762
        %v3501 = vunpack.c.l.b16 %v2763
        %v3502 = vunpack.c.h.b16 %v2763
        %v3503 = vunpack.c.l.b16 %v2764
        %v3504 = vunpack.c.h.b16 %v2764
        %v3505 = vunpack.c.l.b16 %v2765
        %v3506 = vunpack.c.h.b16 %v2765
        %v3507 = vunpack.c.l.b16 %v2766
        %v3508 = vunpack.c.h.b16 %v2766
        %v3509 = vunpack.c.l.b16 %v2767
        %v3510 = vunpack.c.h.b16 %v2767
        %v3511 = vunpack.c.l.b16 %v2768
        %v3512 = vunpack.c.h.b16 %v2768
        %v3513 = vunpack.c.l.b16 %v2769
        %v3514 = vunpack.c.h.b16 %v2769
        %v3515 = vunpack.c.l.b16 %v2770
        %v3516 = vunpack.c.h.b16 %v2770
        %v3517 = vunpack.c.l.b16 %v2771
        %v3518 = vunpack.c.h.b16 %v2771
        %v3519 = vunpack.c.l.b16 %v2772
        %v3520 = vunpack.c.h.b16 %v2772
        %v3521 = vpack.c.b16 %v3459, %v3457
        %v3522 = vpack.c.b16 %v3460, %v3458
        %v3523 = vpack.c.b16 %v3463, %v3461
        %v3524 = vpack.c.b16 %v3464, %v3462
        %v3525 = vpack.c.b16 %v3467, %v3465
        %v3526 = vpack.c.b16 %v3468, %v3466
        %v3527 = vpack.c.b16 %v3471, %v3469
        %v3528 = vpack.c.b16 %v3472, %v3470
        %v3529 = vpack.c.b16 %v3475, %v3473
        %v3530 = vpack.c.b16 %v3476, %v3474
        %v3531 = vpack.c.b16 %v3479, %v3477
        %v3532 = vpack.c.b16 %v3480, %v3478
        %v3533 = vpack.c.b16 %v3483, %v3481
        %v3534 = vpack.c.b16 %v3484, %v3482
        %v3535 = vpack.c.b16 %v3487, %v3485
        %v3536 = vpack.c.b16 %v3488, %v3486
        %v3537 = vpack.c.b16 %v3491, %v3489
        %v3538 = vpack.c.b16 %v3492, %v3490
        %v3539 = vpack.c.b16 %v3495, %v3493
        %v3540 = vpack.c.b16 %v3496, %v3494
        %v3541 = vpack.c.b16 %v3499, %v3497
        %v3542 = vpack.c.b16 %v3500, %v3498
        %v3543 = vpack.c.b16 %v3503, %v3501
        %v3544 = vpack.c.b16 %v3504, %v3502
        %v3545 = vpack.c.b16 %v3507, %v3505
        %v3546 = vpack.c.b16 %v3508, %v3506
        %v3547 = vpack.c.b16 %v3511, %v3509
        %v3548 = vpack.c.b16 %v3512, %v3510
        %v3549 = vpack.c.b16 %v3515, %v3513
        %v3550 = vpack.c.b16 %v3516, %v3514
        %v3551 = vpack.c.b16 %v3519, %v3517
        %v3552 = vpack.c.b16 %v3520, %v3518
        %3585 = vmatprep.subr.bf16.mxu0 %v3522
        %3586 = vmatpush1.bf16.msra.mxu0 %v3521
        %3587 = vmatprep.subr.bf16.mxu0 %v3524
        %3588 = vmatpush1.bf16.msra.mxu0 %v3523
        %3589 = vmatprep.subr.bf16.mxu0 %v3526
        %3590 = vmatpush1.bf16.msra.mxu0 %v3525
        %3591 = vmatprep.subr.bf16.mxu0 %v3528
        %3592 = vmatpush1.bf16.msra.mxu0 %v3527
        %3593 = vmatprep.subr.bf16.mxu0 %v3530
        %3594 = vmatpush1.bf16.msra.mxu0 %v3529
        %3595 = vmatprep.subr.bf16.mxu0 %v3532
        %3596 = vmatpush1.bf16.msra.mxu0 %v3531
        %3597 = vmatprep.subr.bf16.mxu0 %v3534
        %3598 = vmatpush1.bf16.msra.mxu0 %v3533
        %3599 = vmatprep.subr.bf16.mxu0 %v3536
        %3600 = vmatpush1.bf16.msra.mxu0 %v3535
        %3601 = vmatprep.subr.bf16.mxu0 %v3538
        %3602 = vmatpush1.bf16.msra.mxu0 %v3537
        %3603 = vmatprep.subr.bf16.mxu0 %v3540
        %3604 = vmatpush1.bf16.msra.mxu0 %v3539
        %3605 = vmatprep.subr.bf16.mxu0 %v3542
        %3606 = vmatpush1.bf16.msra.mxu0 %v3541
        %3607 = vmatprep.subr.bf16.mxu0 %v3544
        %3608 = vmatpush1.bf16.msra.mxu0 %v3543
        %3609 = vmatprep.subr.bf16.mxu0 %v3546
        %3610 = vmatpush1.bf16.msra.mxu0 %v3545
        %3611 = vmatprep.subr.bf16.mxu0 %v3548
        %3612 = vmatpush1.bf16.msra.mxu0 %v3547
        %3613 = vmatprep.subr.bf16.mxu0 %v3550
        %3614 = vmatpush1.bf16.msra.mxu0 %v3549
        %3615 = vmatprep.subr.bf16.mxu0 %v3552
        %3616 = vmatpush1.bf16.msra.mxu0 %v3551
        %3617 = vmatprep.mubr.bf16.mxu0 %v3394
        %3618 = vmatmul.mubr.bf16.gmra.mrb[0].mxu0 %v3393
        %v3619 = vpop.f32.mrb[0].mxu0
        %v3620 = vadd.f32 %v3267, %v3619
        %v3621 = vpop.f32.mrb[0].mxu0
        %v3622 = vadd.f32 %v3269, %v3621
        %v3623 = vpop.f32.mrb[0].mxu0
        %v3624 = vadd.f32 %v3271, %v3623
        %v3625 = vpop.f32.mrb[0].mxu0
        %v3626 = vadd.f32 %v3273, %v3625
        %3627 = vmatprep.mubr.bf16.mxu0 %v3396
        %3628 = vmatmul.mubr.bf16.gmra.mrb[0].mxu0 %v3395
        %v3629 = vpop.f32.mrb[0].mxu0
        %v3630 = vadd.f32 %v3277, %v3629
        %v3631 = vpop.f32.mrb[0].mxu0
        %v3632 = vadd.f32 %v3279, %v3631
        %v3633 = vpop.f32.mrb[0].mxu0
        %v3634 = vadd.f32 %v3281, %v3633
        %v3635 = vpop.f32.mrb[0].mxu0
        %v3636 = vadd.f32 %v3283, %v3635
        %3637 = vmatprep.mubr.bf16.mxu0 %v3398
        %3638 = vmatmul.mubr.bf16.gmra.mrb[0].mxu0 %v3397
        %v3639 = vpop.f32.mrb[0].mxu0
        %v3640 = vadd.f32 %v3287, %v3639
        %v3641 = vpop.f32.mrb[0].mxu0
        %v3642 = vadd.f32 %v3289, %v3641
        %v3643 = vpop.f32.mrb[0].mxu0
        %v3644 = vadd.f32 %v3291, %v3643
        %v3645 = vpop.f32.mrb[0].mxu0
        %v3646 = vadd.f32 %v3293, %v3645
        %3647 = vmatprep.mubr.bf16.mxu0 %v3400
        %3648 = vmatmul.mubr.bf16.gmra.mrb[0].mxu0 %v3399
        %v3649 = vpop.f32.mrb[0].mxu0
        %v3650 = vadd.f32 %v3297, %v3649
        %v3651 = vpop.f32.mrb[0].mxu0
        %v3652 = vadd.f32 %v3299, %v3651
        %v3653 = vpop.f32.mrb[0].mxu0
        %v3654 = vadd.f32 %v3301, %v3653
        %v3655 = vpop.f32.mrb[0].mxu0
        %v3656 = vadd.f32 %v3303, %v3655
        %3657 = vmatprep.mubr.bf16.mxu0 %v3402
        %3658 = vmatmul.mubr.bf16.gmra.mrb[0].mxu0 %v3401
        %v3659 = vpop.f32.mrb[0].mxu0
        %v3660 = vadd.f32 %v3307, %v3659
        %v3661 = vpop.f32.mrb[0].mxu0
        %v3662 = vadd.f32 %v3309, %v3661
        %v3663 = vpop.f32.mrb[0].mxu0
        %v3664 = vadd.f32 %v3311, %v3663
        %v3665 = vpop.f32.mrb[0].mxu0
        %v3666 = vadd.f32 %v3313, %v3665
        %3667 = vmatprep.mubr.bf16.mxu0 %v3404
        %3668 = vmatmul.mubr.bf16.gmra.mrb[0].mxu0 %v3403
        %v3669 = vpop.f32.mrb[0].mxu0
        %v3670 = vadd.f32 %v3317, %v3669
        %v3671 = vpop.f32.mrb[0].mxu0
        %v3672 = vadd.f32 %v3319, %v3671
        %v3673 = vpop.f32.mrb[0].mxu0
        %v3674 = vadd.f32 %v3321, %v3673
        %v3675 = vpop.f32.mrb[0].mxu0
        %v3676 = vadd.f32 %v3323, %v3675
        %3677 = vmatprep.mubr.bf16.mxu0 %v3406
        %3678 = vmatmul.mubr.bf16.gmra.mrb[0].mxu0 %v3405
        %v3679 = vpop.f32.mrb[0].mxu0
        %v3680 = vadd.f32 %v3327, %v3679
        %v3681 = vpop.f32.mrb[0].mxu0
        %v3682 = vadd.f32 %v3329, %v3681
        %v3683 = vpop.f32.mrb[0].mxu0
        %v3684 = vadd.f32 %v3331, %v3683
        %v3685 = vpop.f32.mrb[0].mxu0
        %v3686 = vadd.f32 %v3333, %v3685
        %3687 = vmatprep.mubr.bf16.mxu0 %v3408
        %3688 = vmatmul.mubr.bf16.gmra.mrb[0].mxu0 %v3407
        %v3689 = vpop.f32.mrb[0].mxu0
        %v3690 = vadd.f32 %v3337, %v3689
        %v3691 = vpop.f32.mrb[0].mxu0
        %v3692 = vadd.f32 %v3339, %v3691
        %v3693 = vpop.f32.mrb[0].mxu0
        %v3694 = vadd.f32 %v3341, %v3693
        %v3695 = vpop.f32.mrb[0].mxu0
        %v3696 = vadd.f32 %v3343, %v3695
        %3697 = vdwg.mxu0
        %v3698 = vld [vmem:[#allocation2] sm:$0xee]
        %v3699 = vld [vmem:[#allocation2 + $0x18] sm:$0xee]
        %v3700 = vld [vmem:[#allocation2 + $0x30] sm:$0xee]
        %v3701 = vld [vmem:[#allocation2 + $0x48] sm:$0xee]
        %v3702 = vld [vmem:[#allocation2 + $0x60] sm:$0xee]
        %v3703 = vld [vmem:[#allocation2 + $0x78] sm:$0xee]
        %v3704 = vld [vmem:[#allocation2 + $0x90] sm:$0xee]
        %v3705 = vld [vmem:[#allocation2 + $0xa8] sm:$0xee]
        %vm3722 = vcmask 1042432
        %vm3723 = vcmask 1046532
        %vm3724 = vmor %vm3722, %vm3723
        %v3725 = vrot.slane %v3698, 5
        %v3726 = vrot.slane %v3725, 4
        %v3727 = vrot.slane %v2726, 5
        %v3728 = vsel %vm3724, %v3726, %v3727
        %v3729 = vrot.slane %v3727, 4
        %v3730 = vrot.slane %v2773, 5
        %v3731 = vsel %vm3724, %v3729, %v3730
        %v3732 = vrot.slane %v3699, 5
        %v3733 = vrot.slane %v3732, 4
        %v3734 = vrot.slane %v2728, 5
        %v3735 = vsel %vm3724, %v3733, %v3734
        %v3736 = vrot.slane %v3734, 4
        %v3737 = vrot.slane %v2774, 5
        %v3738 = vsel %vm3724, %v3736, %v3737
        %v3739 = vrot.slane %v3700, 5
        %v3740 = vrot.slane %v3739, 4
        %v3741 = vrot.slane %v2730, 5
        %v3742 = vsel %vm3724, %v3740, %v3741
        %v3743 = vrot.slane %v3741, 4
        %v3744 = vrot.slane %v2775, 5
        %v3745 = vsel %vm3724, %v3743, %v3744
        %v3746 = vrot.slane %v3701, 5
        %v3747 = vrot.slane %v3746, 4
        %v3748 = vrot.slane %v2732, 5
        %v3749 = vsel %vm3724, %v3747, %v3748
        %v3750 = vrot.slane %v3748, 4
        %v3751 = vrot.slane %v2776, 5
        %v3752 = vsel %vm3724, %v3750, %v3751
        %v3753 = vrot.slane %v3702, 5
        %v3754 = vrot.slane %v3753, 4
        %v3755 = vrot.slane %v2734, 5
        %v3756 = vsel %vm3724, %v3754, %v3755
        %v3757 = vrot.slane %v3755, 4
        %v3758 = vrot.slane %v2777, 5
        %v3759 = vsel %vm3724, %v3757, %v3758
        %v3760 = vrot.slane %v3703, 5
        %v3761 = vrot.slane %v3760, 4
        %v3762 = vrot.slane %v2736, 5
        %v3763 = vsel %vm3724, %v3761, %v3762
        %v3764 = vrot.slane %v3762, 4
        %v3765 = vrot.slane %v2778, 5
        %v3766 = vsel %vm3724, %v3764, %v3765
        %v3767 = vrot.slane %v3704, 5
        %v3768 = vrot.slane %v3767, 4
        %v3769 = vrot.slane %v2738, 5
        %v3770 = vsel %vm3724, %v3768, %v3769
        %v3771 = vrot.slane %v3769, 4
        %v3772 = vrot.slane %v2779, 5
        %v3773 = vsel %vm3724, %v3771, %v3772
        %v3774 = vrot.slane %v3705, 5
        %v3775 = vrot.slane %v3774, 4
        %v3776 = vrot.slane %v2740, 5
        %v3777 = vsel %vm3724, %v3775, %v3776
        %v3778 = vrot.slane %v3776, 4
        %v3779 = vrot.slane %v2780, 5
        %v3780 = vsel %vm3724, %v3778, %v3779
        %v3781 = vld [vmem:[%s6 + $0x200] sm:$0xff]
        %v3782 = vld [vmem:[%s6 + $0x208] sm:$0xff]
        %v3783 = vld [vmem:[%s6 + $0x210] sm:$0xff]
        %v3784 = vld [vmem:[%s6 + $0x218] sm:$0xff]
        %v3785 = vld [vmem:[%s6 + $0x220] sm:$0xff]
        %v3786 = vld [vmem:[%s6 + $0x228] sm:$0xff]
        %v3787 = vld [vmem:[%s6 + $0x230] sm:$0xff]
        %v3788 = vld [vmem:[%s6 + $0x238] sm:$0xff]
        %v3789 = vld [vmem:[%s6 + $0x240] sm:$0xff]
        %v3790 = vld [vmem:[%s6 + $0x248] sm:$0xff]
        %v3791 = vld [vmem:[%s6 + $0x250] sm:$0xff]
        %v3792 = vld [vmem:[%s6 + $0x258] sm:$0xff]
        %v3793 = vld [vmem:[%s6 + $0x260] sm:$0xff]
        %v3794 = vld [vmem:[%s6 + $0x268] sm:$0xff]
        %v3795 = vld [vmem:[%s6 + $0x270] sm:$0xff]
        %v3796 = vld [vmem:[%s6 + $0x278] sm:$0xff]
        %v3797 = vld [vmem:[%s6 + $0x280] sm:$0xff]
        %v3798 = vld [vmem:[%s6 + $0x288] sm:$0xff]
        %v3799 = vld [vmem:[%s6 + $0x290] sm:$0xff]
        %v3800 = vld [vmem:[%s6 + $0x298] sm:$0xff]
        %v3801 = vld [vmem:[%s6 + $0x2a0] sm:$0xff]
        %v3802 = vld [vmem:[%s6 + $0x2a8] sm:$0xff]
        %v3803 = vld [vmem:[%s6 + $0x2b0] sm:$0xff]
        %v3804 = vld [vmem:[%s6 + $0x2b8] sm:$0xff]
        %v3805 = vld [vmem:[%s6 + $0x2c0] sm:$0xff]
        %v3806 = vld [vmem:[%s6 + $0x2c8] sm:$0xff]
        %v3807 = vld [vmem:[%s6 + $0x2d0] sm:$0xff]
        %v3808 = vld [vmem:[%s6 + $0x2d8] sm:$0xff]
        %v3809 = vld [vmem:[%s6 + $0x2e0] sm:$0xff]
        %v3810 = vld [vmem:[%s6 + $0x2e8] sm:$0xff]
        %v3811 = vld [vmem:[%s6 + $0x2f0] sm:$0xff]
        %v3812 = vld [vmem:[%s6 + $0x2f8] sm:$0xff]
        %v3813 = vunpack.c.l.b16 %v3728
        %v3814 = vunpack.c.h.b16 %v3728
        %v3815 = vunpack.c.l.b16 %v3731
        %v3816 = vunpack.c.h.b16 %v3731
        %v3817 = vunpack.c.l.b16 %v3735
        %v3818 = vunpack.c.h.b16 %v3735
        %v3819 = vunpack.c.l.b16 %v3738
        %v3820 = vunpack.c.h.b16 %v3738
        %v3821 = vunpack.c.l.b16 %v3742
        %v3822 = vunpack.c.h.b16 %v3742
        %v3823 = vunpack.c.l.b16 %v3745
        %v3824 = vunpack.c.h.b16 %v3745
        %v3825 = vunpack.c.l.b16 %v3749
        %v3826 = vunpack.c.h.b16 %v3749
        %v3827 = vunpack.c.l.b16 %v3752
        %v3828 = vunpack.c.h.b16 %v3752
        %v3829 = vunpack.c.l.b16 %v3756
        %v3830 = vunpack.c.h.b16 %v3756
        %v3831 = vunpack.c.l.b16 %v3759
        %v3832 = vunpack.c.h.b16 %v3759
        %v3833 = vunpack.c.l.b16 %v3763
        %v3834 = vunpack.c.h.b16 %v3763
        %v3835 = vunpack.c.l.b16 %v3766
        %v3836 = vunpack.c.h.b16 %v3766
        %v3837 = vunpack.c.l.b16 %v3770
        %v3838 = vunpack.c.h.b16 %v3770
        %v3839 = vunpack.c.l.b16 %v3773
        %v3840 = vunpack.c.h.b16 %v3773
        %v3841 = vunpack.c.l.b16 %v3777
        %v3842 = vunpack.c.h.b16 %v3777
        %v3843 = vunpack.c.l.b16 %v3780
        %v3844 = vunpack.c.h.b16 %v3780
        %v3845 = vpack.c.b16 %v3815, %v3813
        %v3846 = vpack.c.b16 %v3816, %v3814
        %v3847 = vpack.c.b16 %v3819, %v3817
        %v3848 = vpack.c.b16 %v3820, %v3818
        %v3849 = vpack.c.b16 %v3823, %v3821
        %v3850 = vpack.c.b16 %v3824, %v3822
        %v3851 = vpack.c.b16 %v3827, %v3825
        %v3852 = vpack.c.b16 %v3828, %v3826
        %v3853 = vpack.c.b16 %v3831, %v3829
        %v3854 = vpack.c.b16 %v3832, %v3830
        %v3855 = vpack.c.b16 %v3835, %v3833
        %v3856 = vpack.c.b16 %v3836, %v3834
        %v3857 = vpack.c.b16 %v3839, %v3837
        %v3858 = vpack.c.b16 %v3840, %v3838
        %v3859 = vpack.c.b16 %v3843, %v3841
        %v3860 = vpack.c.b16 %v3844, %v3842
        %v3909 = vunpack.c.l.b16 %v3781
        %v3910 = vunpack.c.h.b16 %v3781
        %v3911 = vunpack.c.l.b16 %v3782
        %v3912 = vunpack.c.h.b16 %v3782
        %v3913 = vunpack.c.l.b16 %v3783
        %v3914 = vunpack.c.h.b16 %v3783
        %v3915 = vunpack.c.l.b16 %v3784
        %v3916 = vunpack.c.h.b16 %v3784
        %v3917 = vunpack.c.l.b16 %v3785
        %v3918 = vunpack.c.h.b16 %v3785
        %v3919 = vunpack.c.l.b16 %v3786
        %v3920 = vunpack.c.h.b16 %v3786
        %v3921 = vunpack.c.l.b16 %v3787
        %v3922 = vunpack.c.h.b16 %v3787
        %v3923 = vunpack.c.l.b16 %v3788
        %v3924 = vunpack.c.h.b16 %v3788
        %v3925 = vunpack.c.l.b16 %v3789
        %v3926 = vunpack.c.h.b16 %v3789
        %v3927 = vunpack.c.l.b16 %v3790
        %v3928 = vunpack.c.h.b16 %v3790
        %v3929 = vunpack.c.l.b16 %v3791
        %v3930 = vunpack.c.h.b16 %v3791
        %v3931 = vunpack.c.l.b16 %v3792
        %v3932 = vunpack.c.h.b16 %v3792
        %v3933 = vunpack.c.l.b16 %v3793
        %v3934 = vunpack.c.h.b16 %v3793
        %v3935 = vunpack.c.l.b16 %v3794
        %v3936 = vunpack.c.h.b16 %v3794
        %v3937 = vunpack.c.l.b16 %v3795
        %v3938 = vunpack.c.h.b16 %v3795
        %v3939 = vunpack.c.l.b16 %v3796
        %v3940 = vunpack.c.h.b16 %v3796
        %v3941 = vunpack.c.l.b16 %v3797
        %v3942 = vunpack.c.h.b16 %v3797
        %v3943 = vunpack.c.l.b16 %v3798
        %v3944 = vunpack.c.h.b16 %v3798
        %v3945 = vunpack.c.l.b16 %v3799
        %v3946 = vunpack.c.h.b16 %v3799
        %v3947 = vunpack.c.l.b16 %v3800
        %v3948 = vunpack.c.h.b16 %v3800
        %v3949 = vunpack.c.l.b16 %v3801
        %v3950 = vunpack.c.h.b16 %v3801
        %v3951 = vunpack.c.l.b16 %v3802
        %v3952 = vunpack.c.h.b16 %v3802
        %v3953 = vunpack.c.l.b16 %v3803
        %v3954 = vunpack.c.h.b16 %v3803
        %v3955 = vunpack.c.l.b16 %v3804
        %v3956 = vunpack.c.h.b16 %v3804
        %v3957 = vunpack.c.l.b16 %v3805
        %v3958 = vunpack.c.h.b16 %v3805
        %v3959 = vunpack.c.l.b16 %v3806
        %v3960 = vunpack.c.h.b16 %v3806
        %v3961 = vunpack.c.l.b16 %v3807
        %v3962 = vunpack.c.h.b16 %v3807
        %v3963 = vunpack.c.l.b16 %v3808
        %v3964 = vunpack.c.h.b16 %v3808
        %v3965 = vunpack.c.l.b16 %v3809
        %v3966 = vunpack.c.h.b16 %v3809
        %v3967 = vunpack.c.l.b16 %v3810
        %v3968 = vunpack.c.h.b16 %v3810
        %v3969 = vunpack.c.l.b16 %v3811
        %v3970 = vunpack.c.h.b16 %v3811
        %v3971 = vunpack.c.l.b16 %v3812
        %v3972 = vunpack.c.h.b16 %v3812
        %v3973 = vpack.c.b16 %v3911, %v3909
        %v3974 = vpack.c.b16 %v3912, %v3910
        %v3975 = vpack.c.b16 %v3915, %v3913
        %v3976 = vpack.c.b16 %v3916, %v3914
        %v3977 = vpack.c.b16 %v3919, %v3917
        %v3978 = vpack.c.b16 %v3920, %v3918
        %v3979 = vpack.c.b16 %v3923, %v3921
        %v3980 = vpack.c.b16 %v3924, %v3922
        %v3981 = vpack.c.b16 %v3927, %v3925
        %v3982 = vpack.c.b16 %v3928, %v3926
        %v3983 = vpack.c.b16 %v3931, %v3929
        %v3984 = vpack.c.b16 %v3932, %v3930
        %v3985 = vpack.c.b16 %v3935, %v3933
        %v3986 = vpack.c.b16 %v3936, %v3934
        %v3987 = vpack.c.b16 %v3939, %v3937
        %v3988 = vpack.c.b16 %v3940, %v3938
        %v3989 = vpack.c.b16 %v3943, %v3941
        %v3990 = vpack.c.b16 %v3944, %v3942
        %v3991 = vpack.c.b16 %v3947, %v3945
        %v3992 = vpack.c.b16 %v3948, %v3946
        %v3993 = vpack.c.b16 %v3951, %v3949
        %v3994 = vpack.c.b16 %v3952, %v3950
        %v3995 = vpack.c.b16 %v3955, %v3953
        %v3996 = vpack.c.b16 %v3956, %v3954
        %v3997 = vpack.c.b16 %v3959, %v3957
        %v3998 = vpack.c.b16 %v3960, %v3958
        %v3999 = vpack.c.b16 %v3963, %v3961
        %v4000 = vpack.c.b16 %v3964, %v3962
        %v4001 = vpack.c.b16 %v3967, %v3965
        %v4002 = vpack.c.b16 %v3968, %v3966
        %v4003 = vpack.c.b16 %v3971, %v3969
        %v4004 = vpack.c.b16 %v3972, %v3970
        %4037 = vmatprep.subr.bf16.mxu0 %v3974
        %4038 = vmatpush1.bf16.msra.mxu0 %v3973
        %4039 = vmatprep.subr.bf16.mxu0 %v3976
        %4040 = vmatpush1.bf16.msra.mxu0 %v3975
        %4041 = vmatprep.subr.bf16.mxu0 %v3978
        %4042 = vmatpush1.bf16.msra.mxu0 %v3977
        %4043 = vmatprep.subr.bf16.mxu0 %v3980
        %4044 = vmatpush1.bf16.msra.mxu0 %v3979
        %4045 = vmatprep.subr.bf16.mxu0 %v3982
        %4046 = vmatpush1.bf16.msra.mxu0 %v3981
        %4047 = vmatprep.subr.bf16.mxu0 %v3984
        %4048 = vmatpush1.bf16.msra.mxu0 %v3983
        %4049 = vmatprep.subr.bf16.mxu0 %v3986
        %4050 = vmatpush1.bf16.msra.mxu0 %v3985
        %4051 = vmatprep.subr.bf16.mxu0 %v3988
        %4052 = vmatpush1.bf16.msra.mxu0 %v3987
        %4053 = vmatprep.subr.bf16.mxu0 %v3990
        %4054 = vmatpush1.bf16.msra.mxu0 %v3989
        %4055 = vmatprep.subr.bf16.mxu0 %v3992
        %4056 = vmatpush1.bf16.msra.mxu0 %v3991
        %4057 = vmatprep.subr.bf16.mxu0 %v3994
        %4058 = vmatpush1.bf16.msra.mxu0 %v3993
        %4059 = vmatprep.subr.bf16.mxu0 %v3996
        %4060 = vmatpush1.bf16.msra.mxu0 %v3995
        %4061 = vmatprep.subr.bf16.mxu0 %v3998
        %4062 = vmatpush1.bf16.msra.mxu0 %v3997
        %4063 = vmatprep.subr.bf16.mxu0 %v4000
        %4064 = vmatpush1.bf16.msra.mxu0 %v3999
        %4065 = vmatprep.subr.bf16.mxu0 %v4002
        %4066 = vmatpush1.bf16.msra.mxu0 %v4001
        %4067 = vmatprep.subr.bf16.mxu0 %v4004
        %4068 = vmatpush1.bf16.msra.mxu0 %v4003
        %4069 = vmatprep.mubr.bf16.mxu0 %v3846
        %4070 = vmatmul.mubr.bf16.gmra.mrb[0].mxu0 %v3845
        %v4071 = vpop.f32.mrb[0].mxu0
        %v4072 = vadd.f32 0.0, %v4071
        %v4073 = vpop.f32.mrb[0].mxu0
        %v4074 = vadd.f32 0.0, %v4073
        %v4075 = vpop.f32.mrb[0].mxu0
        %v4076 = vadd.f32 0.0, %v4075
        %v4077 = vpop.f32.mrb[0].mxu0
        %v4078 = vadd.f32 0.0, %v4077
        %4079 = vmatprep.mubr.bf16.mxu0 %v3848
        %4080 = vmatmul.mubr.bf16.gmra.mrb[0].mxu0 %v3847
        %v4081 = vpop.f32.mrb[0].mxu0
        %v4082 = vadd.f32 0.0, %v4081
        %v4083 = vpop.f32.mrb[0].mxu0
        %v4084 = vadd.f32 0.0, %v4083
        %v4085 = vpop.f32.mrb[0].mxu0
        %v4086 = vadd.f32 0.0, %v4085
        %v4087 = vpop.f32.mrb[0].mxu0
        %v4088 = vadd.f32 0.0, %v4087
        %4089 = vmatprep.mubr.bf16.mxu0 %v3850
        %4090 = vmatmul.mubr.bf16.gmra.mrb[0].mxu0 %v3849
        %v4091 = vpop.f32.mrb[0].mxu0
        %v4092 = vadd.f32 0.0, %v4091
        %v4093 = vpop.f32.mrb[0].mxu0
        %v4094 = vadd.f32 0.0, %v4093
        %v4095 = vpop.f32.mrb[0].mxu0
        %v4096 = vadd.f32 0.0, %v4095
        %v4097 = vpop.f32.mrb[0].mxu0
        %v4098 = vadd.f32 0.0, %v4097
        %4099 = vmatprep.mubr.bf16.mxu0 %v3852
        %4100 = vmatmul.mubr.bf16.gmra.mrb[0].mxu0 %v3851
        %v4101 = vpop.f32.mrb[0].mxu0
        %v4102 = vadd.f32 0.0, %v4101
        %v4103 = vpop.f32.mrb[0].mxu0
        %v4104 = vadd.f32 0.0, %v4103
        %v4105 = vpop.f32.mrb[0].mxu0
        %v4106 = vadd.f32 0.0, %v4105
        %v4107 = vpop.f32.mrb[0].mxu0
        %v4108 = vadd.f32 0.0, %v4107
        %4109 = vmatprep.mubr.bf16.mxu0 %v3854
        %4110 = vmatmul.mubr.bf16.gmra.mrb[0].mxu0 %v3853
        %v4111 = vpop.f32.mrb[0].mxu0
        %v4112 = vadd.f32 0.0, %v4111
        %v4113 = vpop.f32.mrb[0].mxu0
        %v4114 = vadd.f32 0.0, %v4113
        %v4115 = vpop.f32.mrb[0].mxu0
        %v4116 = vadd.f32 0.0, %v4115
        %v4117 = vpop.f32.mrb[0].mxu0
        %v4118 = vadd.f32 0.0, %v4117
        %4119 = vmatprep.mubr.bf16.mxu0 %v3856
        %4120 = vmatmul.mubr.bf16.gmra.mrb[0].mxu0 %v3855
        %v4121 = vpop.f32.mrb[0].mxu0
        %v4122 = vadd.f32 0.0, %v4121
        %v4123 = vpop.f32.mrb[0].mxu0
        %v4124 = vadd.f32 0.0, %v4123
        %v4125 = vpop.f32.mrb[0].mxu0
        %v4126 = vadd.f32 0.0, %v4125
        %v4127 = vpop.f32.mrb[0].mxu0
        %v4128 = vadd.f32 0.0, %v4127
        %4129 = vmatprep.mubr.bf16.mxu0 %v3858
        %4130 = vmatmul.mubr.bf16.gmra.mrb[0].mxu0 %v3857
        %v4131 = vpop.f32.mrb[0].mxu0
        %v4132 = vadd.f32 0.0, %v4131
        %v4133 = vpop.f32.mrb[0].mxu0
        %v4134 = vadd.f32 0.0, %v4133
        %v4135 = vpop.f32.mrb[0].mxu0
        %v4136 = vadd.f32 0.0, %v4135
        %v4137 = vpop.f32.mrb[0].mxu0
        %v4138 = vadd.f32 0.0, %v4137
        %4139 = vmatprep.mubr.bf16.mxu0 %v3860
        %4140 = vmatmul.mubr.bf16.gmra.mrb[0].mxu0 %v3859
        %v4141 = vpop.f32.mrb[0].mxu0
        %v4142 = vadd.f32 0.0, %v4141
        %v4143 = vpop.f32.mrb[0].mxu0
        %v4144 = vadd.f32 0.0, %v4143
        %v4145 = vpop.f32.mrb[0].mxu0
        %v4146 = vadd.f32 0.0, %v4145
        %v4147 = vpop.f32.mrb[0].mxu0
        %v4148 = vadd.f32 0.0, %v4147
        %4149 = vdwg.mxu0
        %v4150 = vadd.f32 %v3620, %v4072
        %v4151 = vadd.f32 %v3622, %v4074
        %v4152 = vadd.f32 %v3624, %v4076
        %v4153 = vadd.f32 %v3626, %v4078
        %v4154 = vadd.f32 %v3630, %v4082
        %v4155 = vadd.f32 %v3632, %v4084
        %v4156 = vadd.f32 %v3634, %v4086
        %v4157 = vadd.f32 %v3636, %v4088
        %v4158 = vadd.f32 %v3640, %v4092
        %v4159 = vadd.f32 %v3642, %v4094
        %v4160 = vadd.f32 %v3644, %v4096
        %v4161 = vadd.f32 %v3646, %v4098
        %v4162 = vadd.f32 %v3650, %v4102
        %v4163 = vadd.f32 %v3652, %v4104
        %v4164 = vadd.f32 %v3654, %v4106
        %v4165 = vadd.f32 %v3656, %v4108
        %v4166 = vadd.f32 %v3660, %v4112
        %v4167 = vadd.f32 %v3662, %v4114
        %v4168 = vadd.f32 %v3664, %v4116
        %v4169 = vadd.f32 %v3666, %v4118
        %v4170 = vadd.f32 %v3670, %v4122
        %v4171 = vadd.f32 %v3672, %v4124
        %v4172 = vadd.f32 %v3674, %v4126
        %v4173 = vadd.f32 %v3676, %v4128
        %v4174 = vadd.f32 %v3680, %v4132
        %v4175 = vadd.f32 %v3682, %v4134
        %v4176 = vadd.f32 %v3684, %v4136
        %v4177 = vadd.f32 %v3686, %v4138
        %v4178 = vadd.f32 %v3690, %v4142
        %v4179 = vadd.f32 %v3692, %v4144
        %v4180 = vadd.f32 %v3694, %v4146
        %v4181 = vadd.f32 %v3696, %v4148
        %v4182 = vld [vmem:[%s1763] sm:$0xff]
        %v4183 = vld [vmem:[%s1763 + $0x8] sm:$0xff]
        %v4184 = vld [vmem:[%s1763 + $0x18] sm:$0xff]
        %v4185 = vld [vmem:[%s1763 + $0x20] sm:$0xff]
        %v4186 = vld [vmem:[%s1763 + $0x30] sm:$0xff]
        %v4187 = vld [vmem:[%s1763 + $0x38] sm:$0xff]
        %v4188 = vld [vmem:[%s1763 + $0x48] sm:$0xff]
        %v4189 = vld [vmem:[%s1763 + $0x50] sm:$0xff]
        %v4190 = vld [vmem:[%s1763 + $0x60] sm:$0xff]
        %v4191 = vld [vmem:[%s1763 + $0x68] sm:$0xff]
        %v4192 = vld [vmem:[%s1763 + $0x78] sm:$0xff]
        %v4193 = vld [vmem:[%s1763 + $0x80] sm:$0xff]
        %v4194 = vld [vmem:[%s1763 + $0x90] sm:$0xff]
        %v4195 = vld [vmem:[%s1763 + $0x98] sm:$0xff]
        %v4196 = vld [vmem:[%s1763 + $0xa8] sm:$0xff]
        %v4197 = vld [vmem:[%s1763 + $0xb0] sm:$0xff]
        %v4198 = vld [vmem:[%s6 + $0x300] sm:$0xff]
        %v4199 = vld [vmem:[%s6 + $0x308] sm:$0xff]
        %v4200 = vld [vmem:[%s6 + $0x310] sm:$0xff]
        %v4201 = vld [vmem:[%s6 + $0x318] sm:$0xff]
        %v4202 = vld [vmem:[%s6 + $0x320] sm:$0xff]
        %v4203 = vld [vmem:[%s6 + $0x328] sm:$0xff]
        %v4204 = vld [vmem:[%s6 + $0x330] sm:$0xff]
        %v4205 = vld [vmem:[%s6 + $0x338] sm:$0xff]
        %v4206 = vld [vmem:[%s6 + $0x340] sm:$0xff]
        %v4207 = vld [vmem:[%s6 + $0x348] sm:$0xff]
        %v4208 = vld [vmem:[%s6 + $0x350] sm:$0xff]
        %v4209 = vld [vmem:[%s6 + $0x358] sm:$0xff]
        %v4210 = vld [vmem:[%s6 + $0x360] sm:$0xff]
        %v4211 = vld [vmem:[%s6 + $0x368] sm:$0xff]
        %v4212 = vld [vmem:[%s6 + $0x370] sm:$0xff]
        %v4213 = vld [vmem:[%s6 + $0x378] sm:$0xff]
        %v4214 = vld [vmem:[%s6 + $0x380] sm:$0xff]
        %v4215 = vld [vmem:[%s6 + $0x388] sm:$0xff]
        %v4216 = vld [vmem:[%s6 + $0x390] sm:$0xff]
        %v4217 = vld [vmem:[%s6 + $0x398] sm:$0xff]
        %v4218 = vld [vmem:[%s6 + $0x3a0] sm:$0xff]
        %v4219 = vld [vmem:[%s6 + $0x3a8] sm:$0xff]
        %v4220 = vld [vmem:[%s6 + $0x3b0] sm:$0xff]
        %v4221 = vld [vmem:[%s6 + $0x3b8] sm:$0xff]
        %v4222 = vld [vmem:[%s6 + $0x3c0] sm:$0xff]
        %v4223 = vld [vmem:[%s6 + $0x3c8] sm:$0xff]
        %v4224 = vld [vmem:[%s6 + $0x3d0] sm:$0xff]
        %v4225 = vld [vmem:[%s6 + $0x3d8] sm:$0xff]
        %v4226 = vld [vmem:[%s6 + $0x3e0] sm:$0xff]
        %v4227 = vld [vmem:[%s6 + $0x3e8] sm:$0xff]
        %v4228 = vld [vmem:[%s6 + $0x3f0] sm:$0xff]
        %v4229 = vld [vmem:[%s6 + $0x3f8] sm:$0xff]
        %v4246 = vunpack.c.l.b16 %v4182
        %v4247 = vunpack.c.h.b16 %v4182
        %v4248 = vunpack.c.l.b16 %v4183
        %v4249 = vunpack.c.h.b16 %v4183
        %v4250 = vunpack.c.l.b16 %v4184
        %v4251 = vunpack.c.h.b16 %v4184
        %v4252 = vunpack.c.l.b16 %v4185
        %v4253 = vunpack.c.h.b16 %v4185
        %v4254 = vunpack.c.l.b16 %v4186
        %v4255 = vunpack.c.h.b16 %v4186
        %v4256 = vunpack.c.l.b16 %v4187
        %v4257 = vunpack.c.h.b16 %v4187
        %v4258 = vunpack.c.l.b16 %v4188
        %v4259 = vunpack.c.h.b16 %v4188
        %v4260 = vunpack.c.l.b16 %v4189
        %v4261 = vunpack.c.h.b16 %v4189
        %v4262 = vunpack.c.l.b16 %v4190
        %v4263 = vunpack.c.h.b16 %v4190
        %v4264 = vunpack.c.l.b16 %v4191
        %v4265 = vunpack.c.h.b16 %v4191
        %v4266 = vunpack.c.l.b16 %v4192
        %v4267 = vunpack.c.h.b16 %v4192
        %v4268 = vunpack.c.l.b16 %v4193
        %v4269 = vunpack.c.h.b16 %v4193
        %v4270 = vunpack.c.l.b16 %v4194
        %v4271 = vunpack.c.h.b16 %v4194
        %v4272 = vunpack.c.l.b16 %v4195
        %v4273 = vunpack.c.h.b16 %v4195
        %v4274 = vunpack.c.l.b16 %v4196
        %v4275 = vunpack.c.h.b16 %v4196
        %v4276 = vunpack.c.l.b16 %v4197
        %v4277 = vunpack.c.h.b16 %v4197
        %v4278 = vpack.c.b16 %v4248, %v4246
        %v4279 = vpack.c.b16 %v4249, %v4247
        %v4280 = vpack.c.b16 %v4252, %v4250
        %v4281 = vpack.c.b16 %v4253, %v4251
        %v4282 = vpack.c.b16 %v4256, %v4254
        %v4283 = vpack.c.b16 %v4257, %v4255
        %v4284 = vpack.c.b16 %v4260, %v4258
        %v4285 = vpack.c.b16 %v4261, %v4259
        %v4286 = vpack.c.b16 %v4264, %v4262
        %v4287 = vpack.c.b16 %v4265, %v4263
        %v4288 = vpack.c.b16 %v4268, %v4266
        %v4289 = vpack.c.b16 %v4269, %v4267
        %v4290 = vpack.c.b16 %v4272, %v4270
        %v4291 = vpack.c.b16 %v4273, %v4271
        %v4292 = vpack.c.b16 %v4276, %v4274
        %v4293 = vpack.c.b16 %v4277, %v4275
        %v4342 = vunpack.c.l.b16 %v4198
        %v4343 = vunpack.c.h.b16 %v4198
        %v4344 = vunpack.c.l.b16 %v4199
        %v4345 = vunpack.c.h.b16 %v4199
        %v4346 = vunpack.c.l.b16 %v4200
        %v4347 = vunpack.c.h.b16 %v4200
        %v4348 = vunpack.c.l.b16 %v4201
        %v4349 = vunpack.c.h.b16 %v4201
        %v4350 = vunpack.c.l.b16 %v4202
        %v4351 = vunpack.c.h.b16 %v4202
        %v4352 = vunpack.c.l.b16 %v4203
        %v4353 = vunpack.c.h.b16 %v4203
        %v4354 = vunpack.c.l.b16 %v4204
        %v4355 = vunpack.c.h.b16 %v4204
        %v4356 = vunpack.c.l.b16 %v4205
        %v4357 = vunpack.c.h.b16 %v4205
        %v4358 = vunpack.c.l.b16 %v4206
        %v4359 = vunpack.c.h.b16 %v4206
        %v4360 = vunpack.c.l.b16 %v4207
        %v4361 = vunpack.c.h.b16 %v4207
        %v4362 = vunpack.c.l.b16 %v4208
        %v4363 = vunpack.c.h.b16 %v4208
        %v4364 = vunpack.c.l.b16 %v4209
        %v4365 = vunpack.c.h.b16 %v4209
        %v4366 = vunpack.c.l.b16 %v4210
        %v4367 = vunpack.c.h.b16 %v4210
        %v4368 = vunpack.c.l.b16 %v4211
        %v4369 = vunpack.c.h.b16 %v4211
        %v4370 = vunpack.c.l.b16 %v4212
        %v4371 = vunpack.c.h.b16 %v4212
        %v4372 = vunpack.c.l.b16 %v4213
        %v4373 = vunpack.c.h.b16 %v4213
        %v4374 = vunpack.c.l.b16 %v4214
        %v4375 = vunpack.c.h.b16 %v4214
        %v4376 = vunpack.c.l.b16 %v4215
        %v4377 = vunpack.c.h.b16 %v4215
        %v4378 = vunpack.c.l.b16 %v4216
        %v4379 = vunpack.c.h.b16 %v4216
        %v4380 = vunpack.c.l.b16 %v4217
        %v4381 = vunpack.c.h.b16 %v4217
        %v4382 = vunpack.c.l.b16 %v4218
        %v4383 = vunpack.c.h.b16 %v4218
        %v4384 = vunpack.c.l.b16 %v4219
        %v4385 = vunpack.c.h.b16 %v4219
        %v4386 = vunpack.c.l.b16 %v4220
        %v4387 = vunpack.c.h.b16 %v4220
        %v4388 = vunpack.c.l.b16 %v4221
        %v4389 = vunpack.c.h.b16 %v4221
        %v4390 = vunpack.c.l.b16 %v4222
        %v4391 = vunpack.c.h.b16 %v4222
        %v4392 = vunpack.c.l.b16 %v4223
        %v4393 = vunpack.c.h.b16 %v4223
        %v4394 = vunpack.c.l.b16 %v4224
        %v4395 = vunpack.c.h.b16 %v4224
        %v4396 = vunpack.c.l.b16 %v4225
        %v4397 = vunpack.c.h.b16 %v4225
        %v4398 = vunpack.c.l.b16 %v4226
        %v4399 = vunpack.c.h.b16 %v4226
        %v4400 = vunpack.c.l.b16 %v4227
        %v4401 = vunpack.c.h.b16 %v4227
        %v4402 = vunpack.c.l.b16 %v4228
        %v4403 = vunpack.c.h.b16 %v4228
        %v4404 = vunpack.c.l.b16 %v4229
        %v4405 = vunpack.c.h.b16 %v4229
        %v4406 = vpack.c.b16 %v4344, %v4342
        %v4407 = vpack.c.b16 %v4345, %v4343
        %v4408 = vpack.c.b16 %v4348, %v4346
        %v4409 = vpack.c.b16 %v4349, %v4347
        %v4410 = vpack.c.b16 %v4352, %v4350
        %v4411 = vpack.c.b16 %v4353, %v4351
        %v4412 = vpack.c.b16 %v4356, %v4354
        %v4413 = vpack.c.b16 %v4357, %v4355
        %v4414 = vpack.c.b16 %v4360, %v4358
        %v4415 = vpack.c.b16 %v4361, %v4359
        %v4416 = vpack.c.b16 %v4364, %v4362
        %v4417 = vpack.c.b16 %v4365, %v4363
        %v4418 = vpack.c.b16 %v4368, %v4366
        %v4419 = vpack.c.b16 %v4369, %v4367
        %v4420 = vpack.c.b16 %v4372, %v4370
        %v4421 = vpack.c.b16 %v4373, %v4371
        %v4422 = vpack.c.b16 %v4376, %v4374
        %v4423 = vpack.c.b16 %v4377, %v4375
        %v4424 = vpack.c.b16 %v4380, %v4378
        %v4425 = vpack.c.b16 %v4381, %v4379
        %v4426 = vpack.c.b16 %v4384, %v4382
        %v4427 = vpack.c.b16 %v4385, %v4383
        %v4428 = vpack.c.b16 %v4388, %v4386
        %v4429 = vpack.c.b16 %v4389, %v4387
        %v4430 = vpack.c.b16 %v4392, %v4390
        %v4431 = vpack.c.b16 %v4393, %v4391
        %v4432 = vpack.c.b16 %v4396, %v4394
        %v4433 = vpack.c.b16 %v4397, %v4395
        %v4434 = vpack.c.b16 %v4400, %v4398
        %v4435 = vpack.c.b16 %v4401, %v4399
        %v4436 = vpack.c.b16 %v4404, %v4402
        %v4437 = vpack.c.b16 %v4405, %v4403
        %4470 = vmatprep.subr.bf16.mxu0 %v4407
        %4471 = vmatpush1.bf16.msra.mxu0 %v4406
        %4472 = vmatprep.subr.bf16.mxu0 %v4409
        %4473 = vmatpush1.bf16.msra.mxu0 %v4408
        %4474 = vmatprep.subr.bf16.mxu0 %v4411
        %4475 = vmatpush1.bf16.msra.mxu0 %v4410
        %4476 = vmatprep.subr.bf16.mxu0 %v4413
        %4477 = vmatpush1.bf16.msra.mxu0 %v4412
        %4478 = vmatprep.subr.bf16.mxu0 %v4415
        %4479 = vmatpush1.bf16.msra.mxu0 %v4414
        %4480 = vmatprep.subr.bf16.mxu0 %v4417
        %4481 = vmatpush1.bf16.msra.mxu0 %v4416
        %4482 = vmatprep.subr.bf16.mxu0 %v4419
        %4483 = vmatpush1.bf16.msra.mxu0 %v4418
        %4484 = vmatprep.subr.bf16.mxu0 %v4421
        %4485 = vmatpush1.bf16.msra.mxu0 %v4420
        %4486 = vmatprep.subr.bf16.mxu0 %v4423
        %4487 = vmatpush1.bf16.msra.mxu0 %v4422
        %4488 = vmatprep.subr.bf16.mxu0 %v4425
        %4489 = vmatpush1.bf16.msra.mxu0 %v4424
        %4490 = vmatprep.subr.bf16.mxu0 %v4427
        %4491 = vmatpush1.bf16.msra.mxu0 %v4426
        %4492 = vmatprep.subr.bf16.mxu0 %v4429
        %4493 = vmatpush1.bf16.msra.mxu0 %v4428
        %4494 = vmatprep.subr.bf16.mxu0 %v4431
        %4495 = vmatpush1.bf16.msra.mxu0 %v4430
        %4496 = vmatprep.subr.bf16.mxu0 %v4433
        %4497 = vmatpush1.bf16.msra.mxu0 %v4432
        %4498 = vmatprep.subr.bf16.mxu0 %v4435
        %4499 = vmatpush1.bf16.msra.mxu0 %v4434
        %4500 = vmatprep.subr.bf16.mxu0 %v4437
        %4501 = vmatpush1.bf16.msra.mxu0 %v4436
        %4502 = vmatprep.mubr.bf16.mxu0 %v4279
        %4503 = vmatmul.mubr.bf16.gmra.mrb[0].mxu0 %v4278
        %v4504 = vpop.f32.mrb[0].mxu0
        %v4505 = vadd.f32 0.0, %v4504
        %v4506 = vpop.f32.mrb[0].mxu0
        %v4507 = vadd.f32 0.0, %v4506
        %v4508 = vpop.f32.mrb[0].mxu0
        %v4509 = vadd.f32 0.0, %v4508
        %v4510 = vpop.f32.mrb[0].mxu0
        %v4511 = vadd.f32 0.0, %v4510
        %4512 = vmatprep.mubr.bf16.mxu0 %v4281
        %4513 = vmatmul.mubr.bf16.gmra.mrb[0].mxu0 %v4280
        %v4514 = vpop.f32.mrb[0].mxu0
        %v4515 = vadd.f32 0.0, %v4514
        %v4516 = vpop.f32.mrb[0].mxu0
        %v4517 = vadd.f32 0.0, %v4516
        %v4518 = vpop.f32.mrb[0].mxu0
        %v4519 = vadd.f32 0.0, %v4518
        %v4520 = vpop.f32.mrb[0].mxu0
        %v4521 = vadd.f32 0.0, %v4520
        %4522 = vmatprep.mubr.bf16.mxu0 %v4283
        %4523 = vmatmul.mubr.bf16.gmra.mrb[0].mxu0 %v4282
        %v4524 = vpop.f32.mrb[0].mxu0
        %v4525 = vadd.f32 0.0, %v4524
        %v4526 = vpop.f32.mrb[0].mxu0
        %v4527 = vadd.f32 0.0, %v4526
        %v4528 = vpop.f32.mrb[0].mxu0
        %v4529 = vadd.f32 0.0, %v4528
        %v4530 = vpop.f32.mrb[0].mxu0
        %v4531 = vadd.f32 0.0, %v4530
        %4532 = vmatprep.mubr.bf16.mxu0 %v4285
        %4533 = vmatmul.mubr.bf16.gmra.mrb[0].mxu0 %v4284
        %v4534 = vpop.f32.mrb[0].mxu0
        %v4535 = vadd.f32 0.0, %v4534
        %v4536 = vpop.f32.mrb[0].mxu0
        %v4537 = vadd.f32 0.0, %v4536
        %v4538 = vpop.f32.mrb[0].mxu0
        %v4539 = vadd.f32 0.0, %v4538
        %v4540 = vpop.f32.mrb[0].mxu0
        %v4541 = vadd.f32 0.0, %v4540
        %4542 = vmatprep.mubr.bf16.mxu0 %v4287
        %4543 = vmatmul.mubr.bf16.gmra.mrb[0].mxu0 %v4286
        %v4544 = vpop.f32.mrb[0].mxu0
        %v4545 = vadd.f32 0.0, %v4544
        %v4546 = vpop.f32.mrb[0].mxu0
        %v4547 = vadd.f32 0.0, %v4546
        %v4548 = vpop.f32.mrb[0].mxu0
        %v4549 = vadd.f32 0.0, %v4548
        %v4550 = vpop.f32.mrb[0].mxu0
        %v4551 = vadd.f32 0.0, %v4550
        %4552 = vmatprep.mubr.bf16.mxu0 %v4289
        %4553 = vmatmul.mubr.bf16.gmra.mrb[0].mxu0 %v4288
        %v4554 = vpop.f32.mrb[0].mxu0
        %v4555 = vadd.f32 0.0, %v4554
        %v4556 = vpop.f32.mrb[0].mxu0
        %v4557 = vadd.f32 0.0, %v4556
        %v4558 = vpop.f32.mrb[0].mxu0
        %v4559 = vadd.f32 0.0, %v4558
        %v4560 = vpop.f32.mrb[0].mxu0
        %v4561 = vadd.f32 0.0, %v4560
        %4562 = vmatprep.mubr.bf16.mxu0 %v4291
        %4563 = vmatmul.mubr.bf16.gmra.mrb[0].mxu0 %v4290
        %v4564 = vpop.f32.mrb[0].mxu0
        %v4565 = vadd.f32 0.0, %v4564
        %v4566 = vpop.f32.mrb[0].mxu0
        %v4567 = vadd.f32 0.0, %v4566
        %v4568 = vpop.f32.mrb[0].mxu0
        %v4569 = vadd.f32 0.0, %v4568
        %v4570 = vpop.f32.mrb[0].mxu0
        %v4571 = vadd.f32 0.0, %v4570
        %4572 = vmatprep.mubr.bf16.mxu0 %v4293
        %4573 = vmatmul.mubr.bf16.gmra.mrb[0].mxu0 %v4292
        %v4574 = vpop.f32.mrb[0].mxu0
        %v4575 = vadd.f32 0.0, %v4574
        %v4576 = vpop.f32.mrb[0].mxu0
        %v4577 = vadd.f32 0.0, %v4576
        %v4578 = vpop.f32.mrb[0].mxu0
        %v4579 = vadd.f32 0.0, %v4578
        %v4580 = vpop.f32.mrb[0].mxu0
        %v4581 = vadd.f32 0.0, %v4580
        %4582 = vdwg.mxu0
        %v4583 = vadd.f32 %v4150, %v4505
        %v4584 = vadd.f32 %v4151, %v4507
        %v4585 = vadd.f32 %v4152, %v4509
        %v4586 = vadd.f32 %v4153, %v4511
        %v4587 = vadd.f32 %v4154, %v4515
        %v4588 = vadd.f32 %v4155, %v4517
        %v4589 = vadd.f32 %v4156, %v4519
        %v4590 = vadd.f32 %v4157, %v4521
        %v4591 = vadd.f32 %v4158, %v4525
        %v4592 = vadd.f32 %v4159, %v4527
        %v4593 = vadd.f32 %v4160, %v4529
        %v4594 = vadd.f32 %v4161, %v4531
        %v4595 = vadd.f32 %v4162, %v4535
        %v4596 = vadd.f32 %v4163, %v4537
        %v4597 = vadd.f32 %v4164, %v4539
        %v4598 = vadd.f32 %v4165, %v4541
        %v4599 = vadd.f32 %v4166, %v4545
        %v4600 = vadd.f32 %v4167, %v4547
        %v4601 = vadd.f32 %v4168, %v4549
        %v4602 = vadd.f32 %v4169, %v4551
        %v4603 = vadd.f32 %v4170, %v4555
        %v4604 = vadd.f32 %v4171, %v4557
        %v4605 = vadd.f32 %v4172, %v4559
        %v4606 = vadd.f32 %v4173, %v4561
        %v4607 = vadd.f32 %v4174, %v4565
        %v4608 = vadd.f32 %v4175, %v4567
        %v4609 = vadd.f32 %v4176, %v4569
        %v4610 = vadd.f32 %v4177, %v4571
        %v4611 = vadd.f32 %v4178, %v4575
        %v4612 = vadd.f32 %v4179, %v4577
        %v4613 = vadd.f32 %v4180, %v4579
        %v4614 = vadd.f32 %v4181, %v4581
        %v4615 = vld [vmem:[%s1763] sm:$0xff]
        %v4616 = vld [vmem:[%s1763 + $0x8] sm:$0xff]
        %v4617 = vld [vmem:[%s1763 + $0x10] sm:$0x11]
        %v4618 = vld [vmem:[%s1763 + $0x18] sm:$0xff]
        %v4619 = vld [vmem:[%s1763 + $0x20] sm:$0xff]
        %v4620 = vld [vmem:[%s1763 + $0x28] sm:$0x11]
        %v4621 = vld [vmem:[%s1763 + $0x30] sm:$0xff]
        %v4622 = vld [vmem:[%s1763 + $0x38] sm:$0xff]
        %v4623 = vld [vmem:[%s1763 + $0x40] sm:$0x11]
        %v4624 = vld [vmem:[%s1763 + $0x48] sm:$0xff]
        %v4625 = vld [vmem:[%s1763 + $0x50] sm:$0xff]
        %v4626 = vld [vmem:[%s1763 + $0x58] sm:$0x11]
        %v4627 = vld [vmem:[%s1763 + $0x60] sm:$0xff]
        %v4628 = vld [vmem:[%s1763 + $0x68] sm:$0xff]
        %v4629 = vld [vmem:[%s1763 + $0x70] sm:$0x11]
        %v4630 = vld [vmem:[%s1763 + $0x78] sm:$0xff]
        %v4631 = vld [vmem:[%s1763 + $0x80] sm:$0xff]
        %v4632 = vld [vmem:[%s1763 + $0x88] sm:$0x11]
        %v4633 = vld [vmem:[%s1763 + $0x90] sm:$0xff]
        %v4634 = vld [vmem:[%s1763 + $0x98] sm:$0xff]
        %v4635 = vld [vmem:[%s1763 + $0xa0] sm:$0x11]
        %v4636 = vld [vmem:[%s1763 + $0xa8] sm:$0xff]
        %v4637 = vld [vmem:[%s1763 + $0xb0] sm:$0xff]
        %v4638 = vld [vmem:[%s1763 + $0xb8] sm:$0x11]
        %v4640 = vshrl.u32 %v4615, 16
        %v4642 = vrot.slane %v4640, 4
        %v4643 = vshll.u32 %v4615, 16
        %v4645 = vrot.slane %v4643, 5
        %v4646 = vor.u32 %v4642, %v4645
        %v4647 = vrot.slane %v4646, 4
        %v4649 = vshll.u32 %v4616, 16
        %v4651 = vrot.slane %v4649, 5
        %v4652 = vsel %vm2783, %v4647, %v4651
        %v4653 = vshrl.u32 %v4616, 16
        %v4655 = vrot.slane %v4653, 4
        %v4656 = vor.u32 %v4655, %v4651
        %v4657 = vrot.slane %v4656, 4
        %v4659 = vshll.u32 %v4617, 16
        %v4661 = vrot.slane %v4659, 5
        %v4662 = vsel %vm2783, %v4657, %v4661
        %v4664 = vshrl.u32 %v4618, 16
        %v4666 = vrot.slane %v4664, 4
        %v4667 = vshll.u32 %v4618, 16
        %v4669 = vrot.slane %v4667, 5
        %v4670 = vor.u32 %v4666, %v4669
        %v4671 = vrot.slane %v4670, 4
        %v4673 = vshll.u32 %v4619, 16
        %v4675 = vrot.slane %v4673, 5
        %v4676 = vsel %vm2783, %v4671, %v4675
        %v4677 = vshrl.u32 %v4619, 16
        %v4679 = vrot.slane %v4677, 4
        %v4680 = vor.u32 %v4679, %v4675
        %v4681 = vrot.slane %v4680, 4
        %v4683 = vshll.u32 %v4620, 16
        %v4685 = vrot.slane %v4683, 5
        %v4686 = vsel %vm2783, %v4681, %v4685
        %v4688 = vshrl.u32 %v4621, 16
        %v4690 = vrot.slane %v4688, 4
        %v4691 = vshll.u32 %v4621, 16
        %v4693 = vrot.slane %v4691, 5
        %v4694 = vor.u32 %v4690, %v4693
        %v4695 = vrot.slane %v4694, 4
        %v4697 = vshll.u32 %v4622, 16
        %v4699 = vrot.slane %v4697, 5
        %v4700 = vsel %vm2783, %v4695, %v4699
        %v4701 = vshrl.u32 %v4622, 16
        %v4703 = vrot.slane %v4701, 4
        %v4704 = vor.u32 %v4703, %v4699
        %v4705 = vrot.slane %v4704, 4
        %v4707 = vshll.u32 %v4623, 16
        %v4709 = vrot.slane %v4707, 5
        %v4710 = vsel %vm2783, %v4705, %v4709
        %v4712 = vshrl.u32 %v4624, 16
        %v4714 = vrot.slane %v4712, 4
        %v4715 = vshll.u32 %v4624, 16
        %v4717 = vrot.slane %v4715, 5
        %v4718 = vor.u32 %v4714, %v4717
        %v4719 = vrot.slane %v4718, 4
        %v4721 = vshll.u32 %v4625, 16
        %v4723 = vrot.slane %v4721, 5
        %v4724 = vsel %vm2783, %v4719, %v4723
        %v4725 = vshrl.u32 %v4625, 16
        %v4727 = vrot.slane %v4725, 4
        %v4728 = vor.u32 %v4727, %v4723
        %v4729 = vrot.slane %v4728, 4
        %v4731 = vshll.u32 %v4626, 16
        %v4733 = vrot.slane %v4731, 5
        %v4734 = vsel %vm2783, %v4729, %v4733
        %v4736 = vshrl.u32 %v4627, 16
        %v4738 = vrot.slane %v4736, 4
        %v4739 = vshll.u32 %v4627, 16
        %v4741 = vrot.slane %v4739, 5
        %v4742 = vor.u32 %v4738, %v4741
        %v4743 = vrot.slane %v4742, 4
        %v4745 = vshll.u32 %v4628, 16
        %v4747 = vrot.slane %v4745, 5
        %v4748 = vsel %vm2783, %v4743, %v4747
        %v4749 = vshrl.u32 %v4628, 16
        %v4751 = vrot.slane %v4749, 4
        %v4752 = vor.u32 %v4751, %v4747
        %v4753 = vrot.slane %v4752, 4
        %v4755 = vshll.u32 %v4629, 16
        %v4757 = vrot.slane %v4755, 5
        %v4758 = vsel %vm2783, %v4753, %v4757
        %v4760 = vshrl.u32 %v4630, 16
        %v4762 = vrot.slane %v4760, 4
        %v4763 = vshll.u32 %v4630, 16
        %v4765 = vrot.slane %v4763, 5
        %v4766 = vor.u32 %v4762, %v4765
        %v4767 = vrot.slane %v4766, 4
        %v4769 = vshll.u32 %v4631, 16
        %v4771 = vrot.slane %v4769, 5
        %v4772 = vsel %vm2783, %v4767, %v4771
        %v4773 = vshrl.u32 %v4631, 16
        %v4775 = vrot.slane %v4773, 4
        %v4776 = vor.u32 %v4775, %v4771
        %v4777 = vrot.slane %v4776, 4
        %v4779 = vshll.u32 %v4632, 16
        %v4781 = vrot.slane %v4779, 5
        %v4782 = vsel %vm2783, %v4777, %v4781
        %v4784 = vshrl.u32 %v4633, 16
        %v4786 = vrot.slane %v4784, 4
        %v4787 = vshll.u32 %v4633, 16
        %v4789 = vrot.slane %v4787, 5
        %v4790 = vor.u32 %v4786, %v4789
        %v4791 = vrot.slane %v4790, 4
        %v4793 = vshll.u32 %v4634, 16
        %v4795 = vrot.slane %v4793, 5
        %v4796 = vsel %vm2783, %v4791, %v4795
        %v4797 = vshrl.u32 %v4634, 16
        %v4799 = vrot.slane %v4797, 4
        %v4800 = vor.u32 %v4799, %v4795
        %v4801 = vrot.slane %v4800, 4
        %v4803 = vshll.u32 %v4635, 16
        %v4805 = vrot.slane %v4803, 5
        %v4806 = vsel %vm2783, %v4801, %v4805
        %v4808 = vshrl.u32 %v4636, 16
        %v4810 = vrot.slane %v4808, 4
        %v4811 = vshll.u32 %v4636, 16
        %v4813 = vrot.slane %v4811, 5
        %v4814 = vor.u32 %v4810, %v4813
        %v4815 = vrot.slane %v4814, 4
        %v4817 = vshll.u32 %v4637, 16
        %v4819 = vrot.slane %v4817, 5
        %v4820 = vsel %vm2783, %v4815, %v4819
        %v4821 = vshrl.u32 %v4637, 16
        %v4823 = vrot.slane %v4821, 4
        %v4824 = vor.u32 %v4823, %v4819
        %v4825 = vrot.slane %v4824, 4
        %v4827 = vshll.u32 %v4638, 16
        %v4829 = vrot.slane %v4827, 5
        %v4830 = vsel %vm2783, %v4825, %v4829
        %v4831 = vld [vmem:[%s6 + $0x400] sm:$0xff]
        %v4832 = vld [vmem:[%s6 + $0x408] sm:$0xff]
        %v4833 = vld [vmem:[%s6 + $0x410] sm:$0xff]
        %v4834 = vld [vmem:[%s6 + $0x418] sm:$0xff]
        %v4835 = vld [vmem:[%s6 + $0x420] sm:$0xff]
        %v4836 = vld [vmem:[%s6 + $0x428] sm:$0xff]
        %v4837 = vld [vmem:[%s6 + $0x430] sm:$0xff]
        %v4838 = vld [vmem:[%s6 + $0x438] sm:$0xff]
        %v4839 = vld [vmem:[%s6 + $0x440] sm:$0xff]
        %v4840 = vld [vmem:[%s6 + $0x448] sm:$0xff]
        %v4841 = vld [vmem:[%s6 + $0x450] sm:$0xff]
        %v4842 = vld [vmem:[%s6 + $0x458] sm:$0xff]
        %v4843 = vld [vmem:[%s6 + $0x460] sm:$0xff]
        %v4844 = vld [vmem:[%s6 + $0x468] sm:$0xff]
        %v4845 = vld [vmem:[%s6 + $0x470] sm:$0xff]
        %v4846 = vld [vmem:[%s6 + $0x478] sm:$0xff]
        %v4847 = vld [vmem:[%s6 + $0x480] sm:$0xff]
        %v4848 = vld [vmem:[%s6 + $0x488] sm:$0xff]
        %v4849 = vld [vmem:[%s6 + $0x490] sm:$0xff]
        %v4850 = vld [vmem:[%s6 + $0x498] sm:$0xff]
        %v4851 = vld [vmem:[%s6 + $0x4a0] sm:$0xff]
        %v4852 = vld [vmem:[%s6 + $0x4a8] sm:$0xff]
        %v4853 = vld [vmem:[%s6 + $0x4b0] sm:$0xff]
        %v4854 = vld [vmem:[%s6 + $0x4b8] sm:$0xff]
        %v4855 = vld [vmem:[%s6 + $0x4c0] sm:$0xff]
        %v4856 = vld [vmem:[%s6 + $0x4c8] sm:$0xff]
        %v4857 = vld [vmem:[%s6 + $0x4d0] sm:$0xff]
        %v4858 = vld [vmem:[%s6 + $0x4d8] sm:$0xff]
        %v4859 = vld [vmem:[%s6 + $0x4e0] sm:$0xff]
        %v4860 = vld [vmem:[%s6 + $0x4e8] sm:$0xff]
        %v4861 = vld [vmem:[%s6 + $0x4f0] sm:$0xff]
        %v4862 = vld [vmem:[%s6 + $0x4f8] sm:$0xff]
        %v4863 = vunpack.c.l.b16 %v4652
        %v4864 = vunpack.c.h.b16 %v4652
        %v4865 = vunpack.c.l.b16 %v4662
        %v4866 = vunpack.c.h.b16 %v4662
        %v4867 = vunpack.c.l.b16 %v4676
        %v4868 = vunpack.c.h.b16 %v4676
        %v4869 = vunpack.c.l.b16 %v4686
        %v4870 = vunpack.c.h.b16 %v4686
        %v4871 = vunpack.c.l.b16 %v4700
        %v4872 = vunpack.c.h.b16 %v4700
        %v4873 = vunpack.c.l.b16 %v4710
        %v4874 = vunpack.c.h.b16 %v4710
        %v4875 = vunpack.c.l.b16 %v4724
        %v4876 = vunpack.c.h.b16 %v4724
        %v4877 = vunpack.c.l.b16 %v4734
        %v4878 = vunpack.c.h.b16 %v4734
        %v4879 = vunpack.c.l.b16 %v4748
        %v4880 = vunpack.c.h.b16 %v4748
        %v4881 = vunpack.c.l.b16 %v4758
        %v4882 = vunpack.c.h.b16 %v4758
        %v4883 = vunpack.c.l.b16 %v4772
        %v4884 = vunpack.c.h.b16 %v4772
        %v4885 = vunpack.c.l.b16 %v4782
        %v4886 = vunpack.c.h.b16 %v4782
        %v4887 = vunpack.c.l.b16 %v4796
        %v4888 = vunpack.c.h.b16 %v4796
        %v4889 = vunpack.c.l.b16 %v4806
        %v4890 = vunpack.c.h.b16 %v4806
        %v4891 = vunpack.c.l.b16 %v4820
        %v4892 = vunpack.c.h.b16 %v4820
        %v4893 = vunpack.c.l.b16 %v4830
        %v4894 = vunpack.c.h.b16 %v4830
        %v4895 = vpack.c.b16 %v4865, %v4863
        %v4896 = vpack.c.b16 %v4866, %v4864
        %v4897 = vpack.c.b16 %v4869, %v4867
        %v4898 = vpack.c.b16 %v4870, %v4868
        %v4899 = vpack.c.b16 %v4873, %v4871
        %v4900 = vpack.c.b16 %v4874, %v4872
        %v4901 = vpack.c.b16 %v4877, %v4875
        %v4902 = vpack.c.b16 %v4878, %v4876
        %v4903 = vpack.c.b16 %v4881, %v4879
        %v4904 = vpack.c.b16 %v4882, %v4880
        %v4905 = vpack.c.b16 %v4885, %v4883
        %v4906 = vpack.c.b16 %v4886, %v4884
        %v4907 = vpack.c.b16 %v4889, %v4887
        %v4908 = vpack.c.b16 %v4890, %v4888
        %v4909 = vpack.c.b16 %v4893, %v4891
        %v4910 = vpack.c.b16 %v4894, %v4892
        %v4959 = vunpack.c.l.b16 %v4831
        %v4960 = vunpack.c.h.b16 %v4831
        %v4961 = vunpack.c.l.b16 %v4832
        %v4962 = vunpack.c.h.b16 %v4832
        %v4963 = vunpack.c.l.b16 %v4833
        %v4964 = vunpack.c.h.b16 %v4833
        %v4965 = vunpack.c.l.b16 %v4834
        %v4966 = vunpack.c.h.b16 %v4834
        %v4967 = vunpack.c.l.b16 %v4835
        %v4968 = vunpack.c.h.b16 %v4835
        %v4969 = vunpack.c.l.b16 %v4836
        %v4970 = vunpack.c.h.b16 %v4836
        %v4971 = vunpack.c.l.b16 %v4837
        %v4972 = vunpack.c.h.b16 %v4837
        %v4973 = vunpack.c.l.b16 %v4838
        %v4974 = vunpack.c.h.b16 %v4838
        %v4975 = vunpack.c.l.b16 %v4839
        %v4976 = vunpack.c.h.b16 %v4839
        %v4977 = vunpack.c.l.b16 %v4840
        %v4978 = vunpack.c.h.b16 %v4840
        %v4979 = vunpack.c.l.b16 %v4841
        %v4980 = vunpack.c.h.b16 %v4841
        %v4981 = vunpack.c.l.b16 %v4842
        %v4982 = vunpack.c.h.b16 %v4842
        %v4983 = vunpack.c.l.b16 %v4843
        %v4984 = vunpack.c.h.b16 %v4843
        %v4985 = vunpack.c.l.b16 %v4844
        %v4986 = vunpack.c.h.b16 %v4844
        %v4987 = vunpack.c.l.b16 %v4845
        %v4988 = vunpack.c.h.b16 %v4845
        %v4989 = vunpack.c.l.b16 %v4846
        %v4990 = vunpack.c.h.b16 %v4846
        %v4991 = vunpack.c.l.b16 %v4847
        %v4992 = vunpack.c.h.b16 %v4847
        %v4993 = vunpack.c.l.b16 %v4848
        %v4994 = vunpack.c.h.b16 %v4848
        %v4995 = vunpack.c.l.b16 %v4849
        %v4996 = vunpack.c.h.b16 %v4849
        %v4997 = vunpack.c.l.b16 %v4850
        %v4998 = vunpack.c.h.b16 %v4850
        %v4999 = vunpack.c.l.b16 %v4851
        %v5000 = vunpack.c.h.b16 %v4851
        %v5001 = vunpack.c.l.b16 %v4852
        %v5002 = vunpack.c.h.b16 %v4852
        %v5003 = vunpack.c.l.b16 %v4853
        %v5004 = vunpack.c.h.b16 %v4853
        %v5005 = vunpack.c.l.b16 %v4854
        %v5006 = vunpack.c.h.b16 %v4854
        %v5007 = vunpack.c.l.b16 %v4855
        %v5008 = vunpack.c.h.b16 %v4855
        %v5009 = vunpack.c.l.b16 %v4856
        %v5010 = vunpack.c.h.b16 %v4856
        %v5011 = vunpack.c.l.b16 %v4857
        %v5012 = vunpack.c.h.b16 %v4857
        %v5013 = vunpack.c.l.b16 %v4858
        %v5014 = vunpack.c.h.b16 %v4858
        %v5015 = vunpack.c.l.b16 %v4859
        %v5016 = vunpack.c.h.b16 %v4859
        %v5017 = vunpack.c.l.b16 %v4860
        %v5018 = vunpack.c.h.b16 %v4860
        %v5019 = vunpack.c.l.b16 %v4861
        %v5020 = vunpack.c.h.b16 %v4861
        %v5021 = vunpack.c.l.b16 %v4862
        %v5022 = vunpack.c.h.b16 %v4862
        %v5023 = vpack.c.b16 %v4961, %v4959
        %v5024 = vpack.c.b16 %v4962, %v4960
        %v5025 = vpack.c.b16 %v4965, %v4963
        %v5026 = vpack.c.b16 %v4966, %v4964
        %v5027 = vpack.c.b16 %v4969, %v4967
        %v5028 = vpack.c.b16 %v4970, %v4968
        %v5029 = vpack.c.b16 %v4973, %v4971
        %v5030 = vpack.c.b16 %v4974, %v4972
        %v5031 = vpack.c.b16 %v4977, %v4975
        %v5032 = vpack.c.b16 %v4978, %v4976
        %v5033 = vpack.c.b16 %v4981, %v4979
        %v5034 = vpack.c.b16 %v4982, %v4980
        %v5035 = vpack.c.b16 %v4985, %v4983
        %v5036 = vpack.c.b16 %v4986, %v4984
        %v5037 = vpack.c.b16 %v4989, %v4987
        %v5038 = vpack.c.b16 %v4990, %v4988
        %v5039 = vpack.c.b16 %v4993, %v4991
        %v5040 = vpack.c.b16 %v4994, %v4992
        %v5041 = vpack.c.b16 %v4997, %v4995
        %v5042 = vpack.c.b16 %v4998, %v4996
        %v5043 = vpack.c.b16 %v5001, %v4999
        %v5044 = vpack.c.b16 %v5002, %v5000
        %v5045 = vpack.c.b16 %v5005, %v5003
        %v5046 = vpack.c.b16 %v5006, %v5004
        %v5047 = vpack.c.b16 %v5009, %v5007
        %v5048 = vpack.c.b16 %v5010, %v5008
        %v5049 = vpack.c.b16 %v5013, %v5011
        %v5050 = vpack.c.b16 %v5014, %v5012
        %v5051 = vpack.c.b16 %v5017, %v5015
        %v5052 = vpack.c.b16 %v5018, %v5016
        %v5053 = vpack.c.b16 %v5021, %v5019
        %v5054 = vpack.c.b16 %v5022, %v5020
        %5087 = vmatprep.subr.bf16.mxu0 %v5024
        %5088 = vmatpush1.bf16.msra.mxu0 %v5023
        %5089 = vmatprep.subr.bf16.mxu0 %v5026
        %5090 = vmatpush1.bf16.msra.mxu0 %v5025
        %5091 = vmatprep.subr.bf16.mxu0 %v5028
        %5092 = vmatpush1.bf16.msra.mxu0 %v5027
        %5093 = vmatprep.subr.bf16.mxu0 %v5030
        %5094 = vmatpush1.bf16.msra.mxu0 %v5029
        %5095 = vmatprep.subr.bf16.mxu0 %v5032
        %5096 = vmatpush1.bf16.msra.mxu0 %v5031
        %5097 = vmatprep.subr.bf16.mxu0 %v5034
        %5098 = vmatpush1.bf16.msra.mxu0 %v5033
        %5099 = vmatprep.subr.bf16.mxu0 %v5036
        %5100 = vmatpush1.bf16.msra.mxu0 %v5035
        %5101 = vmatprep.subr.bf16.mxu0 %v5038
        %5102 = vmatpush1.bf16.msra.mxu0 %v5037
        %5103 = vmatprep.subr.bf16.mxu0 %v5040
        %5104 = vmatpush1.bf16.msra.mxu0 %v5039
        %5105 = vmatprep.subr.bf16.mxu0 %v5042
        %5106 = vmatpush1.bf16.msra.mxu0 %v5041
        %5107 = vmatprep.subr.bf16.mxu0 %v5044
        %5108 = vmatpush1.bf16.msra.mxu0 %v5043
        %5109 = vmatprep.subr.bf16.mxu0 %v5046
        %5110 = vmatpush1.bf16.msra.mxu0 %v5045
        %5111 = vmatprep.subr.bf16.mxu0 %v5048
        %5112 = vmatpush1.bf16.msra.mxu0 %v5047
        %5113 = vmatprep.subr.bf16.mxu0 %v5050
        %5114 = vmatpush1.bf16.msra.mxu0 %v5049
        %5115 = vmatprep.subr.bf16.mxu0 %v5052
        %5116 = vmatpush1.bf16.msra.mxu0 %v5051
        %5117 = vmatprep.subr.bf16.mxu0 %v5054
        %5118 = vmatpush1.bf16.msra.mxu0 %v5053
        %5119 = vmatprep.mubr.bf16.mxu0 %v4896
        %5120 = vmatmul.mubr.bf16.gmra.mrb[0].mxu0 %v4895
        %v5121 = vpop.f32.mrb[0].mxu0
        %v5122 = vadd.f32 0.0, %v5121
        %v5123 = vpop.f32.mrb[0].mxu0
        %v5124 = vadd.f32 0.0, %v5123
        %v5125 = vpop.f32.mrb[0].mxu0
        %v5126 = vadd.f32 0.0, %v5125
        %v5127 = vpop.f32.mrb[0].mxu0
        %v5128 = vadd.f32 0.0, %v5127
        %5129 = vmatprep.mubr.bf16.mxu0 %v4898
        %5130 = vmatmul.mubr.bf16.gmra.mrb[0].mxu0 %v4897
        %v5131 = vpop.f32.mrb[0].mxu0
        %v5132 = vadd.f32 0.0, %v5131
        %v5133 = vpop.f32.mrb[0].mxu0
        %v5134 = vadd.f32 0.0, %v5133
        %v5135 = vpop.f32.mrb[0].mxu0
        %v5136 = vadd.f32 0.0, %v5135
        %v5137 = vpop.f32.mrb[0].mxu0
        %v5138 = vadd.f32 0.0, %v5137
        %5139 = vmatprep.mubr.bf16.mxu0 %v4900
        %5140 = vmatmul.mubr.bf16.gmra.mrb[0].mxu0 %v4899
        %v5141 = vpop.f32.mrb[0].mxu0
        %v5142 = vadd.f32 0.0, %v5141
        %v5143 = vpop.f32.mrb[0].mxu0
        %v5144 = vadd.f32 0.0, %v5143
        %v5145 = vpop.f32.mrb[0].mxu0
        %v5146 = vadd.f32 0.0, %v5145
        %v5147 = vpop.f32.mrb[0].mxu0
        %v5148 = vadd.f32 0.0, %v5147
        %5149 = vmatprep.mubr.bf16.mxu0 %v4902
        %5150 = vmatmul.mubr.bf16.gmra.mrb[0].mxu0 %v4901
        %v5151 = vpop.f32.mrb[0].mxu0
        %v5152 = vadd.f32 0.0, %v5151
        %v5153 = vpop.f32.mrb[0].mxu0
        %v5154 = vadd.f32 0.0, %v5153
        %v5155 = vpop.f32.mrb[0].mxu0
        %v5156 = vadd.f32 0.0, %v5155
        %v5157 = vpop.f32.mrb[0].mxu0
        %v5158 = vadd.f32 0.0, %v5157
        %5159 = vmatprep.mubr.bf16.mxu0 %v4904
        %5160 = vmatmul.mubr.bf16.gmra.mrb[0].mxu0 %v4903
        %v5161 = vpop.f32.mrb[0].mxu0
        %v5162 = vadd.f32 0.0, %v5161
        %v5163 = vpop.f32.mrb[0].mxu0
        %v5164 = vadd.f32 0.0, %v5163
        %v5165 = vpop.f32.mrb[0].mxu0
        %v5166 = vadd.f32 0.0, %v5165
        %v5167 = vpop.f32.mrb[0].mxu0
        %v5168 = vadd.f32 0.0, %v5167
        %5169 = vmatprep.mubr.bf16.mxu0 %v4906
        %5170 = vmatmul.mubr.bf16.gmra.mrb[0].mxu0 %v4905
        %v5171 = vpop.f32.mrb[0].mxu0
        %v5172 = vadd.f32 0.0, %v5171
        %v5173 = vpop.f32.mrb[0].mxu0
        %v5174 = vadd.f32 0.0, %v5173
        %v5175 = vpop.f32.mrb[0].mxu0
        %v5176 = vadd.f32 0.0, %v5175
        %v5177 = vpop.f32.mrb[0].mxu0
        %v5178 = vadd.f32 0.0, %v5177
        %5179 = vmatprep.mubr.bf16.mxu0 %v4908
        %5180 = vmatmul.mubr.bf16.gmra.mrb[0].mxu0 %v4907
        %v5181 = vpop.f32.mrb[0].mxu0
        %v5182 = vadd.f32 0.0, %v5181
        %v5183 = vpop.f32.mrb[0].mxu0
        %v5184 = vadd.f32 0.0, %v5183
        %v5185 = vpop.f32.mrb[0].mxu0
        %v5186 = vadd.f32 0.0, %v5185
        %v5187 = vpop.f32.mrb[0].mxu0
        %v5188 = vadd.f32 0.0, %v5187
        %5189 = vmatprep.mubr.bf16.mxu0 %v4910
        %5190 = vmatmul.mubr.bf16.gmra.mrb[0].mxu0 %v4909
        %v5191 = vpop.f32.mrb[0].mxu0
        %v5192 = vadd.f32 0.0, %v5191
        %v5193 = vpop.f32.mrb[0].mxu0
        %v5194 = vadd.f32 0.0, %v5193
        %v5195 = vpop.f32.mrb[0].mxu0
        %v5196 = vadd.f32 0.0, %v5195
        %v5197 = vpop.f32.mrb[0].mxu0
        %v5198 = vadd.f32 0.0, %v5197
        %5199 = vdwg.mxu0
        %v5200 = vadd.f32 %v4583, %v5122
        %v5201 = vadd.f32 %v4584, %v5124
        %v5202 = vadd.f32 %v4585, %v5126
        %v5203 = vadd.f32 %v4586, %v5128
        %v5204 = vadd.f32 %v4587, %v5132
        %v5205 = vadd.f32 %v4588, %v5134
        %v5206 = vadd.f32 %v4589, %v5136
        %v5207 = vadd.f32 %v4590, %v5138
        %v5208 = vadd.f32 %v4591, %v5142
        %v5209 = vadd.f32 %v4592, %v5144
        %v5210 = vadd.f32 %v4593, %v5146
        %v5211 = vadd.f32 %v4594, %v5148
        %v5212 = vadd.f32 %v4595, %v5152
        %v5213 = vadd.f32 %v4596, %v5154
        %v5214 = vadd.f32 %v4597, %v5156
        %v5215 = vadd.f32 %v4598, %v5158
        %v5216 = vadd.f32 %v4599, %v5162
        %v5217 = vadd.f32 %v4600, %v5164
        %v5218 = vadd.f32 %v4601, %v5166
        %v5219 = vadd.f32 %v4602, %v5168
        %v5220 = vadd.f32 %v4603, %v5172
        %v5221 = vadd.f32 %v4604, %v5174
        %v5222 = vadd.f32 %v4605, %v5176
        %v5223 = vadd.f32 %v4606, %v5178
        %v5224 = vadd.f32 %v4607, %v5182
        %v5225 = vadd.f32 %v4608, %v5184
        %v5226 = vadd.f32 %v4609, %v5186
        %v5227 = vadd.f32 %v4610, %v5188
        %v5228 = vadd.f32 %v4611, %v5192
        %v5229 = vadd.f32 %v4612, %v5194
        %v5230 = vadd.f32 %v4613, %v5196
        %v5231 = vadd.f32 %v4614, %v5198
        %v5232 = vld [vmem:[%s1763] sm:$0xee]
        %v5233 = vld [vmem:[%s1763 + $0x18] sm:$0xee]
        %v5234 = vld [vmem:[%s1763 + $0x30] sm:$0xee]
        %v5235 = vld [vmem:[%s1763 + $0x48] sm:$0xee]
        %v5236 = vld [vmem:[%s1763 + $0x60] sm:$0xee]
        %v5237 = vld [vmem:[%s1763 + $0x78] sm:$0xee]
        %v5238 = vld [vmem:[%s1763 + $0x90] sm:$0xee]
        %v5239 = vld [vmem:[%s1763 + $0xa8] sm:$0xee]
        %v5264 = vrot.slane %v5232, 5
        %v5265 = vrot.slane %v5264, 4
        %v5266 = vrot.slane %v4616, 5
        %v5267 = vsel %vm3724, %v5265, %v5266
        %v5268 = vrot.slane %v5266, 4
        %v5269 = vrot.slane %v4617, 5
        %v5270 = vsel %vm3724, %v5268, %v5269
        %v5271 = vrot.slane %v5233, 5
        %v5272 = vrot.slane %v5271, 4
        %v5273 = vrot.slane %v4619, 5
        %v5274 = vsel %vm3724, %v5272, %v5273
        %v5275 = vrot.slane %v5273, 4
        %v5276 = vrot.slane %v4620, 5
        %v5277 = vsel %vm3724, %v5275, %v5276
        %v5278 = vrot.slane %v5234, 5
        %v5279 = vrot.slane %v5278, 4
        %v5280 = vrot.slane %v4622, 5
        %v5281 = vsel %vm3724, %v5279, %v5280
        %v5282 = vrot.slane %v5280, 4
        %v5283 = vrot.slane %v4623, 5
        %v5284 = vsel %vm3724, %v5282, %v5283
        %v5285 = vrot.slane %v5235, 5
        %v5286 = vrot.slane %v5285, 4
        %v5287 = vrot.slane %v4625, 5
        %v5288 = vsel %vm3724, %v5286, %v5287
        %v5289 = vrot.slane %v5287, 4
        %v5290 = vrot.slane %v4626, 5
        %v5291 = vsel %vm3724, %v5289, %v5290
        %v5292 = vrot.slane %v5236, 5
        %v5293 = vrot.slane %v5292, 4
        %v5294 = vrot.slane %v4628, 5
        %v5295 = vsel %vm3724, %v5293, %v5294
        %v5296 = vrot.slane %v5294, 4
        %v5297 = vrot.slane %v4629, 5
        %v5298 = vsel %vm3724, %v5296, %v5297
        %v5299 = vrot.slane %v5237, 5
        %v5300 = vrot.slane %v5299, 4
        %v5301 = vrot.slane %v4631, 5
        %v5302 = vsel %vm3724, %v5300, %v5301
        %v5303 = vrot.slane %v5301, 4
        %v5304 = vrot.slane %v4632, 5
        %v5305 = vsel %vm3724, %v5303, %v5304
        %v5306 = vrot.slane %v5238, 5
        %v5307 = vrot.slane %v5306, 4
        %v5308 = vrot.slane %v4634, 5
        %v5309 = vsel %vm3724, %v5307, %v5308
        %v5310 = vrot.slane %v5308, 4
        %v5311 = vrot.slane %v4635, 5
        %v5312 = vsel %vm3724, %v5310, %v5311
        %v5313 = vrot.slane %v5239, 5
        %v5314 = vrot.slane %v5313, 4
        %v5315 = vrot.slane %v4637, 5
        %v5316 = vsel %vm3724, %v5314, %v5315
        %v5317 = vrot.slane %v5315, 4
        %v5318 = vrot.slane %v4638, 5
        %v5319 = vsel %vm3724, %v5317, %v5318
        %v5320 = vld [vmem:[%s6 + $0x500] sm:$0xff]
        %v5321 = vld [vmem:[%s6 + $0x508] sm:$0xff]
        %v5322 = vld [vmem:[%s6 + $0x510] sm:$0xff]
        %v5323 = vld [vmem:[%s6 + $0x518] sm:$0xff]
        %v5324 = vld [vmem:[%s6 + $0x520] sm:$0xff]
        %v5325 = vld [vmem:[%s6 + $0x528] sm:$0xff]
        %v5326 = vld [vmem:[%s6 + $0x530] sm:$0xff]
        %v5327 = vld [vmem:[%s6 + $0x538] sm:$0xff]
        %v5328 = vld [vmem:[%s6 + $0x540] sm:$0xff]
        %v5329 = vld [vmem:[%s6 + $0x548] sm:$0xff]
        %v5330 = vld [vmem:[%s6 + $0x550] sm:$0xff]
        %v5331 = vld [vmem:[%s6 + $0x558] sm:$0xff]
        %v5332 = vld [vmem:[%s6 + $0x560] sm:$0xff]
        %v5333 = vld [vmem:[%s6 + $0x568] sm:$0xff]
        %v5334 = vld [vmem:[%s6 + $0x570] sm:$0xff]
        %v5335 = vld [vmem:[%s6 + $0x578] sm:$0xff]
        %v5336 = vld [vmem:[%s6 + $0x580] sm:$0xff]
        %v5337 = vld [vmem:[%s6 + $0x588] sm:$0xff]
        %v5338 = vld [vmem:[%s6 + $0x590] sm:$0xff]
        %v5339 = vld [vmem:[%s6 + $0x598] sm:$0xff]
        %v5340 = vld [vmem:[%s6 + $0x5a0] sm:$0xff]
        %v5341 = vld [vmem:[%s6 + $0x5a8] sm:$0xff]
        %v5342 = vld [vmem:[%s6 + $0x5b0] sm:$0xff]
        %v5343 = vld [vmem:[%s6 + $0x5b8] sm:$0xff]
        %v5344 = vld [vmem:[%s6 + $0x5c0] sm:$0xff]
        %v5345 = vld [vmem:[%s6 + $0x5c8] sm:$0xff]
        %v5346 = vld [vmem:[%s6 + $0x5d0] sm:$0xff]
        %v5347 = vld [vmem:[%s6 + $0x5d8] sm:$0xff]
        %v5348 = vld [vmem:[%s6 + $0x5e0] sm:$0xff]
        %v5349 = vld [vmem:[%s6 + $0x5e8] sm:$0xff]
        %v5350 = vld [vmem:[%s6 + $0x5f0] sm:$0xff]
        %v5351 = vld [vmem:[%s6 + $0x5f8] sm:$0xff]
        %v5352 = vunpack.c.l.b16 %v5267
        %v5353 = vunpack.c.h.b16 %v5267
        %v5354 = vunpack.c.l.b16 %v5270
        %v5355 = vunpack.c.h.b16 %v5270
        %v5356 = vunpack.c.l.b16 %v5274
        %v5357 = vunpack.c.h.b16 %v5274
        %v5358 = vunpack.c.l.b16 %v5277
        %v5359 = vunpack.c.h.b16 %v5277
        %v5360 = vunpack.c.l.b16 %v5281
        %v5361 = vunpack.c.h.b16 %v5281
        %v5362 = vunpack.c.l.b16 %v5284
        %v5363 = vunpack.c.h.b16 %v5284
        %v5364 = vunpack.c.l.b16 %v5288
        %v5365 = vunpack.c.h.b16 %v5288
        %v5366 = vunpack.c.l.b16 %v5291
        %v5367 = vunpack.c.h.b16 %v5291
        %v5368 = vunpack.c.l.b16 %v5295
        %v5369 = vunpack.c.h.b16 %v5295
        %v5370 = vunpack.c.l.b16 %v5298
        %v5371 = vunpack.c.h.b16 %v5298
        %v5372 = vunpack.c.l.b16 %v5302
        %v5373 = vunpack.c.h.b16 %v5302
        %v5374 = vunpack.c.l.b16 %v5305
        %v5375 = vunpack.c.h.b16 %v5305
        %v5376 = vunpack.c.l.b16 %v5309
        %v5377 = vunpack.c.h.b16 %v5309
        %v5378 = vunpack.c.l.b16 %v5312
        %v5379 = vunpack.c.h.b16 %v5312
        %v5380 = vunpack.c.l.b16 %v5316
        %v5381 = vunpack.c.h.b16 %v5316
        %v5382 = vunpack.c.l.b16 %v5319
        %v5383 = vunpack.c.h.b16 %v5319
        %v5384 = vpack.c.b16 %v5354, %v5352
        %v5385 = vpack.c.b16 %v5355, %v5353
        %v5386 = vpack.c.b16 %v5358, %v5356
        %v5387 = vpack.c.b16 %v5359, %v5357
        %v5388 = vpack.c.b16 %v5362, %v5360
        %v5389 = vpack.c.b16 %v5363, %v5361
        %v5390 = vpack.c.b16 %v5366, %v5364
        %v5391 = vpack.c.b16 %v5367, %v5365
        %v5392 = vpack.c.b16 %v5370, %v5368
        %v5393 = vpack.c.b16 %v5371, %v5369
        %v5394 = vpack.c.b16 %v5374, %v5372
        %v5395 = vpack.c.b16 %v5375, %v5373
        %v5396 = vpack.c.b16 %v5378, %v5376
        %v5397 = vpack.c.b16 %v5379, %v5377
        %v5398 = vpack.c.b16 %v5382, %v5380
        %v5399 = vpack.c.b16 %v5383, %v5381
        %v5448 = vunpack.c.l.b16 %v5320
        %v5449 = vunpack.c.h.b16 %v5320
        %v5450 = vunpack.c.l.b16 %v5321
        %v5451 = vunpack.c.h.b16 %v5321
        %v5452 = vunpack.c.l.b16 %v5322
        %v5453 = vunpack.c.h.b16 %v5322
        %v5454 = vunpack.c.l.b16 %v5323
        %v5455 = vunpack.c.h.b16 %v5323
        %v5456 = vunpack.c.l.b16 %v5324
        %v5457 = vunpack.c.h.b16 %v5324
        %v5458 = vunpack.c.l.b16 %v5325
        %v5459 = vunpack.c.h.b16 %v5325
        %v5460 = vunpack.c.l.b16 %v5326
        %v5461 = vunpack.c.h.b16 %v5326
        %v5462 = vunpack.c.l.b16 %v5327
        %v5463 = vunpack.c.h.b16 %v5327
        %v5464 = vunpack.c.l.b16 %v5328
        %v5465 = vunpack.c.h.b16 %v5328
        %v5466 = vunpack.c.l.b16 %v5329
        %v5467 = vunpack.c.h.b16 %v5329
        %v5468 = vunpack.c.l.b16 %v5330
        %v5469 = vunpack.c.h.b16 %v5330
        %v5470 = vunpack.c.l.b16 %v5331
        %v5471 = vunpack.c.h.b16 %v5331
        %v5472 = vunpack.c.l.b16 %v5332
        %v5473 = vunpack.c.h.b16 %v5332
        %v5474 = vunpack.c.l.b16 %v5333
        %v5475 = vunpack.c.h.b16 %v5333
        %v5476 = vunpack.c.l.b16 %v5334
        %v5477 = vunpack.c.h.b16 %v5334
        %v5478 = vunpack.c.l.b16 %v5335
        %v5479 = vunpack.c.h.b16 %v5335
        %v5480 = vunpack.c.l.b16 %v5336
        %v5481 = vunpack.c.h.b16 %v5336
        %v5482 = vunpack.c.l.b16 %v5337
        %v5483 = vunpack.c.h.b16 %v5337
        %v5484 = vunpack.c.l.b16 %v5338
        %v5485 = vunpack.c.h.b16 %v5338
        %v5486 = vunpack.c.l.b16 %v5339
        %v5487 = vunpack.c.h.b16 %v5339
        %v5488 = vunpack.c.l.b16 %v5340
        %v5489 = vunpack.c.h.b16 %v5340
        %v5490 = vunpack.c.l.b16 %v5341
        %v5491 = vunpack.c.h.b16 %v5341
        %v5492 = vunpack.c.l.b16 %v5342
        %v5493 = vunpack.c.h.b16 %v5342
        %v5494 = vunpack.c.l.b16 %v5343
        %v5495 = vunpack.c.h.b16 %v5343
        %v5496 = vunpack.c.l.b16 %v5344
        %v5497 = vunpack.c.h.b16 %v5344
        %v5498 = vunpack.c.l.b16 %v5345
        %v5499 = vunpack.c.h.b16 %v5345
        %v5500 = vunpack.c.l.b16 %v5346
        %v5501 = vunpack.c.h.b16 %v5346
        %v5502 = vunpack.c.l.b16 %v5347
        %v5503 = vunpack.c.h.b16 %v5347
        %v5504 = vunpack.c.l.b16 %v5348
        %v5505 = vunpack.c.h.b16 %v5348
        %v5506 = vunpack.c.l.b16 %v5349
        %v5507 = vunpack.c.h.b16 %v5349
        %v5508 = vunpack.c.l.b16 %v5350
        %v5509 = vunpack.c.h.b16 %v5350
        %v5510 = vunpack.c.l.b16 %v5351
        %v5511 = vunpack.c.h.b16 %v5351
        %v5512 = vpack.c.b16 %v5450, %v5448
        %v5513 = vpack.c.b16 %v5451, %v5449
        %v5514 = vpack.c.b16 %v5454, %v5452
        %v5515 = vpack.c.b16 %v5455, %v5453
        %v5516 = vpack.c.b16 %v5458, %v5456
        %v5517 = vpack.c.b16 %v5459, %v5457
        %v5518 = vpack.c.b16 %v5462, %v5460
        %v5519 = vpack.c.b16 %v5463, %v5461
        %v5520 = vpack.c.b16 %v5466, %v5464
        %v5521 = vpack.c.b16 %v5467, %v5465
        %v5522 = vpack.c.b16 %v5470, %v5468
        %v5523 = vpack.c.b16 %v5471, %v5469
        %v5524 = vpack.c.b16 %v5474, %v5472
        %v5525 = vpack.c.b16 %v5475, %v5473
        %v5526 = vpack.c.b16 %v5478, %v5476
        %v5527 = vpack.c.b16 %v5479, %v5477
        %v5528 = vpack.c.b16 %v5482, %v5480
        %v5529 = vpack.c.b16 %v5483, %v5481
        %v5530 = vpack.c.b16 %v5486, %v5484
        %v5531 = vpack.c.b16 %v5487, %v5485
        %v5532 = vpack.c.b16 %v5490, %v5488
        %v5533 = vpack.c.b16 %v5491, %v5489
        %v5534 = vpack.c.b16 %v5494, %v5492
        %v5535 = vpack.c.b16 %v5495, %v5493
        %v5536 = vpack.c.b16 %v5498, %v5496
        %v5537 = vpack.c.b16 %v5499, %v5497
        %v5538 = vpack.c.b16 %v5502, %v5500
        %v5539 = vpack.c.b16 %v5503, %v5501
        %v5540 = vpack.c.b16 %v5506, %v5504
        %v5541 = vpack.c.b16 %v5507, %v5505
        %v5542 = vpack.c.b16 %v5510, %v5508
        %v5543 = vpack.c.b16 %v5511, %v5509
        %5576 = vmatprep.subr.bf16.mxu0 %v5513
        %5577 = vmatpush1.bf16.msra.mxu0 %v5512
        %5578 = vmatprep.subr.bf16.mxu0 %v5515
        %5579 = vmatpush1.bf16.msra.mxu0 %v5514
        %5580 = vmatprep.subr.bf16.mxu0 %v5517
        %5581 = vmatpush1.bf16.msra.mxu0 %v5516
        %5582 = vmatprep.subr.bf16.mxu0 %v5519
        %5583 = vmatpush1.bf16.msra.mxu0 %v5518
        %5584 = vmatprep.subr.bf16.mxu0 %v5521
        %5585 = vmatpush1.bf16.msra.mxu0 %v5520
        %5586 = vmatprep.subr.bf16.mxu0 %v5523
        %5587 = vmatpush1.bf16.msra.mxu0 %v5522
        %5588 = vmatprep.subr.bf16.mxu0 %v5525
        %5589 = vmatpush1.bf16.msra.mxu0 %v5524
        %5590 = vmatprep.subr.bf16.mxu0 %v5527
        %5591 = vmatpush1.bf16.msra.mxu0 %v5526
        %5592 = vmatprep.subr.bf16.mxu0 %v5529
        %5593 = vmatpush1.bf16.msra.mxu0 %v5528
        %5594 = vmatprep.subr.bf16.mxu0 %v5531
        %5595 = vmatpush1.bf16.msra.mxu0 %v5530
        %5596 = vmatprep.subr.bf16.mxu0 %v5533
        %5597 = vmatpush1.bf16.msra.mxu0 %v5532
        %5598 = vmatprep.subr.bf16.mxu0 %v5535
        %5599 = vmatpush1.bf16.msra.mxu0 %v5534
        %5600 = vmatprep.subr.bf16.mxu0 %v5537
        %5601 = vmatpush1.bf16.msra.mxu0 %v5536
        %5602 = vmatprep.subr.bf16.mxu0 %v5539
        %5603 = vmatpush1.bf16.msra.mxu0 %v5538
        %5604 = vmatprep.subr.bf16.mxu0 %v5541
        %5605 = vmatpush1.bf16.msra.mxu0 %v5540
        %5606 = vmatprep.subr.bf16.mxu0 %v5543
        %5607 = vmatpush1.bf16.msra.mxu0 %v5542
        %5608 = vmatprep.mubr.bf16.mxu0 %v5385
        %5609 = vmatmul.mubr.bf16.gmra.mrb[0].mxu0 %v5384
        %v5610 = vpop.f32.mrb[0].mxu0
        %v5611 = vadd.f32 0.0, %v5610
        %v5612 = vpop.f32.mrb[0].mxu0
        %v5613 = vadd.f32 0.0, %v5612
        %v5614 = vpop.f32.mrb[0].mxu0
        %v5615 = vadd.f32 0.0, %v5614
        %v5616 = vpop.f32.mrb[0].mxu0
        %v5617 = vadd.f32 0.0, %v5616
        %5618 = vmatprep.mubr.bf16.mxu0 %v5387
        %5619 = vmatmul.mubr.bf16.gmra.mrb[0].mxu0 %v5386
        %v5620 = vpop.f32.mrb[0].mxu0
        %v5621 = vadd.f32 0.0, %v5620
        %v5622 = vpop.f32.mrb[0].mxu0
        %v5623 = vadd.f32 0.0, %v5622
        %v5624 = vpop.f32.mrb[0].mxu0
        %v5625 = vadd.f32 0.0, %v5624
        %v5626 = vpop.f32.mrb[0].mxu0
        %v5627 = vadd.f32 0.0, %v5626
        %5628 = vmatprep.mubr.bf16.mxu0 %v5389
        %5629 = vmatmul.mubr.bf16.gmra.mrb[0].mxu0 %v5388
        %v5630 = vpop.f32.mrb[0].mxu0
        %v5631 = vadd.f32 0.0, %v5630
        %v5632 = vpop.f32.mrb[0].mxu0
        %v5633 = vadd.f32 0.0, %v5632
        %v5634 = vpop.f32.mrb[0].mxu0
        %v5635 = vadd.f32 0.0, %v5634
        %v5636 = vpop.f32.mrb[0].mxu0
        %v5637 = vadd.f32 0.0, %v5636
        %5638 = vmatprep.mubr.bf16.mxu0 %v5391
        %5639 = vmatmul.mubr.bf16.gmra.mrb[0].mxu0 %v5390
        %v5640 = vpop.f32.mrb[0].mxu0
        %v5641 = vadd.f32 0.0, %v5640
        %v5642 = vpop.f32.mrb[0].mxu0
        %v5643 = vadd.f32 0.0, %v5642
        %v5644 = vpop.f32.mrb[0].mxu0
        %v5645 = vadd.f32 0.0, %v5644
        %v5646 = vpop.f32.mrb[0].mxu0
        %v5647 = vadd.f32 0.0, %v5646
        %5648 = vmatprep.mubr.bf16.mxu0 %v5393
        %5649 = vmatmul.mubr.bf16.gmra.mrb[0].mxu0 %v5392
        %v5650 = vpop.f32.mrb[0].mxu0
        %v5651 = vadd.f32 0.0, %v5650
        %v5652 = vpop.f32.mrb[0].mxu0
        %v5653 = vadd.f32 0.0, %v5652
        %v5654 = vpop.f32.mrb[0].mxu0
        %v5655 = vadd.f32 0.0, %v5654
        %v5656 = vpop.f32.mrb[0].mxu0
        %v5657 = vadd.f32 0.0, %v5656
        %5658 = vmatprep.mubr.bf16.mxu0 %v5395
        %5659 = vmatmul.mubr.bf16.gmra.mrb[0].mxu0 %v5394
        %v5660 = vpop.f32.mrb[0].mxu0
        %v5661 = vadd.f32 0.0, %v5660
        %v5662 = vpop.f32.mrb[0].mxu0
        %v5663 = vadd.f32 0.0, %v5662
        %v5664 = vpop.f32.mrb[0].mxu0
        %v5665 = vadd.f32 0.0, %v5664
        %v5666 = vpop.f32.mrb[0].mxu0
        %v5667 = vadd.f32 0.0, %v5666
        %5668 = vmatprep.mubr.bf16.mxu0 %v5397
        %5669 = vmatmul.mubr.bf16.gmra.mrb[0].mxu0 %v5396
        %v5670 = vpop.f32.mrb[0].mxu0
        %v5671 = vadd.f32 0.0, %v5670
        %v5672 = vpop.f32.mrb[0].mxu0
        %v5673 = vadd.f32 0.0, %v5672
        %v5674 = vpop.f32.mrb[0].mxu0
        %v5675 = vadd.f32 0.0, %v5674
        %v5676 = vpop.f32.mrb[0].mxu0
        %v5677 = vadd.f32 0.0, %v5676
        %5678 = vmatprep.mubr.bf16.mxu0 %v5399
        %5679 = vmatmul.mubr.bf16.gmra.mrb[0].mxu0 %v5398
        %v5680 = vpop.f32.mrb[0].mxu0
        %v5681 = vadd.f32 0.0, %v5680
        %v5682 = vpop.f32.mrb[0].mxu0
        %v5683 = vadd.f32 0.0, %v5682
        %v5684 = vpop.f32.mrb[0].mxu0
        %v5685 = vadd.f32 0.0, %v5684
        %v5686 = vpop.f32.mrb[0].mxu0
        %v5687 = vadd.f32 0.0, %v5686
        %5688 = vdwg.mxu0
        %v5689 = vadd.f32 %v5200, %v5611
        %v5690 = vadd.f32 %v5201, %v5613
        %v5691 = vadd.f32 %v5202, %v5615
        %v5692 = vadd.f32 %v5203, %v5617
        %v5693 = vadd.f32 %v5204, %v5621
        %v5694 = vadd.f32 %v5205, %v5623
        %v5695 = vadd.f32 %v5206, %v5625
        %v5696 = vadd.f32 %v5207, %v5627
        %v5697 = vadd.f32 %v5208, %v5631
        %v5698 = vadd.f32 %v5209, %v5633
        %v5699 = vadd.f32 %v5210, %v5635
        %v5700 = vadd.f32 %v5211, %v5637
        %v5701 = vadd.f32 %v5212, %v5641
        %v5702 = vadd.f32 %v5213, %v5643
        %v5703 = vadd.f32 %v5214, %v5645
        %v5704 = vadd.f32 %v5215, %v5647
        %v5705 = vadd.f32 %v5216, %v5651
        %v5706 = vadd.f32 %v5217, %v5653
        %v5707 = vadd.f32 %v5218, %v5655
        %v5708 = vadd.f32 %v5219, %v5657
        %v5709 = vadd.f32 %v5220, %v5661
        %v5710 = vadd.f32 %v5221, %v5663
        %v5711 = vadd.f32 %v5222, %v5665
        %v5712 = vadd.f32 %v5223, %v5667
        %v5713 = vadd.f32 %v5224, %v5671
        %v5714 = vadd.f32 %v5225, %v5673
        %v5715 = vadd.f32 %v5226, %v5675
        %v5716 = vadd.f32 %v5227, %v5677
        %v5717 = vadd.f32 %v5228, %v5681
        %v5718 = vadd.f32 %v5229, %v5683
        %v5719 = vadd.f32 %v5230, %v5685
        %v5720 = vadd.f32 %v5231, %v5687
        %v5721 = vld [vmem:[%s1872] sm:$0xff]
        %v5722 = vld [vmem:[%s1872 + $0x8] sm:$0xff]
        %v5723 = vld [vmem:[%s1872 + $0x18] sm:$0xff]
        %v5724 = vld [vmem:[%s1872 + $0x20] sm:$0xff]
        %v5725 = vld [vmem:[%s1872 + $0x30] sm:$0xff]
        %v5726 = vld [vmem:[%s1872 + $0x38] sm:$0xff]
        %v5727 = vld [vmem:[%s1872 + $0x48] sm:$0xff]
        %v5728 = vld [vmem:[%s1872 + $0x50] sm:$0xff]
        %v5729 = vld [vmem:[%s1872 + $0x60] sm:$0xff]
        %v5730 = vld [vmem:[%s1872 + $0x68] sm:$0xff]
        %v5731 = vld [vmem:[%s1872 + $0x78] sm:$0xff]
        %v5732 = vld [vmem:[%s1872 + $0x80] sm:$0xff]
        %v5733 = vld [vmem:[%s1872 + $0x90] sm:$0xff]
        %v5734 = vld [vmem:[%s1872 + $0x98] sm:$0xff]
        %v5735 = vld [vmem:[%s1872 + $0xa8] sm:$0xff]
        %v5736 = vld [vmem:[%s1872 + $0xb0] sm:$0xff]
        %v5737 = vld [vmem:[%s6 + $0x600] sm:$0xff]
        %v5738 = vld [vmem:[%s6 + $0x608] sm:$0xff]
        %v5739 = vld [vmem:[%s6 + $0x610] sm:$0xff]
        %v5740 = vld [vmem:[%s6 + $0x618] sm:$0xff]
        %v5741 = vld [vmem:[%s6 + $0x620] sm:$0xff]
        %v5742 = vld [vmem:[%s6 + $0x628] sm:$0xff]
        %v5743 = vld [vmem:[%s6 + $0x630] sm:$0xff]
        %v5744 = vld [vmem:[%s6 + $0x638] sm:$0xff]
        %v5745 = vld [vmem:[%s6 + $0x640] sm:$0xff]
        %v5746 = vld [vmem:[%s6 + $0x648] sm:$0xff]
        %v5747 = vld [vmem:[%s6 + $0x650] sm:$0xff]
        %v5748 = vld [vmem:[%s6 + $0x658] sm:$0xff]
        %v5749 = vld [vmem:[%s6 + $0x660] sm:$0xff]
        %v5750 = vld [vmem:[%s6 + $0x668] sm:$0xff]
        %v5751 = vld [vmem:[%s6 + $0x670] sm:$0xff]
        %v5752 = vld [vmem:[%s6 + $0x678] sm:$0xff]
        %v5753 = vld [vmem:[%s6 + $0x680] sm:$0xff]
        %v5754 = vld [vmem:[%s6 + $0x688] sm:$0xff]
        %v5755 = vld [vmem:[%s6 + $0x690] sm:$0xff]
        %v5756 = vld [vmem:[%s6 + $0x698] sm:$0xff]
        %v5757 = vld [vmem:[%s6 + $0x6a0] sm:$0xff]
        %v5758 = vld [vmem:[%s6 + $0x6a8] sm:$0xff]
        %v5759 = vld [vmem:[%s6 + $0x6b0] sm:$0xff]
        %v5760 = vld [vmem:[%s6 + $0x6b8] sm:$0xff]
        %v5761 = vld [vmem:[%s6 + $0x6c0] sm:$0xff]
        %v5762 = vld [vmem:[%s6 + $0x6c8] sm:$0xff]
        %v5763 = vld [vmem:[%s6 + $0x6d0] sm:$0xff]
        %v5764 = vld [vmem:[%s6 + $0x6d8] sm:$0xff]
        %v5765 = vld [vmem:[%s6 + $0x6e0] sm:$0xff]
        %v5766 = vld [vmem:[%s6 + $0x6e8] sm:$0xff]
        %v5767 = vld [vmem:[%s6 + $0x6f0] sm:$0xff]
        %v5768 = vld [vmem:[%s6 + $0x6f8] sm:$0xff]
        %v5785 = vunpack.c.l.b16 %v5721
        %v5786 = vunpack.c.h.b16 %v5721
        %v5787 = vunpack.c.l.b16 %v5722
        %v5788 = vunpack.c.h.b16 %v5722
        %v5789 = vunpack.c.l.b16 %v5723
        %v5790 = vunpack.c.h.b16 %v5723
        %v5791 = vunpack.c.l.b16 %v5724
        %v5792 = vunpack.c.h.b16 %v5724
        %v5793 = vunpack.c.l.b16 %v5725
        %v5794 = vunpack.c.h.b16 %v5725
        %v5795 = vunpack.c.l.b16 %v5726
        %v5796 = vunpack.c.h.b16 %v5726
        %v5797 = vunpack.c.l.b16 %v5727
        %v5798 = vunpack.c.h.b16 %v5727
        %v5799 = vunpack.c.l.b16 %v5728
        %v5800 = vunpack.c.h.b16 %v5728
        %v5801 = vunpack.c.l.b16 %v5729
        %v5802 = vunpack.c.h.b16 %v5729
        %v5803 = vunpack.c.l.b16 %v5730
        %v5804 = vunpack.c.h.b16 %v5730
        %v5805 = vunpack.c.l.b16 %v5731
        %v5806 = vunpack.c.h.b16 %v5731
        %v5807 = vunpack.c.l.b16 %v5732
        %v5808 = vunpack.c.h.b16 %v5732
        %v5809 = vunpack.c.l.b16 %v5733
        %v5810 = vunpack.c.h.b16 %v5733
        %v5811 = vunpack.c.l.b16 %v5734
        %v5812 = vunpack.c.h.b16 %v5734
        %v5813 = vunpack.c.l.b16 %v5735
        %v5814 = vunpack.c.h.b16 %v5735
        %v5815 = vunpack.c.l.b16 %v5736
        %v5816 = vunpack.c.h.b16 %v5736
        %v5817 = vpack.c.b16 %v5787, %v5785
        %v5818 = vpack.c.b16 %v5788, %v5786
        %v5819 = vpack.c.b16 %v5791, %v5789
        %v5820 = vpack.c.b16 %v5792, %v5790
        %v5821 = vpack.c.b16 %v5795, %v5793
        %v5822 = vpack.c.b16 %v5796, %v5794
        %v5823 = vpack.c.b16 %v5799, %v5797
        %v5824 = vpack.c.b16 %v5800, %v5798
        %v5825 = vpack.c.b16 %v5803, %v5801
        %v5826 = vpack.c.b16 %v5804, %v5802
        %v5827 = vpack.c.b16 %v5807, %v5805
        %v5828 = vpack.c.b16 %v5808, %v5806
        %v5829 = vpack.c.b16 %v5811, %v5809
        %v5830 = vpack.c.b16 %v5812, %v5810
        %v5831 = vpack.c.b16 %v5815, %v5813
        %v5832 = vpack.c.b16 %v5816, %v5814
        %v5881 = vunpack.c.l.b16 %v5737
        %v5882 = vunpack.c.h.b16 %v5737
        %v5883 = vunpack.c.l.b16 %v5738
        %v5884 = vunpack.c.h.b16 %v5738
        %v5885 = vunpack.c.l.b16 %v5739
        %v5886 = vunpack.c.h.b16 %v5739
        %v5887 = vunpack.c.l.b16 %v5740
        %v5888 = vunpack.c.h.b16 %v5740
        %v5889 = vunpack.c.l.b16 %v5741
        %v5890 = vunpack.c.h.b16 %v5741
        %v5891 = vunpack.c.l.b16 %v5742
        %v5892 = vunpack.c.h.b16 %v5742
        %v5893 = vunpack.c.l.b16 %v5743
        %v5894 = vunpack.c.h.b16 %v5743
        %v5895 = vunpack.c.l.b16 %v5744
        %v5896 = vunpack.c.h.b16 %v5744
        %v5897 = vunpack.c.l.b16 %v5745
        %v5898 = vunpack.c.h.b16 %v5745
        %v5899 = vunpack.c.l.b16 %v5746
        %v5900 = vunpack.c.h.b16 %v5746
        %v5901 = vunpack.c.l.b16 %v5747
        %v5902 = vunpack.c.h.b16 %v5747
        %v5903 = vunpack.c.l.b16 %v5748
        %v5904 = vunpack.c.h.b16 %v5748
        %v5905 = vunpack.c.l.b16 %v5749
        %v5906 = vunpack.c.h.b16 %v5749
        %v5907 = vunpack.c.l.b16 %v5750
        %v5908 = vunpack.c.h.b16 %v5750
        %v5909 = vunpack.c.l.b16 %v5751
        %v5910 = vunpack.c.h.b16 %v5751
        %v5911 = vunpack.c.l.b16 %v5752
        %v5912 = vunpack.c.h.b16 %v5752
        %v5913 = vunpack.c.l.b16 %v5753
        %v5914 = vunpack.c.h.b16 %v5753
        %v5915 = vunpack.c.l.b16 %v5754
        %v5916 = vunpack.c.h.b16 %v5754
        %v5917 = vunpack.c.l.b16 %v5755
        %v5918 = vunpack.c.h.b16 %v5755
        %v5919 = vunpack.c.l.b16 %v5756
        %v5920 = vunpack.c.h.b16 %v5756
        %v5921 = vunpack.c.l.b16 %v5757
        %v5922 = vunpack.c.h.b16 %v5757
        %v5923 = vunpack.c.l.b16 %v5758
        %v5924 = vunpack.c.h.b16 %v5758
        %v5925 = vunpack.c.l.b16 %v5759
        %v5926 = vunpack.c.h.b16 %v5759
        %v5927 = vunpack.c.l.b16 %v5760
        %v5928 = vunpack.c.h.b16 %v5760
        %v5929 = vunpack.c.l.b16 %v5761
        %v5930 = vunpack.c.h.b16 %v5761
        %v5931 = vunpack.c.l.b16 %v5762
        %v5932 = vunpack.c.h.b16 %v5762
        %v5933 = vunpack.c.l.b16 %v5763
        %v5934 = vunpack.c.h.b16 %v5763
        %v5935 = vunpack.c.l.b16 %v5764
        %v5936 = vunpack.c.h.b16 %v5764
        %v5937 = vunpack.c.l.b16 %v5765
        %v5938 = vunpack.c.h.b16 %v5765
        %v5939 = vunpack.c.l.b16 %v5766
        %v5940 = vunpack.c.h.b16 %v5766
        %v5941 = vunpack.c.l.b16 %v5767
        %v5942 = vunpack.c.h.b16 %v5767
        %v5943 = vunpack.c.l.b16 %v5768
        %v5944 = vunpack.c.h.b16 %v5768
        %v5945 = vpack.c.b16 %v5883, %v5881
        %v5946 = vpack.c.b16 %v5884, %v5882
        %v5947 = vpack.c.b16 %v5887, %v5885
        %v5948 = vpack.c.b16 %v5888, %v5886
        %v5949 = vpack.c.b16 %v5891, %v5889
        %v5950 = vpack.c.b16 %v5892, %v5890
        %v5951 = vpack.c.b16 %v5895, %v5893
        %v5952 = vpack.c.b16 %v5896, %v5894
        %v5953 = vpack.c.b16 %v5899, %v5897
        %v5954 = vpack.c.b16 %v5900, %v5898
        %v5955 = vpack.c.b16 %v5903, %v5901
        %v5956 = vpack.c.b16 %v5904, %v5902
        %v5957 = vpack.c.b16 %v5907, %v5905
        %v5958 = vpack.c.b16 %v5908, %v5906
        %v5959 = vpack.c.b16 %v5911, %v5909
        %v5960 = vpack.c.b16 %v5912, %v5910
        %v5961 = vpack.c.b16 %v5915, %v5913
        %v5962 = vpack.c.b16 %v5916, %v5914
        %v5963 = vpack.c.b16 %v5919, %v5917
        %v5964 = vpack.c.b16 %v5920, %v5918
        %v5965 = vpack.c.b16 %v5923, %v5921
        %v5966 = vpack.c.b16 %v5924, %v5922
        %v5967 = vpack.c.b16 %v5927, %v5925
        %v5968 = vpack.c.b16 %v5928, %v5926
        %v5969 = vpack.c.b16 %v5931, %v5929
        %v5970 = vpack.c.b16 %v5932, %v5930
        %v5971 = vpack.c.b16 %v5935, %v5933
        %v5972 = vpack.c.b16 %v5936, %v5934
        %v5973 = vpack.c.b16 %v5939, %v5937
        %v5974 = vpack.c.b16 %v5940, %v5938
        %v5975 = vpack.c.b16 %v5943, %v5941
        %v5976 = vpack.c.b16 %v5944, %v5942
        %6009 = vmatprep.subr.bf16.mxu0 %v5946
        %6010 = vmatpush1.bf16.msra.mxu0 %v5945
        %6011 = vmatprep.subr.bf16.mxu0 %v5948
        %6012 = vmatpush1.bf16.msra.mxu0 %v5947
        %6013 = vmatprep.subr.bf16.mxu0 %v5950
        %6014 = vmatpush1.bf16.msra.mxu0 %v5949
        %6015 = vmatprep.subr.bf16.mxu0 %v5952
        %6016 = vmatpush1.bf16.msra.mxu0 %v5951
        %6017 = vmatprep.subr.bf16.mxu0 %v5954
        %6018 = vmatpush1.bf16.msra.mxu0 %v5953
        %6019 = vmatprep.subr.bf16.mxu0 %v5956
        %6020 = vmatpush1.bf16.msra.mxu0 %v5955
        %6021 = vmatprep.subr.bf16.mxu0 %v5958
        %6022 = vmatpush1.bf16.msra.mxu0 %v5957
        %6023 = vmatprep.subr.bf16.mxu0 %v5960
        %6024 = vmatpush1.bf16.msra.mxu0 %v5959
        %6025 = vmatprep.subr.bf16.mxu0 %v5962
        %6026 = vmatpush1.bf16.msra.mxu0 %v5961
        %6027 = vmatprep.subr.bf16.mxu0 %v5964
        %6028 = vmatpush1.bf16.msra.mxu0 %v5963
        %6029 = vmatprep.subr.bf16.mxu0 %v5966
        %6030 = vmatpush1.bf16.msra.mxu0 %v5965
        %6031 = vmatprep.subr.bf16.mxu0 %v5968
        %6032 = vmatpush1.bf16.msra.mxu0 %v5967
        %6033 = vmatprep.subr.bf16.mxu0 %v5970
        %6034 = vmatpush1.bf16.msra.mxu0 %v5969
        %6035 = vmatprep.subr.bf16.mxu0 %v5972
        %6036 = vmatpush1.bf16.msra.mxu0 %v5971
        %6037 = vmatprep.subr.bf16.mxu0 %v5974
        %6038 = vmatpush1.bf16.msra.mxu0 %v5973
        %6039 = vmatprep.subr.bf16.mxu0 %v5976
        %6040 = vmatpush1.bf16.msra.mxu0 %v5975
        %6041 = vmatprep.mubr.bf16.mxu0 %v5818
        %6042 = vmatmul.mubr.bf16.gmra.mrb[0].mxu0 %v5817
        %v6043 = vpop.f32.mrb[0].mxu0
        %v6044 = vadd.f32 0.0, %v6043
        %v6045 = vpop.f32.mrb[0].mxu0
        %v6046 = vadd.f32 0.0, %v6045
        %v6047 = vpop.f32.mrb[0].mxu0
        %v6048 = vadd.f32 0.0, %v6047
        %v6049 = vpop.f32.mrb[0].mxu0
        %v6050 = vadd.f32 0.0, %v6049
        %6051 = vmatprep.mubr.bf16.mxu0 %v5820
        %6052 = vmatmul.mubr.bf16.gmra.mrb[0].mxu0 %v5819
        %v6053 = vpop.f32.mrb[0].mxu0
        %v6054 = vadd.f32 0.0, %v6053
        %v6055 = vpop.f32.mrb[0].mxu0
        %v6056 = vadd.f32 0.0, %v6055
        %v6057 = vpop.f32.mrb[0].mxu0
        %v6058 = vadd.f32 0.0, %v6057
        %v6059 = vpop.f32.mrb[0].mxu0
        %v6060 = vadd.f32 0.0, %v6059
        %6061 = vmatprep.mubr.bf16.mxu0 %v5822
        %6062 = vmatmul.mubr.bf16.gmra.mrb[0].mxu0 %v5821
        %v6063 = vpop.f32.mrb[0].mxu0
        %v6064 = vadd.f32 0.0, %v6063
        %v6065 = vpop.f32.mrb[0].mxu0
        %v6066 = vadd.f32 0.0, %v6065
        %v6067 = vpop.f32.mrb[0].mxu0
        %v6068 = vadd.f32 0.0, %v6067
        %v6069 = vpop.f32.mrb[0].mxu0
        %v6070 = vadd.f32 0.0, %v6069
        %6071 = vmatprep.mubr.bf16.mxu0 %v5824
        %6072 = vmatmul.mubr.bf16.gmra.mrb[0].mxu0 %v5823
        %v6073 = vpop.f32.mrb[0].mxu0
        %v6074 = vadd.f32 0.0, %v6073
        %v6075 = vpop.f32.mrb[0].mxu0
        %v6076 = vadd.f32 0.0, %v6075
        %v6077 = vpop.f32.mrb[0].mxu0
        %v6078 = vadd.f32 0.0, %v6077
        %v6079 = vpop.f32.mrb[0].mxu0
        %v6080 = vadd.f32 0.0, %v6079
        %6081 = vmatprep.mubr.bf16.mxu0 %v5826
        %6082 = vmatmul.mubr.bf16.gmra.mrb[0].mxu0 %v5825
        %v6083 = vpop.f32.mrb[0].mxu0
        %v6084 = vadd.f32 0.0, %v6083
        %v6085 = vpop.f32.mrb[0].mxu0
        %v6086 = vadd.f32 0.0, %v6085
        %v6087 = vpop.f32.mrb[0].mxu0
        %v6088 = vadd.f32 0.0, %v6087
        %v6089 = vpop.f32.mrb[0].mxu0
        %v6090 = vadd.f32 0.0, %v6089
        %6091 = vmatprep.mubr.bf16.mxu0 %v5828
        %6092 = vmatmul.mubr.bf16.gmra.mrb[0].mxu0 %v5827
        %v6093 = vpop.f32.mrb[0].mxu0
        %v6094 = vadd.f32 0.0, %v6093
        %v6095 = vpop.f32.mrb[0].mxu0
        %v6096 = vadd.f32 0.0, %v6095
        %v6097 = vpop.f32.mrb[0].mxu0
        %v6098 = vadd.f32 0.0, %v6097
        %v6099 = vpop.f32.mrb[0].mxu0
        %v6100 = vadd.f32 0.0, %v6099
        %6101 = vmatprep.mubr.bf16.mxu0 %v5830
        %6102 = vmatmul.mubr.bf16.gmra.mrb[0].mxu0 %v5829
        %v6103 = vpop.f32.mrb[0].mxu0
        %v6104 = vadd.f32 0.0, %v6103
        %v6105 = vpop.f32.mrb[0].mxu0
        %v6106 = vadd.f32 0.0, %v6105
        %v6107 = vpop.f32.mrb[0].mxu0
        %v6108 = vadd.f32 0.0, %v6107
        %v6109 = vpop.f32.mrb[0].mxu0
        %v6110 = vadd.f32 0.0, %v6109
        %6111 = vmatprep.mubr.bf16.mxu0 %v5832
        %6112 = vmatmul.mubr.bf16.gmra.mrb[0].mxu0 %v5831
        %v6113 = vpop.f32.mrb[0].mxu0
        %v6114 = vadd.f32 0.0, %v6113
        %v6115 = vpop.f32.mrb[0].mxu0
        %v6116 = vadd.f32 0.0, %v6115
        %v6117 = vpop.f32.mrb[0].mxu0
        %v6118 = vadd.f32 0.0, %v6117
        %v6119 = vpop.f32.mrb[0].mxu0
        %v6120 = vadd.f32 0.0, %v6119
        %6121 = vdwg.mxu0
        %v6122 = vadd.f32 %v5689, %v6044
        %v6123 = vadd.f32 %v5690, %v6046
        %v6124 = vadd.f32 %v5691, %v6048
        %v6125 = vadd.f32 %v5692, %v6050
        %v6126 = vadd.f32 %v5693, %v6054
        %v6127 = vadd.f32 %v5694, %v6056
        %v6128 = vadd.f32 %v5695, %v6058
        %v6129 = vadd.f32 %v5696, %v6060
        %v6130 = vadd.f32 %v5697, %v6064
        %v6131 = vadd.f32 %v5698, %v6066
        %v6132 = vadd.f32 %v5699, %v6068
        %v6133 = vadd.f32 %v5700, %v6070
        %v6134 = vadd.f32 %v5701, %v6074
        %v6135 = vadd.f32 %v5702, %v6076
        %v6136 = vadd.f32 %v5703, %v6078
        %v6137 = vadd.f32 %v5704, %v6080
        %v6138 = vadd.f32 %v5705, %v6084
        %v6139 = vadd.f32 %v5706, %v6086
        %v6140 = vadd.f32 %v5707, %v6088
        %v6141 = vadd.f32 %v5708, %v6090
        %v6142 = vadd.f32 %v5709, %v6094
        %v6143 = vadd.f32 %v5710, %v6096
        %v6144 = vadd.f32 %v5711, %v6098
        %v6145 = vadd.f32 %v5712, %v6100
        %v6146 = vadd.f32 %v5713, %v6104
        %v6147 = vadd.f32 %v5714, %v6106
        %v6148 = vadd.f32 %v5715, %v6108
        %v6149 = vadd.f32 %v5716, %v6110
        %v6150 = vadd.f32 %v5717, %v6114
        %v6151 = vadd.f32 %v5718, %v6116
        %v6152 = vadd.f32 %v5719, %v6118
        %v6153 = vadd.f32 %v5720, %v6120
        %v6154 = vld [vmem:[%s1872] sm:$0xff]
        %v6155 = vld [vmem:[%s1872 + $0x8] sm:$0xff]
        %v6156 = vld [vmem:[%s1872 + $0x10] sm:$0x11]
        %v6157 = vld [vmem:[%s1872 + $0x18] sm:$0xff]
        %v6158 = vld [vmem:[%s1872 + $0x20] sm:$0xff]
        %v6159 = vld [vmem:[%s1872 + $0x28] sm:$0x11]
        %v6160 = vld [vmem:[%s1872 + $0x30] sm:$0xff]
        %v6161 = vld [vmem:[%s1872 + $0x38] sm:$0xff]
        %v6162 = vld [vmem:[%s1872 + $0x40] sm:$0x11]
        %v6163 = vld [vmem:[%s1872 + $0x48] sm:$0xff]
        %v6164 = vld [vmem:[%s1872 + $0x50] sm:$0xff]
        %v6165 = vld [vmem:[%s1872 + $0x58] sm:$0x11]
        %v6166 = vld [vmem:[%s1872 + $0x60] sm:$0xff]
        %v6167 = vld [vmem:[%s1872 + $0x68] sm:$0xff]
        %v6168 = vld [vmem:[%s1872 + $0x70] sm:$0x11]
        %v6169 = vld [vmem:[%s1872 + $0x78] sm:$0xff]
        %v6170 = vld [vmem:[%s1872 + $0x80] sm:$0xff]
        %v6171 = vld [vmem:[%s1872 + $0x88] sm:$0x11]
        %v6172 = vld [vmem:[%s1872 + $0x90] sm:$0xff]
        %v6173 = vld [vmem:[%s1872 + $0x98] sm:$0xff]
        %v6174 = vld [vmem:[%s1872 + $0xa0] sm:$0x11]
        %v6175 = vld [vmem:[%s1872 + $0xa8] sm:$0xff]
        %v6176 = vld [vmem:[%s1872 + $0xb0] sm:$0xff]
        %v6177 = vld [vmem:[%s1872 + $0xb8] sm:$0x11]
        %v6179 = vshrl.u32 %v6154, 16
        %v6181 = vrot.slane %v6179, 4
        %v6182 = vshll.u32 %v6154, 16
        %v6184 = vrot.slane %v6182, 5
        %v6185 = vor.u32 %v6181, %v6184
        %v6186 = vrot.slane %v6185, 4
        %v6188 = vshll.u32 %v6155, 16
        %v6190 = vrot.slane %v6188, 5
        %v6191 = vsel %vm2783, %v6186, %v6190
        %v6192 = vshrl.u32 %v6155, 16
        %v6194 = vrot.slane %v6192, 4
        %v6195 = vor.u32 %v6194, %v6190
        %v6196 = vrot.slane %v6195, 4
        %v6198 = vshll.u32 %v6156, 16
        %v6200 = vrot.slane %v6198, 5
        %v6201 = vsel %vm2783, %v6196, %v6200
        %v6203 = vshrl.u32 %v6157, 16
        %v6205 = vrot.slane %v6203, 4
        %v6206 = vshll.u32 %v6157, 16
        %v6208 = vrot.slane %v6206, 5
        %v6209 = vor.u32 %v6205, %v6208
        %v6210 = vrot.slane %v6209, 4
        %v6212 = vshll.u32 %v6158, 16
        %v6214 = vrot.slane %v6212, 5
        %v6215 = vsel %vm2783, %v6210, %v6214
        %v6216 = vshrl.u32 %v6158, 16
        %v6218 = vrot.slane %v6216, 4
        %v6219 = vor.u32 %v6218, %v6214
        %v6220 = vrot.slane %v6219, 4
        %v6222 = vshll.u32 %v6159, 16
        %v6224 = vrot.slane %v6222, 5
        %v6225 = vsel %vm2783, %v6220, %v6224
        %v6227 = vshrl.u32 %v6160, 16
        %v6229 = vrot.slane %v6227, 4
        %v6230 = vshll.u32 %v6160, 16
        %v6232 = vrot.slane %v6230, 5
        %v6233 = vor.u32 %v6229, %v6232
        %v6234 = vrot.slane %v6233, 4
        %v6236 = vshll.u32 %v6161, 16
        %v6238 = vrot.slane %v6236, 5
        %v6239 = vsel %vm2783, %v6234, %v6238
        %v6240 = vshrl.u32 %v6161, 16
        %v6242 = vrot.slane %v6240, 4
        %v6243 = vor.u32 %v6242, %v6238
        %v6244 = vrot.slane %v6243, 4
        %v6246 = vshll.u32 %v6162, 16
        %v6248 = vrot.slane %v6246, 5
        %v6249 = vsel %vm2783, %v6244, %v6248
        %v6251 = vshrl.u32 %v6163, 16
        %v6253 = vrot.slane %v6251, 4
        %v6254 = vshll.u32 %v6163, 16
        %v6256 = vrot.slane %v6254, 5
        %v6257 = vor.u32 %v6253, %v6256
        %v6258 = vrot.slane %v6257, 4
        %v6260 = vshll.u32 %v6164, 16
        %v6262 = vrot.slane %v6260, 5
        %v6263 = vsel %vm2783, %v6258, %v6262
        %v6264 = vshrl.u32 %v6164, 16
        %v6266 = vrot.slane %v6264, 4
        %v6267 = vor.u32 %v6266, %v6262
        %v6268 = vrot.slane %v6267, 4
        %v6270 = vshll.u32 %v6165, 16
        %v6272 = vrot.slane %v6270, 5
        %v6273 = vsel %vm2783, %v6268, %v6272
        %v6275 = vshrl.u32 %v6166, 16
        %v6277 = vrot.slane %v6275, 4
        %v6278 = vshll.u32 %v6166, 16
        %v6280 = vrot.slane %v6278, 5
        %v6281 = vor.u32 %v6277, %v6280
        %v6282 = vrot.slane %v6281, 4
        %v6284 = vshll.u32 %v6167, 16
        %v6286 = vrot.slane %v6284, 5
        %v6287 = vsel %vm2783, %v6282, %v6286
        %v6288 = vshrl.u32 %v6167, 16
        %v6290 = vrot.slane %v6288, 4
        %v6291 = vor.u32 %v6290, %v6286
        %v6292 = vrot.slane %v6291, 4
        %v6294 = vshll.u32 %v6168, 16
        %v6296 = vrot.slane %v6294, 5
        %v6297 = vsel %vm2783, %v6292, %v6296
        %v6299 = vshrl.u32 %v6169, 16
        %v6301 = vrot.slane %v6299, 4
        %v6302 = vshll.u32 %v6169, 16
        %v6304 = vrot.slane %v6302, 5
        %v6305 = vor.u32 %v6301, %v6304
        %v6306 = vrot.slane %v6305, 4
        %v6308 = vshll.u32 %v6170, 16
        %v6310 = vrot.slane %v6308, 5
        %v6311 = vsel %vm2783, %v6306, %v6310
        %v6312 = vshrl.u32 %v6170, 16
        %v6314 = vrot.slane %v6312, 4
        %v6315 = vor.u32 %v6314, %v6310
        %v6316 = vrot.slane %v6315, 4
        %v6318 = vshll.u32 %v6171, 16
        %v6320 = vrot.slane %v6318, 5
        %v6321 = vsel %vm2783, %v6316, %v6320
        %v6323 = vshrl.u32 %v6172, 16
        %v6325 = vrot.slane %v6323, 4
        %v6326 = vshll.u32 %v6172, 16
        %v6328 = vrot.slane %v6326, 5
        %v6329 = vor.u32 %v6325, %v6328
        %v6330 = vrot.slane %v6329, 4
        %v6332 = vshll.u32 %v6173, 16
        %v6334 = vrot.slane %v6332, 5
        %v6335 = vsel %vm2783, %v6330, %v6334
        %v6336 = vshrl.u32 %v6173, 16
        %v6338 = vrot.slane %v6336, 4
        %v6339 = vor.u32 %v6338, %v6334
        %v6340 = vrot.slane %v6339, 4
        %v6342 = vshll.u32 %v6174, 16
        %v6344 = vrot.slane %v6342, 5
        %v6345 = vsel %vm2783, %v6340, %v6344
        %v6347 = vshrl.u32 %v6175, 16
        %v6349 = vrot.slane %v6347, 4
        %v6350 = vshll.u32 %v6175, 16
        %v6352 = vrot.slane %v6350, 5
        %v6353 = vor.u32 %v6349, %v6352
        %v6354 = vrot.slane %v6353, 4
        %v6356 = vshll.u32 %v6176, 16
        %v6358 = vrot.slane %v6356, 5
        %v6359 = vsel %vm2783, %v6354, %v6358
        %v6360 = vshrl.u32 %v6176, 16
        %v6362 = vrot.slane %v6360, 4
        %v6363 = vor.u32 %v6362, %v6358
        %v6364 = vrot.slane %v6363, 4
        %v6366 = vshll.u32 %v6177, 16
        %v6368 = vrot.slane %v6366, 5
        %v6369 = vsel %vm2783, %v6364, %v6368
        %v6370 = vld [vmem:[%s6 + $0x700] sm:$0xff]
        %v6371 = vld [vmem:[%s6 + $0x708] sm:$0xff]
        %v6372 = vld [vmem:[%s6 + $0x710] sm:$0xff]
        %v6373 = vld [vmem:[%s6 + $0x718] sm:$0xff]
        %v6374 = vld [vmem:[%s6 + $0x720] sm:$0xff]
        %v6375 = vld [vmem:[%s6 + $0x728] sm:$0xff]
        %v6376 = vld [vmem:[%s6 + $0x730] sm:$0xff]
        %v6377 = vld [vmem:[%s6 + $0x738] sm:$0xff]
        %v6378 = vld [vmem:[%s6 + $0x740] sm:$0xff]
        %v6379 = vld [vmem:[%s6 + $0x748] sm:$0xff]
        %v6380 = vld [vmem:[%s6 + $0x750] sm:$0xff]
        %v6381 = vld [vmem:[%s6 + $0x758] sm:$0xff]
        %v6382 = vld [vmem:[%s6 + $0x760] sm:$0xff]
        %v6383 = vld [vmem:[%s6 + $0x768] sm:$0xff]
        %v6384 = vld [vmem:[%s6 + $0x770] sm:$0xff]
        %v6385 = vld [vmem:[%s6 + $0x778] sm:$0xff]
        %v6386 = vld [vmem:[%s6 + $0x780] sm:$0xff]
        %v6387 = vld [vmem:[%s6 + $0x788] sm:$0xff]
        %v6388 = vld [vmem:[%s6 + $0x790] sm:$0xff]
        %v6389 = vld [vmem:[%s6 + $0x798] sm:$0xff]
        %v6390 = vld [vmem:[%s6 + $0x7a0] sm:$0xff]
        %v6391 = vld [vmem:[%s6 + $0x7a8] sm:$0xff]
        %v6392 = vld [vmem:[%s6 + $0x7b0] sm:$0xff]
        %v6393 = vld [vmem:[%s6 + $0x7b8] sm:$0xff]
        %v6394 = vld [vmem:[%s6 + $0x7c0] sm:$0xff]
        %v6395 = vld [vmem:[%s6 + $0x7c8] sm:$0xff]
        %v6396 = vld [vmem:[%s6 + $0x7d0] sm:$0xff]
        %v6397 = vld [vmem:[%s6 + $0x7d8] sm:$0xff]
        %v6398 = vld [vmem:[%s6 + $0x7e0] sm:$0xff]
        %v6399 = vld [vmem:[%s6 + $0x7e8] sm:$0xff]
        %v6400 = vld [vmem:[%s6 + $0x7f0] sm:$0xff]
        %v6401 = vld [vmem:[%s6 + $0x7f8] sm:$0xff]
        %v6402 = vunpack.c.l.b16 %v6191
        %v6403 = vunpack.c.h.b16 %v6191
        %v6404 = vunpack.c.l.b16 %v6201
        %v6405 = vunpack.c.h.b16 %v6201
        %v6406 = vunpack.c.l.b16 %v6215
        %v6407 = vunpack.c.h.b16 %v6215
        %v6408 = vunpack.c.l.b16 %v6225
        %v6409 = vunpack.c.h.b16 %v6225
        %v6410 = vunpack.c.l.b16 %v6239
        %v6411 = vunpack.c.h.b16 %v6239
        %v6412 = vunpack.c.l.b16 %v6249
        %v6413 = vunpack.c.h.b16 %v6249
        %v6414 = vunpack.c.l.b16 %v6263
        %v6415 = vunpack.c.h.b16 %v6263
        %v6416 = vunpack.c.l.b16 %v6273
        %v6417 = vunpack.c.h.b16 %v6273
        %v6418 = vunpack.c.l.b16 %v6287
        %v6419 = vunpack.c.h.b16 %v6287
        %v6420 = vunpack.c.l.b16 %v6297
        %v6421 = vunpack.c.h.b16 %v6297
        %v6422 = vunpack.c.l.b16 %v6311
        %v6423 = vunpack.c.h.b16 %v6311
        %v6424 = vunpack.c.l.b16 %v6321
        %v6425 = vunpack.c.h.b16 %v6321
        %v6426 = vunpack.c.l.b16 %v6335
        %v6427 = vunpack.c.h.b16 %v6335
        %v6428 = vunpack.c.l.b16 %v6345
        %v6429 = vunpack.c.h.b16 %v6345
        %v6430 = vunpack.c.l.b16 %v6359
        %v6431 = vunpack.c.h.b16 %v6359
        %v6432 = vunpack.c.l.b16 %v6369
        %v6433 = vunpack.c.h.b16 %v6369
        %v6434 = vpack.c.b16 %v6404, %v6402
        %v6435 = vpack.c.b16 %v6405, %v6403
        %v6436 = vpack.c.b16 %v6408, %v6406
        %v6437 = vpack.c.b16 %v6409, %v6407
        %v6438 = vpack.c.b16 %v6412, %v6410
        %v6439 = vpack.c.b16 %v6413, %v6411
        %v6440 = vpack.c.b16 %v6416, %v6414
        %v6441 = vpack.c.b16 %v6417, %v6415
        %v6442 = vpack.c.b16 %v6420, %v6418
        %v6443 = vpack.c.b16 %v6421, %v6419
        %v6444 = vpack.c.b16 %v6424, %v6422
        %v6445 = vpack.c.b16 %v6425, %v6423
        %v6446 = vpack.c.b16 %v6428, %v6426
        %v6447 = vpack.c.b16 %v6429, %v6427
        %v6448 = vpack.c.b16 %v6432, %v6430
        %v6449 = vpack.c.b16 %v6433, %v6431
        %v6498 = vunpack.c.l.b16 %v6370
        %v6499 = vunpack.c.h.b16 %v6370
        %v6500 = vunpack.c.l.b16 %v6371
        %v6501 = vunpack.c.h.b16 %v6371
        %v6502 = vunpack.c.l.b16 %v6372
        %v6503 = vunpack.c.h.b16 %v6372
        %v6504 = vunpack.c.l.b16 %v6373
        %v6505 = vunpack.c.h.b16 %v6373
        %v6506 = vunpack.c.l.b16 %v6374
        %v6507 = vunpack.c.h.b16 %v6374
        %v6508 = vunpack.c.l.b16 %v6375
        %v6509 = vunpack.c.h.b16 %v6375
        %v6510 = vunpack.c.l.b16 %v6376
        %v6511 = vunpack.c.h.b16 %v6376
        %v6512 = vunpack.c.l.b16 %v6377
        %v6513 = vunpack.c.h.b16 %v6377
        %v6514 = vunpack.c.l.b16 %v6378
        %v6515 = vunpack.c.h.b16 %v6378
        %v6516 = vunpack.c.l.b16 %v6379
        %v6517 = vunpack.c.h.b16 %v6379
        %v6518 = vunpack.c.l.b16 %v6380
        %v6519 = vunpack.c.h.b16 %v6380
        %v6520 = vunpack.c.l.b16 %v6381
        %v6521 = vunpack.c.h.b16 %v6381
        %v6522 = vunpack.c.l.b16 %v6382
        %v6523 = vunpack.c.h.b16 %v6382
        %v6524 = vunpack.c.l.b16 %v6383
        %v6525 = vunpack.c.h.b16 %v6383
        %v6526 = vunpack.c.l.b16 %v6384
        %v6527 = vunpack.c.h.b16 %v6384
        %v6528 = vunpack.c.l.b16 %v6385
        %v6529 = vunpack.c.h.b16 %v6385
        %v6530 = vunpack.c.l.b16 %v6386
        %v6531 = vunpack.c.h.b16 %v6386
        %v6532 = vunpack.c.l.b16 %v6387
        %v6533 = vunpack.c.h.b16 %v6387
        %v6534 = vunpack.c.l.b16 %v6388
        %v6535 = vunpack.c.h.b16 %v6388
        %v6536 = vunpack.c.l.b16 %v6389
        %v6537 = vunpack.c.h.b16 %v6389
        %v6538 = vunpack.c.l.b16 %v6390
        %v6539 = vunpack.c.h.b16 %v6390
        %v6540 = vunpack.c.l.b16 %v6391
        %v6541 = vunpack.c.h.b16 %v6391
        %v6542 = vunpack.c.l.b16 %v6392
        %v6543 = vunpack.c.h.b16 %v6392
        %v6544 = vunpack.c.l.b16 %v6393
        %v6545 = vunpack.c.h.b16 %v6393
        %v6546 = vunpack.c.l.b16 %v6394
        %v6547 = vunpack.c.h.b16 %v6394
        %v6548 = vunpack.c.l.b16 %v6395
        %v6549 = vunpack.c.h.b16 %v6395
        %v6550 = vunpack.c.l.b16 %v6396
        %v6551 = vunpack.c.h.b16 %v6396
        %v6552 = vunpack.c.l.b16 %v6397
        %v6553 = vunpack.c.h.b16 %v6397
        %v6554 = vunpack.c.l.b16 %v6398
        %v6555 = vunpack.c.h.b16 %v6398
        %v6556 = vunpack.c.l.b16 %v6399
        %v6557 = vunpack.c.h.b16 %v6399
        %v6558 = vunpack.c.l.b16 %v6400
        %v6559 = vunpack.c.h.b16 %v6400
        %v6560 = vunpack.c.l.b16 %v6401
        %v6561 = vunpack.c.h.b16 %v6401
        %v6562 = vpack.c.b16 %v6500, %v6498
        %v6563 = vpack.c.b16 %v6501, %v6499
        %v6564 = vpack.c.b16 %v6504, %v6502
        %v6565 = vpack.c.b16 %v6505, %v6503
        %v6566 = vpack.c.b16 %v6508, %v6506
        %v6567 = vpack.c.b16 %v6509, %v6507
        %v6568 = vpack.c.b16 %v6512, %v6510
        %v6569 = vpack.c.b16 %v6513, %v6511
        %v6570 = vpack.c.b16 %v6516, %v6514
        %v6571 = vpack.c.b16 %v6517, %v6515
        %v6572 = vpack.c.b16 %v6520, %v6518
        %v6573 = vpack.c.b16 %v6521, %v6519
        %v6574 = vpack.c.b16 %v6524, %v6522
        %v6575 = vpack.c.b16 %v6525, %v6523
        %v6576 = vpack.c.b16 %v6528, %v6526
        %v6577 = vpack.c.b16 %v6529, %v6527
        %v6578 = vpack.c.b16 %v6532, %v6530
        %v6579 = vpack.c.b16 %v6533, %v6531
        %v6580 = vpack.c.b16 %v6536, %v6534
        %v6581 = vpack.c.b16 %v6537, %v6535
        %v6582 = vpack.c.b16 %v6540, %v6538
        %v6583 = vpack.c.b16 %v6541, %v6539
        %v6584 = vpack.c.b16 %v6544, %v6542
        %v6585 = vpack.c.b16 %v6545, %v6543
        %v6586 = vpack.c.b16 %v6548, %v6546
        %v6587 = vpack.c.b16 %v6549, %v6547
        %v6588 = vpack.c.b16 %v6552, %v6550
        %v6589 = vpack.c.b16 %v6553, %v6551
        %v6590 = vpack.c.b16 %v6556, %v6554
        %v6591 = vpack.c.b16 %v6557, %v6555
        %v6592 = vpack.c.b16 %v6560, %v6558
        %v6593 = vpack.c.b16 %v6561, %v6559
        %6626 = vmatprep.subr.bf16.mxu0 %v6563
        %6627 = vmatpush1.bf16.msra.mxu0 %v6562
        %6628 = vmatprep.subr.bf16.mxu0 %v6565
        %6629 = vmatpush1.bf16.msra.mxu0 %v6564
        %6630 = vmatprep.subr.bf16.mxu0 %v6567
        %6631 = vmatpush1.bf16.msra.mxu0 %v6566
        %6632 = vmatprep.subr.bf16.mxu0 %v6569
        %6633 = vmatpush1.bf16.msra.mxu0 %v6568
        %6634 = vmatprep.subr.bf16.mxu0 %v6571
        %6635 = vmatpush1.bf16.msra.mxu0 %v6570
        %6636 = vmatprep.subr.bf16.mxu0 %v6573
        %6637 = vmatpush1.bf16.msra.mxu0 %v6572
        %6638 = vmatprep.subr.bf16.mxu0 %v6575
        %6639 = vmatpush1.bf16.msra.mxu0 %v6574
        %6640 = vmatprep.subr.bf16.mxu0 %v6577
        %6641 = vmatpush1.bf16.msra.mxu0 %v6576
        %6642 = vmatprep.subr.bf16.mxu0 %v6579
        %6643 = vmatpush1.bf16.msra.mxu0 %v6578
        %6644 = vmatprep.subr.bf16.mxu0 %v6581
        %6645 = vmatpush1.bf16.msra.mxu0 %v6580
        %6646 = vmatprep.subr.bf16.mxu0 %v6583
        %6647 = vmatpush1.bf16.msra.mxu0 %v6582
        %6648 = vmatprep.subr.bf16.mxu0 %v6585
        %6649 = vmatpush1.bf16.msra.mxu0 %v6584
        %6650 = vmatprep.subr.bf16.mxu0 %v6587
        %6651 = vmatpush1.bf16.msra.mxu0 %v6586
        %6652 = vmatprep.subr.bf16.mxu0 %v6589
        %6653 = vmatpush1.bf16.msra.mxu0 %v6588
        %6654 = vmatprep.subr.bf16.mxu0 %v6591
        %6655 = vmatpush1.bf16.msra.mxu0 %v6590
        %6656 = vmatprep.subr.bf16.mxu0 %v6593
        %6657 = vmatpush1.bf16.msra.mxu0 %v6592
        %6658 = vmatprep.mubr.bf16.mxu0 %v6435
        %6659 = vmatmul.mubr.bf16.gmra.mrb[0].mxu0 %v6434
        %v6660 = vpop.f32.mrb[0].mxu0
        %v6661 = vadd.f32 0.0, %v6660
        %v6662 = vpop.f32.mrb[0].mxu0
        %v6663 = vadd.f32 0.0, %v6662
        %v6664 = vpop.f32.mrb[0].mxu0
        %v6665 = vadd.f32 0.0, %v6664
        %v6666 = vpop.f32.mrb[0].mxu0
        %v6667 = vadd.f32 0.0, %v6666
        %6668 = vmatprep.mubr.bf16.mxu0 %v6437
        %6669 = vmatmul.mubr.bf16.gmra.mrb[0].mxu0 %v6436
        %v6670 = vpop.f32.mrb[0].mxu0
        %v6671 = vadd.f32 0.0, %v6670
        %v6672 = vpop.f32.mrb[0].mxu0
        %v6673 = vadd.f32 0.0, %v6672
        %v6674 = vpop.f32.mrb[0].mxu0
        %v6675 = vadd.f32 0.0, %v6674
        %v6676 = vpop.f32.mrb[0].mxu0
        %v6677 = vadd.f32 0.0, %v6676
        %6678 = vmatprep.mubr.bf16.mxu0 %v6439
        %6679 = vmatmul.mubr.bf16.gmra.mrb[0].mxu0 %v6438
        %v6680 = vpop.f32.mrb[0].mxu0
        %v6681 = vadd.f32 0.0, %v6680
        %v6682 = vpop.f32.mrb[0].mxu0
        %v6683 = vadd.f32 0.0, %v6682
        %v6684 = vpop.f32.mrb[0].mxu0
        %v6685 = vadd.f32 0.0, %v6684
        %v6686 = vpop.f32.mrb[0].mxu0
        %v6687 = vadd.f32 0.0, %v6686
        %6688 = vmatprep.mubr.bf16.mxu0 %v6441
        %6689 = vmatmul.mubr.bf16.gmra.mrb[0].mxu0 %v6440
        %v6690 = vpop.f32.mrb[0].mxu0
        %v6691 = vadd.f32 0.0, %v6690
        %v6692 = vpop.f32.mrb[0].mxu0
        %v6693 = vadd.f32 0.0, %v6692
        %v6694 = vpop.f32.mrb[0].mxu0
        %v6695 = vadd.f32 0.0, %v6694
        %v6696 = vpop.f32.mrb[0].mxu0
        %v6697 = vadd.f32 0.0, %v6696
        %6698 = vmatprep.mubr.bf16.mxu0 %v6443
        %6699 = vmatmul.mubr.bf16.gmra.mrb[0].mxu0 %v6442
        %v6700 = vpop.f32.mrb[0].mxu0
        %v6701 = vadd.f32 0.0, %v6700
        %v6702 = vpop.f32.mrb[0].mxu0
        %v6703 = vadd.f32 0.0, %v6702
        %v6704 = vpop.f32.mrb[0].mxu0
        %v6705 = vadd.f32 0.0, %v6704
        %v6706 = vpop.f32.mrb[0].mxu0
        %v6707 = vadd.f32 0.0, %v6706
        %6708 = vmatprep.mubr.bf16.mxu0 %v6445
        %6709 = vmatmul.mubr.bf16.gmra.mrb[0].mxu0 %v6444
        %v6710 = vpop.f32.mrb[0].mxu0
        %v6711 = vadd.f32 0.0, %v6710
        %v6712 = vpop.f32.mrb[0].mxu0
        %v6713 = vadd.f32 0.0, %v6712
        %v6714 = vpop.f32.mrb[0].mxu0
        %v6715 = vadd.f32 0.0, %v6714
        %v6716 = vpop.f32.mrb[0].mxu0
        %v6717 = vadd.f32 0.0, %v6716
        %6718 = vmatprep.mubr.bf16.mxu0 %v6447
        %6719 = vmatmul.mubr.bf16.gmra.mrb[0].mxu0 %v6446
        %v6720 = vpop.f32.mrb[0].mxu0
        %v6721 = vadd.f32 0.0, %v6720
        %v6722 = vpop.f32.mrb[0].mxu0
        %v6723 = vadd.f32 0.0, %v6722
        %v6724 = vpop.f32.mrb[0].mxu0
        %v6725 = vadd.f32 0.0, %v6724
        %v6726 = vpop.f32.mrb[0].mxu0
        %v6727 = vadd.f32 0.0, %v6726
        %6728 = vmatprep.mubr.bf16.mxu0 %v6449
        %6729 = vmatmul.mubr.bf16.gmra.mrb[0].mxu0 %v6448
        %v6730 = vpop.f32.mrb[0].mxu0
        %v6731 = vadd.f32 0.0, %v6730
        %v6732 = vpop.f32.mrb[0].mxu0
        %v6733 = vadd.f32 0.0, %v6732
        %v6734 = vpop.f32.mrb[0].mxu0
        %v6735 = vadd.f32 0.0, %v6734
        %v6736 = vpop.f32.mrb[0].mxu0
        %v6737 = vadd.f32 0.0, %v6736
        %6738 = vdwg.mxu0
        %v6739 = vadd.f32 %v6122, %v6661
        %v6740 = vadd.f32 %v6123, %v6663
        %v6741 = vadd.f32 %v6124, %v6665
        %v6742 = vadd.f32 %v6125, %v6667
        %v6743 = vadd.f32 %v6126, %v6671
        %v6744 = vadd.f32 %v6127, %v6673
        %v6745 = vadd.f32 %v6128, %v6675
        %v6746 = vadd.f32 %v6129, %v6677
        %v6747 = vadd.f32 %v6130, %v6681
        %v6748 = vadd.f32 %v6131, %v6683
        %v6749 = vadd.f32 %v6132, %v6685
        %v6750 = vadd.f32 %v6133, %v6687
        %v6751 = vadd.f32 %v6134, %v6691
        %v6752 = vadd.f32 %v6135, %v6693
        %v6753 = vadd.f32 %v6136, %v6695
        %v6754 = vadd.f32 %v6137, %v6697
        %v6755 = vadd.f32 %v6138, %v6701
        %v6756 = vadd.f32 %v6139, %v6703
        %v6757 = vadd.f32 %v6140, %v6705
        %v6758 = vadd.f32 %v6141, %v6707
        %v6759 = vadd.f32 %v6142, %v6711
        %v6760 = vadd.f32 %v6143, %v6713
        %v6761 = vadd.f32 %v6144, %v6715
        %v6762 = vadd.f32 %v6145, %v6717
        %v6763 = vadd.f32 %v6146, %v6721
        %v6764 = vadd.f32 %v6147, %v6723
        %v6765 = vadd.f32 %v6148, %v6725
        %v6766 = vadd.f32 %v6149, %v6727
        %v6767 = vadd.f32 %v6150, %v6731
        %v6768 = vadd.f32 %v6151, %v6733
        %v6769 = vadd.f32 %v6152, %v6735
        %v6770 = vadd.f32 %v6153, %v6737
        %v6771 = vld [vmem:[%s1872] sm:$0xee]
        %v6772 = vld [vmem:[%s1872 + $0x18] sm:$0xee]
        %v6773 = vld [vmem:[%s1872 + $0x30] sm:$0xee]
        %v6774 = vld [vmem:[%s1872 + $0x48] sm:$0xee]
        %v6775 = vld [vmem:[%s1872 + $0x60] sm:$0xee]
        %v6776 = vld [vmem:[%s1872 + $0x78] sm:$0xee]
        %v6777 = vld [vmem:[%s1872 + $0x90] sm:$0xee]
        %v6778 = vld [vmem:[%s1872 + $0xa8] sm:$0xee]
        %v6803 = vrot.slane %v6771, 5
        %v6804 = vrot.slane %v6803, 4
        %v6805 = vrot.slane %v6155, 5
        %v6806 = vsel %vm3724, %v6804, %v6805
        %v6807 = vrot.slane %v6805, 4
        %v6808 = vrot.slane %v6156, 5
        %v6809 = vsel %vm3724, %v6807, %v6808
        %v6810 = vrot.slane %v6772, 5
        %v6811 = vrot.slane %v6810, 4
        %v6812 = vrot.slane %v6158, 5
        %v6813 = vsel %vm3724, %v6811, %v6812
        %v6814 = vrot.slane %v6812, 4
        %v6815 = vrot.slane %v6159, 5
        %v6816 = vsel %vm3724, %v6814, %v6815
        %v6817 = vrot.slane %v6773, 5
        %v6818 = vrot.slane %v6817, 4
        %v6819 = vrot.slane %v6161, 5
        %v6820 = vsel %vm3724, %v6818, %v6819
        %v6821 = vrot.slane %v6819, 4
        %v6822 = vrot.slane %v6162, 5
        %v6823 = vsel %vm3724, %v6821, %v6822
        %v6824 = vrot.slane %v6774, 5
        %v6825 = vrot.slane %v6824, 4
        %v6826 = vrot.slane %v6164, 5
        %v6827 = vsel %vm3724, %v6825, %v6826
        %v6828 = vrot.slane %v6826, 4
        %v6829 = vrot.slane %v6165, 5
        %v6830 = vsel %vm3724, %v6828, %v6829
        %v6831 = vrot.slane %v6775, 5
        %v6832 = vrot.slane %v6831, 4
        %v6833 = vrot.slane %v6167, 5
        %v6834 = vsel %vm3724, %v6832, %v6833
        %v6835 = vrot.slane %v6833, 4
        %v6836 = vrot.slane %v6168, 5
        %v6837 = vsel %vm3724, %v6835, %v6836
        %v6838 = vrot.slane %v6776, 5
        %v6839 = vrot.slane %v6838, 4
        %v6840 = vrot.slane %v6170, 5
        %v6841 = vsel %vm3724, %v6839, %v6840
        %v6842 = vrot.slane %v6840, 4
        %v6843 = vrot.slane %v6171, 5
        %v6844 = vsel %vm3724, %v6842, %v6843
        %v6845 = vrot.slane %v6777, 5
        %v6846 = vrot.slane %v6845, 4
        %v6847 = vrot.slane %v6173, 5
        %v6848 = vsel %vm3724, %v6846, %v6847
        %v6849 = vrot.slane %v6847, 4
        %v6850 = vrot.slane %v6174, 5
        %v6851 = vsel %vm3724, %v6849, %v6850
        %v6852 = vrot.slane %v6778, 5
        %v6853 = vrot.slane %v6852, 4
        %v6854 = vrot.slane %v6176, 5
        %v6855 = vsel %vm3724, %v6853, %v6854
        %v6856 = vrot.slane %v6854, 4
        %v6857 = vrot.slane %v6177, 5
        %v6858 = vsel %vm3724, %v6856, %v6857
        %v6859 = vld [vmem:[%s6 + $0x800] sm:$0xff]
        %v6860 = vld [vmem:[%s6 + $0x808] sm:$0xff]
        %v6861 = vld [vmem:[%s6 + $0x810] sm:$0xff]
        %v6862 = vld [vmem:[%s6 + $0x818] sm:$0xff]
        %v6863 = vld [vmem:[%s6 + $0x820] sm:$0xff]
        %v6864 = vld [vmem:[%s6 + $0x828] sm:$0xff]
        %v6865 = vld [vmem:[%s6 + $0x830] sm:$0xff]
        %v6866 = vld [vmem:[%s6 + $0x838] sm:$0xff]
        %v6867 = vld [vmem:[%s6 + $0x840] sm:$0xff]
        %v6868 = vld [vmem:[%s6 + $0x848] sm:$0xff]
        %v6869 = vld [vmem:[%s6 + $0x850] sm:$0xff]
        %v6870 = vld [vmem:[%s6 + $0x858] sm:$0xff]
        %v6871 = vld [vmem:[%s6 + $0x860] sm:$0xff]
        %v6872 = vld [vmem:[%s6 + $0x868] sm:$0xff]
        %v6873 = vld [vmem:[%s6 + $0x870] sm:$0xff]
        %v6874 = vld [vmem:[%s6 + $0x878] sm:$0xff]
        %v6875 = vld [vmem:[%s6 + $0x880] sm:$0xff]
        %v6876 = vld [vmem:[%s6 + $0x888] sm:$0xff]
        %v6877 = vld [vmem:[%s6 + $0x890] sm:$0xff]
        %v6878 = vld [vmem:[%s6 + $0x898] sm:$0xff]
        %v6879 = vld [vmem:[%s6 + $0x8a0] sm:$0xff]
        %v6880 = vld [vmem:[%s6 + $0x8a8] sm:$0xff]
        %v6881 = vld [vmem:[%s6 + $0x8b0] sm:$0xff]
        %v6882 = vld [vmem:[%s6 + $0x8b8] sm:$0xff]
        %v6883 = vld [vmem:[%s6 + $0x8c0] sm:$0xff]
        %v6884 = vld [vmem:[%s6 + $0x8c8] sm:$0xff]
        %v6885 = vld [vmem:[%s6 + $0x8d0] sm:$0xff]
        %v6886 = vld [vmem:[%s6 + $0x8d8] sm:$0xff]
        %v6887 = vld [vmem:[%s6 + $0x8e0] sm:$0xff]
        %v6888 = vld [vmem:[%s6 + $0x8e8] sm:$0xff]
        %v6889 = vld [vmem:[%s6 + $0x8f0] sm:$0xff]
        %v6890 = vld [vmem:[%s6 + $0x8f8] sm:$0xff]
        %v6891 = vunpack.c.l.b16 %v6806
        %v6892 = vunpack.c.h.b16 %v6806
        %v6893 = vunpack.c.l.b16 %v6809
        %v6894 = vunpack.c.h.b16 %v6809
        %v6895 = vunpack.c.l.b16 %v6813
        %v6896 = vunpack.c.h.b16 %v6813
        %v6897 = vunpack.c.l.b16 %v6816
        %v6898 = vunpack.c.h.b16 %v6816
        %v6899 = vunpack.c.l.b16 %v6820
        %v6900 = vunpack.c.h.b16 %v6820
        %v6901 = vunpack.c.l.b16 %v6823
        %v6902 = vunpack.c.h.b16 %v6823
        %v6903 = vunpack.c.l.b16 %v6827
        %v6904 = vunpack.c.h.b16 %v6827
        %v6905 = vunpack.c.l.b16 %v6830
        %v6906 = vunpack.c.h.b16 %v6830
        %v6907 = vunpack.c.l.b16 %v6834
        %v6908 = vunpack.c.h.b16 %v6834
        %v6909 = vunpack.c.l.b16 %v6837
        %v6910 = vunpack.c.h.b16 %v6837
        %v6911 = vunpack.c.l.b16 %v6841
        %v6912 = vunpack.c.h.b16 %v6841
        %v6913 = vunpack.c.l.b16 %v6844
        %v6914 = vunpack.c.h.b16 %v6844
        %v6915 = vunpack.c.l.b16 %v6848
        %v6916 = vunpack.c.h.b16 %v6848
        %v6917 = vunpack.c.l.b16 %v6851
        %v6918 = vunpack.c.h.b16 %v6851
        %v6919 = vunpack.c.l.b16 %v6855
        %v6920 = vunpack.c.h.b16 %v6855
        %v6921 = vunpack.c.l.b16 %v6858
        %v6922 = vunpack.c.h.b16 %v6858
        %v6923 = vpack.c.b16 %v6893, %v6891
        %v6924 = vpack.c.b16 %v6894, %v6892
        %v6925 = vpack.c.b16 %v6897, %v6895
        %v6926 = vpack.c.b16 %v6898, %v6896
        %v6927 = vpack.c.b16 %v6901, %v6899
        %v6928 = vpack.c.b16 %v6902, %v6900
        %v6929 = vpack.c.b16 %v6905, %v6903
        %v6930 = vpack.c.b16 %v6906, %v6904
        %v6931 = vpack.c.b16 %v6909, %v6907
        %v6932 = vpack.c.b16 %v6910, %v6908
        %v6933 = vpack.c.b16 %v6913, %v6911
        %v6934 = vpack.c.b16 %v6914, %v6912
        %v6935 = vpack.c.b16 %v6917, %v6915
        %v6936 = vpack.c.b16 %v6918, %v6916
        %v6937 = vpack.c.b16 %v6921, %v6919
        %v6938 = vpack.c.b16 %v6922, %v6920
        %v6987 = vunpack.c.l.b16 %v6859
        %v6988 = vunpack.c.h.b16 %v6859
        %v6989 = vunpack.c.l.b16 %v6860
        %v6990 = vunpack.c.h.b16 %v6860
        %v6991 = vunpack.c.l.b16 %v6861
        %v6992 = vunpack.c.h.b16 %v6861
        %v6993 = vunpack.c.l.b16 %v6862
        %v6994 = vunpack.c.h.b16 %v6862
        %v6995 = vunpack.c.l.b16 %v6863
        %v6996 = vunpack.c.h.b16 %v6863
        %v6997 = vunpack.c.l.b16 %v6864
        %v6998 = vunpack.c.h.b16 %v6864
        %v6999 = vunpack.c.l.b16 %v6865
        %v7000 = vunpack.c.h.b16 %v6865
        %v7001 = vunpack.c.l.b16 %v6866
        %v7002 = vunpack.c.h.b16 %v6866
        %v7003 = vunpack.c.l.b16 %v6867
        %v7004 = vunpack.c.h.b16 %v6867
        %v7005 = vunpack.c.l.b16 %v6868
        %v7006 = vunpack.c.h.b16 %v6868
        %v7007 = vunpack.c.l.b16 %v6869
        %v7008 = vunpack.c.h.b16 %v6869
        %v7009 = vunpack.c.l.b16 %v6870
        %v7010 = vunpack.c.h.b16 %v6870
        %v7011 = vunpack.c.l.b16 %v6871
        %v7012 = vunpack.c.h.b16 %v6871
        %v7013 = vunpack.c.l.b16 %v6872
        %v7014 = vunpack.c.h.b16 %v6872
        %v7015 = vunpack.c.l.b16 %v6873
        %v7016 = vunpack.c.h.b16 %v6873
        %v7017 = vunpack.c.l.b16 %v6874
        %v7018 = vunpack.c.h.b16 %v6874
        %v7019 = vunpack.c.l.b16 %v6875
        %v7020 = vunpack.c.h.b16 %v6875
        %v7021 = vunpack.c.l.b16 %v6876
        %v7022 = vunpack.c.h.b16 %v6876
        %v7023 = vunpack.c.l.b16 %v6877
        %v7024 = vunpack.c.h.b16 %v6877
        %v7025 = vunpack.c.l.b16 %v6878
        %v7026 = vunpack.c.h.b16 %v6878
        %v7027 = vunpack.c.l.b16 %v6879
        %v7028 = vunpack.c.h.b16 %v6879
        %v7029 = vunpack.c.l.b16 %v6880
        %v7030 = vunpack.c.h.b16 %v6880
        %v7031 = vunpack.c.l.b16 %v6881
        %v7032 = vunpack.c.h.b16 %v6881
        %v7033 = vunpack.c.l.b16 %v6882
        %v7034 = vunpack.c.h.b16 %v6882
        %v7035 = vunpack.c.l.b16 %v6883
        %v7036 = vunpack.c.h.b16 %v6883
        %v7037 = vunpack.c.l.b16 %v6884
        %v7038 = vunpack.c.h.b16 %v6884
        %v7039 = vunpack.c.l.b16 %v6885
        %v7040 = vunpack.c.h.b16 %v6885
        %v7041 = vunpack.c.l.b16 %v6886
        %v7042 = vunpack.c.h.b16 %v6886
        %v7043 = vunpack.c.l.b16 %v6887
        %v7044 = vunpack.c.h.b16 %v6887
        %v7045 = vunpack.c.l.b16 %v6888
        %v7046 = vunpack.c.h.b16 %v6888
        %v7047 = vunpack.c.l.b16 %v6889
        %v7048 = vunpack.c.h.b16 %v6889
        %v7049 = vunpack.c.l.b16 %v6890
        %v7050 = vunpack.c.h.b16 %v6890
        %v7051 = vpack.c.b16 %v6989, %v6987
        %v7052 = vpack.c.b16 %v6990, %v6988
        %v7053 = vpack.c.b16 %v6993, %v6991
        %v7054 = vpack.c.b16 %v6994, %v6992
        %v7055 = vpack.c.b16 %v6997, %v6995
        %v7056 = vpack.c.b16 %v6998, %v6996
        %v7057 = vpack.c.b16 %v7001, %v6999
        %v7058 = vpack.c.b16 %v7002, %v7000
        %v7059 = vpack.c.b16 %v7005, %v7003
        %v7060 = vpack.c.b16 %v7006, %v7004
        %v7061 = vpack.c.b16 %v7009, %v7007
        %v7062 = vpack.c.b16 %v7010, %v7008
        %v7063 = vpack.c.b16 %v7013, %v7011
        %v7064 = vpack.c.b16 %v7014, %v7012
        %v7065 = vpack.c.b16 %v7017, %v7015
        %v7066 = vpack.c.b16 %v7018, %v7016
        %v7067 = vpack.c.b16 %v7021, %v7019
        %v7068 = vpack.c.b16 %v7022, %v7020
        %v7069 = vpack.c.b16 %v7025, %v7023
        %v7070 = vpack.c.b16 %v7026, %v7024
        %v7071 = vpack.c.b16 %v7029, %v7027
        %v7072 = vpack.c.b16 %v7030, %v7028
        %v7073 = vpack.c.b16 %v7033, %v7031
        %v7074 = vpack.c.b16 %v7034, %v7032
        %v7075 = vpack.c.b16 %v7037, %v7035
        %v7076 = vpack.c.b16 %v7038, %v7036
        %v7077 = vpack.c.b16 %v7041, %v7039
        %v7078 = vpack.c.b16 %v7042, %v7040
        %v7079 = vpack.c.b16 %v7045, %v7043
        %v7080 = vpack.c.b16 %v7046, %v7044
        %v7081 = vpack.c.b16 %v7049, %v7047
        %v7082 = vpack.c.b16 %v7050, %v7048
        %7115 = vmatprep.subr.bf16.mxu0 %v7052
        %7116 = vmatpush1.bf16.msra.mxu0 %v7051
        %7117 = vmatprep.subr.bf16.mxu0 %v7054
        %7118 = vmatpush1.bf16.msra.mxu0 %v7053
        %7119 = vmatprep.subr.bf16.mxu0 %v7056
        %7120 = vmatpush1.bf16.msra.mxu0 %v7055
        %7121 = vmatprep.subr.bf16.mxu0 %v7058
        %7122 = vmatpush1.bf16.msra.mxu0 %v7057
        %7123 = vmatprep.subr.bf16.mxu0 %v7060
        %7124 = vmatpush1.bf16.msra.mxu0 %v7059
        %7125 = vmatprep.subr.bf16.mxu0 %v7062
        %7126 = vmatpush1.bf16.msra.mxu0 %v7061
        %7127 = vmatprep.subr.bf16.mxu0 %v7064
        %7128 = vmatpush1.bf16.msra.mxu0 %v7063
        %7129 = vmatprep.subr.bf16.mxu0 %v7066
        %7130 = vmatpush1.bf16.msra.mxu0 %v7065
        %7131 = vmatprep.subr.bf16.mxu0 %v7068
        %7132 = vmatpush1.bf16.msra.mxu0 %v7067
        %7133 = vmatprep.subr.bf16.mxu0 %v7070
        %7134 = vmatpush1.bf16.msra.mxu0 %v7069
        %7135 = vmatprep.subr.bf16.mxu0 %v7072
        %7136 = vmatpush1.bf16.msra.mxu0 %v7071
        %7137 = vmatprep.subr.bf16.mxu0 %v7074
        %7138 = vmatpush1.bf16.msra.mxu0 %v7073
        %7139 = vmatprep.subr.bf16.mxu0 %v7076
        %7140 = vmatpush1.bf16.msra.mxu0 %v7075
        %7141 = vmatprep.subr.bf16.mxu0 %v7078
        %7142 = vmatpush1.bf16.msra.mxu0 %v7077
        %7143 = vmatprep.subr.bf16.mxu0 %v7080
        %7144 = vmatpush1.bf16.msra.mxu0 %v7079
        %7145 = vmatprep.subr.bf16.mxu0 %v7082
        %7146 = vmatpush1.bf16.msra.mxu0 %v7081
        %7147 = vmatprep.mubr.bf16.mxu0 %v6924
        %7148 = vmatmul.mubr.bf16.gmra.mrb[0].mxu0 %v6923
        %v7149 = vpop.f32.mrb[0].mxu0
        %v7150 = vadd.f32 0.0, %v7149
        %v7151 = vpop.f32.mrb[0].mxu0
        %v7152 = vadd.f32 0.0, %v7151
        %v7153 = vpop.f32.mrb[0].mxu0
        %v7154 = vadd.f32 0.0, %v7153
        %v7155 = vpop.f32.mrb[0].mxu0
        %v7156 = vadd.f32 0.0, %v7155
        %7157 = vmatprep.mubr.bf16.mxu0 %v6926
        %7158 = vmatmul.mubr.bf16.gmra.mrb[0].mxu0 %v6925
        %v7159 = vpop.f32.mrb[0].mxu0
        %v7160 = vadd.f32 0.0, %v7159
        %v7161 = vpop.f32.mrb[0].mxu0
        %v7162 = vadd.f32 0.0, %v7161
        %v7163 = vpop.f32.mrb[0].mxu0
        %v7164 = vadd.f32 0.0, %v7163
        %v7165 = vpop.f32.mrb[0].mxu0
        %v7166 = vadd.f32 0.0, %v7165
        %7167 = vmatprep.mubr.bf16.mxu0 %v6928
        %7168 = vmatmul.mubr.bf16.gmra.mrb[0].mxu0 %v6927
        %v7169 = vpop.f32.mrb[0].mxu0
        %v7170 = vadd.f32 0.0, %v7169
        %v7171 = vpop.f32.mrb[0].mxu0
        %v7172 = vadd.f32 0.0, %v7171
        %v7173 = vpop.f32.mrb[0].mxu0
        %v7174 = vadd.f32 0.0, %v7173
        %v7175 = vpop.f32.mrb[0].mxu0
        %v7176 = vadd.f32 0.0, %v7175
        %7177 = vmatprep.mubr.bf16.mxu0 %v6930
        %7178 = vmatmul.mubr.bf16.gmra.mrb[0].mxu0 %v6929
        %v7179 = vpop.f32.mrb[0].mxu0
        %v7180 = vadd.f32 0.0, %v7179
        %v7181 = vpop.f32.mrb[0].mxu0
        %v7182 = vadd.f32 0.0, %v7181
        %v7183 = vpop.f32.mrb[0].mxu0
        %v7184 = vadd.f32 0.0, %v7183
        %v7185 = vpop.f32.mrb[0].mxu0
        %v7186 = vadd.f32 0.0, %v7185
        %7187 = vmatprep.mubr.bf16.mxu0 %v6932
        %7188 = vmatmul.mubr.bf16.gmra.mrb[0].mxu0 %v6931
        %v7189 = vpop.f32.mrb[0].mxu0
        %v7190 = vadd.f32 0.0, %v7189
        %v7191 = vpop.f32.mrb[0].mxu0
        %v7192 = vadd.f32 0.0, %v7191
        %v7193 = vpop.f32.mrb[0].mxu0
        %v7194 = vadd.f32 0.0, %v7193
        %v7195 = vpop.f32.mrb[0].mxu0
        %v7196 = vadd.f32 0.0, %v7195
        %7197 = vmatprep.mubr.bf16.mxu0 %v6934
        %7198 = vmatmul.mubr.bf16.gmra.mrb[0].mxu0 %v6933
        %v7199 = vpop.f32.mrb[0].mxu0
        %v7200 = vadd.f32 0.0, %v7199
        %v7201 = vpop.f32.mrb[0].mxu0
        %v7202 = vadd.f32 0.0, %v7201
        %v7203 = vpop.f32.mrb[0].mxu0
        %v7204 = vadd.f32 0.0, %v7203
        %v7205 = vpop.f32.mrb[0].mxu0
        %v7206 = vadd.f32 0.0, %v7205
        %7207 = vmatprep.mubr.bf16.mxu0 %v6936
        %7208 = vmatmul.mubr.bf16.gmra.mrb[0].mxu0 %v6935
        %v7209 = vpop.f32.mrb[0].mxu0
        %v7210 = vadd.f32 0.0, %v7209
        %v7211 = vpop.f32.mrb[0].mxu0
        %v7212 = vadd.f32 0.0, %v7211
        %v7213 = vpop.f32.mrb[0].mxu0
        %v7214 = vadd.f32 0.0, %v7213
        %v7215 = vpop.f32.mrb[0].mxu0
        %v7216 = vadd.f32 0.0, %v7215
        %7217 = vmatprep.mubr.bf16.mxu0 %v6938
        %7218 = vmatmul.mubr.bf16.gmra.mrb[0].mxu0 %v6937
        %v7219 = vpop.f32.mrb[0].mxu0
        %v7220 = vadd.f32 0.0, %v7219
        %v7221 = vpop.f32.mrb[0].mxu0
        %v7222 = vadd.f32 0.0, %v7221
        %v7223 = vpop.f32.mrb[0].mxu0
        %v7224 = vadd.f32 0.0, %v7223
        %v7225 = vpop.f32.mrb[0].mxu0
        %v7226 = vadd.f32 0.0, %v7225
        %7227 = vdwg.mxu0
        %v7228 = vadd.f32 %v6739, %v7150
        %v7229 = vadd.f32 %v6740, %v7152
        %v7230 = vadd.f32 %v6741, %v7154
        %v7231 = vadd.f32 %v6742, %v7156
        %v7232 = vadd.f32 %v6743, %v7160
        %v7233 = vadd.f32 %v6744, %v7162
        %v7234 = vadd.f32 %v6745, %v7164
        %v7235 = vadd.f32 %v6746, %v7166
        %v7236 = vadd.f32 %v6747, %v7170
        %v7237 = vadd.f32 %v6748, %v7172
        %v7238 = vadd.f32 %v6749, %v7174
        %v7239 = vadd.f32 %v6750, %v7176
        %v7240 = vadd.f32 %v6751, %v7180
        %v7241 = vadd.f32 %v6752, %v7182
        %v7242 = vadd.f32 %v6753, %v7184
        %v7243 = vadd.f32 %v6754, %v7186
        %v7244 = vadd.f32 %v6755, %v7190
        %v7245 = vadd.f32 %v6756, %v7192
        %v7246 = vadd.f32 %v6757, %v7194
        %v7247 = vadd.f32 %v6758, %v7196
        %v7248 = vadd.f32 %v6759, %v7200
        %v7249 = vadd.f32 %v6760, %v7202
        %v7250 = vadd.f32 %v6761, %v7204
        %v7251 = vadd.f32 %v6762, %v7206
        %v7252 = vadd.f32 %v6763, %v7210
        %v7253 = vadd.f32 %v6764, %v7212
        %v7254 = vadd.f32 %v6765, %v7214
        %v7255 = vadd.f32 %v6766, %v7216
        %v7256 = vadd.f32 %v6767, %v7220
        %v7257 = vadd.f32 %v6768, %v7222
        %v7258 = vadd.f32 %v6769, %v7224
        %v7259 = vadd.f32 %v6770, %v7226
        %v7260 = vld [vmem:[%s7] sm:$0x3]
        %v7262 = vlaneseq
        %v7263 = vshrl.u32 %v7262, 7
        %v7264 = vsub.s32 0, %v7263
        %v7265 = vrot.slane %v7260, %v7264
        %v7266 = vlaneseq
        %v7267 = vshrl.u32 %v7266, 7
        %v7268 = vsub.s32 1, %v7267
        %v7269 = vrot.slane %v7260, %v7268
        %v7272 = vadd.f32 %v7228, %v7265
        %v7273 = vadd.f32 %v7229, %v7269
        %v7274 = vadd.f32 %v7230, %v7265
        %v7275 = vadd.f32 %v7231, %v7269
        %v7276 = vadd.f32 %v7232, %v7265
        %v7277 = vadd.f32 %v7233, %v7269
        %v7278 = vadd.f32 %v7234, %v7265
        %v7279 = vadd.f32 %v7235, %v7269
        %v7280 = vadd.f32 %v7236, %v7265
        %v7281 = vadd.f32 %v7237, %v7269
        %v7282 = vadd.f32 %v7238, %v7265
        %v7283 = vadd.f32 %v7239, %v7269
        %v7284 = vadd.f32 %v7240, %v7265
        %v7285 = vadd.f32 %v7241, %v7269
        %v7286 = vadd.f32 %v7242, %v7265
        %v7287 = vadd.f32 %v7243, %v7269
        %v7288 = vadd.f32 %v7244, %v7265
        %v7289 = vadd.f32 %v7245, %v7269
        %v7290 = vadd.f32 %v7246, %v7265
        %v7291 = vadd.f32 %v7247, %v7269
        %v7292 = vadd.f32 %v7248, %v7265
        %v7293 = vadd.f32 %v7249, %v7269
        %v7294 = vadd.f32 %v7250, %v7265
        %v7295 = vadd.f32 %v7251, %v7269
        %v7296 = vadd.f32 %v7252, %v7265
        %v7297 = vadd.f32 %v7253, %v7269
        %v7298 = vadd.f32 %v7254, %v7265
        %v7299 = vadd.f32 %v7255, %v7269
        %v7300 = vadd.f32 %v7256, %v7265
        %v7301 = vadd.f32 %v7257, %v7269
        %v7302 = vadd.f32 %v7258, %v7265
        %v7303 = vadd.f32 %v7259, %v7269
        %v7304 = vmax.f32 %v7272, 0.0
        %v7305 = vmax.f32 %v7273, 0.0
        %v7306 = vmax.f32 %v7274, 0.0
        %v7307 = vmax.f32 %v7275, 0.0
        %v7308 = vmax.f32 %v7276, 0.0
        %v7309 = vmax.f32 %v7277, 0.0
        %v7310 = vmax.f32 %v7278, 0.0
        %v7311 = vmax.f32 %v7279, 0.0
        %v7312 = vmax.f32 %v7280, 0.0
        %v7313 = vmax.f32 %v7281, 0.0
        %v7314 = vmax.f32 %v7282, 0.0
        %v7315 = vmax.f32 %v7283, 0.0
        %v7316 = vmax.f32 %v7284, 0.0
        %v7317 = vmax.f32 %v7285, 0.0
        %v7318 = vmax.f32 %v7286, 0.0
        %v7319 = vmax.f32 %v7287, 0.0
        %v7320 = vmax.f32 %v7288, 0.0
        %v7321 = vmax.f32 %v7289, 0.0
        %v7322 = vmax.f32 %v7290, 0.0
        %v7323 = vmax.f32 %v7291, 0.0
        %v7324 = vmax.f32 %v7292, 0.0
        %v7325 = vmax.f32 %v7293, 0.0
        %v7326 = vmax.f32 %v7294, 0.0
        %v7327 = vmax.f32 %v7295, 0.0
        %v7328 = vmax.f32 %v7296, 0.0
        %v7329 = vmax.f32 %v7297, 0.0
        %v7330 = vmax.f32 %v7298, 0.0
        %v7331 = vmax.f32 %v7299, 0.0
        %v7332 = vmax.f32 %v7300, 0.0
        %v7333 = vmax.f32 %v7301, 0.0
        %v7334 = vmax.f32 %v7302, 0.0
        %v7335 = vmax.f32 %v7303, 0.0
        %7336 = vst [vmem:[%s422] sm:$0xff] %v7304
        %7337 = vst [vmem:[%s422 + $0x8] sm:$0xff] %v7305
        %7338 = vst [vmem:[%s422 + $0x10] sm:$0xff] %v7306
        %7339 = vst [vmem:[%s422 + $0x18] sm:$0xff] %v7307
        %7340 = vst [vmem:[%s422 + $0x20] sm:$0xff] %v7308
        %7341 = vst [vmem:[%s422 + $0x28] sm:$0xff] %v7309
        %7342 = vst [vmem:[%s422 + $0x30] sm:$0xff] %v7310
        %7343 = vst [vmem:[%s422 + $0x38] sm:$0xff] %v7311
        %7344 = vst [vmem:[%s422 + $0x40] sm:$0xff] %v7312
        %7345 = vst [vmem:[%s422 + $0x48] sm:$0xff] %v7313
        %7346 = vst [vmem:[%s422 + $0x50] sm:$0xff] %v7314
        %7347 = vst [vmem:[%s422 + $0x58] sm:$0xff] %v7315
        %7348 = vst [vmem:[%s422 + $0x60] sm:$0xff] %v7316
        %7349 = vst [vmem:[%s422 + $0x68] sm:$0xff] %v7317
        %7350 = vst [vmem:[%s422 + $0x70] sm:$0xff] %v7318
        %7351 = vst [vmem:[%s422 + $0x78] sm:$0xff] %v7319
        %7352 = vst [vmem:[%s422 + $0x80] sm:$0xff] %v7320
        %7353 = vst [vmem:[%s422 + $0x88] sm:$0xff] %v7321
        %7354 = vst [vmem:[%s422 + $0x90] sm:$0xff] %v7322
        %7355 = vst [vmem:[%s422 + $0x98] sm:$0xff] %v7323
        %7356 = vst [vmem:[%s422 + $0xa0] sm:$0xff] %v7324
        %7357 = vst [vmem:[%s422 + $0xa8] sm:$0xff] %v7325
        %7358 = vst [vmem:[%s422 + $0xb0] sm:$0xff] %v7326
        %7359 = vst [vmem:[%s422 + $0xb8] sm:$0xff] %v7327
        %7360 = vst [vmem:[%s422 + $0xc0] sm:$0xff] %v7328
        %7361 = vst [vmem:[%s422 + $0xc8] sm:$0xff] %v7329
        %7362 = vst [vmem:[%s422 + $0xd0] sm:$0xff] %v7330
        %7363 = vst [vmem:[%s422 + $0xd8] sm:$0xff] %v7331
        %7364 = vst [vmem:[%s422 + $0xe0] sm:$0xff] %v7332
        %7365 = vst [vmem:[%s422 + $0xe8] sm:$0xff] %v7333
        %7366 = vst [vmem:[%s422 + $0xf0] sm:$0xff] %v7334
        %7367 = vst [vmem:[%s422 + $0xf8] sm:$0xff] %v7335
        %v7368 = vpack.c.bf16 %v7306, %v7304
        %v7369 = vpack.c.bf16 %v7307, %v7305
        %v7370 = vpack.c.bf16 %v7310, %v7308
        %v7371 = vpack.c.bf16 %v7311, %v7309
        %v7372 = vpack.c.bf16 %v7314, %v7312
        %v7373 = vpack.c.bf16 %v7315, %v7313
        %v7374 = vpack.c.bf16 %v7318, %v7316
        %v7375 = vpack.c.bf16 %v7319, %v7317
        %v7376 = vpack.c.bf16 %v7322, %v7320
        %v7377 = vpack.c.bf16 %v7323, %v7321
        %v7378 = vpack.c.bf16 %v7326, %v7324
        %v7379 = vpack.c.bf16 %v7327, %v7325
        %v7380 = vpack.c.bf16 %v7330, %v7328
        %v7381 = vpack.c.bf16 %v7331, %v7329
        %v7382 = vpack.c.bf16 %v7334, %v7332
        %v7383 = vpack.c.bf16 %v7335, %v7333
        %v7384 = vld [vmem:[%s8] sm:$0xf]
        %v7385 = vld [vmem:[%s8 + $0x4] sm:$0xf]
        %v7386 = vld [vmem:[%s8 + $0x8] sm:$0xf]
        %v7387 = vld [vmem:[%s8 + $0xc] sm:$0xf]
        %v7388 = vld [vmem:[%s8 + $0x10] sm:$0xf]
        %v7389 = vld [vmem:[%s8 + $0x14] sm:$0xf]
        %v7390 = vld [vmem:[%s8 + $0x18] sm:$0xf]
        %v7391 = vld [vmem:[%s8 + $0x1c] sm:$0xf]
        %v7392 = vld [vmem:[%s8 + $0x20] sm:$0xf]
        %v7393 = vld [vmem:[%s8 + $0x24] sm:$0xf]
        %v7394 = vld [vmem:[%s8 + $0x28] sm:$0xf]
        %v7395 = vld [vmem:[%s8 + $0x2c] sm:$0xf]
        %v7396 = vld [vmem:[%s8 + $0x30] sm:$0xf]
        %v7397 = vld [vmem:[%s8 + $0x34] sm:$0xf]
        %v7398 = vld [vmem:[%s8 + $0x38] sm:$0xf]
        %v7399 = vld [vmem:[%s8 + $0x3c] sm:$0xf]
        %v7400 = vld [vmem:[%s8 + $0x40] sm:$0xf]
        %v7401 = vld [vmem:[%s8 + $0x44] sm:$0xf]
        %v7402 = vld [vmem:[%s8 + $0x48] sm:$0xf]
        %v7403 = vld [vmem:[%s8 + $0x4c] sm:$0xf]
        %v7404 = vld [vmem:[%s8 + $0x50] sm:$0xf]
        %v7405 = vld [vmem:[%s8 + $0x54] sm:$0xf]
        %v7406 = vld [vmem:[%s8 + $0x58] sm:$0xf]
        %v7407 = vld [vmem:[%s8 + $0x5c] sm:$0xf]
        %v7408 = vld [vmem:[%s8 + $0x60] sm:$0xf]
        %v7409 = vld [vmem:[%s8 + $0x64] sm:$0xf]
        %v7410 = vld [vmem:[%s8 + $0x68] sm:$0xf]
        %v7411 = vld [vmem:[%s8 + $0x6c] sm:$0xf]
        %v7412 = vld [vmem:[%s8 + $0x70] sm:$0xf]
        %v7413 = vld [vmem:[%s8 + $0x74] sm:$0xf]
        %v7414 = vld [vmem:[%s8 + $0x78] sm:$0xf]
        %v7415 = vld [vmem:[%s8 + $0x7c] sm:$0xf]
        %v7416 = vld [vmem:[%s9] sm:$0x1]
        %v7418 = vlaneseq
        %v7419 = vshrl.u32 %v7418, 7
        %v7420 = vsub.s32 0, %v7419
        %v7421 = vrot.slane %v7416, %v7420
        %v7455 = vunpack.c.l.b16 %v7384
        %v7456 = vunpack.c.l.b16 %v7385
        %v7457 = vunpack.c.l.b16 %v7386
        %v7458 = vunpack.c.l.b16 %v7387
        %v7459 = vunpack.c.l.b16 %v7388
        %v7460 = vunpack.c.l.b16 %v7389
        %v7461 = vunpack.c.l.b16 %v7390
        %v7462 = vunpack.c.l.b16 %v7391
        %v7463 = vunpack.c.l.b16 %v7392
        %v7464 = vunpack.c.l.b16 %v7393
        %v7465 = vunpack.c.l.b16 %v7394
        %v7466 = vunpack.c.l.b16 %v7395
        %v7467 = vunpack.c.l.b16 %v7396
        %v7468 = vunpack.c.l.b16 %v7397
        %v7469 = vunpack.c.l.b16 %v7398
        %v7470 = vunpack.c.l.b16 %v7399
        %v7471 = vunpack.c.l.b16 %v7400
        %v7472 = vunpack.c.l.b16 %v7401
        %v7473 = vunpack.c.l.b16 %v7402
        %v7474 = vunpack.c.l.b16 %v7403
        %v7475 = vunpack.c.l.b16 %v7404
        %v7476 = vunpack.c.l.b16 %v7405
        %v7477 = vunpack.c.l.b16 %v7406
        %v7478 = vunpack.c.l.b16 %v7407
        %v7479 = vunpack.c.l.b16 %v7408
        %v7480 = vunpack.c.l.b16 %v7409
        %v7481 = vunpack.c.l.b16 %v7410
        %v7482 = vunpack.c.l.b16 %v7411
        %v7483 = vunpack.c.l.b16 %v7412
        %v7484 = vunpack.c.l.b16 %v7413
        %v7485 = vunpack.c.l.b16 %v7414
        %v7486 = vunpack.c.l.b16 %v7415
        %v7487 = vpack.c.b16 %v7456, %v7455
        %v7488 = vpack.c.b16 %v7458, %v7457
        %v7489 = vpack.c.b16 %v7460, %v7459
        %v7490 = vpack.c.b16 %v7462, %v7461
        %v7491 = vpack.c.b16 %v7464, %v7463
        %v7492 = vpack.c.b16 %v7466, %v7465
        %v7493 = vpack.c.b16 %v7468, %v7467
        %v7494 = vpack.c.b16 %v7470, %v7469
        %v7495 = vpack.c.b16 %v7472, %v7471
        %v7496 = vpack.c.b16 %v7474, %v7473
        %v7497 = vpack.c.b16 %v7476, %v7475
        %v7498 = vpack.c.b16 %v7478, %v7477
        %v7499 = vpack.c.b16 %v7480, %v7479
        %v7500 = vpack.c.b16 %v7482, %v7481
        %v7501 = vpack.c.b16 %v7484, %v7483
        %v7502 = vpack.c.b16 %v7486, %v7485
        %7519 = vmatprep.subr.bf16.mxu0 0
        %7520 = vmatpush1.bf16.msra.mxu0 %v7487
        %7521 = vmatprep.subr.bf16.mxu0 0
        %7522 = vmatpush1.bf16.msra.mxu0 %v7488
        %7523 = vmatprep.subr.bf16.mxu0 0
        %7524 = vmatpush1.bf16.msra.mxu0 %v7489
        %7525 = vmatprep.subr.bf16.mxu0 0
        %7526 = vmatpush1.bf16.msra.mxu0 %v7490
        %7527 = vmatprep.subr.bf16.mxu0 0
        %7528 = vmatpush1.bf16.msra.mxu0 %v7491
        %7529 = vmatprep.subr.bf16.mxu0 0
        %7530 = vmatpush1.bf16.msra.mxu0 %v7492
        %7531 = vmatprep.subr.bf16.mxu0 0
        %7532 = vmatpush1.bf16.msra.mxu0 %v7493
        %7533 = vmatprep.subr.bf16.mxu0 0
        %7534 = vmatpush1.bf16.msra.mxu0 %v7494
        %7535 = vmatprep.subr.bf16.mxu0 0
        %7536 = vmatpush1.bf16.msra.mxu0 %v7495
        %7537 = vmatprep.subr.bf16.mxu0 0
        %7538 = vmatpush1.bf16.msra.mxu0 %v7496
        %7539 = vmatprep.subr.bf16.mxu0 0
        %7540 = vmatpush1.bf16.msra.mxu0 %v7497
        %7541 = vmatprep.subr.bf16.mxu0 0
        %7542 = vmatpush1.bf16.msra.mxu0 %v7498
        %7543 = vmatprep.subr.bf16.mxu0 0
        %7544 = vmatpush1.bf16.msra.mxu0 %v7499
        %7545 = vmatprep.subr.bf16.mxu0 0
        %7546 = vmatpush1.bf16.msra.mxu0 %v7500
        %7547 = vmatprep.subr.bf16.mxu0 0
        %7548 = vmatpush1.bf16.msra.mxu0 %v7501
        %7549 = vmatprep.subr.bf16.mxu0 0
        %7550 = vmatpush1.bf16.msra.mxu0 %v7502
        %7551 = vmatprep.mubr.bf16.mxu0 %v7369
        %7552 = vmatmul.mubr.bf16.gmra.mrb[0].mxu0 %v7368
        %v7553 = vpop.f32.mrb[0].mxu0
        %v7554 = vadd.f32 %v7421, %v7553
        %v7555 = vpop.f32.mrb[0].mxu0
        %v7556 = vpop.f32.mrb[0].mxu0
        %v7557 = vadd.f32 %v7421, %v7556
        %v7558 = vpop.f32.mrb[0].mxu0
        %7559 = vmatprep.mubr.bf16.mxu0 %v7371
        %7560 = vmatmul.mubr.bf16.gmra.mrb[0].mxu0 %v7370
        %v7561 = vpop.f32.mrb[0].mxu0
        %v7562 = vadd.f32 %v7421, %v7561
        %v7563 = vpop.f32.mrb[0].mxu0
        %v7564 = vpop.f32.mrb[0].mxu0
        %v7565 = vadd.f32 %v7421, %v7564
        %v7566 = vpop.f32.mrb[0].mxu0
        %7567 = vmatprep.mubr.bf16.mxu0 %v7373
        %7568 = vmatmul.mubr.bf16.gmra.mrb[0].mxu0 %v7372
        %v7569 = vpop.f32.mrb[0].mxu0
        %v7570 = vadd.f32 %v7421, %v7569
        %v7571 = vpop.f32.mrb[0].mxu0
        %v7572 = vpop.f32.mrb[0].mxu0
        %v7573 = vadd.f32 %v7421, %v7572
        %v7574 = vpop.f32.mrb[0].mxu0
        %7575 = vmatprep.mubr.bf16.mxu0 %v7375
        %7576 = vmatmul.mubr.bf16.gmra.mrb[0].mxu0 %v7374
        %v7577 = vpop.f32.mrb[0].mxu0
        %v7578 = vadd.f32 %v7421, %v7577
        %v7579 = vpop.f32.mrb[0].mxu0
        %v7580 = vpop.f32.mrb[0].mxu0
        %v7581 = vadd.f32 %v7421, %v7580
        %v7582 = vpop.f32.mrb[0].mxu0
        %7583 = vmatprep.mubr.bf16.mxu0 %v7377
        %7584 = vmatmul.mubr.bf16.gmra.mrb[0].mxu0 %v7376
        %v7585 = vpop.f32.mrb[0].mxu0
        %v7586 = vadd.f32 %v7421, %v7585
        %v7587 = vpop.f32.mrb[0].mxu0
        %v7588 = vpop.f32.mrb[0].mxu0
        %v7589 = vadd.f32 %v7421, %v7588
        %v7590 = vpop.f32.mrb[0].mxu0
        %7591 = vmatprep.mubr.bf16.mxu0 %v7379
        %7592 = vmatmul.mubr.bf16.gmra.mrb[0].mxu0 %v7378
        %v7593 = vpop.f32.mrb[0].mxu0
        %v7594 = vadd.f32 %v7421, %v7593
        %v7595 = vpop.f32.mrb[0].mxu0
        %v7596 = vpop.f32.mrb[0].mxu0
        %v7597 = vadd.f32 %v7421, %v7596
        %v7598 = vpop.f32.mrb[0].mxu0
        %7599 = vmatprep.mubr.bf16.mxu0 %v7381
        %7600 = vmatmul.mubr.bf16.gmra.mrb[0].mxu0 %v7380
        %v7601 = vpop.f32.mrb[0].mxu0
        %v7602 = vadd.f32 %v7421, %v7601
        %v7603 = vpop.f32.mrb[0].mxu0
        %v7604 = vpop.f32.mrb[0].mxu0
        %v7605 = vadd.f32 %v7421, %v7604
        %v7606 = vpop.f32.mrb[0].mxu0
        %7607 = vmatprep.mubr.bf16.mxu0 %v7383
        %7608 = vmatmul.mubr.bf16.gmra.mrb[0].mxu0 %v7382
        %v7609 = vpop.f32.mrb[0].mxu0
        %v7610 = vadd.f32 %v7421, %v7609
        %v7611 = vpop.f32.mrb[0].mxu0
        %v7612 = vpop.f32.mrb[0].mxu0
        %v7613 = vadd.f32 %v7421, %v7612
        %v7614 = vpop.f32.mrb[0].mxu0
        %7615 = vdwg.mxu0
        %7616 = vst.msk [vmem:[%s441] sm:$0xff] %vm529, %v7554
        %7617 = vst.msk [vmem:[%s441 + $0x8] sm:$0xff] %vm529, %v7557
        %7618 = vst.msk [vmem:[%s441 + $0x10] sm:$0xff] %vm529, %v7562
        %7619 = vst.msk [vmem:[%s441 + $0x18] sm:$0xff] %vm529, %v7565
        %7620 = vst.msk [vmem:[%s441 + $0x20] sm:$0xff] %vm529, %v7570
        %7621 = vst.msk [vmem:[%s441 + $0x28] sm:$0xff] %vm529, %v7573
        %7622 = vst.msk [vmem:[%s441 + $0x30] sm:$0xff] %vm529, %v7578
        %7623 = vst.msk [vmem:[%s441 + $0x38] sm:$0xff] %vm529, %v7581
        %7624 = vst.msk [vmem:[%s441 + $0x40] sm:$0xff] %vm529, %v7586
        %7625 = vst.msk [vmem:[%s441 + $0x48] sm:$0xff] %vm529, %v7589
        %7626 = vst.msk [vmem:[%s441 + $0x50] sm:$0xff] %vm529, %v7594
        %7627 = vst.msk [vmem:[%s441 + $0x58] sm:$0xff] %vm529, %v7597
        %7628 = vst.msk [vmem:[%s441 + $0x60] sm:$0xff] %vm529, %v7602
        %7629 = vst.msk [vmem:[%s441 + $0x68] sm:$0xff] %vm529, %v7605
        %7630 = vst.msk [vmem:[%s441 + $0x70] sm:$0xff] %vm529, %v7610
        %7631 = vst.msk [vmem:[%s441 + $0x78] sm:$0xff] %vm529, %v7613
        %s7632 = smul.u32 16, %s31
        %p7633 = scmp.lt.s32.totalorder %s30, 1
        %s7634 = scalar_select %p7633, %s30, 1
        %p7635 = scmp.lt.s32.totalorder %s7632, 31
        %s7636 = scalar_select %p7635, %s7632, 31
        %s7637 = smul.addr %s7634, 32
        %s7638 = sadd.s32 %s7636, %s7637
        %s7639 = smul.addr %s7638, 8
        %s7640 = scalar_lea.vmem %s10, %s7639
        %s7641 = sand.u32 %s296, 1
        %s7642 = scalar_lea.sflag [#allocation4], %s7641
        %s7643 = sand.u32 %s296, 1
        %s7644 = smul.addr %s7643, 256
        %s7645 = scalar_lea.vmem [#allocation3], %s7644
        // Predicated region
        $region69: #{decoder_deeplabv3p_forward.1} parent=59 // pred_check
          %p7646 = pneg %p278
        $region70: #{decoder_deeplabv3p_forward.1} parent=59 // pred_check_branch
          %7648 = sbr.rel (%p7646) target = $region72
        $region71: #{decoder_deeplabv3p_forward.1} parent=59 // pred_region
          %s7649 = smul.u32 16, %s31
        $region72: #{decoder_deeplabv3p_forward.1} parent=59 // pred_fallthru
          _
        // Predicated region
        $region73: #{decoder_deeplabv3p_forward.1} parent=59 // pred_check
          %p7650 = pneg %p306
        $region74: #{decoder_deeplabv3p_forward.1} parent=59 // pred_check_branch
          %7652 = sbr.rel (%p7650) target = $region76
        $region75: #{decoder_deeplabv3p_forward.1} parent=59 // pred_region
          %s7653 = smul.u32 16, %s31
          %s7655 = ssub.s32 4096, 4096
          %7656 = vsyncadd %s7642, %s7655
          %s7657 = smul.addr %s7653, 2
          %s7658 = smul.addr %s30, 64
          %s7659 = sadd.s32 %s7657, %s7658
          %s7660 = smul.addr %s7659, 128
          %s7661 = scalar_lea.hbm %s11, %s7660
          %s7662 = sshll.u32 %s7645, 4
          %s7663 = int_to_ptr.vmem [resolvable:$true] %s7662
          %7668 = dma.vmem_to_hbm [thread:$0]  %s7663, 4096, %s7661, %s7642, 256, 256, 16
        $region76: #{decoder_deeplabv3p_forward.1} parent=59 // pred_fallthru
          _
      $region60: #{decoder_deeplabv3p_forward.1} parent=5 // pred_fallthru
        _
      %p7669 = scmp.le.s32.totalorder 2, %s21
      // Predicated region
      $region77: #{decoder_deeplabv3p_forward.1} parent=5 // pred_check
        %p7670 = pneg %p7669
      $region78: #{decoder_deeplabv3p_forward.1} parent=5 // pred_check_branch
        %7672 = sbr.rel (%p7670) target = $region80
      $region79: #{decoder_deeplabv3p_forward.1} parent=5 // pred_region
        %s7673 = ssub.s32 %s21, 2
        // Predicated region
        $region81: #{decoder_deeplabv3p_forward.1} parent=79 // pred_check
          %p7674 = pneg %p284
        $region82: #{decoder_deeplabv3p_forward.1} parent=79 // pred_check_branch
          %7676 = sbr.rel (%p7674) target = $region84
        $region83: #{decoder_deeplabv3p_forward.1} parent=79 // pred_region
          %s7677 = smul.u32 16, %s33
          %p7678 = scmp.lt.s32.totalorder %s32, 1
          %s7679 = scalar_select %p7678, %s32, 1
          %p7680 = scmp.lt.s32.totalorder %s7677, 31
          %s7681 = scalar_select %p7680, %s7677, 31
          %s7682 = smul.addr %s7679, 32
          %s7683 = sadd.s32 %s7681, %s7682
          %s7684 = smul.addr %s7683, 8
          %s7685 = scalar_lea.vmem %s10, %s7684
        $region84: #{decoder_deeplabv3p_forward.1} parent=79 // pred_fallthru
          _
        // Predicated region
        $region85: #{decoder_deeplabv3p_forward.1} parent=79 // pred_check
          %p7686 = pneg %p312
        $region86: #{decoder_deeplabv3p_forward.1} parent=79 // pred_check_branch
          %7688 = sbr.rel (%p7686) target = $region88
        $region87: #{decoder_deeplabv3p_forward.1} parent=79 // pred_region
          %s7689 = sand.u32 %s297, 1
          %s7690 = scalar_lea.sflag [#allocation4], %s7689
          %s7691 = sand.u32 %s297, 1
          %s7692 = smul.addr %s7691, 256
          %s7693 = scalar_lea.vmem [#allocation3], %s7692
          %7694 = dma.done %s7690, 4096
        $region88: #{decoder_deeplabv3p_forward.1} parent=79 // pred_fallthru
          _
      $region80: #{decoder_deeplabv3p_forward.1} parent=5 // pred_fallthru
        _
    $region6: #{decoder_deeplabv3p_forward.1} parent=1 // loop_footer
      %s25 = sadd.s32 1, %s21
    $region7: #{decoder_deeplabv3p_forward.1} parent=1 // loop_footer_branch
      %20 = sbr.rel target = $region3
    $region8: #{decoder_deeplabv3p_forward.1} parent=1 // loop_exit
      _
    %7695 = vsyncpa [#allocation4], 1
    %s7696 = scalar_lea.sflag [#allocation4], 1
    %7697 = vsyncpa %s7696, 1

</llo_original>
